<compile_context>
chip_gen: v6e
topology: v6e:2x2x1
jax: 0.10.0
libtpu: 0.0.40
codegen_flags: <defaults>
</compile_context>

<pallas_src>
import functools
import numpy as np
import jax
import jax.numpy as jnp
from jax.experimental import pallas as pl
from jax.experimental.pallas import tpu as pltpu

# BBHeavyAtom indices (N, CA, C, O)
ATOM_N, ATOM_CA, ATOM_C, ATOM_O = 0, 1, 2, 3

MXU_DTYPE = jnp.bfloat16            # matmul operand dtype (f32 accumulation)
_VMEM_LIMIT = 48 * 1024 * 1024      # safe on v5e/v6e (128 MiB) and v7x (64 MiB)
_PAIR_BUDGET = 6 * 1024 * 1024      # per-grid-step working-set target (pair kernels)


def _cp(n_parallel):
    return pltpu.CompilerParams(
        dimension_semantics=("parallel",) * n_parallel,
        vmem_limit_bytes=_VMEM_LIMIT)


def _mdot(x, w):
    """MXU matmul: bf16 operands, f32 accumulation."""
    return jnp.dot(x.astype(MXU_DTYPE), w, preferred_element_type=jnp.float32)


def _node_tile(M, cap=512):
    """Row tile for (M, D) node-level kernels: multiple of 8 (or == M)."""
    if M <= cap:
        return M
    t = cap
    while t >= 8 and M % t:
        t -= 8
    return t if (t >= 8 and M % t == 0) else cap


def _pair_tile(L, per_pair_floats, budget=_PAIR_BUDGET):
    """Row tile ti for pair kernels: ti divides L and is a multiple of 8 (or == L)."""
    per_row = L * per_pair_floats * 4
    if L * per_row <= budget:
        return L
    div8 = [t for t in range(8, L + 1, 8) if L % t == 0]
    fit = [t for t in div8 if t * per_row <= budget]
    if fit:
        return max(fit)
    return min(div8) if div8 else L


# ----------------------------------------------------------------------------
# Pallas kernels
# ----------------------------------------------------------------------------
def _linear_bias_kernel(x_ref, w_ref, b_ref, o_ref):
    o_ref[...] = (_mdot(x_ref[...], w_ref[...]) + b_ref[...]).astype(o_ref.dtype)


def pallas_linear_bias(x, w_bf16, b, cap=512):
    """x: (M, Din) @ w: (Din, Dout) + b."""
    M, Din = x.shape
    Dout = w_bf16.shape[1]
    tm = _node_tile(M, cap)
    Mp = -(-M // tm) * tm
    xp = x if Mp == M else jnp.pad(x, ((0, Mp - M), (0, 0)))
    out = pl.pallas_call(
        _linear_bias_kernel,
        out_shape=jax.ShapeDtypeStruct((Mp, Dout), jnp.float32),
        grid=(Mp // tm,),
        in_specs=[
            pl.BlockSpec((tm, Din), lambda i: (i, 0)),
            pl.BlockSpec((Din, Dout), lambda i: (0, 0)),
            pl.BlockSpec((1, Dout), lambda i: (0, 0)),
        ],
        out_specs=pl.BlockSpec((tm, Dout), lambda i: (i, 0)),
        compiler_params=_cp(1),
    )(xp, w_bf16, b.reshape(1, -1))
    return out if Mp == M else out[:M]


def _msg_agg_kernel(rad_ref, z_ref, pi_ref, pj_ref, cd_ref, intra_ref, inter_ref,
                    wr_ref, wz_ref, w2_ref, b2_ref, wc1_ref, bc1_ref, wc2_ref,
                    si_ref, se_ref, ca_ref):
    """Fused: message MLP + coord MLPs (both edge types) + masked aggregations."""
    ti, L, CC = rad_ref.shape[1], rad_ref.shape[2], rad_ref.shape[3]
    P = z_ref.shape[3]

    rad2 = rad_ref[0].reshape(ti * L, CC)
    z2 = z_ref[0].reshape(ti * L, P)
    # first layer: pairwise part (radial, z); node halves come in pre-projected
    pre = _mdot(rad2, wr_ref[...]) + _mdot(z2, wz_ref[...])
    H = pre.shape[-1]
    pre = pre.reshape(ti, L, H) + pi_ref[0] + pj_ref[0]   # (+ msg bias folded in pi)
    pre = pre * jax.nn.sigmoid(pre)                       # SiLU
    m2 = _mdot(pre.reshape(ti * L, H), w2_ref[...]) + b2_ref[...]
    # TODO(synk): nn.Dropout(0.1) on the message is identity (eval / deterministic).
    F = m2.shape[-1]
    m3 = m2.reshape(ti, L, F)

    intra = intra_ref[0]                                  # (ti, L, 1) float 0/1
    inter = inter_ref[0]
    si_ref[0] = jnp.sum(m3 * intra, axis=1)               # masked message sums
    se_ref[0] = jnp.sum(m3 * inter, axis=1)

    # fused coord MLPs: [c0 | c1] first layer, block-diagonal + lane-expanded 2nd
    ch = _mdot(m2, wc1_ref[...]) + bc1_ref[...]
    ch = ch * jax.nn.sigmoid(ch)
    c01 = _mdot(ch, wc2_ref[...]).reshape(ti, L, 24)      # lanes: [c0f(12) | c1f(12)]
    wsum = c01[:, :, :12] * intra + c01[:, :, 12:] * inter
    agg = jnp.sum(cd_ref[0] * wsum, axis=1)               # (ti, 12)
    denom = jnp.sum(jnp.maximum(intra, inter) + 1e-6, axis=1)   # (ti, 1)
    ca_ref[0] = agg / denom


def pallas_msg_agg(radial, z, mproj_i, mproj_j, cdiff_flat, intra, inter,
                   wr, wz, w2, b2, wc1, bc1, wc2x):
    N, L, _, CC = radial.shape
    P = z.shape[-1]
    H = wr.shape[1]
    F = w2.shape[1]
    feats = CC + P + 12 + 2 + 4 * F + 40                  # rough f32 / pair working set
    ti = _pair_tile(L, feats)
    p4 = lambda n, i: (n, i, 0, 0)
    p3o = lambda n, i: (n, i, 0)
    w0 = lambda n, i: (0, 0)
    return pl.pallas_call(
        _msg_agg_kernel,
        out_shape=(jax.ShapeDtypeStruct((N, L, F), jnp.float32),
                   jax.ShapeDtypeStruct((N, L, F), jnp.float32),
                   jax.ShapeDtypeStruct((N, L, 12), jnp.float32)),
        grid=(N, L // ti),
        in_specs=[
            pl.BlockSpec((1, ti, L, CC), p4),
            pl.BlockSpec((1, ti, L, P), p4),
            pl.BlockSpec((1, ti, 1, H), p4),
            pl.BlockSpec((1, L, H), lambda n, i: (n, 0, 0)),
            pl.BlockSpec((1, ti, L, 12), p4),
            pl.BlockSpec((1, ti, L, 1), p4),
            pl.BlockSpec((1, ti, L, 1), p4),
            pl.BlockSpec((CC, H), w0),
            pl.BlockSpec((P, H), w0),
            pl.BlockSpec((H, F), w0),
            pl.BlockSpec((1, F), w0),
            pl.BlockSpec((F, 2 * F), w0),
            pl.BlockSpec((1, 2 * F), w0),
            pl.BlockSpec((2 * F, 24), w0),
        ],
        out_specs=(pl.BlockSpec((1, ti, F), p3o),
                   pl.BlockSpec((1, ti, F), p3o),
                   pl.BlockSpec((1, ti, 12), p3o)),
        compiler_params=_cp(2),
    )(radial, z, mproj_i, mproj_j, cdiff_flat, intra, inter,
      wr, wz, w2, b2.reshape(1, -1), wc1, bc1.reshape(1, -1), wc2x)


def _node_kernel(h_ref, si_ref, se_ref,
                 wh_ref, wsi_ref, wse_ref, b1_ref, w2_ref, b2_ref,
                 g_ref, beta_ref, we_ref, be_ref,
                 h_out_ref, ep_out_ref):
    """Fused node MLP (relation linears folded in) + residual + LayerNorm +
    edge-MLP first-layer node projections of the updated h."""
    h = h_ref[...]
    pre = (_mdot(h, wh_ref[...]) + _mdot(si_ref[...], wsi_ref[...])
           + _mdot(se_ref[...], wse_ref[...]) + b1_ref[...])
    pre = pre * jax.nn.sigmoid(pre)                       # SiLU
    upd = _mdot(pre, w2_ref[...]) + b2_ref[...]
    # TODO(synk): nn.Dropout(0.1) on the node update is identity (eval mode).
    x = h + upd
    mu = jnp.mean(x, axis=-1, keepdims=True)
    var = jnp.mean((x - mu) ** 2, axis=-1, keepdims=True)
    hn = g_ref[...] * (x - mu) * jax.lax.rsqrt(var + 1e-5) + beta_ref[...]
    h_out_ref[...] = hn
    ep_out_ref[...] = _mdot(hn, we_ref[...]) + be_ref[...]


def pallas_node(h, si, se, wh, wsi, wse, b1, w2, b2, gamma, beta, we, be, cap=512):
    M, F = h.shape
    H = wh.shape[1]
    tm = _node_tile(M, cap)
    Mp = -(-M // tm) * tm
    pad = lambda a: a if Mp == M else jnp.pad(a, ((0, Mp - M), (0, 0)))
    idx = lambda i: (i, 0)
    ws = lambda s: pl.BlockSpec(s, lambda i: (0, 0))
    h_new, ep = pl.pallas_call(
        _node_kernel,
        out_shape=(jax.ShapeDtypeStruct((Mp, F), jnp.float32),
                   jax.ShapeDtypeStruct((Mp, 2 * H), jnp.float32)),
        grid=(Mp // tm,),
        in_specs=[
            pl.BlockSpec((tm, F), idx), pl.BlockSpec((tm, F), idx),
            pl.BlockSpec((tm, F), idx),
            ws((F, H)), ws((F, H)), ws((F, H)), ws((1, H)),
            ws((H, F)), ws((1, F)), ws((1, F)), ws((1, F)),
            ws((F, 2 * H)), ws((1, 2 * H)),
        ],
        out_specs=(pl.BlockSpec((tm, F), idx), pl.BlockSpec((tm, 2 * H), idx)),
        compiler_params=_cp(1),
    )(pad(h), pad(si), pad(se), wh, wsi, wse, b1.reshape(1, -1), w2,
      b2.reshape(1, -1), gamma.reshape(1, -1), beta.reshape(1, -1),
      we, be.reshape(1, -1))
    if Mp != M:
        h_new, ep = h_new[:M], ep[:M]
    return h_new, ep


def _edge_kernel(z_ref, pi_ref, pj_ref, wz_ref, w2_ref, b2_ref, o_ref):
    """Edge MLP: only the z part of the first layer is pairwise."""
    ti, L, P = z_ref.shape[1], z_ref.shape[2], z_ref.shape[3]
    z2 = z_ref[0].reshape(ti * L, P)
    pre = _mdot(z2, wz_ref[...])
    H = pre.shape[-1]
    pre = pre.reshape(ti, L, H) + pi_ref[0] + pj_ref[0]   # (+ edge bias folded in pi)
    pre = pre * jax.nn.sigmoid(pre)                       # SiLU
    out = _mdot(pre.reshape(ti * L, H), w2_ref[...]) + b2_ref[...]
    o_ref[0] = out.reshape(ti, L, P)


def pallas_edge(z, eproj_i, eproj_j, wz, w2, b2):
    N, L, _, P = z.shape
    H = wz.shape[1]
    feats = 2 * P + 2 * H + 16
    ti = _pair_tile(L, feats)
    p4 = lambda n, i: (n, i, 0, 0)
    w0 = lambda n, i: (0, 0)
    return pl.pallas_call(
        _edge_kernel,
        out_shape=jax.ShapeDtypeStruct((N, L, L, P), jnp.float32),
        grid=(N, L // ti),
        in_specs=[
            pl.BlockSpec((1, ti, L, P), p4),
            pl.BlockSpec((1, ti, 1, H), p4),
            pl.BlockSpec((1, L, H), lambda n, i: (n, 0, 0)),
            pl.BlockSpec((P, H), w0),
            pl.BlockSpec((H, P), w0),
            pl.BlockSpec((1, P), w0),
        ],
        out_specs=pl.BlockSpec((1, ti, L, P), p4),
        compiler_params=_cp(2),
    )(z, eproj_i, eproj_j, wz, w2, b2.reshape(1, -1))


# ----------------------------------------------------------------------------
# Plain-JAX glue
# ----------------------------------------------------------------------------
def _normalize(v, eps=1e-8):
    return v / jnp.maximum(jnp.linalg.norm(v, axis=-1, keepdims=True), eps)


def construct_3d_basis(center, p1, p2):
    v1 = p1 - center
    e1 = _normalize(v1)
    v2 = p2 - center
    u2 = v2 - jnp.sum(e1 * v2, axis=-1, keepdims=True) * e1
    e2 = _normalize(u2)
    e3 = jnp.cross(e1, e2)
    return jnp.stack([e1, e2, e3], axis=-1)


def edge_construction(batch, cutoff, K):
    mask_res = batch["mask_atoms"][:, :, ATOM_CA]                          # (N, L)
    mask_pair = (mask_res[:, :, None] * mask_res[:, None, :]) > 0
    same_chain = batch["chain_nb"][:, :, None] == batch["chain_nb"][:, None, :]
    diff_chain = jnp.logical_not(same_chain)
    seq_dis = jnp.abs(batch["res_nb"][:, :, None] - batch["res_nb"][:, None, :])
    seq_mask = (seq_dis == 1) | (seq_dis == 2)
    ca = batch["pos_atoms"][:, :, ATOM_CA]                                  # (N, L, 3)
    pairwise = jnp.linalg.norm(ca[:, :, None] - ca[:, None, :], axis=-1)    # (N, L, L)
    rball = pairwise < cutoff
    thresh = jnp.sort(pairwise, axis=-1)[:, :, K:K + 1]                     # (K+1)-th smallest
    knn = pairwise < thresh
    intra = (rball | knn | seq_mask) & same_chain & mask_pair
    inter = (rball | knn) & diff_chain & mask_pair
    return intra, inter


def sa_block_forward(p, coord, h, z, intra4, inter4):
    N, L, F = h.shape
    P = z.shape[-1]
    C = coord.shape[2]
    CC = C * C
    H = F                                   # hidden width of every 2-layer MLP

    # --- coord2radial (global F.normalize over the whole N*L*L batch) --------
    cdiff = coord[:, :, None, :, :] - coord[:, None, :, :, :]        # (N,L,L,C,3)
    radial = jnp.einsum("nijab,nijcb->nijac", cdiff, cdiff)          # (N,L,L,C,C)
    r2 = radial.reshape(-1, C, C)
    nrm = jnp.sqrt(jnp.sum(r2 * r2, axis=0, keepdims=True))
    radial = (r2 / jnp.maximum(nrm, 1e-12)).reshape(N, L, L, CC)
    cdiff_flat = cdiff.reshape(N, L, L, C * 3)

    bf = lambda w: w.astype(MXU_DTYPE)

    # --- message MLP: hoist node halves of the first layer out of L^2 --------
    msg_w1 = p["msg_w1"]
    msg_wa, msg_wb = msg_w1[:F], msg_w1[F:2 * F]
    msg_wr, msg_wz = msg_w1[2 * F:2 * F + CC], msg_w1[2 * F + CC:]
    proj = pallas_linear_bias(
        h.reshape(N * L, F),
        bf(jnp.concatenate([msg_wa, msg_wb], axis=1)),
        jnp.concatenate([p["msg_b1"], jnp.zeros_like(p["msg_b1"])]))
    mproj_i = proj[:, :H].reshape(N, L, 1, H)
    mproj_j = proj[:, H:].reshape(N, L, H)

    # --- coord MLP weights: fuse both edge types, bake repeat(.,3) into W2 ----
    wc1 = jnp.concatenate([p["c0_w1"], p["c1_w1"]], axis=1)          # (F, 2F)
    bc1 = jnp.concatenate([p["c0_b1"], p["c1_b1"]])                  # (2F,)
    z12 = jnp.zeros((F, 12), jnp.float32)
    wc2x = jnp.concatenate(
        [jnp.concatenate([jnp.repeat(p["c0_w2"], 3, axis=1), z12], axis=1),
         jnp.concatenate([z12, jnp.repeat(p["c1_w2"], 3, axis=1)], axis=1)],
        axis=0)                                                      # (2F, 24)

    # --- fused pair kernel: message + coord MLPs + masked aggregations -------
    si, se, cagg = pallas_msg_agg(
        radial, z, mproj_i, mproj_j, cdiff_flat, intra4, inter4,
        bf(msg_wr), bf(msg_wz), bf(p["msg_w2"]), p["msg_b2"],
        bf(wc1), bc1, bf(wc2x))

    # --- node update: fold relation linears into node MLP; fuse LN + edge proj
    node_w1 = p["node_w1"]
    wh = node_w1[:F]
    wsi = p["rel_w0"] @ node_w1[F:2 * F]
    wse = p["rel_w1"] @ node_w1[2 * F:]
    edge_w1 = p["edge_w1"]
    we = jnp.concatenate([edge_w1[:F], edge_w1[F:2 * F]], axis=1)    # (F, 2H)
    be = jnp.concatenate([p["edge_b1"], jnp.zeros_like(p["edge_b1"])])
    h_new_flat, eproj = pallas_node(
        h.reshape(N * L, F), si.reshape(N * L, F), se.reshape(N * L, F),
        bf(wh), bf(wsi), bf(wse), p["node_b1"], bf(p["node_w2"]), p["node_b2"],
        p["ln_gamma"], p["ln_beta"], bf(we), be)
    h_new = h_new_flat.reshape(N, L, F)
    eproj_i = eproj[:, :H].reshape(N, L, 1, H)
    eproj_j = eproj[:, H:].reshape(N, L, H)

    # --- edge update (uses updated h via the fused projections) ---------------
    z_new = pallas_edge(z, eproj_i, eproj_j, bf(edge_w1[2 * F:]),
                        bf(p["edge_w2"]), p["edge_b2"])

    # --- coord update ----------------------------------------------------------
    coord_new = coord + cagg.reshape(N, L, C, 3)
    return coord_new, h_new, z_new


def gadecoder_forward(params, batch, res_feat, pair_feat, rng,
                      cutoff, knn, mask_ratio, noise_sigma=1.0):
    intra, inter = edge_construction(batch, cutoff, knn)
    coord = batch["pos_atoms"][:, :, :4, :]
    N, L = coord.shape[0], coord.shape[1]

    kb, kn = jax.random.split(rng)
    bern = jax.random.bernoulli(kb, mask_ratio, (N, L)).astype(jnp.float32)
    mask = (bern * batch["mask_atoms"][:, :, ATOM_CA]) > 0
    noise = jax.random.normal(kn, (N, L, 1, 3)) * noise_sigma
    noise = jnp.broadcast_to(noise, coord.shape)
    coord = coord + jnp.where(mask[:, :, None, None], noise, 0.0)

    pos = batch["pos_atoms"]
    # R, t are computed in the reference forward but never used inside SABlock.
    R = construct_3d_basis(pos[:, :, ATOM_CA], pos[:, :, ATOM_C], pos[:, :, ATOM_N])
    t = pos[:, :, ATOM_CA] * 0.1  # angstrom_to_nm
    del R, t

    intra4 = intra.astype(jnp.float32)[..., None]
    inter4 = inter.astype(jnp.float32)[..., None]
    h, z = res_feat, pair_feat
    for p in params["blocks"]:
        coord, h, z = sa_block_forward(p, coord, h, z, intra4, inter4)
    return coord, mask


# ----------------------------------------------------------------------------
# Deterministic parameter init (mirrors SABlock.__init__ shapes)
# ----------------------------------------------------------------------------
def _init_linear(key, din, dout, bias=True):
    bound = 1.0 / np.sqrt(din)
    kw, kb = jax.random.split(key)
    w = jax.random.uniform(kw, (din, dout), jnp.float32, -bound, bound)
    b = (jax.random.uniform(kb, (dout,), jnp.float32, -bound, bound)
         if bias else jnp.zeros((dout,), jnp.float32))
    return w, b


def init_sablock_params(key, F, P, C=4):
    ks = jax.random.split(key, 12)
    p = {}
    p["msg_w1"], p["msg_b1"] = _init_linear(ks[0], 2 * F + C * C + P, F)
    p["msg_w2"], p["msg_b2"] = _init_linear(ks[1], F, F)
    p["node_w1"], p["node_b1"] = _init_linear(ks[2], 3 * F, F)
    p["node_w2"], p["node_b2"] = _init_linear(ks[3], F, F)
    p["edge_w1"], p["edge_b1"] = _init_linear(ks[4], 2 * F + P, F)
    p["edge_w2"], p["edge_b2"] = _init_linear(ks[5], F, P)
    p["rel_w0"], _ = _init_linear(ks[6], F, F, bias=False)
    p["rel_w1"], _ = _init_linear(ks[7], F, F, bias=False)

    def coord_mlp(k):
        k1, k2 = jax.random.split(k)
        w1, b1 = _init_linear(k1, F, F)
        gain = 0.001  # xavier_uniform_(gain=0.001), no bias
        bound = gain * np.sqrt(6.0 / (F + C))
        w2 = jax.random.uniform(k2, (F, C), jnp.float32, -bound, bound)
        return w1, b1, w2

    p["c0_w1"], p["c0_b1"], p["c0_w2"] = coord_mlp(ks[8])
    p["c1_w1"], p["c1_b1"], p["c1_w2"] = coord_mlp(ks[9])
    p["ln_gamma"] = jnp.ones((F,), jnp.float32)
    p["ln_beta"] = jnp.zeros((F,), jnp.float32)
    return p


def init_gadecoder_params(key, F, P, num_layers):
    keys = jax.random.split(key, num_layers)
    return {"blocks": [init_sablock_params(k, F, P) for k in keys]}


# ----------------------------------------------------------------------------
if __name__ == "__main__":
    N, L, A = 2, 8, 4
    NODE_DIM, PAIR_DIM, NUM_LAYERS = 32, 16, 2
    CUTOFF, KNN, MASK_RATIO = 15.0, 3, 0.5

    key = jax.random.PRNGKey(0)
    k_pos, k_res, k_pair, k_params, k_fwd = jax.random.split(key, 5)

    batch = {
        "pos_atoms": jax.random.normal(k_pos, (N, L, A, 3), jnp.float32) * 3.0,
        "mask_atoms": jnp.ones((N, L, A), jnp.float32),
        "chain_nb": jnp.concatenate(
            [jnp.zeros((N, L // 2), jnp.int32), jnp.ones((N, L // 2), jnp.int32)],
            axis=1),
        "res_nb": jnp.broadcast_to(jnp.arange(L, dtype=jnp.int32), (N, L)),
    }
    res_feat = jax.random.normal(k_res, (N, L, NODE_DIM), jnp.float32)
    pair_feat = jax.random.normal(k_pair, (N, L, L, PAIR_DIM), jnp.float32)

    params = init_gadecoder_params(k_params, NODE_DIM, PAIR_DIM, NUM_LAYERS)

    fwd = jax.jit(functools.partial(
        gadecoder_forward, cutoff=CUTOFF, knn=KNN, mask_ratio=MASK_RATIO))
    coord, mask = fwd(params, batch, res_feat, pair_feat, k_fwd)
    coord = jax.block_until_ready(coord)
    mask = jax.block_until_ready(mask)

    assert coord.shape == (N, L, 4, 3) and coord.dtype == jnp.float32
    assert mask.shape == (N, L) and mask.dtype == jnp.bool_
    assert bool(jnp.all(jnp.isfinite(coord)))
    print("KERNEL_OK")
</pallas_src>

<mosaic_0001>
module attributes {stable_mosaic.version = 11 : i64} {
  func.func @_linear_bias_kernel(%arg0: i32, %arg1: memref<16x32xf32, #tpu.memory_space<vmem>>, %arg2: memref<32x64xbf16, #tpu.memory_space<vmem>>, %arg3: memref<1x64xf32, #tpu.memory_space<vmem>>, %arg4: memref<16x64xf32, #tpu.memory_space<vmem>>) attributes {dimension_semantics = [#tpu.dimension_semantics<parallel>], iteration_bounds = array<i64: 1>, scalar_prefetch = 0 : i64, scratch_operands = 0 : i64, tpu.core_type = #tpu.core_type<tc>, window_params = [{transform_indices = @transform_0, window_bounds = array<i64: 16, 32>}, {pipeline_mode = #tpu.pipeline_mode<synchronous>, transform_indices = @transform_1, window_bounds = array<i64: 32, 64>}, {pipeline_mode = #tpu.pipeline_mode<synchronous>, transform_indices = @transform_2, window_bounds = array<i64: 1, 64>}, {transform_indices = @transform_3, window_bounds = array<i64: 16, 64>}]} {
    %c0 = arith.constant 0 : index
    %c0_0 = arith.constant 0 : index
    %0 = vector.load %arg1[%c0, %c0_0] : memref<16x32xf32, #tpu.memory_space<vmem>>, vector<16x32xf32>
    %c0_1 = arith.constant 0 : index
    %c0_2 = arith.constant 0 : index
    %1 = vector.load %arg2[%c0_1, %c0_2] : memref<32x64xbf16, #tpu.memory_space<vmem>>, vector<32x64xbf16>
    %2 = arith.truncf %0 : vector<16x32xf32> to vector<16x32xbf16>
    %cst = arith.constant dense<0.000000e+00> : vector<16x64xf32>
    %3 = tpu.matmul %2, %1, %cst {dimension_numbers = #tpu.dot_dimension_numbers<[1], [0], [0], [1], [0, 0, 1, 1], [], []>} : vector<16x32xbf16>, vector<32x64xbf16>, vector<16x64xf32> -> vector<16x64xf32>
    %c0_3 = arith.constant 0 : index
    %c0_4 = arith.constant 0 : index
    %4 = vector.load %arg3[%c0_3, %c0_4] : memref<1x64xf32, #tpu.memory_space<vmem>>, vector<1x64xf32>
    %5 = vector.broadcast %4 : vector<1x64xf32> to vector<16x64xf32>
    %6 = arith.addf %3, %5 : vector<16x64xf32>
    %c0_5 = arith.constant 0 : index
    %c0_6 = arith.constant 0 : index
    %7 = vector.load %arg4[%c0_5, %c0_6] : memref<16x64xf32, #tpu.memory_space<vmem>>, vector<16x64xf32>
    tpu.vector_store %arg4[%c0_5, %c0_6], %6 {strides = array<i32>} : memref<16x64xf32, #tpu.memory_space<vmem>>, vector<16x64xf32>,
    return
  }
  func.func @transform_0(%arg0: i32) -> (i32, i32) {
    %c0_i32 = arith.constant 0 : i32
    %c0_i32_0 = arith.constant 0 : i32
    return %arg0, %c0_i32 : i32, i32
  }
  func.func @transform_1(%arg0: i32) -> (i32, i32) {
    %c0_i32 = arith.constant 0 : i32
    %c0_i32_0 = arith.constant 0 : i32
    %c0_i32_1 = arith.constant 0 : i32
    return %c0_i32, %c0_i32_0 : i32, i32
  }
  func.func @transform_2(%arg0: i32) -> (i32, i32) {
    %c0_i32 = arith.constant 0 : i32
    %c0_i32_0 = arith.constant 0 : i32
    %c0_i32_1 = arith.constant 0 : i32
    return %c0_i32, %c0_i32_0 : i32, i32
  }
  func.func @transform_3(%arg0: i32) -> (i32, i32) {
    %c0_i32 = arith.constant 0 : i32
    %c0_i32_0 = arith.constant 0 : i32
    return %arg0, %c0_i32 : i32, i32
  }
}

module attributes {stable_mosaic.version = 11 : i64} {
  func.func @_msg_agg_kernel(%arg0: i32, %arg1: i32, %arg2: memref<1x8x8x16xf32, #tpu.memory_space<vmem>>, %arg3: memref<1x8x8x16xf32, #tpu.memory_space<vmem>>, %arg4: memref<1x8x1x32xf32, #tpu.memory_space<vmem>>, %arg5: memref<1x8x32xf32, #tpu.memory_space<vmem>>, %arg6: memref<1x8x8x12xf32, #tpu.memory_space<vmem>>, %arg7: memref<1x8x8x1xf32, #tpu.memory_space<vmem>>, %arg8: memref<1x8x8x1xf32, #tpu.memory_space<vmem>>, %arg9: memref<16x32xbf16, #tpu.memory_space<vmem>>, %arg10: memref<16x32xbf16, #tpu.memory_space<vmem>>, %arg11: memref<32x32xbf16, #tpu.memory_space<vmem>>, %arg12: memref<1x32xf32, #tpu.memory_space<vmem>>, %arg13: memref<32x64xbf16, #tpu.memory_space<vmem>>, %arg14: memref<1x64xf32, #tpu.memory_space<vmem>>, %arg15: memref<64x24xbf16, #tpu.memory_space<vmem>>, %arg16: memref<1x8x32xf32, #tpu.memory_space<vmem>>, %arg17: memref<1x8x32xf32, #tpu.memory_space<vmem>>, %arg18: memref<1x8x12xf32, #tpu.memory_space<vmem>>) attributes {dimension_semantics = [#tpu.dimension_semantics<parallel>, #tpu.dimension_semantics<parallel>], iteration_bounds = array<i64: 2, 1>, scalar_prefetch = 0 : i64, scratch_operands = 0 : i64, tpu.core_type = #tpu.core_type<tc>, window_params = [{transform_indices = @transform_0, window_bounds = array<i64: 1, 8, 8, 16>}, {transform_indices = @transform_1, window_bounds = array<i64: 1, 8, 8, 16>}, {transform_indices = @transform_2, window_bounds = array<i64: 1, 8, 1, 32>}, {transform_indices = @transform_3, window_bounds = array<i64: 1, 8, 32>}, {transform_indices = @transform_4, window_bounds = array<i64: 1, 8, 8, 12>}, {transform_indices = @transform_5, window_bounds = array<i64: 1, 8, 8, 1>}, {transform_indices = @transform_6, window_bounds = array<i64: 1, 8, 8, 1>}, {pipeline_mode = #tpu.pipeline_mode<synchronous>, transform_indices = @transform_7, window_bounds = array<i64: 16, 32>}, {pipeline_mode = #tpu.pipeline_mode<synchronous>, transform_indices = @transform_8, window_bounds = array<i64: 16, 32>}, {pipeline_mode = #tpu.pipeline_mode<synchronous>, transform_indices = @transform_9, window_bounds = array<i64: 32, 32>}, {pipeline_mode = #tpu.pipeline_mode<synchronous>, transform_indices = @transform_10, window_bounds = array<i64: 1, 32>}, {pipeline_mode = #tpu.pipeline_mode<synchronous>, transform_indices = @transform_11, window_bounds = array<i64: 32, 64>}, {pipeline_mode = #tpu.pipeline_mode<synchronous>, transform_indices = @transform_12, window_bounds = array<i64: 1, 64>}, {pipeline_mode = #tpu.pipeline_mode<synchronous>, transform_indices = @transform_13, window_bounds = array<i64: 64, 24>}, {transform_indices = @transform_14, window_bounds = array<i64: 1, 8, 32>}, {transform_indices = @transform_15, window_bounds = array<i64: 1, 8, 32>}, {transform_indices = @transform_16, window_bounds = array<i64: 1, 8, 12>}]} {
    %c0 = arith.constant 0 : index
    %c0_0 = arith.constant 0 : index
    %c0_1 = arith.constant 0 : index
    %c0_2 = arith.constant 0 : index
    %0 = vector.load %arg2[%c0, %c0_0, %c0_1, %c0_2] : memref<1x8x8x16xf32, #tpu.memory_space<vmem>>, vector<1x8x8x16xf32>
    %1 = vector.shape_cast %0 : vector<1x8x8x16xf32> to vector<8x8x16xf32>
    %2 = vector.shape_cast %1 : vector<8x8x16xf32> to vector<64x16xf32>
    %c0_3 = arith.constant 0 : index
    %c0_4 = arith.constant 0 : index
    %c0_5 = arith.constant 0 : index
    %c0_6 = arith.constant 0 : index
    %3 = vector.load %arg3[%c0_3, %c0_4, %c0_5, %c0_6] : memref<1x8x8x16xf32, #tpu.memory_space<vmem>>, vector<1x8x8x16xf32>
    %4 = vector.shape_cast %3 : vector<1x8x8x16xf32> to vector<8x8x16xf32>
    %5 = vector.shape_cast %4 : vector<8x8x16xf32> to vector<64x16xf32>
    %c0_7 = arith.constant 0 : index
    %c0_8 = arith.constant 0 : index
    %6 = vector.load %arg9[%c0_7, %c0_8] : memref<16x32xbf16, #tpu.memory_space<vmem>>, vector<16x32xbf16>
    %7 = arith.truncf %2 : vector<64x16xf32> to vector<64x16xbf16>
    %cst = arith.constant dense<0.000000e+00> : vector<64x32xf32>
    %8 = tpu.matmul %7, %6, %cst {dimension_numbers = #tpu.dot_dimension_numbers<[1], [0], [0], [1], [0, 0, 1, 1], [], []>} : vector<64x16xbf16>, vector<16x32xbf16>, vector<64x32xf32> -> vector<64x32xf32>
    %c0_9 = arith.constant 0 : index
    %c0_10 = arith.constant 0 : index
    %9 = vector.load %arg10[%c0_9, %c0_10] : memref<16x32xbf16, #tpu.memory_space<vmem>>, vector<16x32xbf16>
    %10 = arith.truncf %5 : vector<64x16xf32> to vector<64x16xbf16>
    %cst_11 = arith.constant dense<0.000000e+00> : vector<64x32xf32>
    %11 = tpu.matmul %10, %9, %cst_11 {dimension_numbers = #tpu.dot_dimension_numbers<[1], [0], [0], [1], [0, 0, 1, 1], [], []>} : vector<64x16xbf16>, vector<16x32xbf16>, vector<64x32xf32> -> vector<64x32xf32>
    %12 = arith.addf %8, %11 : vector<64x32xf32>
    %13 = vector.shape_cast %12 : vector<64x32xf32> to vector<8x8x32xf32>
    %c0_12 = arith.constant 0 : index
    %c0_13 = arith.constant 0 : index
    %c0_14 = arith.constant 0 : index
    %c0_15 = arith.constant 0 : index
    %14 = vector.load %arg4[%c0_12, %c0_13, %c0_14, %c0_15] : memref<1x8x1x32xf32, #tpu.memory_space<vmem>>, vector<1x8x1x32xf32>
    %15 = vector.shape_cast %14 : vector<1x8x1x32xf32> to vector<8x1x32xf32>
    %16 = vector.broadcast %15 : vector<8x1x32xf32> to vector<8x8x32xf32>
    %17 = arith.addf %13, %16 : vector<8x8x32xf32>
    %c0_16 = arith.constant 0 : index
    %c0_17 = arith.constant 0 : index
    %c0_18 = arith.constant 0 : index
    %18 = vector.load %arg5[%c0_16, %c0_17, %c0_18] : memref<1x8x32xf32, #tpu.memory_space<vmem>>, vector<1x8x32xf32>
    %19 = vector.shape_cast %18 : vector<1x8x32xf32> to vector<8x32xf32>
    %20 = vector.shape_cast %19 : vector<8x32xf32> to vector<1x8x32xf32>
    %21 = vector.broadcast %20 : vector<1x8x32xf32> to vector<8x8x32xf32>
    %22 = arith.addf %17, %21 : vector<8x8x32xf32>
    %23 = arith.negf %22 : vector<8x8x32xf32>
    %24 = math.exp %23 : vector<8x8x32xf32>
    %cst_19 = arith.constant 1.000000e+00 : f32
    %25 = vector.broadcast %cst_19 : f32 to vector<8x8x32xf32>
    %26 = arith.addf %25, %24 : vector<8x8x32xf32>
    %27 = arith.divf %25, %26 : vector<8x8x32xf32>
    %28 = arith.mulf %22, %27 : vector<8x8x32xf32>
    %29 = vector.shape_cast %28 : vector<8x8x32xf32> to vector<64x32xf32>
    %c0_20 = arith.constant 0 : index
    %c0_21 = arith.constant 0 : index
    %30 = vector.load %arg11[%c0_20, %c0_21] : memref<32x32xbf16, #tpu.memory_space<vmem>>, vector<32x32xbf16>
    %31 = arith.truncf %29 : vector<64x32xf32> to vector<64x32xbf16>
    %cst_22 = arith.constant dense<0.000000e+00> : vector<64x32xf32>
    %32 = tpu.matmul %31, %30, %cst_22 {dimension_numbers = #tpu.dot_dimension_numbers<[1], [0], [0], [1], [0, 0, 1, 1], [], []>} : vector<64x32xbf16>, vector<32x32xbf16>, vector<64x32xf32> -> vector<64x32xf32>
    %c0_23 = arith.constant 0 : index
    %c0_24 = arith.constant 0 : index
    %33 = vector.load %arg12[%c0_23, %c0_24] : memref<1x32xf32, #tpu.memory_space<vmem>>, vector<1x32xf32>
    %34 = vector.broadcast %33 : vector<1x32xf32> to vector<64x32xf32>
    %35 = arith.addf %32, %34 : vector<64x32xf32>
    %36 = vector.shape_cast %35 : vector<64x32xf32> to vector<8x8x32xf32>
    %c0_25 = arith.constant 0 : index
    %c0_26 = arith.constant 0 : index
    %c0_27 = arith.constant 0 : index
    %c0_28 = arith.constant 0 : index
    %37 = vector.load %arg7[%c0_25, %c0_26, %c0_27, %c0_28] : memref<1x8x8x1xf32, #tpu.memory_space<vmem>>, vector<1x8x8x1xf32>
    %38 = vector.shape_cast %37 : vector<1x8x8x1xf32> to vector<8x8x1xf32>
    %c0_29 = arith.constant 0 : index
    %c0_30 = arith.constant 0 : index
    %c0_31 = arith.constant 0 : index
    %c0_32 = arith.constant 0 : index
    %39 = vector.load %arg8[%c0_29, %c0_30, %c0_31, %c0_32] : memref<1x8x8x1xf32, #tpu.memory_space<vmem>>, vector<1x8x8x1xf32>
    %40 = vector.shape_cast %39 : vector<1x8x8x1xf32> to vector<8x8x1xf32>
    %41 = vector.broadcast %38 : vector<8x8x1xf32> to vector<8x8x32xf32>
    %42 = arith.mulf %36, %41 : vector<8x8x32xf32>
    %cst_33 = arith.constant dense<0.000000e+00> : vector<8x32xf32>
    %43 = vector.multi_reduction <add>, %42, %cst_33 [1] : vector<8x8x32xf32> to vector<8x32xf32>
    %c0_34 = arith.constant 0 : index
    %c0_35 = arith.constant 0 : index
    %c0_36 = arith.constant 0 : index
    %44 = vector.load %arg16[%c0_34, %c0_35, %c0_36] : memref<1x8x32xf32, #tpu.memory_space<vmem>>, vector<1x8x32xf32>
    %45 = vector.shape_cast %44 : vector<1x8x32xf32> to vector<8x32xf32>
    %46 = vector.shape_cast %43 : vector<8x32xf32> to vector<1x8x32xf32>
    tpu.vector_store %arg16[%c0_34, %c0_35, %c0_36], %46 {strides = array<i32>} : memref<1x8x32xf32, #tpu.memory_space<vmem>>, vector<1x8x32xf32>,
    %47 = vector.broadcast %40 : vector<8x8x1xf32> to vector<8x8x32xf32>
    %48 = arith.mulf %36, %47 : vector<8x8x32xf32>
    %cst_37 = arith.constant dense<0.000000e+00> : vector<8x32xf32>
    %49 = vector.multi_reduction <add>, %48, %cst_37 [1] : vector<8x8x32xf32> to vector<8x32xf32>
    %c0_38 = arith.constant 0 : index
    %c0_39 = arith.constant 0 : index
    %c0_40 = arith.constant 0 : index
    %50 = vector.load %arg17[%c0_38, %c0_39, %c0_40] : memref<1x8x32xf32, #tpu.memory_space<vmem>>, vector<1x8x32xf32>
    %51 = vector.shape_cast %50 : vector<1x8x32xf32> to vector<8x32xf32>
    %52 = vector.shape_cast %49 : vector<8x32xf32> to vector<1x8x32xf32>
    tpu.vector_store %arg17[%c0_38, %c0_39, %c0_40], %52 {strides = array<i32>} : memref<1x8x32xf32, #tpu.memory_space<vmem>>, vector<1x8x32xf32>,
    %c0_41 = arith.constant 0 : index
    %c0_42 = arith.constant 0 : index
    %53 = vector.load %arg13[%c0_41, %c0_42] : memref<32x64xbf16, #tpu.memory_space<vmem>>, vector<32x64xbf16>
    %54 = arith.truncf %35 : vector<64x32xf32> to vector<64x32xbf16>
    %cst_43 = arith.constant dense<0.000000e+00> : vector<64x64xf32>
    %55 = tpu.matmul %54, %53, %cst_43 {dimension_numbers = #tpu.dot_dimension_numbers<[1], [0], [0], [1], [0, 0, 1, 1], [], []>} : vector<64x32xbf16>, vector<32x64xbf16>, vector<64x64xf32> -> vector<64x64xf32>
    %c0_44 = arith.constant 0 : index
    %c0_45 = arith.constant 0 : index
    %56 = vector.load %arg14[%c0_44, %c0_45] : memref<1x64xf32, #tpu.memory_space<vmem>>, vector<1x64xf32>
    %57 = vector.broadcast %56 : vector<1x64xf32> to vector<64x64xf32>
    %58 = arith.addf %55, %57 : vector<64x64xf32>
    %59 = arith.negf %58 : vector<64x64xf32>
    %60 = math.exp %59 : vector<64x64xf32>
    %cst_46 = arith.constant 1.000000e+00 : f32
    %61 = vector.broadcast %cst_46 : f32 to vector<64x64xf32>
    %62 = arith.addf %61, %60 : vector<64x64xf32>
    %63 = arith.divf %61, %62 : vector<64x64xf32>
    %64 = arith.mulf %58, %63 : vector<64x64xf32>
    %c0_47 = arith.constant 0 : index
    %c0_48 = arith.constant 0 : index
    %65 = vector.load %arg15[%c0_47, %c0_48] : memref<64x24xbf16, #tpu.memory_space<vmem>>, vector<64x24xbf16>
    %66 = arith.truncf %64 : vector<64x64xf32> to vector<64x64xbf16>
    %cst_49 = arith.constant dense<0.000000e+00> : vector<64x24xf32>
    %67 = tpu.matmul %66, %65, %cst_49 {dimension_numbers = #tpu.dot_dimension_numbers<[1], [0], [0], [1], [0, 0, 1, 1], [], []>} : vector<64x64xbf16>, vector<64x24xbf16>, vector<64x24xf32> -> vector<64x24xf32>
    %68 = vector.shape_cast %67 : vector<64x24xf32> to vector<8x8x24xf32>
    %69 = vector.extract_strided_slice %68 {offsets = [0, 0, 0], sizes = [8, 8, 12], strides = [1, 1, 1]} : vector<8x8x24xf32> to vector<8x8x12xf32>
    %70 = vector.broadcast %38 : vector<8x8x1xf32> to vector<8x8x12xf32>
    %71 = arith.mulf %69, %70 : vector<8x8x12xf32>
    %72 = vector.extract_strided_slice %68 {offsets = [0, 0, 12], sizes = [8, 8, 12], strides = [1, 1, 1]} : vector<8x8x24xf32> to vector<8x8x12xf32>
    %73 = vector.broadcast %40 : vector<8x8x1xf32> to vector<8x8x12xf32>
    %74 = arith.mulf %72, %73 : vector<8x8x12xf32>
    %75 = arith.addf %71, %74 : vector<8x8x12xf32>
    %c0_50 = arith.constant 0 : index
    %c0_51 = arith.constant 0 : index
    %c0_52 = arith.constant 0 : index
    %c0_53 = arith.constant 0 : index
    %76 = vector.load %arg6[%c0_50, %c0_51, %c0_52, %c0_53] : memref<1x8x8x12xf32, #tpu.memory_space<vmem>>, vector<1x8x8x12xf32>
    %77 = vector.shape_cast %76 : vector<1x8x8x12xf32> to vector<8x8x12xf32>
    %78 = arith.mulf %77, %75 : vector<8x8x12xf32>
    %cst_54 = arith.constant dense<0.000000e+00> : vector<8x12xf32>
    %79 = vector.multi_reduction <add>, %78, %cst_54 [1] : vector<8x8x12xf32> to vector<8x12xf32>
    %80 = arith.maximumf %38, %40 : vector<8x8x1xf32>
    %cst_55 = arith.constant 9.99999997E-7 : f32
    %81 = vector.broadcast %cst_55 : f32 to vector<8x8x1xf32>
    %82 = arith.addf %80, %81 : vector<8x8x1xf32>
    %cst_56 = arith.constant dense<0.000000e+00> : vector<8x1xf32>
    %83 = vector.multi_reduction <add>, %82, %cst_56 [1] : vector<8x8x1xf32> to vector<8x1xf32>
    %84 = vector.broadcast %83 : vector<8x1xf32> to vector<8x12xf32>
    %85 = arith.divf %79, %84 : vector<8x12xf32>
    %c0_57 = arith.constant 0 : index
    %c0_58 = arith.constant 0 : index
    %c0_59 = arith.constant 0 : index
    %86 = vector.load %arg18[%c0_57, %c0_58, %c0_59] : memref<1x8x12xf32, #tpu.memory_space<vmem>>, vector<1x8x12xf32>
    %87 = vector.shape_cast %86 : vector<1x8x12xf32> to vector<8x12xf32>
    %88 = vector.shape_cast %85 : vector<8x12xf32> to vector<1x8x12xf32>
    tpu.vector_store %arg18[%c0_57, %c0_58, %c0_59], %88 {strides = array<i32>} : memref<1x8x12xf32, #tpu.memory_space<vmem>>, vector<1x8x12xf32>,
    return
  }
  func.func @transform_0(%arg0: i32, %arg1: i32) -> (i32, i32, i32, i32) {
    %c0_i32 = arith.constant 0 : i32
    %c0_i32_0 = arith.constant 0 : i32
    %c0_i32_1 = arith.constant 0 : i32
    return %arg0, %arg1, %c0_i32, %c0_i32_0 : i32, i32, i32, i32
  }
  func.func @transform_1(%arg0: i32, %arg1: i32) -> (i32, i32, i32, i32) {
    %c0_i32 = arith.constant 0 : i32
    %c0_i32_0 = arith.constant 0 : i32
    %c0_i32_1 = arith.constant 0 : i32
    return %arg0, %arg1, %c0_i32, %c0_i32_0 : i32, i32, i32, i32
  }
  func.func @transform_2(%arg0: i32, %arg1: i32) -> (i32, i32, i32, i32) {
    %c0_i32 = arith.constant 0 : i32
    %c0_i32_0 = arith.constant 0 : i32
    %c0_i32_1 = arith.constant 0 : i32
    return %arg0, %arg1, %c0_i32, %c0_i32_0 : i32, i32, i32, i32
  }
  func.func @transform_3(%arg0: i32, %arg1: i32) -> (i32, i32, i32) {
    %c0_i32 = arith.constant 0 : i32
    %c0_i32_0 = arith.constant 0 : i32
    %c0_i32_1 = arith.constant 0 : i32
    return %arg0, %c0_i32, %c0_i32_0 : i32, i32, i32
  }
  func.func @transform_4(%arg0: i32, %arg1: i32) -> (i32, i32, i32, i32) {
    %c0_i32 = arith.constant 0 : i32
    %c0_i32_0 = arith.constant 0 : i32
    %c0_i32_1 = arith.constant 0 : i32
    return %arg0, %arg1, %c0_i32, %c0_i32_0 : i32, i32, i32, i32
  }
  func.func @transform_5(%arg0: i32, %arg1: i32) -> (i32, i32, i32, i32) {
    %c0_i32 = arith.constant 0 : i32
    %c0_i32_0 = arith.constant 0 : i32
    %c0_i32_1 = arith.constant 0 : i32
    return %arg0, %arg1, %c0_i32, %c0_i32_0 : i32, i32, i32, i32
  }
  func.func @transform_6(%arg0: i32, %arg1: i32) -> (i32, i32, i32, i32) {
    %c0_i32 = arith.constant 0 : i32
    %c0_i32_0 = arith.constant 0 : i32
    %c0_i32_1 = arith.constant 0 : i32
    return %arg0, %arg1, %c0_i32, %c0_i32_0 : i32, i32, i32, i32
  }
  func.func @transform_7(%arg0: i32, %arg1: i32) -> (i32, i32) {
    %c0_i32 = arith.constant 0 : i32
    %c0_i32_0 = arith.constant 0 : i32
    %c0_i32_1 = arith.constant 0 : i32
    return %c0_i32, %c0_i32_0 : i32, i32
  }
  func.func @transform_8(%arg0: i32, %arg1: i32) -> (i32, i32) {
    %c0_i32 = arith.constant 0 : i32
    %c0_i32_0 = arith.constant 0 : i32
    %c0_i32_1 = arith.constant 0 : i32
    return %c0_i32, %c0_i32_0 : i32, i32
  }
  func.func @transform_9(%arg0: i32, %arg1: i32) -> (i32, i32) {
    %c0_i32 = arith.constant 0 : i32
    %c0_i32_0 = arith.constant 0 : i32
    %c0_i32_1 = arith.constant 0 : i32
    return %c0_i32, %c0_i32_0 : i32, i32
  }
  func.func @transform_10(%arg0: i32, %arg1: i32) -> (i32, i32) {
    %c0_i32 = arith.constant 0 : i32
    %c0_i32_0 = arith.constant 0 : i32
    %c0_i32_1 = arith.constant 0 : i32
    return %c0_i32, %c0_i32_0 : i32, i32
  }
  func.func @transform_11(%arg0: i32, %arg1: i32) -> (i32, i32) {
    %c0_i32 = arith.constant 0 : i32
    %c0_i32_0 = arith.constant 0 : i32
    %c0_i32_1 = arith.constant 0 : i32
    return %c0_i32, %c0_i32_0 : i32, i32
  }
  func.func @transform_12(%arg0: i32, %arg1: i32) -> (i32, i32) {
    %c0_i32 = arith.constant 0 : i32
    %c0_i32_0 = arith.constant 0 : i32
    %c0_i32_1 = arith.constant 0 : i32
    return %c0_i32, %c0_i32_0 : i32, i32
  }
  func.func @transform_13(%arg0: i32, %arg1: i32) -> (i32, i32) {
    %c0_i32 = arith.constant 0 : i32
    %c0_i32_0 = arith.constant 0 : i32
    %c0_i32_1 = arith.constant 0 : i32
    return %c0_i32, %c0_i32_0 : i32, i32
  }
  func.func @transform_14(%arg0: i32, %arg1: i32) -> (i32, i32, i32) {
    %c0_i32 = arith.constant 0 : i32
    %c0_i32_0 = arith.constant 0 : i32
    return %arg0, %arg1, %c0_i32 : i32, i32, i32
  }
  func.func @transform_15(%arg0: i32, %arg1: i32) -> (i32, i32, i32) {
    %c0_i32 = arith.constant 0 : i32
    %c0_i32_0 = arith.constant 0 : i32
    return %arg0, %arg1, %c0_i32 : i32, i32, i32
  }
  func.func @transform_16(%arg0: i32, %arg1: i32) -> (i32, i32, i32) {
    %c0_i32 = arith.constant 0 : i32
    %c0_i32_0 = arith.constant 0 : i32
    return %arg0, %arg1, %c0_i32 : i32, i32, i32
  }
}

module attributes {stable_mosaic.version = 11 : i64} {
  func.func @_edge_kernel(%arg0: i32, %arg1: i32, %arg2: memref<1x8x8x16xf32, #tpu.memory_space<vmem>>, %arg3: memref<1x8x1x32xf32, #tpu.memory_space<vmem>>, %arg4: memref<1x8x32xf32, #tpu.memory_space<vmem>>, %arg5: memref<16x32xbf16, #tpu.memory_space<vmem>>, %arg6: memref<32x16xbf16, #tpu.memory_space<vmem>>, %arg7: memref<1x16xf32, #tpu.memory_space<vmem>>, %arg8: memref<1x8x8x16xf32, #tpu.memory_space<vmem>>) attributes {dimension_semantics = [#tpu.dimension_semantics<parallel>, #tpu.dimension_semantics<parallel>], iteration_bounds = array<i64: 2, 1>, scalar_prefetch = 0 : i64, scratch_operands = 0 : i64, tpu.core_type = #tpu.core_type<tc>, window_params = [{transform_indices = @transform_0, window_bounds = array<i64: 1, 8, 8, 16>}, {transform_indices = @transform_1, window_bounds = array<i64: 1, 8, 1, 32>}, {transform_indices = @transform_2, window_bounds = array<i64: 1, 8, 32>}, {pipeline_mode = #tpu.pipeline_mode<synchronous>, transform_indices = @transform_3, window_bounds = array<i64: 16, 32>}, {pipeline_mode = #tpu.pipeline_mode<synchronous>, transform_indices = @transform_4, window_bounds = array<i64: 32, 16>}, {pipeline_mode = #tpu.pipeline_mode<synchronous>, transform_indices = @transform_5, window_bounds = array<i64: 1, 16>}, {transform_indices = @transform_6, window_bounds = array<i64: 1, 8, 8, 16>}]} {
    %c0 = arith.constant 0 : index
    %c0_0 = arith.constant 0 : index
    %c0_1 = arith.constant 0 : index
    %c0_2 = arith.constant 0 : index
    %0 = vector.load %arg2[%c0, %c0_0, %c0_1, %c0_2] : memref<1x8x8x16xf32, #tpu.memory_space<vmem>>, vector<1x8x8x16xf32>
    %1 = vector.shape_cast %0 : vector<1x8x8x16xf32> to vector<8x8x16xf32>
    %2 = vector.shape_cast %1 : vector<8x8x16xf32> to vector<64x16xf32>
    %c0_3 = arith.constant 0 : index
    %c0_4 = arith.constant 0 : index
    %3 = vector.load %arg5[%c0_3, %c0_4] : memref<16x32xbf16, #tpu.memory_space<vmem>>, vector<16x32xbf16>
    %4 = arith.truncf %2 : vector<64x16xf32> to vector<64x16xbf16>
    %cst = arith.constant dense<0.000000e+00> : vector<64x32xf32>
    %5 = tpu.matmul %4, %3, %cst {dimension_numbers = #tpu.dot_dimension_numbers<[1], [0], [0], [1], [0, 0, 1, 1], [], []>} : vector<64x16xbf16>, vector<16x32xbf16>, vector<64x32xf32> -> vector<64x32xf32>
    %6 = vector.shape_cast %5 : vector<64x32xf32> to vector<8x8x32xf32>
    %c0_5 = arith.constant 0 : index
    %c0_6 = arith.constant 0 : index
    %c0_7 = arith.constant 0 : index
    %c0_8 = arith.constant 0 : index
    %7 = vector.load %arg3[%c0_5, %c0_6, %c0_7, %c0_8] : memref<1x8x1x32xf32, #tpu.memory_space<vmem>>, vector<1x8x1x32xf32>
    %8 = vector.shape_cast %7 : vector<1x8x1x32xf32> to vector<8x1x32xf32>
    %9 = vector.broadcast %8 : vector<8x1x32xf32> to vector<8x8x32xf32>
    %10 = arith.addf %6, %9 : vector<8x8x32xf32>
    %c0_9 = arith.constant 0 : index
    %c0_10 = arith.constant 0 : index
    %c0_11 = arith.constant 0 : index
    %11 = vector.load %arg4[%c0_9, %c0_10, %c0_11] : memref<1x8x32xf32, #tpu.memory_space<vmem>>, vector<1x8x32xf32>
    %12 = vector.shape_cast %11 : vector<1x8x32xf32> to vector<8x32xf32>
    %13 = vector.shape_cast %12 : vector<8x32xf32> to vector<1x8x32xf32>
    %14 = vector.broadcast %13 : vector<1x8x32xf32> to vector<8x8x32xf32>
    %15 = arith.addf %10, %14 : vector<8x8x32xf32>
    %16 = arith.negf %15 : vector<8x8x32xf32>
    %17 = math.exp %16 : vector<8x8x32xf32>
    %cst_12 = arith.constant 1.000000e+00 : f32
    %18 = vector.broadcast %cst_12 : f32 to vector<8x8x32xf32>
    %19 = arith.addf %18, %17 : vector<8x8x32xf32>
    %20 = arith.divf %18, %19 : vector<8x8x32xf32>
    %21 = arith.mulf %15, %20 : vector<8x8x32xf32>
    %22 = vector.shape_cast %21 : vector<8x8x32xf32> to vector<64x32xf32>
    %c0_13 = arith.constant 0 : index
    %c0_14 = arith.constant 0 : index
    %23 = vector.load %arg6[%c0_13, %c0_14] : memref<32x16xbf16, #tpu.memory_space<vmem>>, vector<32x16xbf16>
    %24 = arith.truncf %22 : vector<64x32xf32> to vector<64x32xbf16>
    %cst_15 = arith.constant dense<0.000000e+00> : vector<64x16xf32>
    %25 = tpu.matmul %24, %23, %cst_15 {dimension_numbers = #tpu.dot_dimension_numbers<[1], [0], [0], [1], [0, 0, 1, 1], [], []>} : vector<64x32xbf16>, vector<32x16xbf16>, vector<64x16xf32> -> vector<64x16xf32>
    %c0_16 = arith.constant 0 : index
    %c0_17 = arith.constant 0 : index
    %26 = vector.load %arg7[%c0_16, %c0_17] : memref<1x16xf32, #tpu.memory_space<vmem>>, vector<1x16xf32>
    %27 = vector.broadcast %26 : vector<1x16xf32> to vector<64x16xf32>
    %28 = arith.addf %25, %27 : vector<64x16xf32>
    %29 = vector.shape_cast %28 : vector<64x16xf32> to vector<8x8x16xf32>
    %c0_18 = arith.constant 0 : index
    %c0_19 = arith.constant 0 : index
    %c0_20 = arith.constant 0 : index
    %c0_21 = arith.constant 0 : index
    %30 = vector.load %arg8[%c0_18, %c0_19, %c0_20, %c0_21] : memref<1x8x8x16xf32, #tpu.memory_space<vmem>>, vector<1x8x8x16xf32>
    %31 = vector.shape_cast %30 : vector<1x8x8x16xf32> to vector<8x8x16xf32>
    %32 = vector.shape_cast %29 : vector<8x8x16xf32> to vector<1x8x8x16xf32>
    tpu.vector_store %arg8[%c0_18, %c0_19, %c0_20, %c0_21], %32 {strides = array<i32>} : memref<1x8x8x16xf32, #tpu.memory_space<vmem>>, vector<1x8x8x16xf32>,
    return
  }
  func.func @transform_0(%arg0: i32, %arg1: i32) -> (i32, i32, i32, i32) {
    %c0_i32 = arith.constant 0 : i32
    %c0_i32_0 = arith.constant 0 : i32
    %c0_i32_1 = arith.constant 0 : i32
    return %arg0, %arg1, %c0_i32, %c0_i32_0 : i32, i32, i32, i32
  }
  func.func @transform_1(%arg0: i32, %arg1: i32) -> (i32, i32, i32, i32) {
    %c0_i32 = arith.constant 0 : i32
    %c0_i32_0 = arith.constant 0 : i32
    %c0_i32_1 = arith.constant 0 : i32
    return %arg0, %arg1, %c0_i32, %c0_i32_0 : i32, i32, i32, i32
  }
  func.func @transform_2(%arg0: i32, %arg1: i32) -> (i32, i32, i32) {
    %c0_i32 = arith.constant 0 : i32
    %c0_i32_0 = arith.constant 0 : i32
    %c0_i32_1 = arith.constant 0 : i32
    return %arg0, %c0_i32, %c0_i32_0 : i32, i32, i32
  }
  func.func @transform_3(%arg0: i32, %arg1: i32) -> (i32, i32) {
    %c0_i32 = arith.constant 0 : i32
    %c0_i32_0 = arith.constant 0 : i32
    %c0_i32_1 = arith.constant 0 : i32
    return %c0_i32, %c0_i32_0 : i32, i32
  }
  func.func @transform_4(%arg0: i32, %arg1: i32) -> (i32, i32) {
    %c0_i32 = arith.constant 0 : i32
    %c0_i32_0 = arith.constant 0 : i32
    %c0_i32_1 = arith.constant 0 : i32
    return %c0_i32, %c0_i32_0 : i32, i32
  }
  func.func @transform_5(%arg0: i32, %arg1: i32) -> (i32, i32) {
    %c0_i32 = arith.constant 0 : i32
    %c0_i32_0 = arith.constant 0 : i32
    %c0_i32_1 = arith.constant 0 : i32
    return %c0_i32, %c0_i32_0 : i32, i32
  }
  func.func @transform_6(%arg0: i32, %arg1: i32) -> (i32, i32, i32, i32) {
    %c0_i32 = arith.constant 0 : i32
    %c0_i32_0 = arith.constant 0 : i32
    %c0_i32_1 = arith.constant 0 : i32
    return %arg0, %arg1, %c0_i32, %c0_i32_0 : i32, i32, i32, i32
  }
}

module attributes {stable_mosaic.version = 11 : i64} {
  func.func @_node_kernel(%arg0: i32, %arg1: memref<16x32xf32, #tpu.memory_space<vmem>>, %arg2: memref<16x32xf32, #tpu.memory_space<vmem>>, %arg3: memref<16x32xf32, #tpu.memory_space<vmem>>, %arg4: memref<32x32xbf16, #tpu.memory_space<vmem>>, %arg5: memref<32x32xbf16, #tpu.memory_space<vmem>>, %arg6: memref<32x32xbf16, #tpu.memory_space<vmem>>, %arg7: memref<1x32xf32, #tpu.memory_space<vmem>>, %arg8: memref<32x32xbf16, #tpu.memory_space<vmem>>, %arg9: memref<1x32xf32, #tpu.memory_space<vmem>>, %arg10: memref<1x32xf32, #tpu.memory_space<vmem>>, %arg11: memref<1x32xf32, #tpu.memory_space<vmem>>, %arg12: memref<32x64xbf16, #tpu.memory_space<vmem>>, %arg13: memref<1x64xf32, #tpu.memory_space<vmem>>, %arg14: memref<16x32xf32, #tpu.memory_space<vmem>>, %arg15: memref<16x64xf32, #tpu.memory_space<vmem>>) attributes {dimension_semantics = [#tpu.dimension_semantics<parallel>], iteration_bounds = array<i64: 1>, scalar_prefetch = 0 : i64, scratch_operands = 0 : i64, tpu.core_type = #tpu.core_type<tc>, window_params = [{transform_indices = @transform_0, window_bounds = array<i64: 16, 32>}, {transform_indices = @transform_1, window_bounds = array<i64: 16, 32>}, {transform_indices = @transform_2, window_bounds = array<i64: 16, 32>}, {pipeline_mode = #tpu.pipeline_mode<synchronous>, transform_indices = @transform_3, window_bounds = array<i64: 32, 32>}, {pipeline_mode = #tpu.pipeline_mode<synchronous>, transform_indices = @transform_4, window_bounds = array<i64: 32, 32>}, {pipeline_mode = #tpu.pipeline_mode<synchronous>, transform_indices = @transform_5, window_bounds = array<i64: 32, 32>}, {pipeline_mode = #tpu.pipeline_mode<synchronous>, transform_indices = @transform_6, window_bounds = array<i64: 1, 32>}, {pipeline_mode = #tpu.pipeline_mode<synchronous>, transform_indices = @transform_7, window_bounds = array<i64: 32, 32>}, {pipeline_mode = #tpu.pipeline_mode<synchronous>, transform_indices = @transform_8, window_bounds = array<i64: 1, 32>}, {pipeline_mode = #tpu.pipeline_mode<synchronous>, transform_indices = @transform_9, window_bounds = array<i64: 1, 32>}, {pipeline_mode = #tpu.pipeline_mode<synchronous>, transform_indices = @transform_10, window_bounds = array<i64: 1, 32>}, {pipeline_mode = #tpu.pipeline_mode<synchronous>, transform_indices = @transform_11, window_bounds = array<i64: 32, 64>}, {pipeline_mode = #tpu.pipeline_mode<synchronous>, transform_indices = @transform_12, window_bounds = array<i64: 1, 64>}, {transform_indices = @transform_13, window_bounds = array<i64: 16, 32>}, {transform_indices = @transform_14, window_bounds = array<i64: 16, 64>}]} {
    %c0 = arith.constant 0 : index
    %c0_0 = arith.constant 0 : index
    %0 = vector.load %arg1[%c0, %c0_0] : memref<16x32xf32, #tpu.memory_space<vmem>>, vector<16x32xf32>
    %c0_1 = arith.constant 0 : index
    %c0_2 = arith.constant 0 : index
    %1 = vector.load %arg4[%c0_1, %c0_2] : memref<32x32xbf16, #tpu.memory_space<vmem>>, vector<32x32xbf16>
    %2 = arith.truncf %0 : vector<16x32xf32> to vector<16x32xbf16>
    %cst = arith.constant dense<0.000000e+00> : vector<16x32xf32>
    %3 = tpu.matmul %2, %1, %cst {dimension_numbers = #tpu.dot_dimension_numbers<[1], [0], [0], [1], [0, 0, 1, 1], [], []>} : vector<16x32xbf16>, vector<32x32xbf16>, vector<16x32xf32> -> vector<16x32xf32>
    %c0_3 = arith.constant 0 : index
    %c0_4 = arith.constant 0 : index
    %4 = vector.load %arg2[%c0_3, %c0_4] : memref<16x32xf32, #tpu.memory_space<vmem>>, vector<16x32xf32>
    %c0_5 = arith.constant 0 : index
    %c0_6 = arith.constant 0 : index
    %5 = vector.load %arg5[%c0_5, %c0_6] : memref<32x32xbf16, #tpu.memory_space<vmem>>, vector<32x32xbf16>
    %6 = arith.truncf %4 : vector<16x32xf32> to vector<16x32xbf16>
    %cst_7 = arith.constant dense<0.000000e+00> : vector<16x32xf32>
    %7 = tpu.matmul %6, %5, %cst_7 {dimension_numbers = #tpu.dot_dimension_numbers<[1], [0], [0], [1], [0, 0, 1, 1], [], []>} : vector<16x32xbf16>, vector<32x32xbf16>, vector<16x32xf32> -> vector<16x32xf32>
    %8 = arith.addf %3, %7 : vector<16x32xf32>
    %c0_8 = arith.constant 0 : index
    %c0_9 = arith.constant 0 : index
    %9 = vector.load %arg3[%c0_8, %c0_9] : memref<16x32xf32, #tpu.memory_space<vmem>>, vector<16x32xf32>
    %c0_10 = arith.constant 0 : index
    %c0_11 = arith.constant 0 : index
    %10 = vector.load %arg6[%c0_10, %c0_11] : memref<32x32xbf16, #tpu.memory_space<vmem>>, vector<32x32xbf16>
    %11 = arith.truncf %9 : vector<16x32xf32> to vector<16x32xbf16>
    %cst_12 = arith.constant dense<0.000000e+00> : vector<16x32xf32>
    %12 = tpu.matmul %11, %10, %cst_12 {dimension_numbers = #tpu.dot_dimension_numbers<[1], [0], [0], [1], [0, 0, 1, 1], [], []>} : vector<16x32xbf16>, vector<32x32xbf16>, vector<16x32xf32> -> vector<16x32xf32>
    %13 = arith.addf %8, %12 : vector<16x32xf32>
    %c0_13 = arith.constant 0 : index
    %c0_14 = arith.constant 0 : index
    %14 = vector.load %arg7[%c0_13, %c0_14] : memref<1x32xf32, #tpu.memory_space<vmem>>, vector<1x32xf32>
    %15 = vector.broadcast %14 : vector<1x32xf32> to vector<16x32xf32>
    %16 = arith.addf %13, %15 : vector<16x32xf32>
    %17 = arith.negf %16 : vector<16x32xf32>
    %18 = math.exp %17 : vector<16x32xf32>
    %cst_15 = arith.constant 1.000000e+00 : f32
    %19 = vector.broadcast %cst_15 : f32 to vector<16x32xf32>
    %20 = arith.addf %19, %18 : vector<16x32xf32>
    %21 = arith.divf %19, %20 : vector<16x32xf32>
    %22 = arith.mulf %16, %21 : vector<16x32xf32>
    %c0_16 = arith.constant 0 : index
    %c0_17 = arith.constant 0 : index
    %23 = vector.load %arg8[%c0_16, %c0_17] : memref<32x32xbf16, #tpu.memory_space<vmem>>, vector<32x32xbf16>
    %24 = arith.truncf %22 : vector<16x32xf32> to vector<16x32xbf16>
    %cst_18 = arith.constant dense<0.000000e+00> : vector<16x32xf32>
    %25 = tpu.matmul %24, %23, %cst_18 {dimension_numbers = #tpu.dot_dimension_numbers<[1], [0], [0], [1], [0, 0, 1, 1], [], []>} : vector<16x32xbf16>, vector<32x32xbf16>, vector<16x32xf32> -> vector<16x32xf32>
    %c0_19 = arith.constant 0 : index
    %c0_20 = arith.constant 0 : index
    %26 = vector.load %arg9[%c0_19, %c0_20] : memref<1x32xf32, #tpu.memory_space<vmem>>, vector<1x32xf32>
    %27 = vector.broadcast %26 : vector<1x32xf32> to vector<16x32xf32>
    %28 = arith.addf %25, %27 : vector<16x32xf32>
    %29 = arith.addf %0, %28 : vector<16x32xf32>
    %cst_21 = arith.constant dense<0.000000e+00> : vector<16xf32>
    %30 = vector.multi_reduction <add>, %29, %cst_21 [1] : vector<16x32xf32> to vector<16xf32>
    %31 = vector.shape_cast %30 : vector<16xf32> to vector<16x1xf32>
    %cst_22 = arith.constant 3.200000e+01 : f32
    %32 = vector.broadcast %cst_22 : f32 to vector<16x1xf32>
    %33 = arith.divf %31, %32 : vector<16x1xf32>
    %34 = vector.broadcast %33 : vector<16x1xf32> to vector<16x32xf32>
    %35 = arith.subf %29, %34 : vector<16x32xf32>
    %36 = arith.mulf %35, %35 : vector<16x32xf32>
    %cst_23 = arith.constant dense<0.000000e+00> : vector<16xf32>
    %37 = vector.multi_reduction <add>, %36, %cst_23 [1] : vector<16x32xf32> to vector<16xf32>
    %38 = vector.shape_cast %37 : vector<16xf32> to vector<16x1xf32>
    %cst_24 = arith.constant 3.200000e+01 : f32
    %39 = vector.broadcast %cst_24 : f32 to vector<16x1xf32>
    %40 = arith.divf %38, %39 : vector<16x1xf32>
    %c0_25 = arith.constant 0 : index
    %c0_26 = arith.constant 0 : index
    %41 = vector.load %arg10[%c0_25, %c0_26] : memref<1x32xf32, #tpu.memory_space<vmem>>, vector<1x32xf32>
    %42 = vector.broadcast %33 : vector<16x1xf32> to vector<16x32xf32>
    %43 = arith.subf %29, %42 : vector<16x32xf32>
    %44 = vector.broadcast %41 : vector<1x32xf32> to vector<16x32xf32>
    %45 = arith.mulf %44, %43 : vector<16x32xf32>
    %cst_27 = arith.constant 9.99999974E-6 : f32
    %46 = vector.broadcast %cst_27 : f32 to vector<16x1xf32>
    %47 = arith.addf %40, %46 : vector<16x1xf32>
    %48 = math.rsqrt %47 : vector<16x1xf32>
    %49 = vector.broadcast %48 : vector<16x1xf32> to vector<16x32xf32>
    %50 = arith.mulf %45, %49 : vector<16x32xf32>
    %c0_28 = arith.constant 0 : index
    %c0_29 = arith.constant 0 : index
    %51 = vector.load %arg11[%c0_28, %c0_29] : memref<1x32xf32, #tpu.memory_space<vmem>>, vector<1x32xf32>
    %52 = vector.broadcast %51 : vector<1x32xf32> to vector<16x32xf32>
    %53 = arith.addf %50, %52 : vector<16x32xf32>
    %c0_30 = arith.constant 0 : index
    %c0_31 = arith.constant 0 : index
    %54 = vector.load %arg14[%c0_30, %c0_31] : memref<16x32xf32, #tpu.memory_space<vmem>>, vector<16x32xf32>
    tpu.vector_store %arg14[%c0_30, %c0_31], %53 {strides = array<i32>} : memref<16x32xf32, #tpu.memory_space<vmem>>, vector<16x32xf32>,
    %c0_32 = arith.constant 0 : index
    %c0_33 = arith.constant 0 : index
    %55 = vector.load %arg12[%c0_32, %c0_33] : memref<32x64xbf16, #tpu.memory_space<vmem>>, vector<32x64xbf16>
    %56 = arith.truncf %53 : vector<16x32xf32> to vector<16x32xbf16>
    %cst_34 = arith.constant dense<0.000000e+00> : vector<16x64xf32>
    %57 = tpu.matmul %56, %55, %cst_34 {dimension_numbers = #tpu.dot_dimension_numbers<[1], [0], [0], [1], [0, 0, 1, 1], [], []>} : vector<16x32xbf16>, vector<32x64xbf16>, vector<16x64xf32> -> vector<16x64xf32>
    %c0_35 = arith.constant 0 : index
    %c0_36 = arith.constant 0 : index
    %58 = vector.load %arg13[%c0_35, %c0_36] : memref<1x64xf32, #tpu.memory_space<vmem>>, vector<1x64xf32>
    %59 = vector.broadcast %58 : vector<1x64xf32> to vector<16x64xf32>
    %60 = arith.addf %57, %59 : vector<16x64xf32>
    %c0_37 = arith.constant 0 : index
    %c0_38 = arith.constant 0 : index
    %61 = vector.load %arg15[%c0_37, %c0_38] : memref<16x64xf32, #tpu.memory_space<vmem>>, vector<16x64xf32>
    tpu.vector_store %arg15[%c0_37, %c0_38], %60 {strides = array<i32>} : memref<16x64xf32, #tpu.memory_space<vmem>>, vector<16x64xf32>,
    return
  }
  func.func @transform_0(%arg0: i32) -> (i32, i32) {
    %c0_i32 = arith.constant 0 : i32
    %c0_i32_0 = arith.constant 0 : i32
    return %arg0, %c0_i32 : i32, i32
  }
  func.func @transform_1(%arg0: i32) -> (i32, i32) {
    %c0_i32 = arith.constant 0 : i32
    %c0_i32_0 = arith.constant 0 : i32
    return %arg0, %c0_i32 : i32, i32
  }
  func.func @transform_2(%arg0: i32) -> (i32, i32) {
    %c0_i32 = arith.constant 0 : i32
    %c0_i32_0 = arith.constant 0 : i32
    return %arg0, %c0_i32 : i32, i32
  }
  func.func @transform_3(%arg0: i32) -> (i32, i32) {
    %c0_i32 = arith.constant 0 : i32
    %c0_i32_0 = arith.constant 0 : i32
    %c0_i32_1 = arith.constant 0 : i32
    return %c0_i32, %c0_i32_0 : i32, i32
  }
  func.func @transform_4(%arg0: i32) -> (i32, i32) {
    %c0_i32 = arith.constant 0 : i32
    %c0_i32_0 = arith.constant 0 : i32
    %c0_i32_1 = arith.constant 0 : i32
    return %c0_i32, %c0_i32_0 : i32, i32
  }
  func.func @transform_5(%arg0: i32) -> (i32, i32) {
    %c0_i32 = arith.constant 0 : i32
    %c0_i32_0 = arith.constant 0 : i32
    %c0_i32_1 = arith.constant 0 : i32
    return %c0_i32, %c0_i32_0 : i32, i32
  }
  func.func @transform_6(%arg0: i32) -> (i32, i32) {
    %c0_i32 = arith.constant 0 : i32
    %c0_i32_0 = arith.constant 0 : i32
    %c0_i32_1 = arith.constant 0 : i32
    return %c0_i32, %c0_i32_0 : i32, i32
  }
  func.func @transform_7(%arg0: i32) -> (i32, i32) {
    %c0_i32 = arith.constant 0 : i32
    %c0_i32_0 = arith.constant 0 : i32
    %c0_i32_1 = arith.constant 0 : i32
    return %c0_i32, %c0_i32_0 : i32, i32
  }
  func.func @transform_8(%arg0: i32) -> (i32, i32) {
    %c0_i32 = arith.constant 0 : i32
    %c0_i32_0 = arith.constant 0 : i32
    %c0_i32_1 = arith.constant 0 : i32
    return %c0_i32, %c0_i32_0 : i32, i32
  }
  func.func @transform_9(%arg0: i32) -> (i32, i32) {
    %c0_i32 = arith.constant 0 : i32
    %c0_i32_0 = arith.constant 0 : i32
    %c0_i32_1 = arith.constant 0 : i32
    return %c0_i32, %c0_i32_0 : i32, i32
  }
  func.func @transform_10(%arg0: i32) -> (i32, i32) {
    %c0_i32 = arith.constant 0 : i32
    %c0_i32_0 = arith.constant 0 : i32
    %c0_i32_1 = arith.constant 0 : i32
    return %c0_i32, %c0_i32_0 : i32, i32
  }
  func.func @transform_11(%arg0: i32) -> (i32, i32) {
    %c0_i32 = arith.constant 0 : i32
    %c0_i32_0 = arith.constant 0 : i32
    %c0_i32_1 = arith.constant 0 : i32
    return %c0_i32, %c0_i32_0 : i32, i32
  }
  func.func @transform_12(%arg0: i32) -> (i32, i32) {
    %c0_i32 = arith.constant 0 : i32
    %c0_i32_0 = arith.constant 0 : i32
    %c0_i32_1 = arith.constant 0 : i32
    return %c0_i32, %c0_i32_0 : i32, i32
  }
  func.func @transform_13(%arg0: i32) -> (i32, i32) {
    %c0_i32 = arith.constant 0 : i32
    %c0_i32_0 = arith.constant 0 : i32
    return %arg0, %c0_i32 : i32, i32
  }
  func.func @transform_14(%arg0: i32) -> (i32, i32) {
    %c0_i32 = arith.constant 0 : i32
    %c0_i32_0 = arith.constant 0 : i32
    return %arg0, %c0_i32 : i32, i32
  }
}

module attributes {stable_mosaic.version = 11 : i64} {
  func.func @_msg_agg_kernel(%arg0: i32, %arg1: i32, %arg2: memref<1x8x8x16xf32, #tpu.memory_space<vmem>>, %arg3: memref<1x8x8x16xf32, #tpu.memory_space<vmem>>, %arg4: memref<1x8x1x32xf32, #tpu.memory_space<vmem>>, %arg5: memref<1x8x32xf32, #tpu.memory_space<vmem>>, %arg6: memref<1x8x8x12xf32, #tpu.memory_space<vmem>>, %arg7: memref<1x8x8x1xf32, #tpu.memory_space<vmem>>, %arg8: memref<1x8x8x1xf32, #tpu.memory_space<vmem>>, %arg9: memref<16x32xbf16, #tpu.memory_space<vmem>>, %arg10: memref<16x32xbf16, #tpu.memory_space<vmem>>, %arg11: memref<32x32xbf16, #tpu.memory_space<vmem>>, %arg12: memref<1x32xf32, #tpu.memory_space<vmem>>, %arg13: memref<32x64xbf16, #tpu.memory_space<vmem>>, %arg14: memref<1x64xf32, #tpu.memory_space<vmem>>, %arg15: memref<64x24xbf16, #tpu.memory_space<vmem>>, %arg16: memref<1x8x32xf32, #tpu.memory_space<vmem>>, %arg17: memref<1x8x32xf32, #tpu.memory_space<vmem>>, %arg18: memref<1x8x12xf32, #tpu.memory_space<vmem>>) attributes {dimension_semantics = [#tpu.dimension_semantics<parallel>, #tpu.dimension_semantics<parallel>], iteration_bounds = array<i64: 2, 1>, scalar_prefetch = 0 : i64, scratch_operands = 0 : i64, tpu.core_type = #tpu.core_type<tc>, window_params = [{transform_indices = @transform_0, window_bounds = array<i64: 1, 8, 8, 16>}, {transform_indices = @transform_1, window_bounds = array<i64: 1, 8, 8, 16>}, {transform_indices = @transform_2, window_bounds = array<i64: 1, 8, 1, 32>}, {transform_indices = @transform_3, window_bounds = array<i64: 1, 8, 32>}, {transform_indices = @transform_4, window_bounds = array<i64: 1, 8, 8, 12>}, {transform_indices = @transform_5, window_bounds = array<i64: 1, 8, 8, 1>}, {transform_indices = @transform_6, window_bounds = array<i64: 1, 8, 8, 1>}, {pipeline_mode = #tpu.pipeline_mode<synchronous>, transform_indices = @transform_7, window_bounds = array<i64: 16, 32>}, {pipeline_mode = #tpu.pipeline_mode<synchronous>, transform_indices = @transform_8, window_bounds = array<i64: 16, 32>}, {pipeline_mode = #tpu.pipeline_mode<synchronous>, transform_indices = @transform_9, window_bounds = array<i64: 32, 32>}, {pipeline_mode = #tpu.pipeline_mode<synchronous>, transform_indices = @transform_10, window_bounds = array<i64: 1, 32>}, {pipeline_mode = #tpu.pipeline_mode<synchronous>, transform_indices = @transform_11, window_bounds = array<i64: 32, 64>}, {pipeline_mode = #tpu.pipeline_mode<synchronous>, transform_indices = @transform_12, window_bounds = array<i64: 1, 64>}, {pipeline_mode = #tpu.pipeline_mode<synchronous>, transform_indices = @transform_13, window_bounds = array<i64: 64, 24>}, {transform_indices = @transform_14, window_bounds = array<i64: 1, 8, 32>}, {transform_indices = @transform_15, window_bounds = array<i64: 1, 8, 32>}, {transform_indices = @transform_16, window_bounds = array<i64: 1, 8, 12>}]} {
    %c0 = arith.constant 0 : index
    %c0_0 = arith.constant 0 : index
    %c0_1 = arith.constant 0 : index
    %c0_2 = arith.constant 0 : index
    %0 = vector.load %arg2[%c0, %c0_0, %c0_1, %c0_2] : memref<1x8x8x16xf32, #tpu.memory_space<vmem>>, vector<1x8x8x16xf32>
    %1 = vector.shape_cast %0 : vector<1x8x8x16xf32> to vector<8x8x16xf32>
    %2 = vector.shape_cast %1 : vector<8x8x16xf32> to vector<64x16xf32>
    %c0_3 = arith.constant 0 : index
    %c0_4 = arith.constant 0 : index
    %c0_5 = arith.constant 0 : index
    %c0_6 = arith.constant 0 : index
    %3 = vector.load %arg3[%c0_3, %c0_4, %c0_5, %c0_6] : memref<1x8x8x16xf32, #tpu.memory_space<vmem>>, vector<1x8x8x16xf32>
    %4 = vector.shape_cast %3 : vector<1x8x8x16xf32> to vector<8x8x16xf32>
    %5 = vector.shape_cast %4 : vector<8x8x16xf32> to vector<64x16xf32>
    %c0_7 = arith.constant 0 : index
    %c0_8 = arith.constant 0 : index
    %6 = vector.load %arg9[%c0_7, %c0_8] : memref<16x32xbf16, #tpu.memory_space<vmem>>, vector<16x32xbf16>
    %7 = arith.truncf %2 : vector<64x16xf32> to vector<64x16xbf16>
    %cst = arith.constant dense<0.000000e+00> : vector<64x32xf32>
    %8 = tpu.matmul %7, %6, %cst {dimension_numbers = #tpu.dot_dimension_numbers<[1], [0], [0], [1], [0, 0, 1, 1], [], []>} : vector<64x16xbf16>, vector<16x32xbf16>, vector<64x32xf32> -> vector<64x32xf32>
    %c0_9 = arith.constant 0 : index
    %c0_10 = arith.constant 0 : index
    %9 = vector.load %arg10[%c0_9, %c0_10] : memref<16x32xbf16, #tpu.memory_space<vmem>>, vector<16x32xbf16>
    %10 = arith.truncf %5 : vector<64x16xf32> to vector<64x16xbf16>
    %cst_11 = arith.constant dense<0.000000e+00> : vector<64x32xf32>
    %11 = tpu.matmul %10, %9, %cst_11 {dimension_numbers = #tpu.dot_dimension_numbers<[1], [0], [0], [1], [0, 0, 1, 1], [], []>} : vector<64x16xbf16>, vector<16x32xbf16>, vector<64x32xf32> -> vector<64x32xf32>
    %12 = arith.addf %8, %11 : vector<64x32xf32>
    %13 = vector.shape_cast %12 : vector<64x32xf32> to vector<8x8x32xf32>
    %c0_12 = arith.constant 0 : index
    %c0_13 = arith.constant 0 : index
    %c0_14 = arith.constant 0 : index
    %c0_15 = arith.constant 0 : index
    %14 = vector.load %arg4[%c0_12, %c0_13, %c0_14, %c0_15] : memref<1x8x1x32xf32, #tpu.memory_space<vmem>>, vector<1x8x1x32xf32>
    %15 = vector.shape_cast %14 : vector<1x8x1x32xf32> to vector<8x1x32xf32>
    %16 = vector.broadcast %15 : vector<8x1x32xf32> to vector<8x8x32xf32>
    %17 = arith.addf %13, %16 : vector<8x8x32xf32>
    %c0_16 = arith.constant 0 : index
    %c0_17 = arith.constant 0 : index
    %c0_18 = arith.constant 0 : index
    %18 = vector.load %arg5[%c0_16, %c0_17, %c0_18] : memref<1x8x32xf32, #tpu.memory_space<vmem>>, vector<1x8x32xf32>
    %19 = vector.shape_cast %18 : vector<1x8x32xf32> to vector<8x32xf32>
    %20 = vector.shape_cast %19 : vector<8x32xf32> to vector<1x8x32xf32>
    %21 = vector.broadcast %20 : vector<1x8x32xf32> to vector<8x8x32xf32>
    %22 = arith.addf %17, %21 : vector<8x8x32xf32>
    %23 = arith.negf %22 : vector<8x8x32xf32>
    %24 = math.exp %23 : vector<8x8x32xf32>
    %cst_19 = arith.constant 1.000000e+00 : f32
    %25 = vector.broadcast %cst_19 : f32 to vector<8x8x32xf32>
    %26 = arith.addf %25, %24 : vector<8x8x32xf32>
    %27 = arith.divf %25, %26 : vector<8x8x32xf32>
    %28 = arith.mulf %22, %27 : vector<8x8x32xf32>
    %29 = vector.shape_cast %28 : vector<8x8x32xf32> to vector<64x32xf32>
    %c0_20 = arith.constant 0 : index
    %c0_21 = arith.constant 0 : index
    %30 = vector.load %arg11[%c0_20, %c0_21] : memref<32x32xbf16, #tpu.memory_space<vmem>>, vector<32x32xbf16>
    %31 = arith.truncf %29 : vector<64x32xf32> to vector<64x32xbf16>
    %cst_22 = arith.constant dense<0.000000e+00> : vector<64x32xf32>
    %32 = tpu.matmul %31, %30, %cst_22 {dimension_numbers = #tpu.dot_dimension_numbers<[1], [0], [0], [1], [0, 0, 1, 1], [], []>} : vector<64x32xbf16>, vector<32x32xbf16>, vector<64x32xf32> -> vector<64x32xf32>
    %c0_23 = arith.constant 0 : index
    %c0_24 = arith.constant 0 : index
    %33 = vector.load %arg12[%c0_23, %c0_24] : memref<1x32xf32, #tpu.memory_space<vmem>>, vector<1x32xf32>
    %34 = vector.broadcast %33 : vector<1x32xf32> to vector<64x32xf32>
    %35 = arith.addf %32, %34 : vector<64x32xf32>
    %36 = vector.shape_cast %35 : vector<64x32xf32> to vector<8x8x32xf32>
    %c0_25 = arith.constant 0 : index
    %c0_26 = arith.constant 0 : index
    %c0_27 = arith.constant 0 : index
    %c0_28 = arith.constant 0 : index
    %37 = vector.load %arg7[%c0_25, %c0_26, %c0_27, %c0_28] : memref<1x8x8x1xf32, #tpu.memory_space<vmem>>, vector<1x8x8x1xf32>
    %38 = vector.shape_cast %37 : vector<1x8x8x1xf32> to vector<8x8x1xf32>
    %c0_29 = arith.constant 0 : index
    %c0_30 = arith.constant 0 : index
    %c0_31 = arith.constant 0 : index
    %c0_32 = arith.constant 0 : index
    %39 = vector.load %arg8[%c0_29, %c0_30, %c0_31, %c0_32] : memref<1x8x8x1xf32, #tpu.memory_space<vmem>>, vector<1x8x8x1xf32>
    %40 = vector.shape_cast %39 : vector<1x8x8x1xf32> to vector<8x8x1xf32>
    %41 = vector.broadcast %38 : vector<8x8x1xf32> to vector<8x8x32xf32>
    %42 = arith.mulf %36, %41 : vector<8x8x32xf32>
    %cst_33 = arith.constant dense<0.000000e+00> : vector<8x32xf32>
    %43 = vector.multi_reduction <add>, %42, %cst_33 [1] : vector<8x8x32xf32> to vector<8x32xf32>
    %c0_34 = arith.constant 0 : index
    %c0_35 = arith.constant 0 : index
    %c0_36 = arith.constant 0 : index
    %44 = vector.load %arg16[%c0_34, %c0_35, %c0_36] : memref<1x8x32xf32, #tpu.memory_space<vmem>>, vector<1x8x32xf32>
    %45 = vector.shape_cast %44 : vector<1x8x32xf32> to vector<8x32xf32>
    %46 = vector.shape_cast %43 : vector<8x32xf32> to vector<1x8x32xf32>
    tpu.vector_store %arg16[%c0_34, %c0_35, %c0_36], %46 {strides = array<i32>} : memref<1x8x32xf32, #tpu.memory_space<vmem>>, vector<1x8x32xf32>,
    %47 = vector.broadcast %40 : vector<8x8x1xf32> to vector<8x8x32xf32>
    %48 = arith.mulf %36, %47 : vector<8x8x32xf32>
    %cst_37 = arith.constant dense<0.000000e+00> : vector<8x32xf32>
    %49 = vector.multi_reduction <add>, %48, %cst_37 [1] : vector<8x8x32xf32> to vector<8x32xf32>
    %c0_38 = arith.constant 0 : index
    %c0_39 = arith.constant 0 : index
    %c0_40 = arith.constant 0 : index
    %50 = vector.load %arg17[%c0_38, %c0_39, %c0_40] : memref<1x8x32xf32, #tpu.memory_space<vmem>>, vector<1x8x32xf32>
    %51 = vector.shape_cast %50 : vector<1x8x32xf32> to vector<8x32xf32>
    %52 = vector.shape_cast %49 : vector<8x32xf32> to vector<1x8x32xf32>
    tpu.vector_store %arg17[%c0_38, %c0_39, %c0_40], %52 {strides = array<i32>} : memref<1x8x32xf32, #tpu.memory_space<vmem>>, vector<1x8x32xf32>,
    %c0_41 = arith.constant 0 : index
    %c0_42 = arith.constant 0 : index
    %53 = vector.load %arg13[%c0_41, %c0_42] : memref<32x64xbf16, #tpu.memory_space<vmem>>, vector<32x64xbf16>
    %54 = arith.truncf %35 : vector<64x32xf32> to vector<64x32xbf16>
    %cst_43 = arith.constant dense<0.000000e+00> : vector<64x64xf32>
    %55 = tpu.matmul %54, %53, %cst_43 {dimension_numbers = #tpu.dot_dimension_numbers<[1], [0], [0], [1], [0, 0, 1, 1], [], []>} : vector<64x32xbf16>, vector<32x64xbf16>, vector<64x64xf32> -> vector<64x64xf32>
    %c0_44 = arith.constant 0 : index
    %c0_45 = arith.constant 0 : index
    %56 = vector.load %arg14[%c0_44, %c0_45] : memref<1x64xf32, #tpu.memory_space<vmem>>, vector<1x64xf32>
    %57 = vector.broadcast %56 : vector<1x64xf32> to vector<64x64xf32>
    %58 = arith.addf %55, %57 : vector<64x64xf32>
    %59 = arith.negf %58 : vector<64x64xf32>
    %60 = math.exp %59 : vector<64x64xf32>
    %cst_46 = arith.constant 1.000000e+00 : f32
    %61 = vector.broadcast %cst_46 : f32 to vector<64x64xf32>
    %62 = arith.addf %61, %60 : vector<64x64xf32>
    %63 = arith.divf %61, %62 : vector<64x64xf32>
    %64 = arith.mulf %58, %63 : vector<64x64xf32>
    %c0_47 = arith.constant 0 : index
    %c0_48 = arith.constant 0 : index
    %65 = vector.load %arg15[%c0_47, %c0_48] : memref<64x24xbf16, #tpu.memory_space<vmem>>, vector<64x24xbf16>
    %66 = arith.truncf %64 : vector<64x64xf32> to vector<64x64xbf16>
    %cst_49 = arith.constant dense<0.000000e+00> : vector<64x24xf32>
    %67 = tpu.matmul %66, %65, %cst_49 {dimension_numbers = #tpu.dot_dimension_numbers<[1], [0], [0], [1], [0, 0, 1, 1], [], []>} : vector<64x64xbf16>, vector<64x24xbf16>, vector<64x24xf32> -> vector<64x24xf32>
    %68 = vector.shape_cast %67 : vector<64x24xf32> to vector<8x8x24xf32>
    %69 = vector.extract_strided_slice %68 {offsets = [0, 0, 0], sizes = [8, 8, 12], strides = [1, 1, 1]} : vector<8x8x24xf32> to vector<8x8x12xf32>
    %70 = vector.broadcast %38 : vector<8x8x1xf32> to vector<8x8x12xf32>
    %71 = arith.mulf %69, %70 : vector<8x8x12xf32>
    %72 = vector.extract_strided_slice %68 {offsets = [0, 0, 12], sizes = [8, 8, 12], strides = [1, 1, 1]} : vector<8x8x24xf32> to vector<8x8x12xf32>
    %73 = vector.broadcast %40 : vector<8x8x1xf32> to vector<8x8x12xf32>
    %74 = arith.mulf %72, %73 : vector<8x8x12xf32>
    %75 = arith.addf %71, %74 : vector<8x8x12xf32>
    %c0_50 = arith.constant 0 : index
    %c0_51 = arith.constant 0 : index
    %c0_52 = arith.constant 0 : index
    %c0_53 = arith.constant 0 : index
    %76 = vector.load %arg6[%c0_50, %c0_51, %c0_52, %c0_53] : memref<1x8x8x12xf32, #tpu.memory_space<vmem>>, vector<1x8x8x12xf32>
    %77 = vector.shape_cast %76 : vector<1x8x8x12xf32> to vector<8x8x12xf32>
    %78 = arith.mulf %77, %75 : vector<8x8x12xf32>
    %cst_54 = arith.constant dense<0.000000e+00> : vector<8x12xf32>
    %79 = vector.multi_reduction <add>, %78, %cst_54 [1] : vector<8x8x12xf32> to vector<8x12xf32>
    %80 = arith.maximumf %38, %40 : vector<8x8x1xf32>
    %cst_55 = arith.constant 9.99999997E-7 : f32
    %81 = vector.broadcast %cst_55 : f32 to vector<8x8x1xf32>
    %82 = arith.addf %80, %81 : vector<8x8x1xf32>
    %cst_56 = arith.constant dense<0.000000e+00> : vector<8x1xf32>
    %83 = vector.multi_reduction <add>, %82, %cst_56 [1] : vector<8x8x1xf32> to vector<8x1xf32>
    %84 = vector.broadcast %83 : vector<8x1xf32> to vector<8x12xf32>
    %85 = arith.divf %79, %84 : vector<8x12xf32>
    %c0_57 = arith.constant 0 : index
    %c0_58 = arith.constant 0 : index
    %c0_59 = arith.constant 0 : index
    %86 = vector.load %arg18[%c0_57, %c0_58, %c0_59] : memref<1x8x12xf32, #tpu.memory_space<vmem>>, vector<1x8x12xf32>
    %87 = vector.shape_cast %86 : vector<1x8x12xf32> to vector<8x12xf32>
    %88 = vector.shape_cast %85 : vector<8x12xf32> to vector<1x8x12xf32>
    tpu.vector_store %arg18[%c0_57, %c0_58, %c0_59], %88 {strides = array<i32>} : memref<1x8x12xf32, #tpu.memory_space<vmem>>, vector<1x8x12xf32>,
    return
  }
  func.func @transform_0(%arg0: i32, %arg1: i32) -> (i32, i32, i32, i32) {
    %c0_i32 = arith.constant 0 : i32
    %c0_i32_0 = arith.constant 0 : i32
    %c0_i32_1 = arith.constant 0 : i32
    return %arg0, %arg1, %c0_i32, %c0_i32_0 : i32, i32, i32, i32
  }
  func.func @transform_1(%arg0: i32, %arg1: i32) -> (i32, i32, i32, i32) {
    %c0_i32 = arith.constant 0 : i32
    %c0_i32_0 = arith.constant 0 : i32
    %c0_i32_1 = arith.constant 0 : i32
    return %arg0, %arg1, %c0_i32, %c0_i32_0 : i32, i32, i32, i32
  }
  func.func @transform_2(%arg0: i32, %arg1: i32) -> (i32, i32, i32, i32) {
    %c0_i32 = arith.constant 0 : i32
    %c0_i32_0 = arith.constant 0 : i32
    %c0_i32_1 = arith.constant 0 : i32
    return %arg0, %arg1, %c0_i32, %c0_i32_0 : i32, i32, i32, i32
  }
  func.func @transform_3(%arg0: i32, %arg1: i32) -> (i32, i32, i32) {
    %c0_i32 = arith.constant 0 : i32
    %c0_i32_0 = arith.constant 0 : i32
    %c0_i32_1 = arith.constant 0 : i32
    return %arg0, %c0_i32, %c0_i32_0 : i32, i32, i32
  }
  func.func @transform_4(%arg0: i32, %arg1: i32) -> (i32, i32, i32, i32) {
    %c0_i32 = arith.constant 0 : i32
    %c0_i32_0 = arith.constant 0 : i32
    %c0_i32_1 = arith.constant 0 : i32
    return %arg0, %arg1, %c0_i32, %c0_i32_0 : i32, i32, i32, i32
  }
  func.func @transform_5(%arg0: i32, %arg1: i32) -> (i32, i32, i32, i32) {
    %c0_i32 = arith.constant 0 : i32
    %c0_i32_0 = arith.constant 0 : i32
    %c0_i32_1 = arith.constant 0 : i32
    return %arg0, %arg1, %c0_i32, %c0_i32_0 : i32, i32, i32, i32
  }
  func.func @transform_6(%arg0: i32, %arg1: i32) -> (i32, i32, i32, i32) {
    %c0_i32 = arith.constant 0 : i32
    %c0_i32_0 = arith.constant 0 : i32
    %c0_i32_1 = arith.constant 0 : i32
    return %arg0, %arg1, %c0_i32, %c0_i32_0 : i32, i32, i32, i32
  }
  func.func @transform_7(%arg0: i32, %arg1: i32) -> (i32, i32) {
    %c0_i32 = arith.constant 0 : i32
    %c0_i32_0 = arith.constant 0 : i32
    %c0_i32_1 = arith.constant 0 : i32
    return %c0_i32, %c0_i32_0 : i32, i32
  }
  func.func @transform_8(%arg0: i32, %arg1: i32) -> (i32, i32) {
    %c0_i32 = arith.constant 0 : i32
    %c0_i32_0 = arith.constant 0 : i32
    %c0_i32_1 = arith.constant 0 : i32
    return %c0_i32, %c0_i32_0 : i32, i32
  }
  func.func @transform_9(%arg0: i32, %arg1: i32) -> (i32, i32) {
    %c0_i32 = arith.constant 0 : i32
    %c0_i32_0 = arith.constant 0 : i32
    %c0_i32_1 = arith.constant 0 : i32
    return %c0_i32, %c0_i32_0 : i32, i32
  }
  func.func @transform_10(%arg0: i32, %arg1: i32) -> (i32, i32) {
    %c0_i32 = arith.constant 0 : i32
    %c0_i32_0 = arith.constant 0 : i32
    %c0_i32_1 = arith.constant 0 : i32
    return %c0_i32, %c0_i32_0 : i32, i32
  }
  func.func @transform_11(%arg0: i32, %arg1: i32) -> (i32, i32) {
    %c0_i32 = arith.constant 0 : i32
    %c0_i32_0 = arith.constant 0 : i32
    %c0_i32_1 = arith.constant 0 : i32
    return %c0_i32, %c0_i32_0 : i32, i32
  }
  func.func @transform_12(%arg0: i32, %arg1: i32) -> (i32, i32) {
    %c0_i32 = arith.constant 0 : i32
    %c0_i32_0 = arith.constant 0 : i32
    %c0_i32_1 = arith.constant 0 : i32
    return %c0_i32, %c0_i32_0 : i32, i32
  }
  func.func @transform_13(%arg0: i32, %arg1: i32) -> (i32, i32) {
    %c0_i32 = arith.constant 0 : i32
    %c0_i32_0 = arith.constant 0 : i32
    %c0_i32_1 = arith.constant 0 : i32
    return %c0_i32, %c0_i32_0 : i32, i32
  }
  func.func @transform_14(%arg0: i32, %arg1: i32) -> (i32, i32, i32) {
    %c0_i32 = arith.constant 0 : i32
    %c0_i32_0 = arith.constant 0 : i32
    return %arg0, %arg1, %c0_i32 : i32, i32, i32
  }
  func.func @transform_15(%arg0: i32, %arg1: i32) -> (i32, i32, i32) {
    %c0_i32 = arith.constant 0 : i32
    %c0_i32_0 = arith.constant 0 : i32
    return %arg0, %arg1, %c0_i32 : i32, i32, i32
  }
  func.func @transform_16(%arg0: i32, %arg1: i32) -> (i32, i32, i32) {
    %c0_i32 = arith.constant 0 : i32
    %c0_i32_0 = arith.constant 0 : i32
    return %arg0, %arg1, %c0_i32 : i32, i32, i32
  }
}

</mosaic_0001>

<llo_original>
// kernel: gadecoder_forward.8
$region0: #{gadecoder_forward.8}
  #allocation0 [shape = 'u32[]', space=smem, size = 0x4, offset = 0x4, fixed_abs, tag = 'smem constant byte address 0x4 - core index']
  #allocation1 [shape = 'u32[144,128]{1,0:T(1,128)}', space=vmem, size = 0x12000, scoped, tag = 'internal scratch']
  %s0 = inlined_call_operand.vmem [shape: f32[16,32], index: 0, kind: input, shape index: {}]
  %s1 = inlined_call_operand.vmem [shape: bf16[32,64], index: 1, kind: input, shape index: {}]
  %s2 = inlined_call_operand.vmem [shape: f32[1,64], index: 2, kind: input, shape index: {}]
  %s3 = inlined_call_operand.vmem [shape: f32[16,64], index: 3, kind: output, shape index: {}]
  %s4 = sld [smem:[#allocation0]]
  $region22: #{gadecoder_forward.8} parent=0
    _
  %s6 = ssub.s32 1, %s4
  %s7 = scalar_select 0, %s6, %s4
  // Predicated region
  $region2: #{gadecoder_forward.8} parent=0 // pred_check
    _
  $region3: #{gadecoder_forward.8} parent=0 // pred_check_branch
    %9 = sbr.rel (0) target = $region5
  $region4: #{gadecoder_forward.8} parent=0 // pred_region
    _
  $region5: #{gadecoder_forward.8} parent=0 // pred_fallthru
    _
  // Predicated region
  $region6: #{gadecoder_forward.8} parent=0 // pred_check
    _
  $region7: #{gadecoder_forward.8} parent=0 // pred_check_branch
    %11 = sbr.rel (0) target = $region9
  $region8: #{gadecoder_forward.8} parent=0 // pred_region
    _
  $region9: #{gadecoder_forward.8} parent=0 // pred_fallthru
    _
  // Predicated region
  $region10: #{gadecoder_forward.8} parent=0 // pred_check
    _
  $region11: #{gadecoder_forward.8} parent=0 // pred_check_branch
    %13 = sbr.rel (0) target = $region13
  $region12: #{gadecoder_forward.8} parent=0 // pred_region
    _
  $region13: #{gadecoder_forward.8} parent=0 // pred_fallthru
    _
  %v15 = vld [vmem:[%s0] sm:$0xff]
  %v16 = vld [vmem:[%s0 + $0x8] sm:$0xff]
  %v17 = vld [vmem:[%s1] sm:$0xf]
  %v18 = vld [vmem:[%s1 + $0x4] sm:$0xf]
  %v19 = vld [vmem:[%s1 + $0x8] sm:$0xf]
  %v20 = vld [vmem:[%s1 + $0xc] sm:$0xf]
  %v21 = vpack.c.bf16 %v16, %v15
  %v22 = vld [vmem:[%s2] sm:$0x1]
  %v24 = vlaneseq
  %v25 = vshrl.u32 %v24, 7
  %v26 = vsub.s32 0, %v25
  %v27 = vrot.slane %v22, %v26
  %v33 = vunpack.c.l.b16 %v17
  %v34 = vunpack.c.l.b16 %v18
  %v35 = vunpack.c.l.b16 %v19
  %v36 = vunpack.c.l.b16 %v20
  %v37 = vpack.c.b16 %v34, %v33
  %v38 = vpack.c.b16 %v36, %v35
  %vm41 = vcmask 261120
  %v43 = vsel %vm41, %v21, 0
  %45 = vmatprep.subr.bf16.mxu0 0
  %46 = vmatpush1.bf16.msra.mxu0 0
  %47 = vmatprep.subr.bf16.mxu0 0
  %48 = vmatpush1.bf16.msra.mxu0 0
  %49 = vmatprep.subr.bf16.mxu0 0
  %50 = vmatpush1.bf16.msra.mxu0 0
  %51 = vmatprep.subr.bf16.mxu0 0
  %52 = vmatpush1.bf16.msra.mxu0 0
  %53 = vmatprep.subr.bf16.mxu0 0
  %54 = vmatpush1.bf16.msra.mxu0 0
  %55 = vmatprep.subr.bf16.mxu0 0
  %56 = vmatpush1.bf16.msra.mxu0 0
  %57 = vmatprep.subr.bf16.mxu0 0
  %58 = vmatpush1.bf16.msra.mxu0 %v38
  %59 = vmatprep.subr.bf16.mxu0 0
  %60 = vmatpush1.bf16.msra.mxu0 %v37
  %61 = vmatprep.subr.bf16.mxu0 0
  %62 = vmatpush2.bf16.msra.mxu0 0
  %63 = vmatprep.subr.bf16.mxu0 0
  %64 = vmatpush2.bf16.msra.mxu0 0
  %65 = vmatprep.subr.bf16.mxu0 0
  %66 = vmatpush2.bf16.msra.mxu0 0
  %67 = vmatprep.subr.bf16.mxu0 0
  %68 = vmatpush2.bf16.msra.mxu0 0
  %69 = vmatprep.subr.bf16.mxu0 0
  %70 = vmatpush2.bf16.msra.mxu0 0
  %71 = vmatprep.subr.bf16.mxu0 0
  %72 = vmatpush2.bf16.msra.mxu0 0
  %73 = vmatprep.subr.bf16.mxu0 0
  %74 = vmatpush2.bf16.msra.mxu0 0
  %75 = vmatprep.subr.bf16.mxu0 0
  %76 = vmatpush2.bf16.msra.mxu0 0
  %77 = vmatprep.mubr.bf16.mxu0 0
  %78 = vmatmul.mubr.bf16.gmra.mxu0 %v43
  %v79 = vpop.f32.mrf.mxu0
  %v80 = vadd.f32 %v27, %v79
  %v81 = vpop.f32.mrf.mxu0
  %v82 = vpop.f32.mrf.mxu0
  %v83 = vadd.f32 %v27, %v82
  %v84 = vpop.f32.mrf.mxu0
  %85 = vdwg.mxu0
  %vm86 = vcmask 523264
  %87 = vst.msk [vmem:[%s3] sm:$0xff] %vm86, %v80
  %88 = vst.msk [vmem:[%s3 + $0x8] sm:$0xff] %vm86, %v83
  // Predicated region
  $region14: #{gadecoder_forward.8} parent=0 // pred_check
    _
  $region15: #{gadecoder_forward.8} parent=0 // pred_check_branch
    %90 = sbr.rel (0) target = $region17
  $region16: #{gadecoder_forward.8} parent=0 // pred_region
    _
  $region17: #{gadecoder_forward.8} parent=0 // pred_fallthru
    _
  // Predicated region
  $region18: #{gadecoder_forward.8} parent=0 // pred_check
    _
  $region19: #{gadecoder_forward.8} parent=0 // pred_check_branch
    %92 = sbr.rel (0) target = $region21
  $region20: #{gadecoder_forward.8} parent=0 // pred_region
    _
  $region21: #{gadecoder_forward.8} parent=0 // pred_fallthru
    _

// kernel: gadecoder_forward.11
$region0: #{gadecoder_forward.11}
  #allocation0 [shape = 'u32[]', space=smem, size = 0x4, offset = 0x4, fixed_abs, tag = 'smem constant byte address 0x4 - core index']
  #allocation1 [shape = 'u32[144,128]{1,0:T(1,128)}', space=vmem, size = 0x12000, scoped, tag = 'internal scratch']
  %s0 = inlined_call_operand.vmem [shape: f32[2,8,8,16], index: 0, kind: input, shape index: {}]
  %s1 = inlined_call_operand.vmem [shape: f32[2,8,1,32], index: 1, kind: input, shape index: {}]
  %s2 = inlined_call_operand.vmem [shape: f32[2,8,32], index: 2, kind: input, shape index: {}]
  %s3 = inlined_call_operand.vmem [shape: bf16[16,32], index: 3, kind: input, shape index: {}]
  %s4 = inlined_call_operand.vmem [shape: bf16[32,16], index: 4, kind: input, shape index: {}]
  %s5 = inlined_call_operand.vmem [shape: f32[1,16], index: 5, kind: input, shape index: {}]
  %s6 = inlined_call_operand.vmem [shape: f32[2,8,8,16], index: 6, kind: output, shape index: {}]
  %s7 = sld [smem:[#allocation0]]
  $region57: #{gadecoder_forward.11} parent=0
    _
  %s9 = ssub.s32 1, %s7
  %s10 = scalar_select 0, %s9, %s7
  loop: start=0, step=1, limit=4
  $region2: #{gadecoder_forward.11} parent=0 // loop_pre_header
    _
  $region3: #{gadecoder_forward.11} parent=0 // loop_header
    %s12 = sphi 0, %s16
    %p13 = scmp.ge.s32.totalorder %s12, 4
    %s19 = sphi 0, %s31
    %s20 = sphi 0, %s27
    %s21 = sphi 0, %s19
    %s22 = sphi 0, %s20
    %s23 = sphi 0, %s21
    %s24 = sphi 0, %s22
    %s36 = sphi 0, %s38
    %s39 = sphi 0, %s36
    %s40 = sphi 0, %s39
    %s56 = sphi 0, %s40
    %s64 = sphi 0, %s66
    %s67 = sphi 0, %s64
    %s68 = sphi 0, %s67
    %s84 = sphi 0, %s68
    %s90 = sphi 0, %s92
    %s93 = sphi 0, %s90
    %s94 = sphi 0, %s93
    %s110 = sphi 0, %s94
    %s114 = sphi 0, %s114
    %s116 = sphi 0, %s114
    %s117 = sphi 0, %s116
    %s131 = sphi 0, %s117
    %s135 = sphi 0, %s135
    %s137 = sphi 0, %s135
    %s138 = sphi 0, %s137
    %s152 = sphi 0, %s138
    %s156 = sphi 0, %s156
    %s158 = sphi 0, %s156
    %s159 = sphi 0, %s158
    %s173 = sphi 0, %s159
    %s181 = sphi 0, %s183
    %s184 = sphi 0, %s181
    %s185 = sphi 0, %s184
    %s201 = sphi 0, %s185
  $region4: #{gadecoder_forward.11} parent=0 // loop_header_branch
    %15 = sbr.rel (%p13) target = $region8
  $region5: #{gadecoder_forward.11} parent=0 // loop_body
    %s17 = ssub.s32 %s12, 1
    %s18 = ssub.s32 %s12, 2
    %s25 = sadd.s32 1, %s20
    %p26 = scmp.ge.s32.totalorder %s25, 1
    %s27 = scalar_select %p26, 0, %s25
    %s28 = sadd.s32 1, %s19
    %s29 = scalar_select %p26, %s28, %s19
    %p30 = scmp.ge.s32.totalorder %s29, 2
    %s31 = scalar_select %p30, 0, %s29
    %s32 = ssub.s32 %s19, %s31
    %s33 = ssub.s32 %s20, %s27
    %s34 = sor.u32 %s32, %s33
    %p35 = scmp.eq.s32.totalorder %s34, 0
    %s37 = sadd.s32 %s36, 1
    %s38 = scalar_select %p35, %s36, %s37
    %p41 = pneg %p35
    %p42 = scmp.eq.s32.totalorder %s12, 1
    %p43 = por %p41, %p42
    %p44 = scmp.ne.s32.totalorder %s36, %s39
    %p45 = scmp.eq.s32.totalorder %s12, 0
    %p46 = por %p44, %p45
    %p47 = scmp.ne.s32.totalorder %s36, %s39
    %p48 = scmp.eq.s32.totalorder %s17, 1
    %p49 = por %p47, %p48
    %p50 = scmp.ne.s32.totalorder %s39, %s40
    %p51 = scmp.eq.s32.totalorder %s17, 0
    %p52 = por %p50, %p51
    %p53 = scmp.ne.s32.totalorder %s39, %s40
    %p54 = scmp.eq.s32.totalorder %s18, 1
    %p55 = por %p53, %p54
    %p57 = scmp.ne.s32.totalorder %s40, %s56
    %p58 = scmp.eq.s32.totalorder %s18, 0
    %p59 = por %p57, %p58
    %s60 = ssub.s32 %s19, %s31
    %s61 = ssub.s32 %s20, %s27
    %s62 = sor.u32 %s60, %s61
    %p63 = scmp.eq.s32.totalorder %s62, 0
    %s65 = sadd.s32 %s64, 1
    %s66 = scalar_select %p63, %s64, %s65
    %p69 = pneg %p63
    %p70 = scmp.eq.s32.totalorder %s12, 1
    %p71 = por %p69, %p70
    %p72 = scmp.ne.s32.totalorder %s64, %s67
    %p73 = scmp.eq.s32.totalorder %s12, 0
    %p74 = por %p72, %p73
    %p75 = scmp.ne.s32.totalorder %s64, %s67
    %p76 = scmp.eq.s32.totalorder %s17, 1
    %p77 = por %p75, %p76
    %p78 = scmp.ne.s32.totalorder %s67, %s68
    %p79 = scmp.eq.s32.totalorder %s17, 0
    %p80 = por %p78, %p79
    %p81 = scmp.ne.s32.totalorder %s67, %s68
    %p82 = scmp.eq.s32.totalorder %s18, 1
    %p83 = por %p81, %p82
    %p85 = scmp.ne.s32.totalorder %s68, %s84
    %p86 = scmp.eq.s32.totalorder %s18, 0
    %p87 = por %p85, %p86
    %s88 = ssub.s32 %s19, %s31
    %p89 = scmp.eq.s32.totalorder %s88, 0
    %s91 = sadd.s32 %s90, 1
    %s92 = scalar_select %p89, %s90, %s91
    %p95 = pneg %p89
    %p96 = scmp.eq.s32.totalorder %s12, 1
    %p97 = por %p95, %p96
    %p98 = scmp.ne.s32.totalorder %s90, %s93
    %p99 = scmp.eq.s32.totalorder %s12, 0
    %p100 = por %p98, %p99
    %p101 = scmp.ne.s32.totalorder %s90, %s93
    %p102 = scmp.eq.s32.totalorder %s17, 1
    %p103 = por %p101, %p102
    %p104 = scmp.ne.s32.totalorder %s93, %s94
    %p105 = scmp.eq.s32.totalorder %s17, 0
    %p106 = por %p104, %p105
    %p107 = scmp.ne.s32.totalorder %s93, %s94
    %p108 = scmp.eq.s32.totalorder %s18, 1
    %p109 = por %p107, %p108
    %p111 = scmp.ne.s32.totalorder %s94, %s110
    %p112 = scmp.eq.s32.totalorder %s18, 0
    %p113 = por %p111, %p112
    %s115 = sadd.s32 %s114, 1
    %p118 = scmp.eq.s32.totalorder %s12, 1
    %p119 = scmp.ne.s32.totalorder %s114, %s116
    %p120 = scmp.eq.s32.totalorder %s12, 0
    %p121 = por %p119, %p120
    %p122 = scmp.ne.s32.totalorder %s114, %s116
    %p123 = scmp.eq.s32.totalorder %s17, 1
    %p124 = por %p122, %p123
    %p125 = scmp.ne.s32.totalorder %s116, %s117
    %p126 = scmp.eq.s32.totalorder %s17, 0
    %p127 = por %p125, %p126
    %p128 = scmp.ne.s32.totalorder %s116, %s117
    %p129 = scmp.eq.s32.totalorder %s18, 1
    %p130 = por %p128, %p129
    %p132 = scmp.ne.s32.totalorder %s117, %s131
    %p133 = scmp.eq.s32.totalorder %s18, 0
    %p134 = por %p132, %p133
    %s136 = sadd.s32 %s135, 1
    %p139 = scmp.eq.s32.totalorder %s12, 1
    %p140 = scmp.ne.s32.totalorder %s135, %s137
    %p141 = scmp.eq.s32.totalorder %s12, 0
    %p142 = por %p140, %p141
    %p143 = scmp.ne.s32.totalorder %s135, %s137
    %p144 = scmp.eq.s32.totalorder %s17, 1
    %p145 = por %p143, %p144
    %p146 = scmp.ne.s32.totalorder %s137, %s138
    %p147 = scmp.eq.s32.totalorder %s17, 0
    %p148 = por %p146, %p147
    %p149 = scmp.ne.s32.totalorder %s137, %s138
    %p150 = scmp.eq.s32.totalorder %s18, 1
    %p151 = por %p149, %p150
    %p153 = scmp.ne.s32.totalorder %s138, %s152
    %p154 = scmp.eq.s32.totalorder %s18, 0
    %p155 = por %p153, %p154
    %s157 = sadd.s32 %s156, 1
    %p160 = scmp.eq.s32.totalorder %s12, 1
    %p161 = scmp.ne.s32.totalorder %s156, %s158
    %p162 = scmp.eq.s32.totalorder %s12, 0
    %p163 = por %p161, %p162
    %p164 = scmp.ne.s32.totalorder %s156, %s158
    %p165 = scmp.eq.s32.totalorder %s17, 1
    %p166 = por %p164, %p165
    %p167 = scmp.ne.s32.totalorder %s158, %s159
    %p168 = scmp.eq.s32.totalorder %s17, 0
    %p169 = por %p167, %p168
    %p170 = scmp.ne.s32.totalorder %s158, %s159
    %p171 = scmp.eq.s32.totalorder %s18, 1
    %p172 = por %p170, %p171
    %p174 = scmp.ne.s32.totalorder %s159, %s173
    %p175 = scmp.eq.s32.totalorder %s18, 0
    %p176 = por %p174, %p175
    %s177 = ssub.s32 %s19, %s31
    %s178 = ssub.s32 %s20, %s27
    %s179 = sor.u32 %s177, %s178
    %p180 = scmp.eq.s32.totalorder %s179, 0
    %s182 = sadd.s32 %s181, 1
    %s183 = scalar_select %p180, %s181, %s182
    %p186 = pneg %p180
    %p187 = scmp.eq.s32.totalorder %s12, 1
    %p188 = por %p186, %p187
    %p189 = scmp.ne.s32.totalorder %s181, %s184
    %p190 = scmp.eq.s32.totalorder %s12, 0
    %p191 = por %p189, %p190
    %p192 = scmp.ne.s32.totalorder %s181, %s184
    %p193 = scmp.eq.s32.totalorder %s17, 1
    %p194 = por %p192, %p193
    %p195 = scmp.ne.s32.totalorder %s184, %s185
    %p196 = scmp.eq.s32.totalorder %s17, 0
    %p197 = por %p195, %p196
    %p198 = scmp.ne.s32.totalorder %s184, %s185
    %p199 = scmp.eq.s32.totalorder %s18, 1
    %p200 = por %p198, %p199
    %p202 = scmp.ne.s32.totalorder %s185, %s201
    %p203 = scmp.eq.s32.totalorder %s18, 0
    %p204 = por %p202, %p203
    %p205 = scmp.le.s32.totalorder 1, %s12
    %p206 = scmp.lt.s32.totalorder %s12, 3
    %p207 = pnand %p205, %p206
    %p208 = pneg %p207
    // Predicated region
    $region9: #{gadecoder_forward.11} parent=5 // pred_check
      _
    $region10: #{gadecoder_forward.11} parent=5 // pred_check_branch
      %210 = sbr.rel (%p207) target = $region12
    $region11: #{gadecoder_forward.11} parent=5 // pred_region
      %s211 = ssub.s32 %s12, 1
      // Predicated region
      $region13: #{gadecoder_forward.11} parent=11 // pred_check
        %p212 = pneg %p127
      $region14: #{gadecoder_forward.11} parent=11 // pred_check_branch
        %214 = sbr.rel (%p212) target = $region16
      $region15: #{gadecoder_forward.11} parent=11 // pred_region
        _
      $region16: #{gadecoder_forward.11} parent=11 // pred_fallthru
        _
      // Predicated region
      $region17: #{gadecoder_forward.11} parent=11 // pred_check
        %p215 = pneg %p148
      $region18: #{gadecoder_forward.11} parent=11 // pred_check_branch
        %217 = sbr.rel (%p215) target = $region20
      $region19: #{gadecoder_forward.11} parent=11 // pred_region
        _
      $region20: #{gadecoder_forward.11} parent=11 // pred_fallthru
        _
      // Predicated region
      $region21: #{gadecoder_forward.11} parent=11 // pred_check
        %p218 = pneg %p169
      $region22: #{gadecoder_forward.11} parent=11 // pred_check_branch
        %220 = sbr.rel (%p218) target = $region24
      $region23: #{gadecoder_forward.11} parent=11 // pred_region
        _
      $region24: #{gadecoder_forward.11} parent=11 // pred_fallthru
        _
    $region12: #{gadecoder_forward.11} parent=5 // pred_fallthru
      _
    %p221 = scmp.lt.s32.totalorder %s12, 2
    // Predicated region
    $region25: #{gadecoder_forward.11} parent=5 // pred_check
      %p222 = pneg %p221
    $region26: #{gadecoder_forward.11} parent=5 // pred_check_branch
      %224 = sbr.rel (%p222) target = $region28
    $region27: #{gadecoder_forward.11} parent=5 // pred_region
      // Predicated region
      $region29: #{gadecoder_forward.11} parent=27 // pred_check
        %p225 = pneg %p46
      $region30: #{gadecoder_forward.11} parent=27 // pred_check_branch
        %227 = sbr.rel (%p225) target = $region32
      $region31: #{gadecoder_forward.11} parent=27 // pred_region
        %s228 = smul.u32 8, %s20
        %p229 = scmp.lt.s32.totalorder %s19, 1
        %s230 = scalar_select %p229, %s19, 1
        %p231 = scmp.lt.s32.totalorder %s228, 7
        %s232 = scalar_select %p231, %s228, 7
        %s233 = smul.addr %s230, 8
        %s234 = sadd.s32 %s232, %s233
        %s235 = smul.addr %s234, 8
        %s236 = scalar_lea.vmem %s0, %s235
        %s237 = smul.u32 8, %s20
      $region32: #{gadecoder_forward.11} parent=27 // pred_fallthru
        _
      // Predicated region
      $region33: #{gadecoder_forward.11} parent=27 // pred_check
        %p238 = pneg %p74
      $region34: #{gadecoder_forward.11} parent=27 // pred_check_branch
        %240 = sbr.rel (%p238) target = $region36
      $region35: #{gadecoder_forward.11} parent=27 // pred_region
        %s241 = smul.u32 8, %s20
        %p242 = scmp.lt.s32.totalorder %s19, 1
        %s243 = scalar_select %p242, %s19, 1
        %p244 = scmp.lt.s32.totalorder %s241, 7
        %s245 = scalar_select %p244, %s241, 7
        %s246 = smul.addr %s243, 8
        %s247 = sadd.s32 %s245, %s246
        %s248 = scalar_lea.vmem %s1, %s247
        %s249 = smul.u32 8, %s20
      $region36: #{gadecoder_forward.11} parent=27 // pred_fallthru
        _
      // Predicated region
      $region37: #{gadecoder_forward.11} parent=27 // pred_check
        %p250 = pneg %p100
      $region38: #{gadecoder_forward.11} parent=27 // pred_check_branch
        %252 = sbr.rel (%p250) target = $region40
      $region39: #{gadecoder_forward.11} parent=27 // pred_region
        %p253 = scmp.lt.s32.totalorder %s19, 1
        %s254 = scalar_select %p253, %s19, 1
        %s255 = smul.addr %s254, 8
        %s256 = scalar_lea.vmem %s2, %s255
      $region40: #{gadecoder_forward.11} parent=27 // pred_fallthru
        _
    $region28: #{gadecoder_forward.11} parent=5 // pred_fallthru
      _
    %p257 = scmp.le.s32.totalorder 1, %s12
    %p258 = scmp.lt.s32.totalorder %s12, 3
    %p259 = pnand %p257, %p258
    %p260 = pneg %p259
    // Predicated region
    $region41: #{gadecoder_forward.11} parent=5 // pred_check
      _
    $region42: #{gadecoder_forward.11} parent=5 // pred_check_branch
      %262 = sbr.rel (%p259) target = $region44
    $region43: #{gadecoder_forward.11} parent=5 // pred_region
      %s263 = ssub.s32 %s12, 1
      %s264 = smul.u32 8, %s22
      %p265 = scmp.lt.s32.totalorder %s21, 1
      %s266 = scalar_select %p265, %s21, 1
      %p267 = scmp.lt.s32.totalorder %s264, 7
      %s268 = scalar_select %p267, %s264, 7
      %s269 = smul.addr %s266, 8
      %s270 = sadd.s32 %s268, %s269
      %s271 = smul.addr %s270, 8
      %s272 = scalar_lea.vmem %s0, %s271
      %p273 = pneg %p52
      %p274 = pneg %p49
      %s275 = smul.u32 8, %s22
      %p276 = scmp.lt.s32.totalorder %s21, 1
      %s277 = scalar_select %p276, %s21, 1
      %p278 = scmp.lt.s32.totalorder %s275, 7
      %s279 = scalar_select %p278, %s275, 7
      %s280 = smul.addr %s277, 8
      %s281 = sadd.s32 %s279, %s280
      %s282 = scalar_lea.vmem %s1, %s281
      %p283 = pneg %p80
      %p284 = pneg %p77
      %p285 = scmp.lt.s32.totalorder %s21, 1
      %s286 = scalar_select %p285, %s21, 1
      %s287 = smul.addr %s286, 8
      %s288 = scalar_lea.vmem %s2, %s287
      %p289 = pneg %p106
      %p290 = pneg %p103
      %p291 = pneg %p127
      %p292 = pneg %p124
      %p293 = pneg %p148
      %p294 = pneg %p145
      %p295 = pneg %p169
      %p296 = pneg %p166
      %p297 = pneg %p197
      %p298 = pneg %p194
      %s299 = smul.u32 8, %s22
      %p300 = scmp.lt.s32.totalorder %s21, 1
      %s301 = scalar_select %p300, %s21, 1
      %p302 = scmp.lt.s32.totalorder %s299, 7
      %s303 = scalar_select %p302, %s299, 7
      %s304 = smul.addr %s301, 8
      %s305 = sadd.s32 %s303, %s304
      %s306 = smul.addr %s305, 8
      %s307 = scalar_lea.vmem %s6, %s306
      %s308 = smul.u32 8, %s22
      %p309 = scmp.lt.s32.totalorder %s21, 1
      %s310 = scalar_select %p309, %s21, 1
      %p311 = scmp.lt.s32.totalorder %s308, 7
      %s312 = scalar_select %p311, %s308, 7
      %s313 = smul.addr %s310, 8
      %s314 = sadd.s32 %s312, %s313
      %s315 = smul.addr %s314, 8
      %s316 = scalar_lea.vmem %s0, %s315
      %s317 = smul.u32 8, %s22
      %s318 = smul.u32 8, %s22
      %p319 = scmp.lt.s32.totalorder %s21, 1
      %s320 = scalar_select %p319, %s21, 1
      %p321 = scmp.lt.s32.totalorder %s318, 7
      %s322 = scalar_select %p321, %s318, 7
      %s323 = smul.addr %s320, 8
      %s324 = sadd.s32 %s322, %s323
      %s325 = scalar_lea.vmem %s1, %s324
      %s326 = smul.u32 8, %s22
      %p327 = scmp.lt.s32.totalorder %s21, 1
      %s328 = scalar_select %p327, %s21, 1
      %s329 = smul.addr %s328, 8
      %s330 = scalar_lea.vmem %s2, %s329
      %s331 = smul.u32 8, %s22
      %p332 = scmp.lt.s32.totalorder %s21, 1
      %s333 = scalar_select %p332, %s21, 1
      %p334 = scmp.lt.s32.totalorder %s331, 7
      %s335 = scalar_select %p334, %s331, 7
      %s336 = smul.addr %s333, 8
      %s337 = sadd.s32 %s335, %s336
      %s338 = smul.addr %s337, 8
      %s339 = scalar_lea.vmem %s6, %s338
      %s340 = smul.u32 8, %s22
      %v342 = vld [vmem:[%s316] sm:$0xff]
      %v343 = vld [vmem:[%s316 + $0x8] sm:$0xff]
      %v344 = vld [vmem:[%s316 + $0x10] sm:$0xff]
      %v345 = vld [vmem:[%s316 + $0x18] sm:$0xff]
      %v346 = vld [vmem:[%s316 + $0x20] sm:$0xff]
      %v347 = vld [vmem:[%s316 + $0x28] sm:$0xff]
      %v348 = vld [vmem:[%s316 + $0x30] sm:$0xff]
      %v349 = vld [vmem:[%s316 + $0x38] sm:$0xff]
      %v350 = vld [vmem:[%s3] sm:$0xf]
      %v351 = vld [vmem:[%s3 + $0x4] sm:$0xf]
      %v352 = vpack.c.bf16 %v343, %v342
      %v353 = vpack.c.bf16 %v345, %v344
      %v354 = vpack.c.bf16 %v347, %v346
      %v355 = vpack.c.bf16 %v349, %v348
      %v358 = vunpack.c.l.b16 %v350
      %v359 = vunpack.c.l.b16 %v351
      %v360 = vpack.c.b16 %v359, %v358
      %vm362 = vcmask 130048
      %v364 = vsel %vm362, %v352, 0
      %v367 = vsel %vm362, %v353, 0
      %v370 = vsel %vm362, %v354, 0
      %v373 = vsel %vm362, %v355, 0
      %375 = vmatprep.subr.bf16.mxu0 0
      %376 = vmatpush1.bf16.msra.mxu0 0
      %377 = vmatprep.subr.bf16.mxu0 0
      %378 = vmatpush1.bf16.msra.mxu0 0
      %379 = vmatprep.subr.bf16.mxu0 0
      %380 = vmatpush1.bf16.msra.mxu0 0
      %381 = vmatprep.subr.bf16.mxu0 0
      %382 = vmatpush1.bf16.msra.mxu0 0
      %383 = vmatprep.subr.bf16.mxu0 0
      %384 = vmatpush1.bf16.msra.mxu0 0
      %385 = vmatprep.subr.bf16.mxu0 0
      %386 = vmatpush1.bf16.msra.mxu0 0
      %387 = vmatprep.subr.bf16.mxu0 0
      %388 = vmatpush1.bf16.msra.mxu0 0
      %389 = vmatprep.subr.bf16.mxu0 0
      %390 = vmatpush1.bf16.msra.mxu0 %v360
      %391 = vmatprep.subr.bf16.mxu0 0
      %392 = vmatpush2.bf16.msra.mxu0 0
      %393 = vmatprep.subr.bf16.mxu0 0
      %394 = vmatpush2.bf16.msra.mxu0 0
      %395 = vmatprep.subr.bf16.mxu0 0
      %396 = vmatpush2.bf16.msra.mxu0 0
      %397 = vmatprep.subr.bf16.mxu0 0
      %398 = vmatpush2.bf16.msra.mxu0 0
      %399 = vmatprep.subr.bf16.mxu0 0
      %400 = vmatpush2.bf16.msra.mxu0 0
      %401 = vmatprep.subr.bf16.mxu0 0
      %402 = vmatpush2.bf16.msra.mxu0 0
      %403 = vmatprep.subr.bf16.mxu0 0
      %404 = vmatpush2.bf16.msra.mxu0 0
      %405 = vmatprep.subr.bf16.mxu0 0
      %406 = vmatpush2.bf16.msra.mxu0 0
      %407 = vmatprep.mubr.bf16.mxu0 0
      %408 = vmatmul.mubr.bf16.gmra.mxu0 %v364
      %v409 = vpop.f32.mrf.mxu0
      %v410 = vadd.f32 0.0, %v409
      %v411 = vpop.f32.mrf.mxu0
      %v412 = vpop.f32.mrf.mxu0
      %v413 = vadd.f32 0.0, %v412
      %v414 = vpop.f32.mrf.mxu0
      %415 = vmatprep.mubr.bf16.mxu0 0
      %416 = vmatmul.mubr.bf16.gmra.mxu0 %v367
      %v417 = vpop.f32.mrf.mxu0
      %v418 = vadd.f32 0.0, %v417
      %v419 = vpop.f32.mrf.mxu0
      %v420 = vpop.f32.mrf.mxu0
      %v421 = vadd.f32 0.0, %v420
      %v422 = vpop.f32.mrf.mxu0
      %423 = vmatprep.mubr.bf16.mxu0 0
      %424 = vmatmul.mubr.bf16.gmra.mxu0 %v370
      %v425 = vpop.f32.mrf.mxu0
      %v426 = vadd.f32 0.0, %v425
      %v427 = vpop.f32.mrf.mxu0
      %v428 = vpop.f32.mrf.mxu0
      %v429 = vadd.f32 0.0, %v428
      %v430 = vpop.f32.mrf.mxu0
      %431 = vmatprep.mubr.bf16.mxu0 0
      %432 = vmatmul.mubr.bf16.gmra.mxu0 %v373
      %v433 = vpop.f32.mrf.mxu0
      %v434 = vadd.f32 0.0, %v433
      %v435 = vpop.f32.mrf.mxu0
      %v436 = vpop.f32.mrf.mxu0
      %v437 = vadd.f32 0.0, %v436
      %v438 = vpop.f32.mrf.mxu0
      %439 = vdwg.mxu0
      %v440 = vld [vmem:[%s325] sm:$0x1]
      %v441 = vld [vmem:[%s325 + $0x1] sm:$0x1]
      %v442 = vld [vmem:[%s325 + $0x2] sm:$0x1]
      %v443 = vld [vmem:[%s325 + $0x3] sm:$0x1]
      %v444 = vld [vmem:[%s325 + $0x4] sm:$0x1]
      %v445 = vld [vmem:[%s325 + $0x5] sm:$0x1]
      %v446 = vld [vmem:[%s325 + $0x6] sm:$0x1]
      %v447 = vld [vmem:[%s325 + $0x7] sm:$0x1]
      %v456 = vlaneseq
      %v457 = vshrl.u32 %v456, 7
      %v458 = vsub.s32 0, %v457
      %v459 = vrot.slane %v440, %v458
      %v460 = vlaneseq
      %v461 = vshrl.u32 %v460, 7
      %v462 = vsub.s32 0, %v461
      %v463 = vrot.slane %v441, %v462
      %v464 = vlaneseq
      %v465 = vshrl.u32 %v464, 7
      %v466 = vsub.s32 0, %v465
      %v467 = vrot.slane %v442, %v466
      %v468 = vlaneseq
      %v469 = vshrl.u32 %v468, 7
      %v470 = vsub.s32 0, %v469
      %v471 = vrot.slane %v443, %v470
      %v472 = vlaneseq
      %v473 = vshrl.u32 %v472, 7
      %v474 = vsub.s32 0, %v473
      %v475 = vrot.slane %v444, %v474
      %v476 = vlaneseq
      %v477 = vshrl.u32 %v476, 7
      %v478 = vsub.s32 0, %v477
      %v479 = vrot.slane %v445, %v478
      %v480 = vlaneseq
      %v481 = vshrl.u32 %v480, 7
      %v482 = vsub.s32 0, %v481
      %v483 = vrot.slane %v446, %v482
      %v484 = vlaneseq
      %v485 = vshrl.u32 %v484, 7
      %v486 = vsub.s32 0, %v485
      %v487 = vrot.slane %v447, %v486
      %v496 = vadd.f32 %v410, %v459
      %v497 = vadd.f32 %v413, %v463
      %v498 = vadd.f32 %v418, %v467
      %v499 = vadd.f32 %v421, %v471
      %v500 = vadd.f32 %v426, %v475
      %v501 = vadd.f32 %v429, %v479
      %v502 = vadd.f32 %v434, %v483
      %v503 = vadd.f32 %v437, %v487
      %v504 = vld [vmem:[%s330] sm:$0xff]
      %v505 = vadd.f32 %v496, %v504
      %v506 = vadd.f32 %v497, %v504
      %v507 = vadd.f32 %v498, %v504
      %v508 = vadd.f32 %v499, %v504
      %v509 = vadd.f32 %v500, %v504
      %v510 = vadd.f32 %v501, %v504
      %v511 = vadd.f32 %v502, %v504
      %v512 = vadd.f32 %v503, %v504
      %v513 = vxor.u32 %v505, 2147483648
      %v514 = vxor.u32 %v506, 2147483648
      %v515 = vxor.u32 %v507, 2147483648
      %v516 = vxor.u32 %v508, 2147483648
      %v517 = vxor.u32 %v509, 2147483648
      %v518 = vxor.u32 %v510, 2147483648
      %v519 = vxor.u32 %v511, 2147483648
      %v520 = vxor.u32 %v512, 2147483648
      %v521 = vmul.f32 %v513, 1.442695
      %v522 = vpow.pop %v521
      %v523 = vmul.f32 %v514, 1.442695
      %v524 = vpow.pop %v523
      %v525 = vmul.f32 %v515, 1.442695
      %v526 = vpow.pop %v525
      %v527 = vmul.f32 %v516, 1.442695
      %v528 = vpow.pop %v527
      %v529 = vmul.f32 %v517, 1.442695
      %v530 = vpow.pop %v529
      %v531 = vmul.f32 %v518, 1.442695
      %v532 = vpow.pop %v531
      %v533 = vmul.f32 %v519, 1.442695
      %v534 = vpow.pop %v533
      %v535 = vmul.f32 %v520, 1.442695
      %v536 = vpow.pop %v535
      %v537 = vadd.f32 %v522, 1.0
      %v538 = vadd.f32 %v524, 1.0
      %v539 = vadd.f32 %v526, 1.0
      %v540 = vadd.f32 %v528, 1.0
      %v541 = vadd.f32 %v530, 1.0
      %v542 = vadd.f32 %v532, 1.0
      %v543 = vadd.f32 %v534, 1.0
      %v544 = vadd.f32 %v536, 1.0
      %v545 = vrcp.pop %v537
      %v546 = vmul.f32 1.0, %v545
      %v547 = vrcp.pop %v538
      %v548 = vmul.f32 1.0, %v547
      %v549 = vrcp.pop %v539
      %v550 = vmul.f32 1.0, %v549
      %v551 = vrcp.pop %v540
      %v552 = vmul.f32 1.0, %v551
      %v553 = vrcp.pop %v541
      %v554 = vmul.f32 1.0, %v553
      %v555 = vrcp.pop %v542
      %v556 = vmul.f32 1.0, %v555
      %v557 = vrcp.pop %v543
      %v558 = vmul.f32 1.0, %v557
      %v559 = vrcp.pop %v544
      %v560 = vmul.f32 1.0, %v559
      %v561 = vmul.f32 %v505, %v546
      %v562 = vmul.f32 %v506, %v548
      %v563 = vmul.f32 %v507, %v550
      %v564 = vmul.f32 %v508, %v552
      %v565 = vmul.f32 %v509, %v554
      %v566 = vmul.f32 %v510, %v556
      %v567 = vmul.f32 %v511, %v558
      %v568 = vmul.f32 %v512, %v560
      %v569 = vld [vmem:[%s4] sm:$0xf]
      %v570 = vld [vmem:[%s4 + $0x4] sm:$0xf]
      %v571 = vld [vmem:[%s4 + $0x8] sm:$0xf]
      %v572 = vld [vmem:[%s4 + $0xc] sm:$0xf]
      %v573 = vpack.c.bf16 %v562, %v561
      %v574 = vpack.c.bf16 %v564, %v563
      %v575 = vpack.c.bf16 %v566, %v565
      %v576 = vpack.c.bf16 %v568, %v567
      %v577 = vld [vmem:[%s5] sm:$0x1]
      %v579 = vlaneseq
      %v580 = vshrl.u32 %v579, 7
      %v581 = vsub.s32 0, %v580
      %v582 = vrot.slane %v577, %v581
      %v588 = vunpack.c.l.b16 %v569
      %v589 = vunpack.c.l.b16 %v570
      %v590 = vunpack.c.l.b16 %v571
      %v591 = vunpack.c.l.b16 %v572
      %v592 = vpack.c.b16 %v589, %v588
      %v593 = vpack.c.b16 %v591, %v590
      %vm596 = vcmask 261120
      %v598 = vsel %vm596, %v573, 0
      %v601 = vsel %vm596, %v574, 0
      %v604 = vsel %vm596, %v575, 0
      %v607 = vsel %vm596, %v576, 0
      %609 = vmatprep.subr.bf16.mxu0 0
      %610 = vmatpush1.bf16.msra.mxu0 0
      %611 = vmatprep.subr.bf16.mxu0 0
      %612 = vmatpush1.bf16.msra.mxu0 0
      %613 = vmatprep.subr.bf16.mxu0 0
      %614 = vmatpush1.bf16.msra.mxu0 0
      %615 = vmatprep.subr.bf16.mxu0 0
      %616 = vmatpush1.bf16.msra.mxu0 0
      %617 = vmatprep.subr.bf16.mxu0 0
      %618 = vmatpush1.bf16.msra.mxu0 0
      %619 = vmatprep.subr.bf16.mxu0 0
      %620 = vmatpush1.bf16.msra.mxu0 0
      %621 = vmatprep.subr.bf16.mxu0 0
      %622 = vmatpush1.bf16.msra.mxu0 %v593
      %623 = vmatprep.subr.bf16.mxu0 0
      %624 = vmatpush1.bf16.msra.mxu0 %v592
      %625 = vmatprep.subr.bf16.mxu0 0
      %626 = vmatpush2.bf16.msra.mxu0 0
      %627 = vmatprep.subr.bf16.mxu0 0
      %628 = vmatpush2.bf16.msra.mxu0 0
      %629 = vmatprep.subr.bf16.mxu0 0
      %630 = vmatpush2.bf16.msra.mxu0 0
      %631 = vmatprep.subr.bf16.mxu0 0
      %632 = vmatpush2.bf16.msra.mxu0 0
      %633 = vmatprep.subr.bf16.mxu0 0
      %634 = vmatpush2.bf16.msra.mxu0 0
      %635 = vmatprep.subr.bf16.mxu0 0
      %636 = vmatpush2.bf16.msra.mxu0 0
      %637 = vmatprep.subr.bf16.mxu0 0
      %638 = vmatpush2.bf16.msra.mxu0 0
      %639 = vmatprep.subr.bf16.mxu0 0
      %640 = vmatpush2.bf16.msra.mxu0 0
      %641 = vmatprep.mubr.bf16.mxu0 0
      %642 = vmatmul.mubr.bf16.gmra.mxu0 %v598
      %v643 = vpop.f32.mrf.mxu0
      %v644 = vadd.f32 %v582, %v643
      %v645 = vpop.f32.mrf.mxu0
      %v646 = vpop.f32.mrf.mxu0
      %v647 = vadd.f32 %v582, %v646
      %v648 = vpop.f32.mrf.mxu0
      %649 = vmatprep.mubr.bf16.mxu0 0
      %650 = vmatmul.mubr.bf16.gmra.mxu0 %v601
      %v651 = vpop.f32.mrf.mxu0
      %v652 = vadd.f32 %v582, %v651
      %v653 = vpop.f32.mrf.mxu0
      %v654 = vpop.f32.mrf.mxu0
      %v655 = vadd.f32 %v582, %v654
      %v656 = vpop.f32.mrf.mxu0
      %657 = vmatprep.mubr.bf16.mxu0 0
      %658 = vmatmul.mubr.bf16.gmra.mxu0 %v604
      %v659 = vpop.f32.mrf.mxu0
      %v660 = vadd.f32 %v582, %v659
      %v661 = vpop.f32.mrf.mxu0
      %v662 = vpop.f32.mrf.mxu0
      %v663 = vadd.f32 %v582, %v662
      %v664 = vpop.f32.mrf.mxu0
      %665 = vmatprep.mubr.bf16.mxu0 0
      %666 = vmatmul.mubr.bf16.gmra.mxu0 %v607
      %v667 = vpop.f32.mrf.mxu0
      %v668 = vadd.f32 %v582, %v667
      %v669 = vpop.f32.mrf.mxu0
      %v670 = vpop.f32.mrf.mxu0
      %v671 = vadd.f32 %v582, %v670
      %v672 = vpop.f32.mrf.mxu0
      %673 = vdwg.mxu0
      %674 = vst.msk [vmem:[%s339] sm:$0xff] %vm362, %v644
      %675 = vst.msk [vmem:[%s339 + $0x8] sm:$0xff] %vm362, %v647
      %676 = vst.msk [vmem:[%s339 + $0x10] sm:$0xff] %vm362, %v652
      %677 = vst.msk [vmem:[%s339 + $0x18] sm:$0xff] %vm362, %v655
      %678 = vst.msk [vmem:[%s339 + $0x20] sm:$0xff] %vm362, %v660
      %679 = vst.msk [vmem:[%s339 + $0x28] sm:$0xff] %vm362, %v663
      %680 = vst.msk [vmem:[%s339 + $0x30] sm:$0xff] %vm362, %v668
      %681 = vst.msk [vmem:[%s339 + $0x38] sm:$0xff] %vm362, %v671
      %s682 = smul.u32 8, %s22
      %p683 = scmp.lt.s32.totalorder %s21, 1
      %s684 = scalar_select %p683, %s21, 1
      %p685 = scmp.lt.s32.totalorder %s682, 7
      %s686 = scalar_select %p685, %s682, 7
      %s687 = smul.addr %s684, 8
      %s688 = sadd.s32 %s686, %s687
      %s689 = smul.addr %s688, 8
      %s690 = scalar_lea.vmem %s6, %s689
      // Predicated region
      $region45: #{gadecoder_forward.11} parent=43 // pred_check
        %p691 = pneg %p194
      $region46: #{gadecoder_forward.11} parent=43 // pred_check_branch
        %693 = sbr.rel (%p691) target = $region48
      $region47: #{gadecoder_forward.11} parent=43 // pred_region
        %s694 = smul.u32 8, %s22
      $region48: #{gadecoder_forward.11} parent=43 // pred_fallthru
        _
    $region44: #{gadecoder_forward.11} parent=5 // pred_fallthru
      _
    %p695 = scmp.le.s32.totalorder 2, %s12
    // Predicated region
    $region49: #{gadecoder_forward.11} parent=5 // pred_check
      %p696 = pneg %p695
    $region50: #{gadecoder_forward.11} parent=5 // pred_check_branch
      %698 = sbr.rel (%p696) target = $region52
    $region51: #{gadecoder_forward.11} parent=5 // pred_region
      %s699 = ssub.s32 %s12, 2
      // Predicated region
      $region53: #{gadecoder_forward.11} parent=51 // pred_check
        %p700 = pneg %p200
      $region54: #{gadecoder_forward.11} parent=51 // pred_check_branch
        %702 = sbr.rel (%p700) target = $region56
      $region55: #{gadecoder_forward.11} parent=51 // pred_region
        %s703 = smul.u32 8, %s24
        %p704 = scmp.lt.s32.totalorder %s23, 1
        %s705 = scalar_select %p704, %s23, 1
        %p706 = scmp.lt.s32.totalorder %s703, 7
        %s707 = scalar_select %p706, %s703, 7
        %s708 = smul.addr %s705, 8
        %s709 = sadd.s32 %s707, %s708
        %s710 = smul.addr %s709, 8
        %s711 = scalar_lea.vmem %s6, %s710
      $region56: #{gadecoder_forward.11} parent=51 // pred_fallthru
        _
    $region52: #{gadecoder_forward.11} parent=5 // pred_fallthru
      _
  $region6: #{gadecoder_forward.11} parent=0 // loop_footer
    %s16 = sadd.s32 1, %s12
  $region7: #{gadecoder_forward.11} parent=0 // loop_footer_branch
    %11 = sbr.rel target = $region3
  $region8: #{gadecoder_forward.11} parent=0 // loop_exit
    _

// kernel: gadecoder_forward.9
$region0: #{gadecoder_forward.9}
  #allocation0 [shape = 'u32[]', space=smem, size = 0x4, offset = 0x4, fixed_abs, tag = 'smem constant byte address 0x4 - core index']
  #allocation1 [shape = 'u32[144,128]{1,0:T(1,128)}', space=vmem, size = 0x12000, scoped, tag = 'internal scratch']
  %s0 = inlined_call_operand.vmem [shape: f32[2,8,8,16], index: 0, kind: input, shape index: {}]
  %s1 = inlined_call_operand.vmem [shape: f32[2,8,8,16], index: 1, kind: input, shape index: {}]
  %s2 = inlined_call_operand.vmem [shape: f32[2,8,1,32], index: 2, kind: input, shape index: {}]
  %s3 = inlined_call_operand.vmem [shape: f32[2,8,32], index: 3, kind: input, shape index: {}]
  %s4 = inlined_call_operand.vmem [shape: f32[2,8,8,12], index: 4, kind: input, shape index: {}]
  %s5 = inlined_call_operand.vmem [shape: f32[2,8,8,1], index: 5, kind: input, shape index: {}]
  %s6 = inlined_call_operand.vmem [shape: f32[2,8,8,1], index: 6, kind: input, shape index: {}]
  %s7 = inlined_call_operand.vmem [shape: bf16[16,32], index: 7, kind: input, shape index: {}]
  %s8 = inlined_call_operand.vmem [shape: bf16[16,32], index: 8, kind: input, shape index: {}]
  %s9 = inlined_call_operand.vmem [shape: bf16[32,32], index: 9, kind: input, shape index: {}]
  %s10 = inlined_call_operand.vmem [shape: f32[1,32], index: 10, kind: input, shape index: {}]
  %s11 = inlined_call_operand.vmem [shape: bf16[32,64], index: 11, kind: input, shape index: {}]
  %s12 = inlined_call_operand.vmem [shape: f32[1,64], index: 12, kind: input, shape index: {}]
  %s13 = inlined_call_operand.vmem [shape: bf16[64,24], index: 13, kind: input, shape index: {}]
  %s14 = inlined_call_operand.vmem [shape: f32[2,8,32], index: 14, kind: output, shape index: {0}]
  %s15 = inlined_call_operand.vmem [shape: f32[2,8,32], index: 15, kind: output, shape index: {1}]
  %s16 = inlined_call_operand.vmem [shape: f32[2,8,12], index: 16, kind: output, shape index: {2}]
  %17 = xla_tuple %s14, %s15, %s16
  %s18 = sld [smem:[#allocation0]]
  $region105: #{gadecoder_forward.9} parent=0
    _
  %s20 = ssub.s32 1, %s18
  %s21 = scalar_select 0, %s20, %s18
  loop: start=0, step=1, limit=4
  $region2: #{gadecoder_forward.9} parent=0 // loop_pre_header
    _
  $region3: #{gadecoder_forward.9} parent=0 // loop_header
    %s23 = sphi 0, %s27
    %p24 = scmp.ge.s32.totalorder %s23, 4
    %s30 = sphi 0, %s42
    %s31 = sphi 0, %s38
    %s32 = sphi 0, %s30
    %s33 = sphi 0, %s31
    %s34 = sphi 0, %s32
    %s35 = sphi 0, %s33
    %s47 = sphi 0, %s49
    %s50 = sphi 0, %s47
    %s51 = sphi 0, %s50
    %s67 = sphi 0, %s51
    %s75 = sphi 0, %s77
    %s78 = sphi 0, %s75
    %s79 = sphi 0, %s78
    %s95 = sphi 0, %s79
    %s103 = sphi 0, %s105
    %s106 = sphi 0, %s103
    %s107 = sphi 0, %s106
    %s123 = sphi 0, %s107
    %s129 = sphi 0, %s131
    %s132 = sphi 0, %s129
    %s133 = sphi 0, %s132
    %s149 = sphi 0, %s133
    %s157 = sphi 0, %s159
    %s160 = sphi 0, %s157
    %s161 = sphi 0, %s160
    %s177 = sphi 0, %s161
    %s185 = sphi 0, %s187
    %s188 = sphi 0, %s185
    %s189 = sphi 0, %s188
    %s205 = sphi 0, %s189
    %s213 = sphi 0, %s215
    %s216 = sphi 0, %s213
    %s217 = sphi 0, %s216
    %s233 = sphi 0, %s217
    %s237 = sphi 0, %s237
    %s239 = sphi 0, %s237
    %s240 = sphi 0, %s239
    %s254 = sphi 0, %s240
    %s258 = sphi 0, %s258
    %s260 = sphi 0, %s258
    %s261 = sphi 0, %s260
    %s275 = sphi 0, %s261
    %s279 = sphi 0, %s279
    %s281 = sphi 0, %s279
    %s282 = sphi 0, %s281
    %s296 = sphi 0, %s282
    %s300 = sphi 0, %s300
    %s302 = sphi 0, %s300
    %s303 = sphi 0, %s302
    %s317 = sphi 0, %s303
    %s321 = sphi 0, %s321
    %s323 = sphi 0, %s321
    %s324 = sphi 0, %s323
    %s338 = sphi 0, %s324
    %s342 = sphi 0, %s342
    %s344 = sphi 0, %s342
    %s345 = sphi 0, %s344
    %s359 = sphi 0, %s345
    %s363 = sphi 0, %s363
    %s365 = sphi 0, %s363
    %s366 = sphi 0, %s365
    %s380 = sphi 0, %s366
    %s388 = sphi 0, %s390
    %s391 = sphi 0, %s388
    %s392 = sphi 0, %s391
    %s408 = sphi 0, %s392
    %s416 = sphi 0, %s418
    %s419 = sphi 0, %s416
    %s420 = sphi 0, %s419
    %s436 = sphi 0, %s420
    %s444 = sphi 0, %s446
    %s447 = sphi 0, %s444
    %s448 = sphi 0, %s447
    %s464 = sphi 0, %s448
  $region4: #{gadecoder_forward.9} parent=0 // loop_header_branch
    %26 = sbr.rel (%p24) target = $region8
  $region5: #{gadecoder_forward.9} parent=0 // loop_body
    %s28 = ssub.s32 %s23, 1
    %s29 = ssub.s32 %s23, 2
    %s36 = sadd.s32 1, %s31
    %p37 = scmp.ge.s32.totalorder %s36, 1
    %s38 = scalar_select %p37, 0, %s36
    %s39 = sadd.s32 1, %s30
    %s40 = scalar_select %p37, %s39, %s30
    %p41 = scmp.ge.s32.totalorder %s40, 2
    %s42 = scalar_select %p41, 0, %s40
    %s43 = ssub.s32 %s30, %s42
    %s44 = ssub.s32 %s31, %s38
    %s45 = sor.u32 %s43, %s44
    %p46 = scmp.eq.s32.totalorder %s45, 0
    %s48 = sadd.s32 %s47, 1
    %s49 = scalar_select %p46, %s47, %s48
    %p52 = pneg %p46
    %p53 = scmp.eq.s32.totalorder %s23, 1
    %p54 = por %p52, %p53
    %p55 = scmp.ne.s32.totalorder %s47, %s50
    %p56 = scmp.eq.s32.totalorder %s23, 0
    %p57 = por %p55, %p56
    %p58 = scmp.ne.s32.totalorder %s47, %s50
    %p59 = scmp.eq.s32.totalorder %s28, 1
    %p60 = por %p58, %p59
    %p61 = scmp.ne.s32.totalorder %s50, %s51
    %p62 = scmp.eq.s32.totalorder %s28, 0
    %p63 = por %p61, %p62
    %p64 = scmp.ne.s32.totalorder %s50, %s51
    %p65 = scmp.eq.s32.totalorder %s29, 1
    %p66 = por %p64, %p65
    %p68 = scmp.ne.s32.totalorder %s51, %s67
    %p69 = scmp.eq.s32.totalorder %s29, 0
    %p70 = por %p68, %p69
    %s71 = ssub.s32 %s30, %s42
    %s72 = ssub.s32 %s31, %s38
    %s73 = sor.u32 %s71, %s72
    %p74 = scmp.eq.s32.totalorder %s73, 0
    %s76 = sadd.s32 %s75, 1
    %s77 = scalar_select %p74, %s75, %s76
    %p80 = pneg %p74
    %p81 = scmp.eq.s32.totalorder %s23, 1
    %p82 = por %p80, %p81
    %p83 = scmp.ne.s32.totalorder %s75, %s78
    %p84 = scmp.eq.s32.totalorder %s23, 0
    %p85 = por %p83, %p84
    %p86 = scmp.ne.s32.totalorder %s75, %s78
    %p87 = scmp.eq.s32.totalorder %s28, 1
    %p88 = por %p86, %p87
    %p89 = scmp.ne.s32.totalorder %s78, %s79
    %p90 = scmp.eq.s32.totalorder %s28, 0
    %p91 = por %p89, %p90
    %p92 = scmp.ne.s32.totalorder %s78, %s79
    %p93 = scmp.eq.s32.totalorder %s29, 1
    %p94 = por %p92, %p93
    %p96 = scmp.ne.s32.totalorder %s79, %s95
    %p97 = scmp.eq.s32.totalorder %s29, 0
    %p98 = por %p96, %p97
    %s99 = ssub.s32 %s30, %s42
    %s100 = ssub.s32 %s31, %s38
    %s101 = sor.u32 %s99, %s100
    %p102 = scmp.eq.s32.totalorder %s101, 0
    %s104 = sadd.s32 %s103, 1
    %s105 = scalar_select %p102, %s103, %s104
    %p108 = pneg %p102
    %p109 = scmp.eq.s32.totalorder %s23, 1
    %p110 = por %p108, %p109
    %p111 = scmp.ne.s32.totalorder %s103, %s106
    %p112 = scmp.eq.s32.totalorder %s23, 0
    %p113 = por %p111, %p112
    %p114 = scmp.ne.s32.totalorder %s103, %s106
    %p115 = scmp.eq.s32.totalorder %s28, 1
    %p116 = por %p114, %p115
    %p117 = scmp.ne.s32.totalorder %s106, %s107
    %p118 = scmp.eq.s32.totalorder %s28, 0
    %p119 = por %p117, %p118
    %p120 = scmp.ne.s32.totalorder %s106, %s107
    %p121 = scmp.eq.s32.totalorder %s29, 1
    %p122 = por %p120, %p121
    %p124 = scmp.ne.s32.totalorder %s107, %s123
    %p125 = scmp.eq.s32.totalorder %s29, 0
    %p126 = por %p124, %p125
    %s127 = ssub.s32 %s30, %s42
    %p128 = scmp.eq.s32.totalorder %s127, 0
    %s130 = sadd.s32 %s129, 1
    %s131 = scalar_select %p128, %s129, %s130
    %p134 = pneg %p128
    %p135 = scmp.eq.s32.totalorder %s23, 1
    %p136 = por %p134, %p135
    %p137 = scmp.ne.s32.totalorder %s129, %s132
    %p138 = scmp.eq.s32.totalorder %s23, 0
    %p139 = por %p137, %p138
    %p140 = scmp.ne.s32.totalorder %s129, %s132
    %p141 = scmp.eq.s32.totalorder %s28, 1
    %p142 = por %p140, %p141
    %p143 = scmp.ne.s32.totalorder %s132, %s133
    %p144 = scmp.eq.s32.totalorder %s28, 0
    %p145 = por %p143, %p144
    %p146 = scmp.ne.s32.totalorder %s132, %s133
    %p147 = scmp.eq.s32.totalorder %s29, 1
    %p148 = por %p146, %p147
    %p150 = scmp.ne.s32.totalorder %s133, %s149
    %p151 = scmp.eq.s32.totalorder %s29, 0
    %p152 = por %p150, %p151
    %s153 = ssub.s32 %s30, %s42
    %s154 = ssub.s32 %s31, %s38
    %s155 = sor.u32 %s153, %s154
    %p156 = scmp.eq.s32.totalorder %s155, 0
    %s158 = sadd.s32 %s157, 1
    %s159 = scalar_select %p156, %s157, %s158
    %p162 = pneg %p156
    %p163 = scmp.eq.s32.totalorder %s23, 1
    %p164 = por %p162, %p163
    %p165 = scmp.ne.s32.totalorder %s157, %s160
    %p166 = scmp.eq.s32.totalorder %s23, 0
    %p167 = por %p165, %p166
    %p168 = scmp.ne.s32.totalorder %s157, %s160
    %p169 = scmp.eq.s32.totalorder %s28, 1
    %p170 = por %p168, %p169
    %p171 = scmp.ne.s32.totalorder %s160, %s161
    %p172 = scmp.eq.s32.totalorder %s28, 0
    %p173 = por %p171, %p172
    %p174 = scmp.ne.s32.totalorder %s160, %s161
    %p175 = scmp.eq.s32.totalorder %s29, 1
    %p176 = por %p174, %p175
    %p178 = scmp.ne.s32.totalorder %s161, %s177
    %p179 = scmp.eq.s32.totalorder %s29, 0
    %p180 = por %p178, %p179
    %s181 = ssub.s32 %s30, %s42
    %s182 = ssub.s32 %s31, %s38
    %s183 = sor.u32 %s181, %s182
    %p184 = scmp.eq.s32.totalorder %s183, 0
    %s186 = sadd.s32 %s185, 1
    %s187 = scalar_select %p184, %s185, %s186
    %p190 = pneg %p184
    %p191 = scmp.eq.s32.totalorder %s23, 1
    %p192 = por %p190, %p191
    %p193 = scmp.ne.s32.totalorder %s185, %s188
    %p194 = scmp.eq.s32.totalorder %s23, 0
    %p195 = por %p193, %p194
    %p196 = scmp.ne.s32.totalorder %s185, %s188
    %p197 = scmp.eq.s32.totalorder %s28, 1
    %p198 = por %p196, %p197
    %p199 = scmp.ne.s32.totalorder %s188, %s189
    %p200 = scmp.eq.s32.totalorder %s28, 0
    %p201 = por %p199, %p200
    %p202 = scmp.ne.s32.totalorder %s188, %s189
    %p203 = scmp.eq.s32.totalorder %s29, 1
    %p204 = por %p202, %p203
    %p206 = scmp.ne.s32.totalorder %s189, %s205
    %p207 = scmp.eq.s32.totalorder %s29, 0
    %p208 = por %p206, %p207
    %s209 = ssub.s32 %s30, %s42
    %s210 = ssub.s32 %s31, %s38
    %s211 = sor.u32 %s209, %s210
    %p212 = scmp.eq.s32.totalorder %s211, 0
    %s214 = sadd.s32 %s213, 1
    %s215 = scalar_select %p212, %s213, %s214
    %p218 = pneg %p212
    %p219 = scmp.eq.s32.totalorder %s23, 1
    %p220 = por %p218, %p219
    %p221 = scmp.ne.s32.totalorder %s213, %s216
    %p222 = scmp.eq.s32.totalorder %s23, 0
    %p223 = por %p221, %p222
    %p224 = scmp.ne.s32.totalorder %s213, %s216
    %p225 = scmp.eq.s32.totalorder %s28, 1
    %p226 = por %p224, %p225
    %p227 = scmp.ne.s32.totalorder %s216, %s217
    %p228 = scmp.eq.s32.totalorder %s28, 0
    %p229 = por %p227, %p228
    %p230 = scmp.ne.s32.totalorder %s216, %s217
    %p231 = scmp.eq.s32.totalorder %s29, 1
    %p232 = por %p230, %p231
    %p234 = scmp.ne.s32.totalorder %s217, %s233
    %p235 = scmp.eq.s32.totalorder %s29, 0
    %p236 = por %p234, %p235
    %s238 = sadd.s32 %s237, 1
    %p241 = scmp.eq.s32.totalorder %s23, 1
    %p242 = scmp.ne.s32.totalorder %s237, %s239
    %p243 = scmp.eq.s32.totalorder %s23, 0
    %p244 = por %p242, %p243
    %p245 = scmp.ne.s32.totalorder %s237, %s239
    %p246 = scmp.eq.s32.totalorder %s28, 1
    %p247 = por %p245, %p246
    %p248 = scmp.ne.s32.totalorder %s239, %s240
    %p249 = scmp.eq.s32.totalorder %s28, 0
    %p250 = por %p248, %p249
    %p251 = scmp.ne.s32.totalorder %s239, %s240
    %p252 = scmp.eq.s32.totalorder %s29, 1
    %p253 = por %p251, %p252
    %p255 = scmp.ne.s32.totalorder %s240, %s254
    %p256 = scmp.eq.s32.totalorder %s29, 0
    %p257 = por %p255, %p256
    %s259 = sadd.s32 %s258, 1
    %p262 = scmp.eq.s32.totalorder %s23, 1
    %p263 = scmp.ne.s32.totalorder %s258, %s260
    %p264 = scmp.eq.s32.totalorder %s23, 0
    %p265 = por %p263, %p264
    %p266 = scmp.ne.s32.totalorder %s258, %s260
    %p267 = scmp.eq.s32.totalorder %s28, 1
    %p268 = por %p266, %p267
    %p269 = scmp.ne.s32.totalorder %s260, %s261
    %p270 = scmp.eq.s32.totalorder %s28, 0
    %p271 = por %p269, %p270
    %p272 = scmp.ne.s32.totalorder %s260, %s261
    %p273 = scmp.eq.s32.totalorder %s29, 1
    %p274 = por %p272, %p273
    %p276 = scmp.ne.s32.totalorder %s261, %s275
    %p277 = scmp.eq.s32.totalorder %s29, 0
    %p278 = por %p276, %p277
    %s280 = sadd.s32 %s279, 1
    %p283 = scmp.eq.s32.totalorder %s23, 1
    %p284 = scmp.ne.s32.totalorder %s279, %s281
    %p285 = scmp.eq.s32.totalorder %s23, 0
    %p286 = por %p284, %p285
    %p287 = scmp.ne.s32.totalorder %s279, %s281
    %p288 = scmp.eq.s32.totalorder %s28, 1
    %p289 = por %p287, %p288
    %p290 = scmp.ne.s32.totalorder %s281, %s282
    %p291 = scmp.eq.s32.totalorder %s28, 0
    %p292 = por %p290, %p291
    %p293 = scmp.ne.s32.totalorder %s281, %s282
    %p294 = scmp.eq.s32.totalorder %s29, 1
    %p295 = por %p293, %p294
    %p297 = scmp.ne.s32.totalorder %s282, %s296
    %p298 = scmp.eq.s32.totalorder %s29, 0
    %p299 = por %p297, %p298
    %s301 = sadd.s32 %s300, 1
    %p304 = scmp.eq.s32.totalorder %s23, 1
    %p305 = scmp.ne.s32.totalorder %s300, %s302
    %p306 = scmp.eq.s32.totalorder %s23, 0
    %p307 = por %p305, %p306
    %p308 = scmp.ne.s32.totalorder %s300, %s302
    %p309 = scmp.eq.s32.totalorder %s28, 1
    %p310 = por %p308, %p309
    %p311 = scmp.ne.s32.totalorder %s302, %s303
    %p312 = scmp.eq.s32.totalorder %s28, 0
    %p313 = por %p311, %p312
    %p314 = scmp.ne.s32.totalorder %s302, %s303
    %p315 = scmp.eq.s32.totalorder %s29, 1
    %p316 = por %p314, %p315
    %p318 = scmp.ne.s32.totalorder %s303, %s317
    %p319 = scmp.eq.s32.totalorder %s29, 0
    %p320 = por %p318, %p319
    %s322 = sadd.s32 %s321, 1
    %p325 = scmp.eq.s32.totalorder %s23, 1
    %p326 = scmp.ne.s32.totalorder %s321, %s323
    %p327 = scmp.eq.s32.totalorder %s23, 0
    %p328 = por %p326, %p327
    %p329 = scmp.ne.s32.totalorder %s321, %s323
    %p330 = scmp.eq.s32.totalorder %s28, 1
    %p331 = por %p329, %p330
    %p332 = scmp.ne.s32.totalorder %s323, %s324
    %p333 = scmp.eq.s32.totalorder %s28, 0
    %p334 = por %p332, %p333
    %p335 = scmp.ne.s32.totalorder %s323, %s324
    %p336 = scmp.eq.s32.totalorder %s29, 1
    %p337 = por %p335, %p336
    %p339 = scmp.ne.s32.totalorder %s324, %s338
    %p340 = scmp.eq.s32.totalorder %s29, 0
    %p341 = por %p339, %p340
    %s343 = sadd.s32 %s342, 1
    %p346 = scmp.eq.s32.totalorder %s23, 1
    %p347 = scmp.ne.s32.totalorder %s342, %s344
    %p348 = scmp.eq.s32.totalorder %s23, 0
    %p349 = por %p347, %p348
    %p350 = scmp.ne.s32.totalorder %s342, %s344
    %p351 = scmp.eq.s32.totalorder %s28, 1
    %p352 = por %p350, %p351
    %p353 = scmp.ne.s32.totalorder %s344, %s345
    %p354 = scmp.eq.s32.totalorder %s28, 0
    %p355 = por %p353, %p354
    %p356 = scmp.ne.s32.totalorder %s344, %s345
    %p357 = scmp.eq.s32.totalorder %s29, 1
    %p358 = por %p356, %p357
    %p360 = scmp.ne.s32.totalorder %s345, %s359
    %p361 = scmp.eq.s32.totalorder %s29, 0
    %p362 = por %p360, %p361
    %s364 = sadd.s32 %s363, 1
    %p367 = scmp.eq.s32.totalorder %s23, 1
    %p368 = scmp.ne.s32.totalorder %s363, %s365
    %p369 = scmp.eq.s32.totalorder %s23, 0
    %p370 = por %p368, %p369
    %p371 = scmp.ne.s32.totalorder %s363, %s365
    %p372 = scmp.eq.s32.totalorder %s28, 1
    %p373 = por %p371, %p372
    %p374 = scmp.ne.s32.totalorder %s365, %s366
    %p375 = scmp.eq.s32.totalorder %s28, 0
    %p376 = por %p374, %p375
    %p377 = scmp.ne.s32.totalorder %s365, %s366
    %p378 = scmp.eq.s32.totalorder %s29, 1
    %p379 = por %p377, %p378
    %p381 = scmp.ne.s32.totalorder %s366, %s380
    %p382 = scmp.eq.s32.totalorder %s29, 0
    %p383 = por %p381, %p382
    %s384 = ssub.s32 %s30, %s42
    %s385 = ssub.s32 %s31, %s38
    %s386 = sor.u32 %s384, %s385
    %p387 = scmp.eq.s32.totalorder %s386, 0
    %s389 = sadd.s32 %s388, 1
    %s390 = scalar_select %p387, %s388, %s389
    %p393 = pneg %p387
    %p394 = scmp.eq.s32.totalorder %s23, 1
    %p395 = por %p393, %p394
    %p396 = scmp.ne.s32.totalorder %s388, %s391
    %p397 = scmp.eq.s32.totalorder %s23, 0
    %p398 = por %p396, %p397
    %p399 = scmp.ne.s32.totalorder %s388, %s391
    %p400 = scmp.eq.s32.totalorder %s28, 1
    %p401 = por %p399, %p400
    %p402 = scmp.ne.s32.totalorder %s391, %s392
    %p403 = scmp.eq.s32.totalorder %s28, 0
    %p404 = por %p402, %p403
    %p405 = scmp.ne.s32.totalorder %s391, %s392
    %p406 = scmp.eq.s32.totalorder %s29, 1
    %p407 = por %p405, %p406
    %p409 = scmp.ne.s32.totalorder %s392, %s408
    %p410 = scmp.eq.s32.totalorder %s29, 0
    %p411 = por %p409, %p410
    %s412 = ssub.s32 %s30, %s42
    %s413 = ssub.s32 %s31, %s38
    %s414 = sor.u32 %s412, %s413
    %p415 = scmp.eq.s32.totalorder %s414, 0
    %s417 = sadd.s32 %s416, 1
    %s418 = scalar_select %p415, %s416, %s417
    %p421 = pneg %p415
    %p422 = scmp.eq.s32.totalorder %s23, 1
    %p423 = por %p421, %p422
    %p424 = scmp.ne.s32.totalorder %s416, %s419
    %p425 = scmp.eq.s32.totalorder %s23, 0
    %p426 = por %p424, %p425
    %p427 = scmp.ne.s32.totalorder %s416, %s419
    %p428 = scmp.eq.s32.totalorder %s28, 1
    %p429 = por %p427, %p428
    %p430 = scmp.ne.s32.totalorder %s419, %s420
    %p431 = scmp.eq.s32.totalorder %s28, 0
    %p432 = por %p430, %p431
    %p433 = scmp.ne.s32.totalorder %s419, %s420
    %p434 = scmp.eq.s32.totalorder %s29, 1
    %p435 = por %p433, %p434
    %p437 = scmp.ne.s32.totalorder %s420, %s436
    %p438 = scmp.eq.s32.totalorder %s29, 0
    %p439 = por %p437, %p438
    %s440 = ssub.s32 %s30, %s42
    %s441 = ssub.s32 %s31, %s38
    %s442 = sor.u32 %s440, %s441
    %p443 = scmp.eq.s32.totalorder %s442, 0
    %s445 = sadd.s32 %s444, 1
    %s446 = scalar_select %p443, %s444, %s445
    %p449 = pneg %p443
    %p450 = scmp.eq.s32.totalorder %s23, 1
    %p451 = por %p449, %p450
    %p452 = scmp.ne.s32.totalorder %s444, %s447
    %p453 = scmp.eq.s32.totalorder %s23, 0
    %p454 = por %p452, %p453
    %p455 = scmp.ne.s32.totalorder %s444, %s447
    %p456 = scmp.eq.s32.totalorder %s28, 1
    %p457 = por %p455, %p456
    %p458 = scmp.ne.s32.totalorder %s447, %s448
    %p459 = scmp.eq.s32.totalorder %s28, 0
    %p460 = por %p458, %p459
    %p461 = scmp.ne.s32.totalorder %s447, %s448
    %p462 = scmp.eq.s32.totalorder %s29, 1
    %p463 = por %p461, %p462
    %p465 = scmp.ne.s32.totalorder %s448, %s464
    %p466 = scmp.eq.s32.totalorder %s29, 0
    %p467 = por %p465, %p466
    %p468 = scmp.le.s32.totalorder 1, %s23
    %p469 = scmp.lt.s32.totalorder %s23, 3
    %p470 = pnand %p468, %p469
    %p471 = pneg %p470
    // Predicated region
    $region9: #{gadecoder_forward.9} parent=5 // pred_check
      _
    $region10: #{gadecoder_forward.9} parent=5 // pred_check_branch
      %473 = sbr.rel (%p470) target = $region12
    $region11: #{gadecoder_forward.9} parent=5 // pred_region
      %s474 = ssub.s32 %s23, 1
      // Predicated region
      $region13: #{gadecoder_forward.9} parent=11 // pred_check
        %p475 = pneg %p250
      $region14: #{gadecoder_forward.9} parent=11 // pred_check_branch
        %477 = sbr.rel (%p475) target = $region16
      $region15: #{gadecoder_forward.9} parent=11 // pred_region
        _
      $region16: #{gadecoder_forward.9} parent=11 // pred_fallthru
        _
      // Predicated region
      $region17: #{gadecoder_forward.9} parent=11 // pred_check
        %p478 = pneg %p271
      $region18: #{gadecoder_forward.9} parent=11 // pred_check_branch
        %480 = sbr.rel (%p478) target = $region20
      $region19: #{gadecoder_forward.9} parent=11 // pred_region
        _
      $region20: #{gadecoder_forward.9} parent=11 // pred_fallthru
        _
      // Predicated region
      $region21: #{gadecoder_forward.9} parent=11 // pred_check
        %p481 = pneg %p292
      $region22: #{gadecoder_forward.9} parent=11 // pred_check_branch
        %483 = sbr.rel (%p481) target = $region24
      $region23: #{gadecoder_forward.9} parent=11 // pred_region
        _
      $region24: #{gadecoder_forward.9} parent=11 // pred_fallthru
        _
      // Predicated region
      $region25: #{gadecoder_forward.9} parent=11 // pred_check
        %p484 = pneg %p313
      $region26: #{gadecoder_forward.9} parent=11 // pred_check_branch
        %486 = sbr.rel (%p484) target = $region28
      $region27: #{gadecoder_forward.9} parent=11 // pred_region
        _
      $region28: #{gadecoder_forward.9} parent=11 // pred_fallthru
        _
      // Predicated region
      $region29: #{gadecoder_forward.9} parent=11 // pred_check
        %p487 = pneg %p334
      $region30: #{gadecoder_forward.9} parent=11 // pred_check_branch
        %489 = sbr.rel (%p487) target = $region32
      $region31: #{gadecoder_forward.9} parent=11 // pred_region
        _
      $region32: #{gadecoder_forward.9} parent=11 // pred_fallthru
        _
      // Predicated region
      $region33: #{gadecoder_forward.9} parent=11 // pred_check
        %p490 = pneg %p355
      $region34: #{gadecoder_forward.9} parent=11 // pred_check_branch
        %492 = sbr.rel (%p490) target = $region36
      $region35: #{gadecoder_forward.9} parent=11 // pred_region
        _
      $region36: #{gadecoder_forward.9} parent=11 // pred_fallthru
        _
      // Predicated region
      $region37: #{gadecoder_forward.9} parent=11 // pred_check
        %p493 = pneg %p376
      $region38: #{gadecoder_forward.9} parent=11 // pred_check_branch
        %495 = sbr.rel (%p493) target = $region40
      $region39: #{gadecoder_forward.9} parent=11 // pred_region
        _
      $region40: #{gadecoder_forward.9} parent=11 // pred_fallthru
        _
    $region12: #{gadecoder_forward.9} parent=5 // pred_fallthru
      _
    %p496 = scmp.lt.s32.totalorder %s23, 2
    // Predicated region
    $region41: #{gadecoder_forward.9} parent=5 // pred_check
      %p497 = pneg %p496
    $region42: #{gadecoder_forward.9} parent=5 // pred_check_branch
      %499 = sbr.rel (%p497) target = $region44
    $region43: #{gadecoder_forward.9} parent=5 // pred_region
      // Predicated region
      $region45: #{gadecoder_forward.9} parent=43 // pred_check
        %p500 = pneg %p57
      $region46: #{gadecoder_forward.9} parent=43 // pred_check_branch
        %502 = sbr.rel (%p500) target = $region48
      $region47: #{gadecoder_forward.9} parent=43 // pred_region
        %s503 = smul.u32 8, %s31
        %p504 = scmp.lt.s32.totalorder %s30, 1
        %s505 = scalar_select %p504, %s30, 1
        %p506 = scmp.lt.s32.totalorder %s503, 7
        %s507 = scalar_select %p506, %s503, 7
        %s508 = smul.addr %s505, 8
        %s509 = sadd.s32 %s507, %s508
        %s510 = smul.addr %s509, 8
        %s511 = scalar_lea.vmem %s0, %s510
        %s512 = smul.u32 8, %s31
      $region48: #{gadecoder_forward.9} parent=43 // pred_fallthru
        _
      // Predicated region
      $region49: #{gadecoder_forward.9} parent=43 // pred_check
        %p513 = pneg %p85
      $region50: #{gadecoder_forward.9} parent=43 // pred_check_branch
        %515 = sbr.rel (%p513) target = $region52
      $region51: #{gadecoder_forward.9} parent=43 // pred_region
        %s516 = smul.u32 8, %s31
        %p517 = scmp.lt.s32.totalorder %s30, 1
        %s518 = scalar_select %p517, %s30, 1
        %p519 = scmp.lt.s32.totalorder %s516, 7
        %s520 = scalar_select %p519, %s516, 7
        %s521 = smul.addr %s518, 8
        %s522 = sadd.s32 %s520, %s521
        %s523 = smul.addr %s522, 8
        %s524 = scalar_lea.vmem %s1, %s523
        %s525 = smul.u32 8, %s31
      $region52: #{gadecoder_forward.9} parent=43 // pred_fallthru
        _
      // Predicated region
      $region53: #{gadecoder_forward.9} parent=43 // pred_check
        %p526 = pneg %p113
      $region54: #{gadecoder_forward.9} parent=43 // pred_check_branch
        %528 = sbr.rel (%p526) target = $region56
      $region55: #{gadecoder_forward.9} parent=43 // pred_region
        %s529 = smul.u32 8, %s31
        %p530 = scmp.lt.s32.totalorder %s30, 1
        %s531 = scalar_select %p530, %s30, 1
        %p532 = scmp.lt.s32.totalorder %s529, 7
        %s533 = scalar_select %p532, %s529, 7
        %s534 = smul.addr %s531, 8
        %s535 = sadd.s32 %s533, %s534
        %s536 = scalar_lea.vmem %s2, %s535
        %s537 = smul.u32 8, %s31
      $region56: #{gadecoder_forward.9} parent=43 // pred_fallthru
        _
      // Predicated region
      $region57: #{gadecoder_forward.9} parent=43 // pred_check
        %p538 = pneg %p139
      $region58: #{gadecoder_forward.9} parent=43 // pred_check_branch
        %540 = sbr.rel (%p538) target = $region60
      $region59: #{gadecoder_forward.9} parent=43 // pred_region
        %p541 = scmp.lt.s32.totalorder %s30, 1
        %s542 = scalar_select %p541, %s30, 1
        %s543 = smul.addr %s542, 8
        %s544 = scalar_lea.vmem %s3, %s543
      $region60: #{gadecoder_forward.9} parent=43 // pred_fallthru
        _
      // Predicated region
      $region61: #{gadecoder_forward.9} parent=43 // pred_check
        %p545 = pneg %p167
      $region62: #{gadecoder_forward.9} parent=43 // pred_check_branch
        %547 = sbr.rel (%p545) target = $region64
      $region63: #{gadecoder_forward.9} parent=43 // pred_region
        %s548 = smul.u32 8, %s31
        %p549 = scmp.lt.s32.totalorder %s30, 1
        %s550 = scalar_select %p549, %s30, 1
        %p551 = scmp.lt.s32.totalorder %s548, 7
        %s552 = scalar_select %p551, %s548, 7
        %s553 = smul.addr %s550, 8
        %s554 = sadd.s32 %s552, %s553
        %s555 = smul.addr %s554, 8
        %s556 = scalar_lea.vmem %s4, %s555
        %s557 = smul.u32 8, %s31
      $region64: #{gadecoder_forward.9} parent=43 // pred_fallthru
        _
      // Predicated region
      $region65: #{gadecoder_forward.9} parent=43 // pred_check
        %p558 = pneg %p195
      $region66: #{gadecoder_forward.9} parent=43 // pred_check_branch
        %560 = sbr.rel (%p558) target = $region68
      $region67: #{gadecoder_forward.9} parent=43 // pred_region
        %s561 = smul.u32 8, %s31
        %p562 = scmp.lt.s32.totalorder %s30, 1
        %s563 = scalar_select %p562, %s30, 1
        %p564 = scmp.lt.s32.totalorder %s561, 7
        %s565 = scalar_select %p564, %s561, 7
        %s566 = smul.addr %s563, 8
        %s567 = sadd.s32 %s565, %s566
        %s568 = smul.addr %s567, 8
        %s569 = scalar_lea.vmem %s5, %s568
        %s570 = smul.u32 8, %s31
      $region68: #{gadecoder_forward.9} parent=43 // pred_fallthru
        _
      // Predicated region
      $region69: #{gadecoder_forward.9} parent=43 // pred_check
        %p571 = pneg %p223
      $region70: #{gadecoder_forward.9} parent=43 // pred_check_branch
        %573 = sbr.rel (%p571) target = $region72
      $region71: #{gadecoder_forward.9} parent=43 // pred_region
        %s574 = smul.u32 8, %s31
        %p575 = scmp.lt.s32.totalorder %s30, 1
        %s576 = scalar_select %p575, %s30, 1
        %p577 = scmp.lt.s32.totalorder %s574, 7
        %s578 = scalar_select %p577, %s574, 7
        %s579 = smul.addr %s576, 8
        %s580 = sadd.s32 %s578, %s579
        %s581 = smul.addr %s580, 8
        %s582 = scalar_lea.vmem %s6, %s581
        %s583 = smul.u32 8, %s31
      $region72: #{gadecoder_forward.9} parent=43 // pred_fallthru
        _
    $region44: #{gadecoder_forward.9} parent=5 // pred_fallthru
      _
    %p584 = scmp.le.s32.totalorder 1, %s23
    %p585 = scmp.lt.s32.totalorder %s23, 3
    %p586 = pnand %p584, %p585
    %p587 = pneg %p586
    // Predicated region
    $region73: #{gadecoder_forward.9} parent=5 // pred_check
      _
    $region74: #{gadecoder_forward.9} parent=5 // pred_check_branch
      %589 = sbr.rel (%p586) target = $region76
    $region75: #{gadecoder_forward.9} parent=5 // pred_region
      %s590 = ssub.s32 %s23, 1
      %s591 = smul.u32 8, %s33
      %p592 = scmp.lt.s32.totalorder %s32, 1
      %s593 = scalar_select %p592, %s32, 1
      %p594 = scmp.lt.s32.totalorder %s591, 7
      %s595 = scalar_select %p594, %s591, 7
      %s596 = smul.addr %s593, 8
      %s597 = sadd.s32 %s595, %s596
      %s598 = smul.addr %s597, 8
      %s599 = scalar_lea.vmem %s0, %s598
      %p600 = pneg %p63
      %p601 = pneg %p60
      %s602 = smul.u32 8, %s33
      %p603 = scmp.lt.s32.totalorder %s32, 1
      %s604 = scalar_select %p603, %s32, 1
      %p605 = scmp.lt.s32.totalorder %s602, 7
      %s606 = scalar_select %p605, %s602, 7
      %s607 = smul.addr %s604, 8
      %s608 = sadd.s32 %s606, %s607
      %s609 = smul.addr %s608, 8
      %s610 = scalar_lea.vmem %s1, %s609
      %p611 = pneg %p91
      %p612 = pneg %p88
      %s613 = smul.u32 8, %s33
      %p614 = scmp.lt.s32.totalorder %s32, 1
      %s615 = scalar_select %p614, %s32, 1
      %p616 = scmp.lt.s32.totalorder %s613, 7
      %s617 = scalar_select %p616, %s613, 7
      %s618 = smul.addr %s615, 8
      %s619 = sadd.s32 %s617, %s618
      %s620 = scalar_lea.vmem %s2, %s619
      %p621 = pneg %p119
      %p622 = pneg %p116
      %p623 = scmp.lt.s32.totalorder %s32, 1
      %s624 = scalar_select %p623, %s32, 1
      %s625 = smul.addr %s624, 8
      %s626 = scalar_lea.vmem %s3, %s625
      %p627 = pneg %p145
      %p628 = pneg %p142
      %s629 = smul.u32 8, %s33
      %p630 = scmp.lt.s32.totalorder %s32, 1
      %s631 = scalar_select %p630, %s32, 1
      %p632 = scmp.lt.s32.totalorder %s629, 7
      %s633 = scalar_select %p632, %s629, 7
      %s634 = smul.addr %s631, 8
      %s635 = sadd.s32 %s633, %s634
      %s636 = smul.addr %s635, 8
      %s637 = scalar_lea.vmem %s4, %s636
      %p638 = pneg %p173
      %p639 = pneg %p170
      %s640 = smul.u32 8, %s33
      %p641 = scmp.lt.s32.totalorder %s32, 1
      %s642 = scalar_select %p641, %s32, 1
      %p643 = scmp.lt.s32.totalorder %s640, 7
      %s644 = scalar_select %p643, %s640, 7
      %s645 = smul.addr %s642, 8
      %s646 = sadd.s32 %s644, %s645
      %s647 = smul.addr %s646, 8
      %s648 = scalar_lea.vmem %s5, %s647
      %p649 = pneg %p201
      %p650 = pneg %p198
      %s651 = smul.u32 8, %s33
      %p652 = scmp.lt.s32.totalorder %s32, 1
      %s653 = scalar_select %p652, %s32, 1
      %p654 = scmp.lt.s32.totalorder %s651, 7
      %s655 = scalar_select %p654, %s651, 7
      %s656 = smul.addr %s653, 8
      %s657 = sadd.s32 %s655, %s656
      %s658 = smul.addr %s657, 8
      %s659 = scalar_lea.vmem %s6, %s658
      %p660 = pneg %p229
      %p661 = pneg %p226
      %p662 = pneg %p250
      %p663 = pneg %p247
      %p664 = pneg %p271
      %p665 = pneg %p268
      %p666 = pneg %p292
      %p667 = pneg %p289
      %p668 = pneg %p313
      %p669 = pneg %p310
      %p670 = pneg %p334
      %p671 = pneg %p331
      %p672 = pneg %p355
      %p673 = pneg %p352
      %p674 = pneg %p376
      %p675 = pneg %p373
      %p676 = pneg %p404
      %p677 = pneg %p401
      %p678 = scmp.lt.s32.totalorder %s32, 1
      %s679 = scalar_select %p678, %s32, 1
      %p680 = scmp.lt.s32.totalorder %s33, 0
      %s681 = scalar_select %p680, %s33, 0
      %s682 = sadd.s32 %s681, %s679
      %s683 = smul.addr %s682, 8
      %s684 = scalar_lea.vmem %s14, %s683
      %p685 = pneg %p432
      %p686 = pneg %p429
      %p687 = scmp.lt.s32.totalorder %s32, 1
      %s688 = scalar_select %p687, %s32, 1
      %p689 = scmp.lt.s32.totalorder %s33, 0
      %s690 = scalar_select %p689, %s33, 0
      %s691 = sadd.s32 %s690, %s688
      %s692 = smul.addr %s691, 8
      %s693 = scalar_lea.vmem %s15, %s692
      %p694 = pneg %p460
      %p695 = pneg %p457
      %p696 = scmp.lt.s32.totalorder %s32, 1
      %s697 = scalar_select %p696, %s32, 1
      %p698 = scmp.lt.s32.totalorder %s33, 0
      %s699 = scalar_select %p698, %s33, 0
      %s700 = sadd.s32 %s699, %s697
      %s701 = smul.addr %s700, 8
      %s702 = scalar_lea.vmem %s16, %s701
      %s703 = smul.u32 8, %s33
      %p704 = scmp.lt.s32.totalorder %s32, 1
      %s705 = scalar_select %p704, %s32, 1
      %p706 = scmp.lt.s32.totalorder %s703, 7
      %s707 = scalar_select %p706, %s703, 7
      %s708 = smul.addr %s705, 8
      %s709 = sadd.s32 %s707, %s708
      %s710 = smul.addr %s709, 8
      %s711 = scalar_lea.vmem %s0, %s710
      %s712 = smul.u32 8, %s33
      %s713 = smul.u32 8, %s33
      %p714 = scmp.lt.s32.totalorder %s32, 1
      %s715 = scalar_select %p714, %s32, 1
      %p716 = scmp.lt.s32.totalorder %s713, 7
      %s717 = scalar_select %p716, %s713, 7
      %s718 = smul.addr %s715, 8
      %s719 = sadd.s32 %s717, %s718
      %s720 = smul.addr %s719, 8
      %s721 = scalar_lea.vmem %s1, %s720
      %s722 = smul.u32 8, %s33
      %s723 = smul.u32 8, %s33
      %p724 = scmp.lt.s32.totalorder %s32, 1
      %s725 = scalar_select %p724, %s32, 1
      %p726 = scmp.lt.s32.totalorder %s723, 7
      %s727 = scalar_select %p726, %s723, 7
      %s728 = smul.addr %s725, 8
      %s729 = sadd.s32 %s727, %s728
      %s730 = scalar_lea.vmem %s2, %s729
      %s731 = smul.u32 8, %s33
      %p732 = scmp.lt.s32.totalorder %s32, 1
      %s733 = scalar_select %p732, %s32, 1
      %s734 = smul.addr %s733, 8
      %s735 = scalar_lea.vmem %s3, %s734
      %s736 = smul.u32 8, %s33
      %p737 = scmp.lt.s32.totalorder %s32, 1
      %s738 = scalar_select %p737, %s32, 1
      %p739 = scmp.lt.s32.totalorder %s736, 7
      %s740 = scalar_select %p739, %s736, 7
      %s741 = smul.addr %s738, 8
      %s742 = sadd.s32 %s740, %s741
      %s743 = smul.addr %s742, 8
      %s744 = scalar_lea.vmem %s4, %s743
      %s745 = smul.u32 8, %s33
      %s746 = smul.u32 8, %s33
      %p747 = scmp.lt.s32.totalorder %s32, 1
      %s748 = scalar_select %p747, %s32, 1
      %p749 = scmp.lt.s32.totalorder %s746, 7
      %s750 = scalar_select %p749, %s746, 7
      %s751 = smul.addr %s748, 8
      %s752 = sadd.s32 %s750, %s751
      %s753 = smul.addr %s752, 8
      %s754 = scalar_lea.vmem %s5, %s753
      %s755 = smul.u32 8, %s33
      %s756 = smul.u32 8, %s33
      %p757 = scmp.lt.s32.totalorder %s32, 1
      %s758 = scalar_select %p757, %s32, 1
      %p759 = scmp.lt.s32.totalorder %s756, 7
      %s760 = scalar_select %p759, %s756, 7
      %s761 = smul.addr %s758, 8
      %s762 = sadd.s32 %s760, %s761
      %s763 = smul.addr %s762, 8
      %s764 = scalar_lea.vmem %s6, %s763
      %s765 = smul.u32 8, %s33
      %p766 = scmp.lt.s32.totalorder %s32, 1
      %s767 = scalar_select %p766, %s32, 1
      %p768 = scmp.lt.s32.totalorder %s33, 0
      %s769 = scalar_select %p768, %s33, 0
      %s770 = sadd.s32 %s769, %s767
      %s771 = smul.addr %s770, 8
      %s772 = scalar_lea.vmem %s14, %s771
      %p773 = scmp.lt.s32.totalorder %s32, 1
      %s774 = scalar_select %p773, %s32, 1
      %p775 = scmp.lt.s32.totalorder %s33, 0
      %s776 = scalar_select %p775, %s33, 0
      %s777 = sadd.s32 %s776, %s774
      %s778 = smul.addr %s777, 8
      %s779 = scalar_lea.vmem %s15, %s778
      %p780 = scmp.lt.s32.totalorder %s32, 1
      %s781 = scalar_select %p780, %s32, 1
      %p782 = scmp.lt.s32.totalorder %s33, 0
      %s783 = scalar_select %p782, %s33, 0
      %s784 = sadd.s32 %s783, %s781
      %s785 = smul.addr %s784, 8
      %s786 = scalar_lea.vmem %s16, %s785
      %v788 = vld [vmem:[%s711] sm:$0xff]
      %v789 = vld [vmem:[%s711 + $0x8] sm:$0xff]
      %v790 = vld [vmem:[%s711 + $0x10] sm:$0xff]
      %v791 = vld [vmem:[%s711 + $0x18] sm:$0xff]
      %v792 = vld [vmem:[%s711 + $0x20] sm:$0xff]
      %v793 = vld [vmem:[%s711 + $0x28] sm:$0xff]
      %v794 = vld [vmem:[%s711 + $0x30] sm:$0xff]
      %v795 = vld [vmem:[%s711 + $0x38] sm:$0xff]
      %v796 = vld [vmem:[%s721] sm:$0xff]
      %v797 = vld [vmem:[%s721 + $0x8] sm:$0xff]
      %v798 = vld [vmem:[%s721 + $0x10] sm:$0xff]
      %v799 = vld [vmem:[%s721 + $0x18] sm:$0xff]
      %v800 = vld [vmem:[%s721 + $0x20] sm:$0xff]
      %v801 = vld [vmem:[%s721 + $0x28] sm:$0xff]
      %v802 = vld [vmem:[%s721 + $0x30] sm:$0xff]
      %v803 = vld [vmem:[%s721 + $0x38] sm:$0xff]
      %v804 = vld [vmem:[%s7] sm:$0xf]
      %v805 = vld [vmem:[%s7 + $0x4] sm:$0xf]
      %v806 = vpack.c.bf16 %v789, %v788
      %v807 = vpack.c.bf16 %v791, %v790
      %v808 = vpack.c.bf16 %v793, %v792
      %v809 = vpack.c.bf16 %v795, %v794
      %v810 = vld [vmem:[%s8] sm:$0xf]
      %v811 = vld [vmem:[%s8 + $0x4] sm:$0xf]
      %v812 = vpack.c.bf16 %v797, %v796
      %v813 = vpack.c.bf16 %v799, %v798
      %v814 = vpack.c.bf16 %v801, %v800
      %v815 = vpack.c.bf16 %v803, %v802
      %v818 = vunpack.c.l.b16 %v810
      %v819 = vunpack.c.l.b16 %v811
      %v820 = vpack.c.b16 %v819, %v818
      %vm822 = vcmask 130048
      %v824 = vsel %vm822, %v812, 0
      %v827 = vsel %vm822, %v813, 0
      %v830 = vsel %vm822, %v814, 0
      %v833 = vsel %vm822, %v815, 0
      %835 = vmatprep.subr.bf16.mxu0 0
      %836 = vmatpush1.bf16.msra.mxu0 0
      %837 = vmatprep.subr.bf16.mxu0 0
      %838 = vmatpush1.bf16.msra.mxu0 0
      %839 = vmatprep.subr.bf16.mxu0 0
      %840 = vmatpush1.bf16.msra.mxu0 0
      %841 = vmatprep.subr.bf16.mxu0 0
      %842 = vmatpush1.bf16.msra.mxu0 0
      %843 = vmatprep.subr.bf16.mxu0 0
      %844 = vmatpush1.bf16.msra.mxu0 0
      %845 = vmatprep.subr.bf16.mxu0 0
      %846 = vmatpush1.bf16.msra.mxu0 0
      %847 = vmatprep.subr.bf16.mxu0 0
      %848 = vmatpush1.bf16.msra.mxu0 0
      %849 = vmatprep.subr.bf16.mxu0 0
      %850 = vmatpush1.bf16.msra.mxu0 %v820
      %851 = vmatprep.subr.bf16.mxu0 0
      %852 = vmatpush2.bf16.msra.mxu0 0
      %853 = vmatprep.subr.bf16.mxu0 0
      %854 = vmatpush2.bf16.msra.mxu0 0
      %855 = vmatprep.subr.bf16.mxu0 0
      %856 = vmatpush2.bf16.msra.mxu0 0
      %857 = vmatprep.subr.bf16.mxu0 0
      %858 = vmatpush2.bf16.msra.mxu0 0
      %859 = vmatprep.subr.bf16.mxu0 0
      %860 = vmatpush2.bf16.msra.mxu0 0
      %861 = vmatprep.subr.bf16.mxu0 0
      %862 = vmatpush2.bf16.msra.mxu0 0
      %863 = vmatprep.subr.bf16.mxu0 0
      %864 = vmatpush2.bf16.msra.mxu0 0
      %865 = vmatprep.subr.bf16.mxu0 0
      %866 = vmatpush2.bf16.msra.mxu0 0
      %867 = vmatprep.mubr.bf16.mxu0 0
      %868 = vmatmul.mubr.bf16.gmra.mxu0 %v824
      %v869 = vpop.f32.mrf.mxu0
      %v870 = vadd.f32 0.0, %v869
      %v871 = vpop.f32.mrf.mxu0
      %v872 = vpop.f32.mrf.mxu0
      %v873 = vadd.f32 0.0, %v872
      %v874 = vpop.f32.mrf.mxu0
      %875 = vmatprep.mubr.bf16.mxu0 0
      %876 = vmatmul.mubr.bf16.gmra.mxu0 %v827
      %v877 = vpop.f32.mrf.mxu0
      %v878 = vadd.f32 0.0, %v877
      %v879 = vpop.f32.mrf.mxu0
      %v880 = vpop.f32.mrf.mxu0
      %v881 = vadd.f32 0.0, %v880
      %v882 = vpop.f32.mrf.mxu0
      %883 = vmatprep.mubr.bf16.mxu0 0
      %884 = vmatmul.mubr.bf16.gmra.mxu0 %v830
      %v885 = vpop.f32.mrf.mxu0
      %v886 = vadd.f32 0.0, %v885
      %v887 = vpop.f32.mrf.mxu0
      %v888 = vpop.f32.mrf.mxu0
      %v889 = vadd.f32 0.0, %v888
      %v890 = vpop.f32.mrf.mxu0
      %891 = vmatprep.mubr.bf16.mxu0 0
      %892 = vmatmul.mubr.bf16.gmra.mxu0 %v833
      %v893 = vpop.f32.mrf.mxu0
      %v894 = vadd.f32 0.0, %v893
      %v895 = vpop.f32.mrf.mxu0
      %v896 = vpop.f32.mrf.mxu0
      %v897 = vadd.f32 0.0, %v896
      %v898 = vpop.f32.mrf.mxu0
      %899 = vdwg.mxu0
      %v902 = vunpack.c.l.b16 %v804
      %v903 = vunpack.c.l.b16 %v805
      %v904 = vpack.c.b16 %v903, %v902
      %v907 = vsel %vm822, %v806, 0
      %v910 = vsel %vm822, %v807, 0
      %v913 = vsel %vm822, %v808, 0
      %v916 = vsel %vm822, %v809, 0
      %918 = vmatprep.subr.bf16.mxu0 0
      %919 = vmatpush1.bf16.msra.mxu0 0
      %920 = vmatprep.subr.bf16.mxu0 0
      %921 = vmatpush1.bf16.msra.mxu0 0
      %922 = vmatprep.subr.bf16.mxu0 0
      %923 = vmatpush1.bf16.msra.mxu0 0
      %924 = vmatprep.subr.bf16.mxu0 0
      %925 = vmatpush1.bf16.msra.mxu0 0
      %926 = vmatprep.subr.bf16.mxu0 0
      %927 = vmatpush1.bf16.msra.mxu0 0
      %928 = vmatprep.subr.bf16.mxu0 0
      %929 = vmatpush1.bf16.msra.mxu0 0
      %930 = vmatprep.subr.bf16.mxu0 0
      %931 = vmatpush1.bf16.msra.mxu0 0
      %932 = vmatprep.subr.bf16.mxu0 0
      %933 = vmatpush1.bf16.msra.mxu0 %v904
      %934 = vmatprep.subr.bf16.mxu0 0
      %935 = vmatpush2.bf16.msra.mxu0 0
      %936 = vmatprep.subr.bf16.mxu0 0
      %937 = vmatpush2.bf16.msra.mxu0 0
      %938 = vmatprep.subr.bf16.mxu0 0
      %939 = vmatpush2.bf16.msra.mxu0 0
      %940 = vmatprep.subr.bf16.mxu0 0
      %941 = vmatpush2.bf16.msra.mxu0 0
      %942 = vmatprep.subr.bf16.mxu0 0
      %943 = vmatpush2.bf16.msra.mxu0 0
      %944 = vmatprep.subr.bf16.mxu0 0
      %945 = vmatpush2.bf16.msra.mxu0 0
      %946 = vmatprep.subr.bf16.mxu0 0
      %947 = vmatpush2.bf16.msra.mxu0 0
      %948 = vmatprep.subr.bf16.mxu0 0
      %949 = vmatpush2.bf16.msra.mxu0 0
      %950 = vmatprep.mubr.bf16.mxu0 0
      %951 = vmatmul.mubr.bf16.gmra.mxu0 %v907
      %v952 = vpop.f32.mrf.mxu0
      %v953 = vadd.f32 %v870, %v952
      %v954 = vpop.f32.mrf.mxu0
      %v955 = vpop.f32.mrf.mxu0
      %v956 = vadd.f32 %v873, %v955
      %v957 = vpop.f32.mrf.mxu0
      %958 = vmatprep.mubr.bf16.mxu0 0
      %959 = vmatmul.mubr.bf16.gmra.mxu0 %v910
      %v960 = vpop.f32.mrf.mxu0
      %v961 = vadd.f32 %v878, %v960
      %v962 = vpop.f32.mrf.mxu0
      %v963 = vpop.f32.mrf.mxu0
      %v964 = vadd.f32 %v881, %v963
      %v965 = vpop.f32.mrf.mxu0
      %966 = vmatprep.mubr.bf16.mxu0 0
      %967 = vmatmul.mubr.bf16.gmra.mxu0 %v913
      %v968 = vpop.f32.mrf.mxu0
      %v969 = vadd.f32 %v886, %v968
      %v970 = vpop.f32.mrf.mxu0
      %v971 = vpop.f32.mrf.mxu0
      %v972 = vadd.f32 %v889, %v971
      %v973 = vpop.f32.mrf.mxu0
      %974 = vmatprep.mubr.bf16.mxu0 0
      %975 = vmatmul.mubr.bf16.gmra.mxu0 %v916
      %v976 = vpop.f32.mrf.mxu0
      %v977 = vadd.f32 %v894, %v976
      %v978 = vpop.f32.mrf.mxu0
      %v979 = vpop.f32.mrf.mxu0
      %v980 = vadd.f32 %v897, %v979
      %v981 = vpop.f32.mrf.mxu0
      %982 = vdwg.mxu0
      %v983 = vld [vmem:[%s730] sm:$0x1]
      %v984 = vld [vmem:[%s730 + $0x1] sm:$0x1]
      %v985 = vld [vmem:[%s730 + $0x2] sm:$0x1]
      %v986 = vld [vmem:[%s730 + $0x3] sm:$0x1]
      %v987 = vld [vmem:[%s730 + $0x4] sm:$0x1]
      %v988 = vld [vmem:[%s730 + $0x5] sm:$0x1]
      %v989 = vld [vmem:[%s730 + $0x6] sm:$0x1]
      %v990 = vld [vmem:[%s730 + $0x7] sm:$0x1]
      %v999 = vlaneseq
      %v1000 = vshrl.u32 %v999, 7
      %v1001 = vsub.s32 0, %v1000
      %v1002 = vrot.slane %v983, %v1001
      %v1003 = vlaneseq
      %v1004 = vshrl.u32 %v1003, 7
      %v1005 = vsub.s32 0, %v1004
      %v1006 = vrot.slane %v984, %v1005
      %v1007 = vlaneseq
      %v1008 = vshrl.u32 %v1007, 7
      %v1009 = vsub.s32 0, %v1008
      %v1010 = vrot.slane %v985, %v1009
      %v1011 = vlaneseq
      %v1012 = vshrl.u32 %v1011, 7
      %v1013 = vsub.s32 0, %v1012
      %v1014 = vrot.slane %v986, %v1013
      %v1015 = vlaneseq
      %v1016 = vshrl.u32 %v1015, 7
      %v1017 = vsub.s32 0, %v1016
      %v1018 = vrot.slane %v987, %v1017
      %v1019 = vlaneseq
      %v1020 = vshrl.u32 %v1019, 7
      %v1021 = vsub.s32 0, %v1020
      %v1022 = vrot.slane %v988, %v1021
      %v1023 = vlaneseq
      %v1024 = vshrl.u32 %v1023, 7
      %v1025 = vsub.s32 0, %v1024
      %v1026 = vrot.slane %v989, %v1025
      %v1027 = vlaneseq
      %v1028 = vshrl.u32 %v1027, 7
      %v1029 = vsub.s32 0, %v1028
      %v1030 = vrot.slane %v990, %v1029
      %v1039 = vadd.f32 %v953, %v1002
      %v1040 = vadd.f32 %v956, %v1006
      %v1041 = vadd.f32 %v961, %v1010
      %v1042 = vadd.f32 %v964, %v1014
      %v1043 = vadd.f32 %v969, %v1018
      %v1044 = vadd.f32 %v972, %v1022
      %v1045 = vadd.f32 %v977, %v1026
      %v1046 = vadd.f32 %v980, %v1030
      %v1047 = vld [vmem:[%s735] sm:$0xff]
      %v1048 = vadd.f32 %v1039, %v1047
      %v1049 = vadd.f32 %v1040, %v1047
      %v1050 = vadd.f32 %v1041, %v1047
      %v1051 = vadd.f32 %v1042, %v1047
      %v1052 = vadd.f32 %v1043, %v1047
      %v1053 = vadd.f32 %v1044, %v1047
      %v1054 = vadd.f32 %v1045, %v1047
      %v1055 = vadd.f32 %v1046, %v1047
      %v1056 = vxor.u32 %v1048, 2147483648
      %v1057 = vxor.u32 %v1049, 2147483648
      %v1058 = vxor.u32 %v1050, 2147483648
      %v1059 = vxor.u32 %v1051, 2147483648
      %v1060 = vxor.u32 %v1052, 2147483648
      %v1061 = vxor.u32 %v1053, 2147483648
      %v1062 = vxor.u32 %v1054, 2147483648
      %v1063 = vxor.u32 %v1055, 2147483648
      %v1064 = vmul.f32 %v1056, 1.442695
      %v1065 = vpow.pop %v1064
      %v1066 = vmul.f32 %v1057, 1.442695
      %v1067 = vpow.pop %v1066
      %v1068 = vmul.f32 %v1058, 1.442695
      %v1069 = vpow.pop %v1068
      %v1070 = vmul.f32 %v1059, 1.442695
      %v1071 = vpow.pop %v1070
      %v1072 = vmul.f32 %v1060, 1.442695
      %v1073 = vpow.pop %v1072
      %v1074 = vmul.f32 %v1061, 1.442695
      %v1075 = vpow.pop %v1074
      %v1076 = vmul.f32 %v1062, 1.442695
      %v1077 = vpow.pop %v1076
      %v1078 = vmul.f32 %v1063, 1.442695
      %v1079 = vpow.pop %v1078
      %v1080 = vadd.f32 %v1065, 1.0
      %v1081 = vadd.f32 %v1067, 1.0
      %v1082 = vadd.f32 %v1069, 1.0
      %v1083 = vadd.f32 %v1071, 1.0
      %v1084 = vadd.f32 %v1073, 1.0
      %v1085 = vadd.f32 %v1075, 1.0
      %v1086 = vadd.f32 %v1077, 1.0
      %v1087 = vadd.f32 %v1079, 1.0
      %v1088 = vrcp.pop %v1080
      %v1089 = vmul.f32 1.0, %v1088
      %v1090 = vrcp.pop %v1081
      %v1091 = vmul.f32 1.0, %v1090
      %v1092 = vrcp.pop %v1082
      %v1093 = vmul.f32 1.0, %v1092
      %v1094 = vrcp.pop %v1083
      %v1095 = vmul.f32 1.0, %v1094
      %v1096 = vrcp.pop %v1084
      %v1097 = vmul.f32 1.0, %v1096
      %v1098 = vrcp.pop %v1085
      %v1099 = vmul.f32 1.0, %v1098
      %v1100 = vrcp.pop %v1086
      %v1101 = vmul.f32 1.0, %v1100
      %v1102 = vrcp.pop %v1087
      %v1103 = vmul.f32 1.0, %v1102
      %v1104 = vmul.f32 %v1048, %v1089
      %v1105 = vmul.f32 %v1049, %v1091
      %v1106 = vmul.f32 %v1050, %v1093
      %v1107 = vmul.f32 %v1051, %v1095
      %v1108 = vmul.f32 %v1052, %v1097
      %v1109 = vmul.f32 %v1053, %v1099
      %v1110 = vmul.f32 %v1054, %v1101
      %v1111 = vmul.f32 %v1055, %v1103
      %v1112 = vld [vmem:[%s9] sm:$0xf]
      %v1113 = vld [vmem:[%s9 + $0x4] sm:$0xf]
      %v1114 = vld [vmem:[%s9 + $0x8] sm:$0xf]
      %v1115 = vld [vmem:[%s9 + $0xc] sm:$0xf]
      %v1116 = vpack.c.bf16 %v1105, %v1104
      %v1117 = vpack.c.bf16 %v1107, %v1106
      %v1118 = vpack.c.bf16 %v1109, %v1108
      %v1119 = vpack.c.bf16 %v1111, %v1110
      %v1120 = vld [vmem:[%s10] sm:$0x1]
      %v1122 = vlaneseq
      %v1123 = vshrl.u32 %v1122, 7
      %v1124 = vsub.s32 0, %v1123
      %v1125 = vrot.slane %v1120, %v1124
      %v1131 = vunpack.c.l.b16 %v1112
      %v1132 = vunpack.c.l.b16 %v1113
      %v1133 = vunpack.c.l.b16 %v1114
      %v1134 = vunpack.c.l.b16 %v1115
      %v1135 = vpack.c.b16 %v1132, %v1131
      %v1136 = vpack.c.b16 %v1134, %v1133
      %vm1139 = vcmask 261120
      %v1141 = vsel %vm1139, %v1116, 0
      %v1144 = vsel %vm1139, %v1117, 0
      %v1147 = vsel %vm1139, %v1118, 0
      %v1150 = vsel %vm1139, %v1119, 0
      %1152 = vmatprep.subr.bf16.mxu0 0
      %1153 = vmatpush1.bf16.msra.mxu0 0
      %1154 = vmatprep.subr.bf16.mxu0 0
      %1155 = vmatpush1.bf16.msra.mxu0 0
      %1156 = vmatprep.subr.bf16.mxu0 0
      %1157 = vmatpush1.bf16.msra.mxu0 0
      %1158 = vmatprep.subr.bf16.mxu0 0
      %1159 = vmatpush1.bf16.msra.mxu0 0
      %1160 = vmatprep.subr.bf16.mxu0 0
      %1161 = vmatpush1.bf16.msra.mxu0 0
      %1162 = vmatprep.subr.bf16.mxu0 0
      %1163 = vmatpush1.bf16.msra.mxu0 0
      %1164 = vmatprep.subr.bf16.mxu0 0
      %1165 = vmatpush1.bf16.msra.mxu0 %v1136
      %1166 = vmatprep.subr.bf16.mxu0 0
      %1167 = vmatpush1.bf16.msra.mxu0 %v1135
      %1168 = vmatprep.subr.bf16.mxu0 0
      %1169 = vmatpush2.bf16.msra.mxu0 0
      %1170 = vmatprep.subr.bf16.mxu0 0
      %1171 = vmatpush2.bf16.msra.mxu0 0
      %1172 = vmatprep.subr.bf16.mxu0 0
      %1173 = vmatpush2.bf16.msra.mxu0 0
      %1174 = vmatprep.subr.bf16.mxu0 0
      %1175 = vmatpush2.bf16.msra.mxu0 0
      %1176 = vmatprep.subr.bf16.mxu0 0
      %1177 = vmatpush2.bf16.msra.mxu0 0
      %1178 = vmatprep.subr.bf16.mxu0 0
      %1179 = vmatpush2.bf16.msra.mxu0 0
      %1180 = vmatprep.subr.bf16.mxu0 0
      %1181 = vmatpush2.bf16.msra.mxu0 0
      %1182 = vmatprep.subr.bf16.mxu0 0
      %1183 = vmatpush2.bf16.msra.mxu0 0
      %1184 = vmatprep.mubr.bf16.mxu0 0
      %1185 = vmatmul.mubr.bf16.gmra.mxu0 %v1141
      %v1186 = vpop.f32.mrf.mxu0
      %v1187 = vadd.f32 %v1125, %v1186
      %v1188 = vpop.f32.mrf.mxu0
      %v1189 = vpop.f32.mrf.mxu0
      %v1190 = vadd.f32 %v1125, %v1189
      %v1191 = vpop.f32.mrf.mxu0
      %1192 = vmatprep.mubr.bf16.mxu0 0
      %1193 = vmatmul.mubr.bf16.gmra.mxu0 %v1144
      %v1194 = vpop.f32.mrf.mxu0
      %v1195 = vadd.f32 %v1125, %v1194
      %v1196 = vpop.f32.mrf.mxu0
      %v1197 = vpop.f32.mrf.mxu0
      %v1198 = vadd.f32 %v1125, %v1197
      %v1199 = vpop.f32.mrf.mxu0
      %1200 = vmatprep.mubr.bf16.mxu0 0
      %1201 = vmatmul.mubr.bf16.gmra.mxu0 %v1147
      %v1202 = vpop.f32.mrf.mxu0
      %v1203 = vadd.f32 %v1125, %v1202
      %v1204 = vpop.f32.mrf.mxu0
      %v1205 = vpop.f32.mrf.mxu0
      %v1206 = vadd.f32 %v1125, %v1205
      %v1207 = vpop.f32.mrf.mxu0
      %1208 = vmatprep.mubr.bf16.mxu0 0
      %1209 = vmatmul.mubr.bf16.gmra.mxu0 %v1150
      %v1210 = vpop.f32.mrf.mxu0
      %v1211 = vadd.f32 %v1125, %v1210
      %v1212 = vpop.f32.mrf.mxu0
      %v1213 = vpop.f32.mrf.mxu0
      %v1214 = vadd.f32 %v1125, %v1213
      %v1215 = vpop.f32.mrf.mxu0
      %1216 = vdwg.mxu0
      %v1217 = vld [vmem:[%s754] sm:$0xff]
      %v1218 = vld [vmem:[%s754 + $0x8] sm:$0xff]
      %v1219 = vld [vmem:[%s754 + $0x10] sm:$0xff]
      %v1220 = vld [vmem:[%s754 + $0x18] sm:$0xff]
      %v1221 = vld [vmem:[%s754 + $0x20] sm:$0xff]
      %v1222 = vld [vmem:[%s754 + $0x28] sm:$0xff]
      %v1223 = vld [vmem:[%s754 + $0x30] sm:$0xff]
      %v1224 = vld [vmem:[%s754 + $0x38] sm:$0xff]
      %v1225 = vld [vmem:[%s764] sm:$0xff]
      %v1226 = vld [vmem:[%s764 + $0x8] sm:$0xff]
      %v1227 = vld [vmem:[%s764 + $0x10] sm:$0xff]
      %v1228 = vld [vmem:[%s764 + $0x18] sm:$0xff]
      %v1229 = vld [vmem:[%s764 + $0x20] sm:$0xff]
      %v1230 = vld [vmem:[%s764 + $0x28] sm:$0xff]
      %v1231 = vld [vmem:[%s764 + $0x30] sm:$0xff]
      %v1232 = vld [vmem:[%s764 + $0x38] sm:$0xff]
      %1234 = vset.pattern.permute.xlu0 0
      %1235 = vperm.xlu0 %1234, %v1217
      %v1236 = vpop.permute.xlu0 %1235
      %1239 = vset.pattern.permute.xlu0 0
      %1240 = vperm.xlu0 %1239, %v1218
      %v1241 = vpop.permute.xlu0 %1240
      %1244 = vset.pattern.permute.xlu0 0
      %1245 = vperm.xlu0 %1244, %v1219
      %v1246 = vpop.permute.xlu0 %1245
      %1249 = vset.pattern.permute.xlu0 0
      %1250 = vperm.xlu0 %1249, %v1220
      %v1251 = vpop.permute.xlu0 %1250
      %1254 = vset.pattern.permute.xlu0 0
      %1255 = vperm.xlu0 %1254, %v1221
      %v1256 = vpop.permute.xlu0 %1255
      %1259 = vset.pattern.permute.xlu0 0
      %1260 = vperm.xlu0 %1259, %v1222
      %v1261 = vpop.permute.xlu0 %1260
      %1264 = vset.pattern.permute.xlu0 0
      %1265 = vperm.xlu0 %1264, %v1223
      %v1266 = vpop.permute.xlu0 %1265
      %1269 = vset.pattern.permute.xlu0 0
      %1270 = vperm.xlu0 %1269, %v1224
      %v1271 = vpop.permute.xlu0 %1270
      %v1273 = vmul.f32 %v1187, %v1236
      %v1274 = vmul.f32 %v1190, %v1241
      %v1275 = vmul.f32 %v1195, %v1246
      %v1276 = vmul.f32 %v1198, %v1251
      %v1277 = vmul.f32 %v1203, %v1256
      %v1278 = vmul.f32 %v1206, %v1261
      %v1279 = vmul.f32 %v1211, %v1266
      %v1280 = vmul.f32 %v1214, %v1271
      %v1281 = vsel %vm1139, %v1273, 0.0
      %v1282 = vrot.slane %v1281, 4
      %v1283 = vadd.f32 %v1281, %v1282
      %v1284 = vrot.slane %v1283, 2
      %v1285 = vadd.f32 %v1283, %v1284
      %v1286 = vrot.slane %v1285, 1
      %v1287 = vadd.f32 %v1285, %v1286
      %v1288 = vsel %vm1139, %v1274, 0.0
      %v1289 = vrot.slane %v1288, 4
      %v1290 = vadd.f32 %v1288, %v1289
      %v1291 = vrot.slane %v1290, 2
      %v1292 = vadd.f32 %v1290, %v1291
      %v1293 = vrot.slane %v1292, 1
      %v1294 = vadd.f32 %v1292, %v1293
      %v1295 = vsel %vm1139, %v1275, 0.0
      %v1296 = vrot.slane %v1295, 4
      %v1297 = vadd.f32 %v1295, %v1296
      %v1298 = vrot.slane %v1297, 2
      %v1299 = vadd.f32 %v1297, %v1298
      %v1300 = vrot.slane %v1299, 1
      %v1301 = vadd.f32 %v1299, %v1300
      %v1302 = vsel %vm1139, %v1276, 0.0
      %v1303 = vrot.slane %v1302, 4
      %v1304 = vadd.f32 %v1302, %v1303
      %v1305 = vrot.slane %v1304, 2
      %v1306 = vadd.f32 %v1304, %v1305
      %v1307 = vrot.slane %v1306, 1
      %v1308 = vadd.f32 %v1306, %v1307
      %v1309 = vsel %vm1139, %v1277, 0.0
      %v1310 = vrot.slane %v1309, 4
      %v1311 = vadd.f32 %v1309, %v1310
      %v1312 = vrot.slane %v1311, 2
      %v1313 = vadd.f32 %v1311, %v1312
      %v1314 = vrot.slane %v1313, 1
      %v1315 = vadd.f32 %v1313, %v1314
      %v1316 = vsel %vm1139, %v1278, 0.0
      %v1317 = vrot.slane %v1316, 4
      %v1318 = vadd.f32 %v1316, %v1317
      %v1319 = vrot.slane %v1318, 2
      %v1320 = vadd.f32 %v1318, %v1319
      %v1321 = vrot.slane %v1320, 1
      %v1322 = vadd.f32 %v1320, %v1321
      %v1323 = vsel %vm1139, %v1279, 0.0
      %v1324 = vrot.slane %v1323, 4
      %v1325 = vadd.f32 %v1323, %v1324
      %v1326 = vrot.slane %v1325, 2
      %v1327 = vadd.f32 %v1325, %v1326
      %v1328 = vrot.slane %v1327, 1
      %v1329 = vadd.f32 %v1327, %v1328
      %v1330 = vsel %vm1139, %v1280, 0.0
      %v1331 = vrot.slane %v1330, 4
      %v1332 = vadd.f32 %v1330, %v1331
      %v1333 = vrot.slane %v1332, 2
      %v1334 = vadd.f32 %v1332, %v1333
      %v1335 = vrot.slane %v1334, 1
      %v1336 = vadd.f32 %v1334, %v1335
      %vm1345 = vcmask 1041409
      %v1346 = vsel %vm1345, %v1294, %v1287
      %vm1347 = vcmask 1042434
      %v1348 = vsel %vm1347, %v1301, %v1346
      %vm1349 = vcmask 1043459
      %v1350 = vsel %vm1349, %v1308, %v1348
      %vm1351 = vcmask 1044484
      %v1352 = vsel %vm1351, %v1315, %v1350
      %vm1353 = vcmask 1045509
      %v1354 = vsel %vm1353, %v1322, %v1352
      %vm1355 = vcmask 1046534
      %v1356 = vsel %vm1355, %v1329, %v1354
      %vm1357 = vcmask 1047559
      %v1358 = vsel %vm1357, %v1336, %v1356
      %1360 = vst.msk [vmem:[%s772] sm:$0xff] %vm1139, %v1358
      %1362 = vset.pattern.permute.xlu0 0
      %1363 = vperm.xlu0 %1362, %v1225
      %v1364 = vpop.permute.xlu0 %1363
      %1367 = vset.pattern.permute.xlu0 0
      %1368 = vperm.xlu0 %1367, %v1226
      %v1369 = vpop.permute.xlu0 %1368
      %1372 = vset.pattern.permute.xlu0 0
      %1373 = vperm.xlu0 %1372, %v1227
      %v1374 = vpop.permute.xlu0 %1373
      %1377 = vset.pattern.permute.xlu0 0
      %1378 = vperm.xlu0 %1377, %v1228
      %v1379 = vpop.permute.xlu0 %1378
      %1382 = vset.pattern.permute.xlu0 0
      %1383 = vperm.xlu0 %1382, %v1229
      %v1384 = vpop.permute.xlu0 %1383
      %1387 = vset.pattern.permute.xlu0 0
      %1388 = vperm.xlu0 %1387, %v1230
      %v1389 = vpop.permute.xlu0 %1388
      %1392 = vset.pattern.permute.xlu0 0
      %1393 = vperm.xlu0 %1392, %v1231
      %v1394 = vpop.permute.xlu0 %1393
      %1397 = vset.pattern.permute.xlu0 0
      %1398 = vperm.xlu0 %1397, %v1232
      %v1399 = vpop.permute.xlu0 %1398
      %v1401 = vmul.f32 %v1187, %v1364
      %v1402 = vmul.f32 %v1190, %v1369
      %v1403 = vmul.f32 %v1195, %v1374
      %v1404 = vmul.f32 %v1198, %v1379
      %v1405 = vmul.f32 %v1203, %v1384
      %v1406 = vmul.f32 %v1206, %v1389
      %v1407 = vmul.f32 %v1211, %v1394
      %v1408 = vmul.f32 %v1214, %v1399
      %v1409 = vsel %vm1139, %v1401, 0.0
      %v1410 = vrot.slane %v1409, 4
      %v1411 = vadd.f32 %v1409, %v1410
      %v1412 = vrot.slane %v1411, 2
      %v1413 = vadd.f32 %v1411, %v1412
      %v1414 = vrot.slane %v1413, 1
      %v1415 = vadd.f32 %v1413, %v1414
      %v1416 = vsel %vm1139, %v1402, 0.0
      %v1417 = vrot.slane %v1416, 4
      %v1418 = vadd.f32 %v1416, %v1417
      %v1419 = vrot.slane %v1418, 2
      %v1420 = vadd.f32 %v1418, %v1419
      %v1421 = vrot.slane %v1420, 1
      %v1422 = vadd.f32 %v1420, %v1421
      %v1423 = vsel %vm1139, %v1403, 0.0
      %v1424 = vrot.slane %v1423, 4
      %v1425 = vadd.f32 %v1423, %v1424
      %v1426 = vrot.slane %v1425, 2
      %v1427 = vadd.f32 %v1425, %v1426
      %v1428 = vrot.slane %v1427, 1
      %v1429 = vadd.f32 %v1427, %v1428
      %v1430 = vsel %vm1139, %v1404, 0.0
      %v1431 = vrot.slane %v1430, 4
      %v1432 = vadd.f32 %v1430, %v1431
      %v1433 = vrot.slane %v1432, 2
      %v1434 = vadd.f32 %v1432, %v1433
      %v1435 = vrot.slane %v1434, 1
      %v1436 = vadd.f32 %v1434, %v1435
      %v1437 = vsel %vm1139, %v1405, 0.0
      %v1438 = vrot.slane %v1437, 4
      %v1439 = vadd.f32 %v1437, %v1438
      %v1440 = vrot.slane %v1439, 2
      %v1441 = vadd.f32 %v1439, %v1440
      %v1442 = vrot.slane %v1441, 1
      %v1443 = vadd.f32 %v1441, %v1442
      %v1444 = vsel %vm1139, %v1406, 0.0
      %v1445 = vrot.slane %v1444, 4
      %v1446 = vadd.f32 %v1444, %v1445
      %v1447 = vrot.slane %v1446, 2
      %v1448 = vadd.f32 %v1446, %v1447
      %v1449 = vrot.slane %v1448, 1
      %v1450 = vadd.f32 %v1448, %v1449
      %v1451 = vsel %vm1139, %v1407, 0.0
      %v1452 = vrot.slane %v1451, 4
      %v1453 = vadd.f32 %v1451, %v1452
      %v1454 = vrot.slane %v1453, 2
      %v1455 = vadd.f32 %v1453, %v1454
      %v1456 = vrot.slane %v1455, 1
      %v1457 = vadd.f32 %v1455, %v1456
      %v1458 = vsel %vm1139, %v1408, 0.0
      %v1459 = vrot.slane %v1458, 4
      %v1460 = vadd.f32 %v1458, %v1459
      %v1461 = vrot.slane %v1460, 2
      %v1462 = vadd.f32 %v1460, %v1461
      %v1463 = vrot.slane %v1462, 1
      %v1464 = vadd.f32 %v1462, %v1463
      %v1473 = vsel %vm1345, %v1422, %v1415
      %v1474 = vsel %vm1347, %v1429, %v1473
      %v1475 = vsel %vm1349, %v1436, %v1474
      %v1476 = vsel %vm1351, %v1443, %v1475
      %v1477 = vsel %vm1353, %v1450, %v1476
      %v1478 = vsel %vm1355, %v1457, %v1477
      %v1479 = vsel %vm1357, %v1464, %v1478
      %1481 = vst.msk [vmem:[%s779] sm:$0xff] %vm1139, %v1479
      %v1482 = vld [vmem:[%s11] sm:$0xf]
      %v1483 = vld [vmem:[%s11 + $0x4] sm:$0xf]
      %v1484 = vld [vmem:[%s11 + $0x8] sm:$0xf]
      %v1485 = vld [vmem:[%s11 + $0xc] sm:$0xf]
      %v1486 = vpack.c.bf16 %v1190, %v1187
      %v1487 = vpack.c.bf16 %v1198, %v1195
      %v1488 = vpack.c.bf16 %v1206, %v1203
      %v1489 = vpack.c.bf16 %v1214, %v1211
      %v1490 = vld [vmem:[%s12] sm:$0x1]
      %v1492 = vlaneseq
      %v1493 = vshrl.u32 %v1492, 7
      %v1494 = vsub.s32 0, %v1493
      %v1495 = vrot.slane %v1490, %v1494
      %v1501 = vunpack.c.l.b16 %v1482
      %v1502 = vunpack.c.l.b16 %v1483
      %v1503 = vunpack.c.l.b16 %v1484
      %v1504 = vunpack.c.l.b16 %v1485
      %v1505 = vpack.c.b16 %v1502, %v1501
      %v1506 = vpack.c.b16 %v1504, %v1503
      %v1510 = vsel %vm1139, %v1486, 0
      %v1513 = vsel %vm1139, %v1487, 0
      %v1516 = vsel %vm1139, %v1488, 0
      %v1519 = vsel %vm1139, %v1489, 0
      %1521 = vmatprep.subr.bf16.mxu0 0
      %1522 = vmatpush1.bf16.msra.mxu0 0
      %1523 = vmatprep.subr.bf16.mxu0 0
      %1524 = vmatpush1.bf16.msra.mxu0 0
      %1525 = vmatprep.subr.bf16.mxu0 0
      %1526 = vmatpush1.bf16.msra.mxu0 0
      %1527 = vmatprep.subr.bf16.mxu0 0
      %1528 = vmatpush1.bf16.msra.mxu0 0
      %1529 = vmatprep.subr.bf16.mxu0 0
      %1530 = vmatpush1.bf16.msra.mxu0 0
      %1531 = vmatprep.subr.bf16.mxu0 0
      %1532 = vmatpush1.bf16.msra.mxu0 0
      %1533 = vmatprep.subr.bf16.mxu0 0
      %1534 = vmatpush1.bf16.msra.mxu0 %v1506
      %1535 = vmatprep.subr.bf16.mxu0 0
      %1536 = vmatpush1.bf16.msra.mxu0 %v1505
      %1537 = vmatprep.subr.bf16.mxu0 0
      %1538 = vmatpush2.bf16.msra.mxu0 0
      %1539 = vmatprep.subr.bf16.mxu0 0
      %1540 = vmatpush2.bf16.msra.mxu0 0
      %1541 = vmatprep.subr.bf16.mxu0 0
      %1542 = vmatpush2.bf16.msra.mxu0 0
      %1543 = vmatprep.subr.bf16.mxu0 0
      %1544 = vmatpush2.bf16.msra.mxu0 0
      %1545 = vmatprep.subr.bf16.mxu0 0
      %1546 = vmatpush2.bf16.msra.mxu0 0
      %1547 = vmatprep.subr.bf16.mxu0 0
      %1548 = vmatpush2.bf16.msra.mxu0 0
      %1549 = vmatprep.subr.bf16.mxu0 0
      %1550 = vmatpush2.bf16.msra.mxu0 0
      %1551 = vmatprep.subr.bf16.mxu0 0
      %1552 = vmatpush2.bf16.msra.mxu0 0
      %1553 = vmatprep.mubr.bf16.mxu0 0
      %1554 = vmatmul.mubr.bf16.gmra.mxu0 %v1510
      %v1555 = vpop.f32.mrf.mxu0
      %v1556 = vadd.f32 %v1495, %v1555
      %v1557 = vpop.f32.mrf.mxu0
      %v1558 = vpop.f32.mrf.mxu0
      %v1559 = vadd.f32 %v1495, %v1558
      %v1560 = vpop.f32.mrf.mxu0
      %1561 = vmatprep.mubr.bf16.mxu0 0
      %1562 = vmatmul.mubr.bf16.gmra.mxu0 %v1513
      %v1563 = vpop.f32.mrf.mxu0
      %v1564 = vadd.f32 %v1495, %v1563
      %v1565 = vpop.f32.mrf.mxu0
      %v1566 = vpop.f32.mrf.mxu0
      %v1567 = vadd.f32 %v1495, %v1566
      %v1568 = vpop.f32.mrf.mxu0
      %1569 = vmatprep.mubr.bf16.mxu0 0
      %1570 = vmatmul.mubr.bf16.gmra.mxu0 %v1516
      %v1571 = vpop.f32.mrf.mxu0
      %v1572 = vadd.f32 %v1495, %v1571
      %v1573 = vpop.f32.mrf.mxu0
      %v1574 = vpop.f32.mrf.mxu0
      %v1575 = vadd.f32 %v1495, %v1574
      %v1576 = vpop.f32.mrf.mxu0
      %1577 = vmatprep.mubr.bf16.mxu0 0
      %1578 = vmatmul.mubr.bf16.gmra.mxu0 %v1519
      %v1579 = vpop.f32.mrf.mxu0
      %v1580 = vadd.f32 %v1495, %v1579
      %v1581 = vpop.f32.mrf.mxu0
      %v1582 = vpop.f32.mrf.mxu0
      %v1583 = vadd.f32 %v1495, %v1582
      %v1584 = vpop.f32.mrf.mxu0
      %1585 = vdwg.mxu0
      %v1586 = vxor.u32 %v1556, 2147483648
      %v1587 = vxor.u32 %v1559, 2147483648
      %v1588 = vxor.u32 %v1564, 2147483648
      %v1589 = vxor.u32 %v1567, 2147483648
      %v1590 = vxor.u32 %v1572, 2147483648
      %v1591 = vxor.u32 %v1575, 2147483648
      %v1592 = vxor.u32 %v1580, 2147483648
      %v1593 = vxor.u32 %v1583, 2147483648
      %v1594 = vmul.f32 %v1586, 1.442695
      %v1595 = vpow.pop %v1594
      %v1596 = vmul.f32 %v1587, 1.442695
      %v1597 = vpow.pop %v1596
      %v1598 = vmul.f32 %v1588, 1.442695
      %v1599 = vpow.pop %v1598
      %v1600 = vmul.f32 %v1589, 1.442695
      %v1601 = vpow.pop %v1600
      %v1602 = vmul.f32 %v1590, 1.442695
      %v1603 = vpow.pop %v1602
      %v1604 = vmul.f32 %v1591, 1.442695
      %v1605 = vpow.pop %v1604
      %v1606 = vmul.f32 %v1592, 1.442695
      %v1607 = vpow.pop %v1606
      %v1608 = vmul.f32 %v1593, 1.442695
      %v1609 = vpow.pop %v1608
      %v1610 = vadd.f32 %v1595, 1.0
      %v1611 = vadd.f32 %v1597, 1.0
      %v1612 = vadd.f32 %v1599, 1.0
      %v1613 = vadd.f32 %v1601, 1.0
      %v1614 = vadd.f32 %v1603, 1.0
      %v1615 = vadd.f32 %v1605, 1.0
      %v1616 = vadd.f32 %v1607, 1.0
      %v1617 = vadd.f32 %v1609, 1.0
      %v1618 = vrcp.pop %v1610
      %v1619 = vmul.f32 1.0, %v1618
      %v1620 = vrcp.pop %v1611
      %v1621 = vmul.f32 1.0, %v1620
      %v1622 = vrcp.pop %v1612
      %v1623 = vmul.f32 1.0, %v1622
      %v1624 = vrcp.pop %v1613
      %v1625 = vmul.f32 1.0, %v1624
      %v1626 = vrcp.pop %v1614
      %v1627 = vmul.f32 1.0, %v1626
      %v1628 = vrcp.pop %v1615
      %v1629 = vmul.f32 1.0, %v1628
      %v1630 = vrcp.pop %v1616
      %v1631 = vmul.f32 1.0, %v1630
      %v1632 = vrcp.pop %v1617
      %v1633 = vmul.f32 1.0, %v1632
      %v1634 = vmul.f32 %v1556, %v1619
      %v1635 = vmul.f32 %v1559, %v1621
      %v1636 = vmul.f32 %v1564, %v1623
      %v1637 = vmul.f32 %v1567, %v1625
      %v1638 = vmul.f32 %v1572, %v1627
      %v1639 = vmul.f32 %v1575, %v1629
      %v1640 = vmul.f32 %v1580, %v1631
      %v1641 = vmul.f32 %v1583, %v1633
      %v1642 = vld [vmem:[%s13] sm:$0xf]
      %v1643 = vld [vmem:[%s13 + $0x4] sm:$0xf]
      %v1644 = vld [vmem:[%s13 + $0x8] sm:$0xf]
      %v1645 = vld [vmem:[%s13 + $0xc] sm:$0xf]
      %v1646 = vld [vmem:[%s13 + $0x10] sm:$0xf]
      %v1647 = vld [vmem:[%s13 + $0x14] sm:$0xf]
      %v1648 = vld [vmem:[%s13 + $0x18] sm:$0xf]
      %v1649 = vld [vmem:[%s13 + $0x1c] sm:$0xf]
      %v1650 = vpack.c.bf16 %v1635, %v1634
      %v1651 = vpack.c.bf16 %v1637, %v1636
      %v1652 = vpack.c.bf16 %v1639, %v1638
      %v1653 = vpack.c.bf16 %v1641, %v1640
      %v1662 = vunpack.c.l.b16 %v1642
      %v1663 = vunpack.c.l.b16 %v1643
      %v1664 = vunpack.c.l.b16 %v1644
      %v1665 = vunpack.c.l.b16 %v1645
      %v1666 = vunpack.c.l.b16 %v1646
      %v1667 = vunpack.c.l.b16 %v1647
      %v1668 = vunpack.c.l.b16 %v1648
      %v1669 = vunpack.c.l.b16 %v1649
      %v1670 = vpack.c.b16 %v1663, %v1662
      %v1671 = vpack.c.b16 %v1665, %v1664
      %v1672 = vpack.c.b16 %v1667, %v1666
      %v1673 = vpack.c.b16 %v1669, %v1668
      %vm1678 = vcmask 523264
      %v1680 = vsel %vm1678, %v1650, 0
      %v1683 = vsel %vm1678, %v1651, 0
      %v1686 = vsel %vm1678, %v1652, 0
      %v1689 = vsel %vm1678, %v1653, 0
      %1691 = vmatprep.subr.bf16.mxu0 0
      %1692 = vmatpush1.bf16.msra.mxu0 0
      %1693 = vmatprep.subr.bf16.mxu0 0
      %1694 = vmatpush1.bf16.msra.mxu0 0
      %1695 = vmatprep.subr.bf16.mxu0 0
      %1696 = vmatpush1.bf16.msra.mxu0 0
      %1697 = vmatprep.subr.bf16.mxu0 0
      %1698 = vmatpush1.bf16.msra.mxu0 0
      %1699 = vmatprep.subr.bf16.mxu0 0
      %1700 = vmatpush1.bf16.msra.mxu0 %v1673
      %1701 = vmatprep.subr.bf16.mxu0 0
      %1702 = vmatpush1.bf16.msra.mxu0 %v1672
      %1703 = vmatprep.subr.bf16.mxu0 0
      %1704 = vmatpush1.bf16.msra.mxu0 %v1671
      %1705 = vmatprep.subr.bf16.mxu0 0
      %1706 = vmatpush1.bf16.msra.mxu0 %v1670
      %1707 = vmatprep.subr.bf16.mxu0 0
      %1708 = vmatpush2.bf16.msra.mxu0 0
      %1709 = vmatprep.subr.bf16.mxu0 0
      %1710 = vmatpush2.bf16.msra.mxu0 0
      %1711 = vmatprep.subr.bf16.mxu0 0
      %1712 = vmatpush2.bf16.msra.mxu0 0
      %1713 = vmatprep.subr.bf16.mxu0 0
      %1714 = vmatpush2.bf16.msra.mxu0 0
      %1715 = vmatprep.subr.bf16.mxu0 0
      %1716 = vmatpush2.bf16.msra.mxu0 0
      %1717 = vmatprep.subr.bf16.mxu0 0
      %1718 = vmatpush2.bf16.msra.mxu0 0
      %1719 = vmatprep.subr.bf16.mxu0 0
      %1720 = vmatpush2.bf16.msra.mxu0 0
      %1721 = vmatprep.subr.bf16.mxu0 0
      %1722 = vmatpush2.bf16.msra.mxu0 0
      %1723 = vmatprep.mubr.bf16.mxu0 0
      %1724 = vmatmul.mubr.bf16.gmra.mxu0 %v1680
      %v1725 = vpop.f32.mrf.mxu0
      %v1726 = vadd.f32 0.0, %v1725
      %v1727 = vpop.f32.mrf.mxu0
      %v1728 = vpop.f32.mrf.mxu0
      %v1729 = vadd.f32 0.0, %v1728
      %v1730 = vpop.f32.mrf.mxu0
      %1731 = vmatprep.mubr.bf16.mxu0 0
      %1732 = vmatmul.mubr.bf16.gmra.mxu0 %v1683
      %v1733 = vpop.f32.mrf.mxu0
      %v1734 = vadd.f32 0.0, %v1733
      %v1735 = vpop.f32.mrf.mxu0
      %v1736 = vpop.f32.mrf.mxu0
      %v1737 = vadd.f32 0.0, %v1736
      %v1738 = vpop.f32.mrf.mxu0
      %1739 = vmatprep.mubr.bf16.mxu0 0
      %1740 = vmatmul.mubr.bf16.gmra.mxu0 %v1686
      %v1741 = vpop.f32.mrf.mxu0
      %v1742 = vadd.f32 0.0, %v1741
      %v1743 = vpop.f32.mrf.mxu0
      %v1744 = vpop.f32.mrf.mxu0
      %v1745 = vadd.f32 0.0, %v1744
      %v1746 = vpop.f32.mrf.mxu0
      %1747 = vmatprep.mubr.bf16.mxu0 0
      %1748 = vmatmul.mubr.bf16.gmra.mxu0 %v1689
      %v1749 = vpop.f32.mrf.mxu0
      %v1750 = vadd.f32 0.0, %v1749
      %v1751 = vpop.f32.mrf.mxu0
      %v1752 = vpop.f32.mrf.mxu0
      %v1753 = vadd.f32 0.0, %v1752
      %v1754 = vpop.f32.mrf.mxu0
      %1755 = vdwg.mxu0
      %v1756 = vmul.f32 %v1726, %v1236
      %v1757 = vmul.f32 %v1729, %v1241
      %v1758 = vmul.f32 %v1734, %v1246
      %v1759 = vmul.f32 %v1737, %v1251
      %v1760 = vmul.f32 %v1742, %v1256
      %v1761 = vmul.f32 %v1745, %v1261
      %v1762 = vmul.f32 %v1750, %v1266
      %v1763 = vmul.f32 %v1753, %v1271
      %v1764 = vmul.f32 %v1726, %v1364
      %v1765 = vmul.f32 %v1729, %v1369
      %v1766 = vmul.f32 %v1734, %v1374
      %v1767 = vmul.f32 %v1737, %v1379
      %v1768 = vmul.f32 %v1742, %v1384
      %v1769 = vmul.f32 %v1745, %v1389
      %v1770 = vmul.f32 %v1750, %v1394
      %v1771 = vmul.f32 %v1753, %v1399
      %1780 = vrot.lane.b32.xlu0 %v1764, 116
      %v1781 = vpop.permute.xlu0 %1780
      %1782 = vrot.lane.b32.xlu0 %v1765, 116
      %v1783 = vpop.permute.xlu0 %1782
      %1784 = vrot.lane.b32.xlu0 %v1766, 116
      %v1785 = vpop.permute.xlu0 %1784
      %1786 = vrot.lane.b32.xlu0 %v1767, 116
      %v1787 = vpop.permute.xlu0 %1786
      %1788 = vrot.lane.b32.xlu0 %v1768, 116
      %v1789 = vpop.permute.xlu0 %1788
      %1790 = vrot.lane.b32.xlu0 %v1769, 116
      %v1791 = vpop.permute.xlu0 %1790
      %1792 = vrot.lane.b32.xlu0 %v1770, 116
      %v1793 = vpop.permute.xlu0 %1792
      %1794 = vrot.lane.b32.xlu0 %v1771, 116
      %v1795 = vpop.permute.xlu0 %1794
      %v1804 = vadd.f32 %v1756, %v1781
      %v1805 = vadd.f32 %v1757, %v1783
      %v1806 = vadd.f32 %v1758, %v1785
      %v1807 = vadd.f32 %v1759, %v1787
      %v1808 = vadd.f32 %v1760, %v1789
      %v1809 = vadd.f32 %v1761, %v1791
      %v1810 = vadd.f32 %v1762, %v1793
      %v1811 = vadd.f32 %v1763, %v1795
      %v1812 = vld [vmem:[%s744] sm:$0xff]
      %v1813 = vld [vmem:[%s744 + $0x8] sm:$0xff]
      %v1814 = vld [vmem:[%s744 + $0x10] sm:$0xff]
      %v1815 = vld [vmem:[%s744 + $0x18] sm:$0xff]
      %v1816 = vld [vmem:[%s744 + $0x20] sm:$0xff]
      %v1817 = vld [vmem:[%s744 + $0x28] sm:$0xff]
      %v1818 = vld [vmem:[%s744 + $0x30] sm:$0xff]
      %v1819 = vld [vmem:[%s744 + $0x38] sm:$0xff]
      %v1820 = vmul.f32 %v1812, %v1804
      %v1821 = vmul.f32 %v1813, %v1805
      %v1822 = vmul.f32 %v1814, %v1806
      %v1823 = vmul.f32 %v1815, %v1807
      %v1824 = vmul.f32 %v1816, %v1808
      %v1825 = vmul.f32 %v1817, %v1809
      %v1826 = vmul.f32 %v1818, %v1810
      %v1827 = vmul.f32 %v1819, %v1811
      %vm1828 = vcmask 97280
      %v1829 = vsel %vm1828, %v1820, 0.0
      %v1830 = vrot.slane %v1829, 4
      %v1831 = vadd.f32 %v1829, %v1830
      %v1832 = vrot.slane %v1831, 2
      %v1833 = vadd.f32 %v1831, %v1832
      %v1834 = vrot.slane %v1833, 1
      %v1835 = vadd.f32 %v1833, %v1834
      %v1836 = vsel %vm1828, %v1821, 0.0
      %v1837 = vrot.slane %v1836, 4
      %v1838 = vadd.f32 %v1836, %v1837
      %v1839 = vrot.slane %v1838, 2
      %v1840 = vadd.f32 %v1838, %v1839
      %v1841 = vrot.slane %v1840, 1
      %v1842 = vadd.f32 %v1840, %v1841
      %v1843 = vsel %vm1828, %v1822, 0.0
      %v1844 = vrot.slane %v1843, 4
      %v1845 = vadd.f32 %v1843, %v1844
      %v1846 = vrot.slane %v1845, 2
      %v1847 = vadd.f32 %v1845, %v1846
      %v1848 = vrot.slane %v1847, 1
      %v1849 = vadd.f32 %v1847, %v1848
      %v1850 = vsel %vm1828, %v1823, 0.0
      %v1851 = vrot.slane %v1850, 4
      %v1852 = vadd.f32 %v1850, %v1851
      %v1853 = vrot.slane %v1852, 2
      %v1854 = vadd.f32 %v1852, %v1853
      %v1855 = vrot.slane %v1854, 1
      %v1856 = vadd.f32 %v1854, %v1855
      %v1857 = vsel %vm1828, %v1824, 0.0
      %v1858 = vrot.slane %v1857, 4
      %v1859 = vadd.f32 %v1857, %v1858
      %v1860 = vrot.slane %v1859, 2
      %v1861 = vadd.f32 %v1859, %v1860
      %v1862 = vrot.slane %v1861, 1
      %v1863 = vadd.f32 %v1861, %v1862
      %v1864 = vsel %vm1828, %v1825, 0.0
      %v1865 = vrot.slane %v1864, 4
      %v1866 = vadd.f32 %v1864, %v1865
      %v1867 = vrot.slane %v1866, 2
      %v1868 = vadd.f32 %v1866, %v1867
      %v1869 = vrot.slane %v1868, 1
      %v1870 = vadd.f32 %v1868, %v1869
      %v1871 = vsel %vm1828, %v1826, 0.0
      %v1872 = vrot.slane %v1871, 4
      %v1873 = vadd.f32 %v1871, %v1872
      %v1874 = vrot.slane %v1873, 2
      %v1875 = vadd.f32 %v1873, %v1874
      %v1876 = vrot.slane %v1875, 1
      %v1877 = vadd.f32 %v1875, %v1876
      %v1878 = vsel %vm1828, %v1827, 0.0
      %v1879 = vrot.slane %v1878, 4
      %v1880 = vadd.f32 %v1878, %v1879
      %v1881 = vrot.slane %v1880, 2
      %v1882 = vadd.f32 %v1880, %v1881
      %v1883 = vrot.slane %v1882, 1
      %v1884 = vadd.f32 %v1882, %v1883
      %v1885 = vmax.f32 %v1217, %v1225
      %v1886 = vmax.f32 %v1218, %v1226
      %v1887 = vmax.f32 %v1219, %v1227
      %v1888 = vmax.f32 %v1220, %v1228
      %v1889 = vmax.f32 %v1221, %v1229
      %v1890 = vmax.f32 %v1222, %v1230
      %v1891 = vmax.f32 %v1223, %v1231
      %v1892 = vmax.f32 %v1224, %v1232
      %v1893 = vadd.f32 %v1885, 1e-06
      %v1894 = vadd.f32 %v1886, 1e-06
      %v1895 = vadd.f32 %v1887, 1e-06
      %v1896 = vadd.f32 %v1888, 1e-06
      %v1897 = vadd.f32 %v1889, 1e-06
      %v1898 = vadd.f32 %v1890, 1e-06
      %v1899 = vadd.f32 %v1891, 1e-06
      %v1900 = vadd.f32 %v1892, 1e-06
      %vm1901 = vcmask 7168
      %v1902 = vsel %vm1901, %v1893, 0.0
      %v1903 = vrot.slane %v1902, 4
      %v1904 = vadd.f32 %v1902, %v1903
      %v1905 = vrot.slane %v1904, 2
      %v1906 = vadd.f32 %v1904, %v1905
      %v1907 = vrot.slane %v1906, 1
      %v1908 = vadd.f32 %v1906, %v1907
      %v1909 = vsel %vm1901, %v1894, 0.0
      %v1910 = vrot.slane %v1909, 4
      %v1911 = vadd.f32 %v1909, %v1910
      %v1912 = vrot.slane %v1911, 2
      %v1913 = vadd.f32 %v1911, %v1912
      %v1914 = vrot.slane %v1913, 1
      %v1915 = vadd.f32 %v1913, %v1914
      %v1916 = vsel %vm1901, %v1895, 0.0
      %v1917 = vrot.slane %v1916, 4
      %v1918 = vadd.f32 %v1916, %v1917
      %v1919 = vrot.slane %v1918, 2
      %v1920 = vadd.f32 %v1918, %v1919
      %v1921 = vrot.slane %v1920, 1
      %v1922 = vadd.f32 %v1920, %v1921
      %v1923 = vsel %vm1901, %v1896, 0.0
      %v1924 = vrot.slane %v1923, 4
      %v1925 = vadd.f32 %v1923, %v1924
      %v1926 = vrot.slane %v1925, 2
      %v1927 = vadd.f32 %v1925, %v1926
      %v1928 = vrot.slane %v1927, 1
      %v1929 = vadd.f32 %v1927, %v1928
      %v1930 = vsel %vm1901, %v1897, 0.0
      %v1931 = vrot.slane %v1930, 4
      %v1932 = vadd.f32 %v1930, %v1931
      %v1933 = vrot.slane %v1932, 2
      %v1934 = vadd.f32 %v1932, %v1933
      %v1935 = vrot.slane %v1934, 1
      %v1936 = vadd.f32 %v1934, %v1935
      %v1937 = vsel %vm1901, %v1898, 0.0
      %v1938 = vrot.slane %v1937, 4
      %v1939 = vadd.f32 %v1937, %v1938
      %v1940 = vrot.slane %v1939, 2
      %v1941 = vadd.f32 %v1939, %v1940
      %v1942 = vrot.slane %v1941, 1
      %v1943 = vadd.f32 %v1941, %v1942
      %v1944 = vsel %vm1901, %v1899, 0.0
      %v1945 = vrot.slane %v1944, 4
      %v1946 = vadd.f32 %v1944, %v1945
      %v1947 = vrot.slane %v1946, 2
      %v1948 = vadd.f32 %v1946, %v1947
      %v1949 = vrot.slane %v1948, 1
      %v1950 = vadd.f32 %v1948, %v1949
      %v1951 = vsel %vm1901, %v1900, 0.0
      %v1952 = vrot.slane %v1951, 4
      %v1953 = vadd.f32 %v1951, %v1952
      %v1954 = vrot.slane %v1953, 2
      %v1955 = vadd.f32 %v1953, %v1954
      %v1956 = vrot.slane %v1955, 1
      %v1957 = vadd.f32 %v1955, %v1956
      %1959 = vset.pattern.permute.xlu0 0
      %1960 = vperm.xlu0 %1959, %v1908
      %v1961 = vpop.permute.xlu0 %1960
      %1964 = vset.pattern.permute.xlu0 0
      %1965 = vperm.xlu0 %1964, %v1915
      %v1966 = vpop.permute.xlu0 %1965
      %1969 = vset.pattern.permute.xlu0 0
      %1970 = vperm.xlu0 %1969, %v1922
      %v1971 = vpop.permute.xlu0 %1970
      %1974 = vset.pattern.permute.xlu0 0
      %1975 = vperm.xlu0 %1974, %v1929
      %v1976 = vpop.permute.xlu0 %1975
      %1979 = vset.pattern.permute.xlu0 0
      %1980 = vperm.xlu0 %1979, %v1936
      %v1981 = vpop.permute.xlu0 %1980
      %1984 = vset.pattern.permute.xlu0 0
      %1985 = vperm.xlu0 %1984, %v1943
      %v1986 = vpop.permute.xlu0 %1985
      %1989 = vset.pattern.permute.xlu0 0
      %1990 = vperm.xlu0 %1989, %v1950
      %v1991 = vpop.permute.xlu0 %1990
      %1994 = vset.pattern.permute.xlu0 0
      %1995 = vperm.xlu0 %1994, %v1957
      %v1996 = vpop.permute.xlu0 %1995
      %v1998 = vrcp.pop %v1961
      %v1999 = vmul.f32 %v1835, %v1998
      %v2000 = vrcp.pop %v1966
      %v2001 = vmul.f32 %v1842, %v2000
      %v2002 = vrcp.pop %v1971
      %v2003 = vmul.f32 %v1849, %v2002
      %v2004 = vrcp.pop %v1976
      %v2005 = vmul.f32 %v1856, %v2004
      %v2006 = vrcp.pop %v1981
      %v2007 = vmul.f32 %v1863, %v2006
      %v2008 = vrcp.pop %v1986
      %v2009 = vmul.f32 %v1870, %v2008
      %v2010 = vrcp.pop %v1991
      %v2011 = vmul.f32 %v1877, %v2010
      %v2012 = vrcp.pop %v1996
      %v2013 = vmul.f32 %v1884, %v2012
      %v2022 = vsel %vm1345, %v2001, %v1999
      %v2023 = vsel %vm1347, %v2003, %v2022
      %v2024 = vsel %vm1349, %v2005, %v2023
      %v2025 = vsel %vm1351, %v2007, %v2024
      %v2026 = vsel %vm1353, %v2009, %v2025
      %v2027 = vsel %vm1355, %v2011, %v2026
      %v2028 = vsel %vm1357, %v2013, %v2027
      %2030 = vst.msk [vmem:[%s786] sm:$0xff] %vm1828, %v2028
      %p2031 = scmp.lt.s32.totalorder %s32, 1
      %s2032 = scalar_select %p2031, %s32, 1
      %p2033 = scmp.lt.s32.totalorder %s33, 0
      %s2034 = scalar_select %p2033, %s33, 0
      %s2035 = sadd.s32 %s2034, %s2032
      %s2036 = smul.addr %s2035, 8
      %s2037 = scalar_lea.vmem %s14, %s2036
      %p2038 = scmp.lt.s32.totalorder %s32, 1
      %s2039 = scalar_select %p2038, %s32, 1
      %p2040 = scmp.lt.s32.totalorder %s33, 0
      %s2041 = scalar_select %p2040, %s33, 0
      %s2042 = sadd.s32 %s2041, %s2039
      %s2043 = smul.addr %s2042, 8
      %s2044 = scalar_lea.vmem %s15, %s2043
      %p2045 = scmp.lt.s32.totalorder %s32, 1
      %s2046 = scalar_select %p2045, %s32, 1
      %p2047 = scmp.lt.s32.totalorder %s33, 0
      %s2048 = scalar_select %p2047, %s33, 0
      %s2049 = sadd.s32 %s2048, %s2046
      %s2050 = smul.addr %s2049, 8
      %s2051 = scalar_lea.vmem %s16, %s2050
      // Predicated region
      $region77: #{gadecoder_forward.9} parent=75 // pred_check
        %p2052 = pneg %p401
      $region78: #{gadecoder_forward.9} parent=75 // pred_check_branch
        %2054 = sbr.rel (%p2052) target = $region80
      $region79: #{gadecoder_forward.9} parent=75 // pred_region
        _
      $region80: #{gadecoder_forward.9} parent=75 // pred_fallthru
        _
      // Predicated region
      $region81: #{gadecoder_forward.9} parent=75 // pred_check
        %p2055 = pneg %p429
      $region82: #{gadecoder_forward.9} parent=75 // pred_check_branch
        %2057 = sbr.rel (%p2055) target = $region84
      $region83: #{gadecoder_forward.9} parent=75 // pred_region
        _
      $region84: #{gadecoder_forward.9} parent=75 // pred_fallthru
        _
      // Predicated region
      $region85: #{gadecoder_forward.9} parent=75 // pred_check
        %p2058 = pneg %p457
      $region86: #{gadecoder_forward.9} parent=75 // pred_check_branch
        %2060 = sbr.rel (%p2058) target = $region88
      $region87: #{gadecoder_forward.9} parent=75 // pred_region
        _
      $region88: #{gadecoder_forward.9} parent=75 // pred_fallthru
        _
    $region76: #{gadecoder_forward.9} parent=5 // pred_fallthru
      _
    %p2061 = scmp.le.s32.totalorder 2, %s23
    // Predicated region
    $region89: #{gadecoder_forward.9} parent=5 // pred_check
      %p2062 = pneg %p2061
    $region90: #{gadecoder_forward.9} parent=5 // pred_check_branch
      %2064 = sbr.rel (%p2062) target = $region92
    $region91: #{gadecoder_forward.9} parent=5 // pred_region
      %s2065 = ssub.s32 %s23, 2
      // Predicated region
      $region93: #{gadecoder_forward.9} parent=91 // pred_check
        %p2066 = pneg %p407
      $region94: #{gadecoder_forward.9} parent=91 // pred_check_branch
        %2068 = sbr.rel (%p2066) target = $region96
      $region95: #{gadecoder_forward.9} parent=91 // pred_region
        %p2069 = scmp.lt.s32.totalorder %s34, 1
        %s2070 = scalar_select %p2069, %s34, 1
        %p2071 = scmp.lt.s32.totalorder %s35, 0
        %s2072 = scalar_select %p2071, %s35, 0
        %s2073 = sadd.s32 %s2072, %s2070
        %s2074 = smul.addr %s2073, 8
        %s2075 = scalar_lea.vmem %s14, %s2074
      $region96: #{gadecoder_forward.9} parent=91 // pred_fallthru
        _
      // Predicated region
      $region97: #{gadecoder_forward.9} parent=91 // pred_check
        %p2076 = pneg %p435
      $region98: #{gadecoder_forward.9} parent=91 // pred_check_branch
        %2078 = sbr.rel (%p2076) target = $region100
      $region99: #{gadecoder_forward.9} parent=91 // pred_region
        %p2079 = scmp.lt.s32.totalorder %s34, 1
        %s2080 = scalar_select %p2079, %s34, 1
        %p2081 = scmp.lt.s32.totalorder %s35, 0
        %s2082 = scalar_select %p2081, %s35, 0
        %s2083 = sadd.s32 %s2082, %s2080
        %s2084 = smul.addr %s2083, 8
        %s2085 = scalar_lea.vmem %s15, %s2084
      $region100: #{gadecoder_forward.9} parent=91 // pred_fallthru
        _
      // Predicated region
      $region101: #{gadecoder_forward.9} parent=91 // pred_check
        %p2086 = pneg %p463
      $region102: #{gadecoder_forward.9} parent=91 // pred_check_branch
        %2088 = sbr.rel (%p2086) target = $region104
      $region103: #{gadecoder_forward.9} parent=91 // pred_region
        %p2089 = scmp.lt.s32.totalorder %s34, 1
        %s2090 = scalar_select %p2089, %s34, 1
        %p2091 = scmp.lt.s32.totalorder %s35, 0
        %s2092 = scalar_select %p2091, %s35, 0
        %s2093 = sadd.s32 %s2092, %s2090
        %s2094 = smul.addr %s2093, 8
        %s2095 = scalar_lea.vmem %s16, %s2094
      $region104: #{gadecoder_forward.9} parent=91 // pred_fallthru
        _
    $region92: #{gadecoder_forward.9} parent=5 // pred_fallthru
      _
  $region6: #{gadecoder_forward.9} parent=0 // loop_footer
    %s27 = sadd.s32 1, %s23
  $region7: #{gadecoder_forward.9} parent=0 // loop_footer_branch
    %22 = sbr.rel target = $region3
  $region8: #{gadecoder_forward.9} parent=0 // loop_exit
    _

// kernel: gadecoder_forward.10
$region0: #{gadecoder_forward.10}
  #allocation0 [shape = 'u32[]', space=smem, size = 0x4, offset = 0x4, fixed_abs, tag = 'smem constant byte address 0x4 - core index']
  #allocation1 [shape = 'u32[144,128]{1,0:T(1,128)}', space=vmem, size = 0x12000, scoped, tag = 'internal scratch']
  %s0 = inlined_call_operand.vmem [shape: f32[16,32], index: 0, kind: input, shape index: {}]
  %s1 = inlined_call_operand.vmem [shape: f32[16,32], index: 1, kind: input, shape index: {}]
  %s2 = inlined_call_operand.vmem [shape: f32[16,32], index: 2, kind: input, shape index: {}]
  %s3 = inlined_call_operand.vmem [shape: bf16[32,32], index: 3, kind: input, shape index: {}]
  %s4 = inlined_call_operand.vmem [shape: bf16[32,32], index: 4, kind: input, shape index: {}]
  %s5 = inlined_call_operand.vmem [shape: bf16[32,32], index: 5, kind: input, shape index: {}]
  %s6 = inlined_call_operand.vmem [shape: f32[1,32], index: 6, kind: input, shape index: {}]
  %s7 = inlined_call_operand.vmem [shape: bf16[32,32], index: 7, kind: input, shape index: {}]
  %s8 = inlined_call_operand.vmem [shape: f32[1,32], index: 8, kind: input, shape index: {}]
  %s9 = inlined_call_operand.vmem [shape: f32[1,32], index: 9, kind: input, shape index: {}]
  %s10 = inlined_call_operand.vmem [shape: f32[1,32], index: 10, kind: input, shape index: {}]
  %s11 = inlined_call_operand.vmem [shape: bf16[32,64], index: 11, kind: input, shape index: {}]
  %s12 = inlined_call_operand.vmem [shape: f32[1,64], index: 12, kind: input, shape index: {}]
  %s13 = inlined_call_operand.vmem [shape: f32[16,32], index: 13, kind: output, shape index: {0}]
  %s14 = inlined_call_operand.vmem [shape: f32[16,64], index: 14, kind: output, shape index: {1}]
  %15 = xla_tuple %s13, %s14
  %s16 = sld [smem:[#allocation0]]
  $region70: #{gadecoder_forward.10} parent=0
    _
  %s18 = ssub.s32 1, %s16
  %s19 = scalar_select 0, %s18, %s16
  // Predicated region
  $region2: #{gadecoder_forward.10} parent=0 // pred_check
    _
  $region3: #{gadecoder_forward.10} parent=0 // pred_check_branch
    %21 = sbr.rel (0) target = $region5
  $region4: #{gadecoder_forward.10} parent=0 // pred_region
    _
  $region5: #{gadecoder_forward.10} parent=0 // pred_fallthru
    _
  // Predicated region
  $region6: #{gadecoder_forward.10} parent=0 // pred_check
    _
  $region7: #{gadecoder_forward.10} parent=0 // pred_check_branch
    %23 = sbr.rel (0) target = $region9
  $region8: #{gadecoder_forward.10} parent=0 // pred_region
    _
  $region9: #{gadecoder_forward.10} parent=0 // pred_fallthru
    _
  // Predicated region
  $region10: #{gadecoder_forward.10} parent=0 // pred_check
    _
  $region11: #{gadecoder_forward.10} parent=0 // pred_check_branch
    %25 = sbr.rel (0) target = $region13
  $region12: #{gadecoder_forward.10} parent=0 // pred_region
    _
  $region13: #{gadecoder_forward.10} parent=0 // pred_fallthru
    _
  // Predicated region
  $region14: #{gadecoder_forward.10} parent=0 // pred_check
    _
  $region15: #{gadecoder_forward.10} parent=0 // pred_check_branch
    %27 = sbr.rel (0) target = $region17
  $region16: #{gadecoder_forward.10} parent=0 // pred_region
    _
  $region17: #{gadecoder_forward.10} parent=0 // pred_fallthru
    _
  // Predicated region
  $region18: #{gadecoder_forward.10} parent=0 // pred_check
    _
  $region19: #{gadecoder_forward.10} parent=0 // pred_check_branch
    %29 = sbr.rel (0) target = $region21
  $region20: #{gadecoder_forward.10} parent=0 // pred_region
    _
  $region21: #{gadecoder_forward.10} parent=0 // pred_fallthru
    _
  // Predicated region
  $region22: #{gadecoder_forward.10} parent=0 // pred_check
    _
  $region23: #{gadecoder_forward.10} parent=0 // pred_check_branch
    %31 = sbr.rel (0) target = $region25
  $region24: #{gadecoder_forward.10} parent=0 // pred_region
    _
  $region25: #{gadecoder_forward.10} parent=0 // pred_fallthru
    _
  // Predicated region
  $region26: #{gadecoder_forward.10} parent=0 // pred_check
    _
  $region27: #{gadecoder_forward.10} parent=0 // pred_check_branch
    %33 = sbr.rel (0) target = $region29
  $region28: #{gadecoder_forward.10} parent=0 // pred_region
    _
  $region29: #{gadecoder_forward.10} parent=0 // pred_fallthru
    _
  // Predicated region
  $region30: #{gadecoder_forward.10} parent=0 // pred_check
    _
  $region31: #{gadecoder_forward.10} parent=0 // pred_check_branch
    %35 = sbr.rel (0) target = $region33
  $region32: #{gadecoder_forward.10} parent=0 // pred_region
    _
  $region33: #{gadecoder_forward.10} parent=0 // pred_fallthru
    _
  // Predicated region
  $region34: #{gadecoder_forward.10} parent=0 // pred_check
    _
  $region35: #{gadecoder_forward.10} parent=0 // pred_check_branch
    %37 = sbr.rel (0) target = $region37
  $region36: #{gadecoder_forward.10} parent=0 // pred_region
    _
  $region37: #{gadecoder_forward.10} parent=0 // pred_fallthru
    _
  // Predicated region
  $region38: #{gadecoder_forward.10} parent=0 // pred_check
    _
  $region39: #{gadecoder_forward.10} parent=0 // pred_check_branch
    %39 = sbr.rel (0) target = $region41
  $region40: #{gadecoder_forward.10} parent=0 // pred_region
    _
  $region41: #{gadecoder_forward.10} parent=0 // pred_fallthru
    _
  // Predicated region
  $region42: #{gadecoder_forward.10} parent=0 // pred_check
    _
  $region43: #{gadecoder_forward.10} parent=0 // pred_check_branch
    %41 = sbr.rel (0) target = $region45
  $region44: #{gadecoder_forward.10} parent=0 // pred_region
    _
  $region45: #{gadecoder_forward.10} parent=0 // pred_fallthru
    _
  // Predicated region
  $region46: #{gadecoder_forward.10} parent=0 // pred_check
    _
  $region47: #{gadecoder_forward.10} parent=0 // pred_check_branch
    %43 = sbr.rel (0) target = $region49
  $region48: #{gadecoder_forward.10} parent=0 // pred_region
    _
  $region49: #{gadecoder_forward.10} parent=0 // pred_fallthru
    _
  // Predicated region
  $region50: #{gadecoder_forward.10} parent=0 // pred_check
    _
  $region51: #{gadecoder_forward.10} parent=0 // pred_check_branch
    %45 = sbr.rel (0) target = $region53
  $region52: #{gadecoder_forward.10} parent=0 // pred_region
    _
  $region53: #{gadecoder_forward.10} parent=0 // pred_fallthru
    _
  %v47 = vld [vmem:[%s0] sm:$0xff]
  %v48 = vld [vmem:[%s0 + $0x8] sm:$0xff]
  %v49 = vld [vmem:[%s3] sm:$0xf]
  %v50 = vld [vmem:[%s3 + $0x4] sm:$0xf]
  %v51 = vld [vmem:[%s3 + $0x8] sm:$0xf]
  %v52 = vld [vmem:[%s3 + $0xc] sm:$0xf]
  %v53 = vpack.c.bf16 %v48, %v47
  %v54 = vld [vmem:[%s1] sm:$0xff]
  %v55 = vld [vmem:[%s1 + $0x8] sm:$0xff]
  %v56 = vld [vmem:[%s4] sm:$0xf]
  %v57 = vld [vmem:[%s4 + $0x4] sm:$0xf]
  %v58 = vld [vmem:[%s4 + $0x8] sm:$0xf]
  %v59 = vld [vmem:[%s4 + $0xc] sm:$0xf]
  %v60 = vpack.c.bf16 %v55, %v54
  %v65 = vunpack.c.l.b16 %v56
  %v66 = vunpack.c.l.b16 %v57
  %v67 = vunpack.c.l.b16 %v58
  %v68 = vunpack.c.l.b16 %v59
  %v69 = vpack.c.b16 %v66, %v65
  %v70 = vpack.c.b16 %v68, %v67
  %vm73 = vcmask 261120
  %v75 = vsel %vm73, %v60, 0
  %77 = vmatprep.subr.bf16.mxu0 0
  %78 = vmatpush1.bf16.msra.mxu0 0
  %79 = vmatprep.subr.bf16.mxu0 0
  %80 = vmatpush1.bf16.msra.mxu0 0
  %81 = vmatprep.subr.bf16.mxu0 0
  %82 = vmatpush1.bf16.msra.mxu0 0
  %83 = vmatprep.subr.bf16.mxu0 0
  %84 = vmatpush1.bf16.msra.mxu0 0
  %85 = vmatprep.subr.bf16.mxu0 0
  %86 = vmatpush1.bf16.msra.mxu0 0
  %87 = vmatprep.subr.bf16.mxu0 0
  %88 = vmatpush1.bf16.msra.mxu0 0
  %89 = vmatprep.subr.bf16.mxu0 0
  %90 = vmatpush1.bf16.msra.mxu0 %v70
  %91 = vmatprep.subr.bf16.mxu0 0
  %92 = vmatpush1.bf16.msra.mxu0 %v69
  %93 = vmatprep.subr.bf16.mxu0 0
  %94 = vmatpush2.bf16.msra.mxu0 0
  %95 = vmatprep.subr.bf16.mxu0 0
  %96 = vmatpush2.bf16.msra.mxu0 0
  %97 = vmatprep.subr.bf16.mxu0 0
  %98 = vmatpush2.bf16.msra.mxu0 0
  %99 = vmatprep.subr.bf16.mxu0 0
  %100 = vmatpush2.bf16.msra.mxu0 0
  %101 = vmatprep.subr.bf16.mxu0 0
  %102 = vmatpush2.bf16.msra.mxu0 0
  %103 = vmatprep.subr.bf16.mxu0 0
  %104 = vmatpush2.bf16.msra.mxu0 0
  %105 = vmatprep.subr.bf16.mxu0 0
  %106 = vmatpush2.bf16.msra.mxu0 0
  %107 = vmatprep.subr.bf16.mxu0 0
  %108 = vmatpush2.bf16.msra.mxu0 0
  %109 = vmatprep.mubr.bf16.mxu0 0
  %110 = vmatmul.mubr.bf16.gmra.mxu0 %v75
  %v111 = vpop.f32.mrf.mxu0
  %v112 = vadd.f32 0.0, %v111
  %v113 = vpop.f32.mrf.mxu0
  %v114 = vpop.f32.mrf.mxu0
  %v115 = vadd.f32 0.0, %v114
  %v116 = vpop.f32.mrf.mxu0
  %117 = vdwg.mxu0
  %v122 = vunpack.c.l.b16 %v49
  %v123 = vunpack.c.l.b16 %v50
  %v124 = vunpack.c.l.b16 %v51
  %v125 = vunpack.c.l.b16 %v52
  %v126 = vpack.c.b16 %v123, %v122
  %v127 = vpack.c.b16 %v125, %v124
  %v131 = vsel %vm73, %v53, 0
  %133 = vmatprep.subr.bf16.mxu0 0
  %134 = vmatpush1.bf16.msra.mxu0 0
  %135 = vmatprep.subr.bf16.mxu0 0
  %136 = vmatpush1.bf16.msra.mxu0 0
  %137 = vmatprep.subr.bf16.mxu0 0
  %138 = vmatpush1.bf16.msra.mxu0 0
  %139 = vmatprep.subr.bf16.mxu0 0
  %140 = vmatpush1.bf16.msra.mxu0 0
  %141 = vmatprep.subr.bf16.mxu0 0
  %142 = vmatpush1.bf16.msra.mxu0 0
  %143 = vmatprep.subr.bf16.mxu0 0
  %144 = vmatpush1.bf16.msra.mxu0 0
  %145 = vmatprep.subr.bf16.mxu0 0
  %146 = vmatpush1.bf16.msra.mxu0 %v127
  %147 = vmatprep.subr.bf16.mxu0 0
  %148 = vmatpush1.bf16.msra.mxu0 %v126
  %149 = vmatprep.subr.bf16.mxu0 0
  %150 = vmatpush2.bf16.msra.mxu0 0
  %151 = vmatprep.subr.bf16.mxu0 0
  %152 = vmatpush2.bf16.msra.mxu0 0
  %153 = vmatprep.subr.bf16.mxu0 0
  %154 = vmatpush2.bf16.msra.mxu0 0
  %155 = vmatprep.subr.bf16.mxu0 0
  %156 = vmatpush2.bf16.msra.mxu0 0
  %157 = vmatprep.subr.bf16.mxu0 0
  %158 = vmatpush2.bf16.msra.mxu0 0
  %159 = vmatprep.subr.bf16.mxu0 0
  %160 = vmatpush2.bf16.msra.mxu0 0
  %161 = vmatprep.subr.bf16.mxu0 0
  %162 = vmatpush2.bf16.msra.mxu0 0
  %163 = vmatprep.subr.bf16.mxu0 0
  %164 = vmatpush2.bf16.msra.mxu0 0
  %165 = vmatprep.mubr.bf16.mxu0 0
  %166 = vmatmul.mubr.bf16.gmra.mxu0 %v131
  %v167 = vpop.f32.mrf.mxu0
  %v168 = vadd.f32 %v112, %v167
  %v169 = vpop.f32.mrf.mxu0
  %v170 = vpop.f32.mrf.mxu0
  %v171 = vadd.f32 %v115, %v170
  %v172 = vpop.f32.mrf.mxu0
  %173 = vdwg.mxu0
  %v174 = vld [vmem:[%s2] sm:$0xff]
  %v175 = vld [vmem:[%s2 + $0x8] sm:$0xff]
  %v176 = vld [vmem:[%s5] sm:$0xf]
  %v177 = vld [vmem:[%s5 + $0x4] sm:$0xf]
  %v178 = vld [vmem:[%s5 + $0x8] sm:$0xf]
  %v179 = vld [vmem:[%s5 + $0xc] sm:$0xf]
  %v180 = vpack.c.bf16 %v175, %v174
  %v185 = vunpack.c.l.b16 %v176
  %v186 = vunpack.c.l.b16 %v177
  %v187 = vunpack.c.l.b16 %v178
  %v188 = vunpack.c.l.b16 %v179
  %v189 = vpack.c.b16 %v186, %v185
  %v190 = vpack.c.b16 %v188, %v187
  %v194 = vsel %vm73, %v180, 0
  %196 = vmatprep.subr.bf16.mxu0 0
  %197 = vmatpush1.bf16.msra.mxu0 0
  %198 = vmatprep.subr.bf16.mxu0 0
  %199 = vmatpush1.bf16.msra.mxu0 0
  %200 = vmatprep.subr.bf16.mxu0 0
  %201 = vmatpush1.bf16.msra.mxu0 0
  %202 = vmatprep.subr.bf16.mxu0 0
  %203 = vmatpush1.bf16.msra.mxu0 0
  %204 = vmatprep.subr.bf16.mxu0 0
  %205 = vmatpush1.bf16.msra.mxu0 0
  %206 = vmatprep.subr.bf16.mxu0 0
  %207 = vmatpush1.bf16.msra.mxu0 0
  %208 = vmatprep.subr.bf16.mxu0 0
  %209 = vmatpush1.bf16.msra.mxu0 %v190
  %210 = vmatprep.subr.bf16.mxu0 0
  %211 = vmatpush1.bf16.msra.mxu0 %v189
  %212 = vmatprep.subr.bf16.mxu0 0
  %213 = vmatpush2.bf16.msra.mxu0 0
  %214 = vmatprep.subr.bf16.mxu0 0
  %215 = vmatpush2.bf16.msra.mxu0 0
  %216 = vmatprep.subr.bf16.mxu0 0
  %217 = vmatpush2.bf16.msra.mxu0 0
  %218 = vmatprep.subr.bf16.mxu0 0
  %219 = vmatpush2.bf16.msra.mxu0 0
  %220 = vmatprep.subr.bf16.mxu0 0
  %221 = vmatpush2.bf16.msra.mxu0 0
  %222 = vmatprep.subr.bf16.mxu0 0
  %223 = vmatpush2.bf16.msra.mxu0 0
  %224 = vmatprep.subr.bf16.mxu0 0
  %225 = vmatpush2.bf16.msra.mxu0 0
  %226 = vmatprep.subr.bf16.mxu0 0
  %227 = vmatpush2.bf16.msra.mxu0 0
  %228 = vmatprep.mubr.bf16.mxu0 0
  %229 = vmatmul.mubr.bf16.gmra.mxu0 %v194
  %v230 = vpop.f32.mrf.mxu0
  %v231 = vadd.f32 0.0, %v230
  %v232 = vpop.f32.mrf.mxu0
  %v233 = vpop.f32.mrf.mxu0
  %v234 = vadd.f32 0.0, %v233
  %v235 = vpop.f32.mrf.mxu0
  %236 = vdwg.mxu0
  %v237 = vadd.f32 %v168, %v231
  %v238 = vadd.f32 %v171, %v234
  %v239 = vld [vmem:[%s6] sm:$0x1]
  %v241 = vlaneseq
  %v242 = vshrl.u32 %v241, 7
  %v243 = vsub.s32 0, %v242
  %v244 = vrot.slane %v239, %v243
  %v246 = vadd.f32 %v237, %v244
  %v247 = vadd.f32 %v238, %v244
  %v248 = vxor.u32 %v246, 2147483648
  %v249 = vxor.u32 %v247, 2147483648
  %v250 = vmul.f32 %v248, 1.442695
  %v251 = vpow.pop %v250
  %v252 = vmul.f32 %v249, 1.442695
  %v253 = vpow.pop %v252
  %v254 = vadd.f32 %v251, 1.0
  %v255 = vadd.f32 %v253, 1.0
  %v256 = vrcp.pop %v254
  %v257 = vmul.f32 1.0, %v256
  %v258 = vrcp.pop %v255
  %v259 = vmul.f32 1.0, %v258
  %v260 = vmul.f32 %v246, %v257
  %v261 = vmul.f32 %v247, %v259
  %v262 = vld [vmem:[%s7] sm:$0xf]
  %v263 = vld [vmem:[%s7 + $0x4] sm:$0xf]
  %v264 = vld [vmem:[%s7 + $0x8] sm:$0xf]
  %v265 = vld [vmem:[%s7 + $0xc] sm:$0xf]
  %v266 = vpack.c.bf16 %v261, %v260
  %v267 = vld [vmem:[%s8] sm:$0x1]
  %v269 = vlaneseq
  %v270 = vshrl.u32 %v269, 7
  %v271 = vsub.s32 0, %v270
  %v272 = vrot.slane %v267, %v271
  %v278 = vunpack.c.l.b16 %v262
  %v279 = vunpack.c.l.b16 %v263
  %v280 = vunpack.c.l.b16 %v264
  %v281 = vunpack.c.l.b16 %v265
  %v282 = vpack.c.b16 %v279, %v278
  %v283 = vpack.c.b16 %v281, %v280
  %v287 = vsel %vm73, %v266, 0
  %289 = vmatprep.subr.bf16.mxu0 0
  %290 = vmatpush1.bf16.msra.mxu0 0
  %291 = vmatprep.subr.bf16.mxu0 0
  %292 = vmatpush1.bf16.msra.mxu0 0
  %293 = vmatprep.subr.bf16.mxu0 0
  %294 = vmatpush1.bf16.msra.mxu0 0
  %295 = vmatprep.subr.bf16.mxu0 0
  %296 = vmatpush1.bf16.msra.mxu0 0
  %297 = vmatprep.subr.bf16.mxu0 0
  %298 = vmatpush1.bf16.msra.mxu0 0
  %299 = vmatprep.subr.bf16.mxu0 0
  %300 = vmatpush1.bf16.msra.mxu0 0
  %301 = vmatprep.subr.bf16.mxu0 0
  %302 = vmatpush1.bf16.msra.mxu0 %v283
  %303 = vmatprep.subr.bf16.mxu0 0
  %304 = vmatpush1.bf16.msra.mxu0 %v282
  %305 = vmatprep.subr.bf16.mxu0 0
  %306 = vmatpush2.bf16.msra.mxu0 0
  %307 = vmatprep.subr.bf16.mxu0 0
  %308 = vmatpush2.bf16.msra.mxu0 0
  %309 = vmatprep.subr.bf16.mxu0 0
  %310 = vmatpush2.bf16.msra.mxu0 0
  %311 = vmatprep.subr.bf16.mxu0 0
  %312 = vmatpush2.bf16.msra.mxu0 0
  %313 = vmatprep.subr.bf16.mxu0 0
  %314 = vmatpush2.bf16.msra.mxu0 0
  %315 = vmatprep.subr.bf16.mxu0 0
  %316 = vmatpush2.bf16.msra.mxu0 0
  %317 = vmatprep.subr.bf16.mxu0 0
  %318 = vmatpush2.bf16.msra.mxu0 0
  %319 = vmatprep.subr.bf16.mxu0 0
  %320 = vmatpush2.bf16.msra.mxu0 0
  %321 = vmatprep.mubr.bf16.mxu0 0
  %322 = vmatmul.mubr.bf16.gmra.mxu0 %v287
  %v323 = vpop.f32.mrf.mxu0
  %v324 = vadd.f32 %v272, %v323
  %v325 = vpop.f32.mrf.mxu0
  %v326 = vpop.f32.mrf.mxu0
  %v327 = vadd.f32 %v272, %v326
  %v328 = vpop.f32.mrf.mxu0
  %329 = vdwg.mxu0
  %v330 = vadd.f32 %v47, %v324
  %v331 = vadd.f32 %v48, %v327
  %v332 = vsel %vm73, %v330, 0.0
  %333 = vadd.xlane.f32.xlu0 %v332
  %v334 = vpop.xlane.xlu0 %333
  %v335 = vsel %vm73, %v331, 0.0
  %336 = vadd.xlane.f32.xlu0 %v335
  %v337 = vpop.xlane.xlu0 %336
  %v338 = vrcp.pop 32.0
  %v339 = vmul.f32 %v334, %v338
  %v340 = vmul.f32 %v337, %v338
  %v341 = vsub.f32 %v330, %v339
  %v342 = vsub.f32 %v331, %v340
  %v343 = vmul.f32 %v341, %v341
  %v344 = vmul.f32 %v342, %v342
  %v345 = vsel %vm73, %v343, 0.0
  %346 = vadd.xlane.f32.xlu0 %v345
  %v347 = vpop.xlane.xlu0 %346
  %v348 = vsel %vm73, %v344, 0.0
  %349 = vadd.xlane.f32.xlu0 %v348
  %v350 = vpop.xlane.xlu0 %349
  %v351 = vmul.f32 %v347, %v338
  %v352 = vmul.f32 %v350, %v338
  %v353 = vld [vmem:[%s9] sm:$0x1]
  %v355 = vlaneseq
  %v356 = vshrl.u32 %v355, 7
  %v357 = vsub.s32 0, %v356
  %v358 = vrot.slane %v353, %v357
  %v360 = vmul.f32 %v358, %v341
  %v361 = vmul.f32 %v358, %v342
  %v362 = vadd.f32 %v351, 1e-05
  %v363 = vadd.f32 %v352, 1e-05
  %v364 = vrsqrt.pop %v362
  %v365 = vrsqrt.pop %v363
  %v366 = vmul.f32 %v360, %v364
  %v367 = vmul.f32 %v361, %v365
  %v368 = vld [vmem:[%s10] sm:$0x1]
  %v370 = vlaneseq
  %v371 = vshrl.u32 %v370, 7
  %v372 = vsub.s32 0, %v371
  %v373 = vrot.slane %v368, %v372
  %v375 = vadd.f32 %v366, %v373
  %v376 = vadd.f32 %v367, %v373
  %377 = vst.msk [vmem:[%s13] sm:$0xff] %vm73, %v375
  %378 = vst.msk [vmem:[%s13 + $0x8] sm:$0xff] %vm73, %v376
  %v379 = vld [vmem:[%s11] sm:$0xf]
  %v380 = vld [vmem:[%s11 + $0x4] sm:$0xf]
  %v381 = vld [vmem:[%s11 + $0x8] sm:$0xf]
  %v382 = vld [vmem:[%s11 + $0xc] sm:$0xf]
  %v383 = vpack.c.bf16 %v376, %v375
  %v384 = vld [vmem:[%s12] sm:$0x1]
  %v386 = vlaneseq
  %v387 = vshrl.u32 %v386, 7
  %v388 = vsub.s32 0, %v387
  %v389 = vrot.slane %v384, %v388
  %v395 = vunpack.c.l.b16 %v379
  %v396 = vunpack.c.l.b16 %v380
  %v397 = vunpack.c.l.b16 %v381
  %v398 = vunpack.c.l.b16 %v382
  %v399 = vpack.c.b16 %v396, %v395
  %v400 = vpack.c.b16 %v398, %v397
  %v404 = vsel %vm73, %v383, 0
  %406 = vmatprep.subr.bf16.mxu0 0
  %407 = vmatpush1.bf16.msra.mxu0 0
  %408 = vmatprep.subr.bf16.mxu0 0
  %409 = vmatpush1.bf16.msra.mxu0 0
  %410 = vmatprep.subr.bf16.mxu0 0
  %411 = vmatpush1.bf16.msra.mxu0 0
  %412 = vmatprep.subr.bf16.mxu0 0
  %413 = vmatpush1.bf16.msra.mxu0 0
  %414 = vmatprep.subr.bf16.mxu0 0
  %415 = vmatpush1.bf16.msra.mxu0 0
  %416 = vmatprep.subr.bf16.mxu0 0
  %417 = vmatpush1.bf16.msra.mxu0 0
  %418 = vmatprep.subr.bf16.mxu0 0
  %419 = vmatpush1.bf16.msra.mxu0 %v400
  %420 = vmatprep.subr.bf16.mxu0 0
  %421 = vmatpush1.bf16.msra.mxu0 %v399
  %422 = vmatprep.subr.bf16.mxu0 0
  %423 = vmatpush2.bf16.msra.mxu0 0
  %424 = vmatprep.subr.bf16.mxu0 0
  %425 = vmatpush2.bf16.msra.mxu0 0
  %426 = vmatprep.subr.bf16.mxu0 0
  %427 = vmatpush2.bf16.msra.mxu0 0
  %428 = vmatprep.subr.bf16.mxu0 0
  %429 = vmatpush2.bf16.msra.mxu0 0
  %430 = vmatprep.subr.bf16.mxu0 0
  %431 = vmatpush2.bf16.msra.mxu0 0
  %432 = vmatprep.subr.bf16.mxu0 0
  %433 = vmatpush2.bf16.msra.mxu0 0
  %434 = vmatprep.subr.bf16.mxu0 0
  %435 = vmatpush2.bf16.msra.mxu0 0
  %436 = vmatprep.subr.bf16.mxu0 0
  %437 = vmatpush2.bf16.msra.mxu0 0
  %438 = vmatprep.mubr.bf16.mxu0 0
  %439 = vmatmul.mubr.bf16.gmra.mxu0 %v404
  %v440 = vpop.f32.mrf.mxu0
  %v441 = vadd.f32 %v389, %v440
  %v442 = vpop.f32.mrf.mxu0
  %v443 = vpop.f32.mrf.mxu0
  %v444 = vadd.f32 %v389, %v443
  %v445 = vpop.f32.mrf.mxu0
  %446 = vdwg.mxu0
  %vm447 = vcmask 523264
  %448 = vst.msk [vmem:[%s14] sm:$0xff] %vm447, %v441
  %449 = vst.msk [vmem:[%s14 + $0x8] sm:$0xff] %vm447, %v444
  // Predicated region
  $region54: #{gadecoder_forward.10} parent=0 // pred_check
    _
  $region55: #{gadecoder_forward.10} parent=0 // pred_check_branch
    %451 = sbr.rel (0) target = $region57
  $region56: #{gadecoder_forward.10} parent=0 // pred_region
    _
  $region57: #{gadecoder_forward.10} parent=0 // pred_fallthru
    _
  // Predicated region
  $region58: #{gadecoder_forward.10} parent=0 // pred_check
    _
  $region59: #{gadecoder_forward.10} parent=0 // pred_check_branch
    %453 = sbr.rel (0) target = $region61
  $region60: #{gadecoder_forward.10} parent=0 // pred_region
    _
  $region61: #{gadecoder_forward.10} parent=0 // pred_fallthru
    _
  // Predicated region
  $region62: #{gadecoder_forward.10} parent=0 // pred_check
    _
  $region63: #{gadecoder_forward.10} parent=0 // pred_check_branch
    %455 = sbr.rel (0) target = $region65
  $region64: #{gadecoder_forward.10} parent=0 // pred_region
    _
  $region65: #{gadecoder_forward.10} parent=0 // pred_fallthru
    _
  // Predicated region
  $region66: #{gadecoder_forward.10} parent=0 // pred_check
    _
  $region67: #{gadecoder_forward.10} parent=0 // pred_check_branch
    %457 = sbr.rel (0) target = $region69
  $region68: #{gadecoder_forward.10} parent=0 // pred_region
    _
  $region69: #{gadecoder_forward.10} parent=0 // pred_fallthru
    _

// kernel: gadecoder_forward.13
$region0: #{gadecoder_forward.13}
  #allocation0 [shape = 'u32[]', space=smem, size = 0x4, offset = 0x4, fixed_abs, tag = 'smem constant byte address 0x4 - core index']
  #allocation1 [shape = 'u32[144,128]{1,0:T(1,128)}', space=vmem, size = 0x12000, scoped, tag = 'internal scratch']
  %s0 = inlined_call_operand.vmem [shape: f32[2,8,8,16], index: 0, kind: input, shape index: {}]
  %s1 = inlined_call_operand.vmem [shape: f32[2,8,8,16], index: 1, kind: input, shape index: {}]
  %s2 = inlined_call_operand.vmem [shape: f32[2,8,1,32], index: 2, kind: input, shape index: {}]
  %s3 = inlined_call_operand.vmem [shape: f32[2,8,32], index: 3, kind: input, shape index: {}]
  %s4 = inlined_call_operand.vmem [shape: f32[2,8,8,12], index: 4, kind: input, shape index: {}]
  %s5 = inlined_call_operand.vmem [shape: f32[2,8,8,1], index: 5, kind: input, shape index: {}]
  %s6 = inlined_call_operand.vmem [shape: f32[2,8,8,1], index: 6, kind: input, shape index: {}]
  %s7 = inlined_call_operand.vmem [shape: bf16[16,32], index: 7, kind: input, shape index: {}]
  %s8 = inlined_call_operand.vmem [shape: bf16[16,32], index: 8, kind: input, shape index: {}]
  %s9 = inlined_call_operand.vmem [shape: bf16[32,32], index: 9, kind: input, shape index: {}]
  %s10 = inlined_call_operand.vmem [shape: f32[1,32], index: 10, kind: input, shape index: {}]
  %s11 = inlined_call_operand.vmem [shape: bf16[32,64], index: 11, kind: input, shape index: {}]
  %s12 = inlined_call_operand.vmem [shape: f32[1,64], index: 12, kind: input, shape index: {}]
  %s13 = inlined_call_operand.vmem [shape: bf16[64,24], index: 13, kind: input, shape index: {}]
  %s14 = inlined_call_operand.hbm [shape: f32[2,8,32], index: 14, kind: output, shape index: {0}]
  %s15 = inlined_call_operand.hbm [shape: f32[2,8,32], index: 15, kind: output, shape index: {1}]
  %s16 = inlined_call_operand.vmem [shape: f32[2,8,12], index: 16, kind: output, shape index: {2}]
  %17 = xla_tuple %s14, %s15, %s16
  %s18 = sld [smem:[#allocation0]]
  $region105: #{gadecoder_forward.13} parent=0
    _
  %s20 = ssub.s32 1, %s18
  %s21 = scalar_select 0, %s20, %s18
  $region1: #{gadecoder_forward.13} parent=0
    #allocation2 [shape = 'u8[8192]{0}', space=vmem, size = 0x2000, scoped, tag = 'output window, operand 0']
    #allocation3 [shape = 's32[2]{0}', space=sflag, size = 0x8, scoped, tag = 'scoped memory for gadecoder_forward.13']
    #allocation4 [shape = 'u8[8192]{0}', space=vmem, size = 0x2000, scoped, tag = 'output window, operand 1']
    #allocation5 [shape = 's32[2]{0}', space=sflag, size = 0x8, scoped, tag = 'scoped memory for gadecoder_forward.13']
    %22 = vsyncpa [#allocation3], 0
    %s23 = scalar_lea.sflag [#allocation3], 1
    %24 = vsyncpa %s23, 0
    %25 = vsyncpa [#allocation5], 0
    %s26 = scalar_lea.sflag [#allocation5], 1
    %27 = vsyncpa %s26, 0
    loop: start=0, step=1, limit=4
    $region2: #{gadecoder_forward.13} parent=1 // loop_pre_header
      _
    $region3: #{gadecoder_forward.13} parent=1 // loop_header
      %s29 = sphi 0, %s33
      %p30 = scmp.ge.s32.totalorder %s29, 4
      %s36 = sphi 0, %s48
      %s37 = sphi 0, %s44
      %s38 = sphi 0, %s36
      %s39 = sphi 0, %s37
      %s40 = sphi 0, %s38
      %s41 = sphi 0, %s39
      %s53 = sphi 0, %s55
      %s56 = sphi 0, %s53
      %s57 = sphi 0, %s56
      %s73 = sphi 0, %s57
      %s81 = sphi 0, %s83
      %s84 = sphi 0, %s81
      %s85 = sphi 0, %s84
      %s101 = sphi 0, %s85
      %s109 = sphi 0, %s111
      %s112 = sphi 0, %s109
      %s113 = sphi 0, %s112
      %s129 = sphi 0, %s113
      %s135 = sphi 0, %s137
      %s138 = sphi 0, %s135
      %s139 = sphi 0, %s138
      %s155 = sphi 0, %s139
      %s163 = sphi 0, %s165
      %s166 = sphi 0, %s163
      %s167 = sphi 0, %s166
      %s183 = sphi 0, %s167
      %s191 = sphi 0, %s193
      %s194 = sphi 0, %s191
      %s195 = sphi 0, %s194
      %s211 = sphi 0, %s195
      %s219 = sphi 0, %s221
      %s222 = sphi 0, %s219
      %s223 = sphi 0, %s222
      %s239 = sphi 0, %s223
      %s243 = sphi 0, %s243
      %s245 = sphi 0, %s243
      %s246 = sphi 0, %s245
      %s260 = sphi 0, %s246
      %s264 = sphi 0, %s264
      %s266 = sphi 0, %s264
      %s267 = sphi 0, %s266
      %s281 = sphi 0, %s267
      %s285 = sphi 0, %s285
      %s287 = sphi 0, %s285
      %s288 = sphi 0, %s287
      %s302 = sphi 0, %s288
      %s306 = sphi 0, %s306
      %s308 = sphi 0, %s306
      %s309 = sphi 0, %s308
      %s323 = sphi 0, %s309
      %s327 = sphi 0, %s327
      %s329 = sphi 0, %s327
      %s330 = sphi 0, %s329
      %s344 = sphi 0, %s330
      %s348 = sphi 0, %s348
      %s350 = sphi 0, %s348
      %s351 = sphi 0, %s350
      %s365 = sphi 0, %s351
      %s369 = sphi 0, %s369
      %s371 = sphi 0, %s369
      %s372 = sphi 0, %s371
      %s386 = sphi 0, %s372
      %s394 = sphi 0, %s396
      %s397 = sphi 0, %s394
      %s398 = sphi 0, %s397
      %s414 = sphi 0, %s398
      %s422 = sphi 0, %s424
      %s425 = sphi 0, %s422
      %s426 = sphi 0, %s425
      %s442 = sphi 0, %s426
      %s450 = sphi 0, %s452
      %s453 = sphi 0, %s450
      %s454 = sphi 0, %s453
      %s470 = sphi 0, %s454
    $region4: #{gadecoder_forward.13} parent=1 // loop_header_branch
      %32 = sbr.rel (%p30) target = $region8
    $region5: #{gadecoder_forward.13} parent=1 // loop_body
      %s34 = ssub.s32 %s29, 1
      %s35 = ssub.s32 %s29, 2
      %s42 = sadd.s32 1, %s37
      %p43 = scmp.ge.s32.totalorder %s42, 1
      %s44 = scalar_select %p43, 0, %s42
      %s45 = sadd.s32 1, %s36
      %s46 = scalar_select %p43, %s45, %s36
      %p47 = scmp.ge.s32.totalorder %s46, 2
      %s48 = scalar_select %p47, 0, %s46
      %s49 = ssub.s32 %s36, %s48
      %s50 = ssub.s32 %s37, %s44
      %s51 = sor.u32 %s49, %s50
      %p52 = scmp.eq.s32.totalorder %s51, 0
      %s54 = sadd.s32 %s53, 1
      %s55 = scalar_select %p52, %s53, %s54
      %p58 = pneg %p52
      %p59 = scmp.eq.s32.totalorder %s29, 1
      %p60 = por %p58, %p59
      %p61 = scmp.ne.s32.totalorder %s53, %s56
      %p62 = scmp.eq.s32.totalorder %s29, 0
      %p63 = por %p61, %p62
      %p64 = scmp.ne.s32.totalorder %s53, %s56
      %p65 = scmp.eq.s32.totalorder %s34, 1
      %p66 = por %p64, %p65
      %p67 = scmp.ne.s32.totalorder %s56, %s57
      %p68 = scmp.eq.s32.totalorder %s34, 0
      %p69 = por %p67, %p68
      %p70 = scmp.ne.s32.totalorder %s56, %s57
      %p71 = scmp.eq.s32.totalorder %s35, 1
      %p72 = por %p70, %p71
      %p74 = scmp.ne.s32.totalorder %s57, %s73
      %p75 = scmp.eq.s32.totalorder %s35, 0
      %p76 = por %p74, %p75
      %s77 = ssub.s32 %s36, %s48
      %s78 = ssub.s32 %s37, %s44
      %s79 = sor.u32 %s77, %s78
      %p80 = scmp.eq.s32.totalorder %s79, 0
      %s82 = sadd.s32 %s81, 1
      %s83 = scalar_select %p80, %s81, %s82
      %p86 = pneg %p80
      %p87 = scmp.eq.s32.totalorder %s29, 1
      %p88 = por %p86, %p87
      %p89 = scmp.ne.s32.totalorder %s81, %s84
      %p90 = scmp.eq.s32.totalorder %s29, 0
      %p91 = por %p89, %p90
      %p92 = scmp.ne.s32.totalorder %s81, %s84
      %p93 = scmp.eq.s32.totalorder %s34, 1
      %p94 = por %p92, %p93
      %p95 = scmp.ne.s32.totalorder %s84, %s85
      %p96 = scmp.eq.s32.totalorder %s34, 0
      %p97 = por %p95, %p96
      %p98 = scmp.ne.s32.totalorder %s84, %s85
      %p99 = scmp.eq.s32.totalorder %s35, 1
      %p100 = por %p98, %p99
      %p102 = scmp.ne.s32.totalorder %s85, %s101
      %p103 = scmp.eq.s32.totalorder %s35, 0
      %p104 = por %p102, %p103
      %s105 = ssub.s32 %s36, %s48
      %s106 = ssub.s32 %s37, %s44
      %s107 = sor.u32 %s105, %s106
      %p108 = scmp.eq.s32.totalorder %s107, 0
      %s110 = sadd.s32 %s109, 1
      %s111 = scalar_select %p108, %s109, %s110
      %p114 = pneg %p108
      %p115 = scmp.eq.s32.totalorder %s29, 1
      %p116 = por %p114, %p115
      %p117 = scmp.ne.s32.totalorder %s109, %s112
      %p118 = scmp.eq.s32.totalorder %s29, 0
      %p119 = por %p117, %p118
      %p120 = scmp.ne.s32.totalorder %s109, %s112
      %p121 = scmp.eq.s32.totalorder %s34, 1
      %p122 = por %p120, %p121
      %p123 = scmp.ne.s32.totalorder %s112, %s113
      %p124 = scmp.eq.s32.totalorder %s34, 0
      %p125 = por %p123, %p124
      %p126 = scmp.ne.s32.totalorder %s112, %s113
      %p127 = scmp.eq.s32.totalorder %s35, 1
      %p128 = por %p126, %p127
      %p130 = scmp.ne.s32.totalorder %s113, %s129
      %p131 = scmp.eq.s32.totalorder %s35, 0
      %p132 = por %p130, %p131
      %s133 = ssub.s32 %s36, %s48
      %p134 = scmp.eq.s32.totalorder %s133, 0
      %s136 = sadd.s32 %s135, 1
      %s137 = scalar_select %p134, %s135, %s136
      %p140 = pneg %p134
      %p141 = scmp.eq.s32.totalorder %s29, 1
      %p142 = por %p140, %p141
      %p143 = scmp.ne.s32.totalorder %s135, %s138
      %p144 = scmp.eq.s32.totalorder %s29, 0
      %p145 = por %p143, %p144
      %p146 = scmp.ne.s32.totalorder %s135, %s138
      %p147 = scmp.eq.s32.totalorder %s34, 1
      %p148 = por %p146, %p147
      %p149 = scmp.ne.s32.totalorder %s138, %s139
      %p150 = scmp.eq.s32.totalorder %s34, 0
      %p151 = por %p149, %p150
      %p152 = scmp.ne.s32.totalorder %s138, %s139
      %p153 = scmp.eq.s32.totalorder %s35, 1
      %p154 = por %p152, %p153
      %p156 = scmp.ne.s32.totalorder %s139, %s155
      %p157 = scmp.eq.s32.totalorder %s35, 0
      %p158 = por %p156, %p157
      %s159 = ssub.s32 %s36, %s48
      %s160 = ssub.s32 %s37, %s44
      %s161 = sor.u32 %s159, %s160
      %p162 = scmp.eq.s32.totalorder %s161, 0
      %s164 = sadd.s32 %s163, 1
      %s165 = scalar_select %p162, %s163, %s164
      %p168 = pneg %p162
      %p169 = scmp.eq.s32.totalorder %s29, 1
      %p170 = por %p168, %p169
      %p171 = scmp.ne.s32.totalorder %s163, %s166
      %p172 = scmp.eq.s32.totalorder %s29, 0
      %p173 = por %p171, %p172
      %p174 = scmp.ne.s32.totalorder %s163, %s166
      %p175 = scmp.eq.s32.totalorder %s34, 1
      %p176 = por %p174, %p175
      %p177 = scmp.ne.s32.totalorder %s166, %s167
      %p178 = scmp.eq.s32.totalorder %s34, 0
      %p179 = por %p177, %p178
      %p180 = scmp.ne.s32.totalorder %s166, %s167
      %p181 = scmp.eq.s32.totalorder %s35, 1
      %p182 = por %p180, %p181
      %p184 = scmp.ne.s32.totalorder %s167, %s183
      %p185 = scmp.eq.s32.totalorder %s35, 0
      %p186 = por %p184, %p185
      %s187 = ssub.s32 %s36, %s48
      %s188 = ssub.s32 %s37, %s44
      %s189 = sor.u32 %s187, %s188
      %p190 = scmp.eq.s32.totalorder %s189, 0
      %s192 = sadd.s32 %s191, 1
      %s193 = scalar_select %p190, %s191, %s192
      %p196 = pneg %p190
      %p197 = scmp.eq.s32.totalorder %s29, 1
      %p198 = por %p196, %p197
      %p199 = scmp.ne.s32.totalorder %s191, %s194
      %p200 = scmp.eq.s32.totalorder %s29, 0
      %p201 = por %p199, %p200
      %p202 = scmp.ne.s32.totalorder %s191, %s194
      %p203 = scmp.eq.s32.totalorder %s34, 1
      %p204 = por %p202, %p203
      %p205 = scmp.ne.s32.totalorder %s194, %s195
      %p206 = scmp.eq.s32.totalorder %s34, 0
      %p207 = por %p205, %p206
      %p208 = scmp.ne.s32.totalorder %s194, %s195
      %p209 = scmp.eq.s32.totalorder %s35, 1
      %p210 = por %p208, %p209
      %p212 = scmp.ne.s32.totalorder %s195, %s211
      %p213 = scmp.eq.s32.totalorder %s35, 0
      %p214 = por %p212, %p213
      %s215 = ssub.s32 %s36, %s48
      %s216 = ssub.s32 %s37, %s44
      %s217 = sor.u32 %s215, %s216
      %p218 = scmp.eq.s32.totalorder %s217, 0
      %s220 = sadd.s32 %s219, 1
      %s221 = scalar_select %p218, %s219, %s220
      %p224 = pneg %p218
      %p225 = scmp.eq.s32.totalorder %s29, 1
      %p226 = por %p224, %p225
      %p227 = scmp.ne.s32.totalorder %s219, %s222
      %p228 = scmp.eq.s32.totalorder %s29, 0
      %p229 = por %p227, %p228
      %p230 = scmp.ne.s32.totalorder %s219, %s222
      %p231 = scmp.eq.s32.totalorder %s34, 1
      %p232 = por %p230, %p231
      %p233 = scmp.ne.s32.totalorder %s222, %s223
      %p234 = scmp.eq.s32.totalorder %s34, 0
      %p235 = por %p233, %p234
      %p236 = scmp.ne.s32.totalorder %s222, %s223
      %p237 = scmp.eq.s32.totalorder %s35, 1
      %p238 = por %p236, %p237
      %p240 = scmp.ne.s32.totalorder %s223, %s239
      %p241 = scmp.eq.s32.totalorder %s35, 0
      %p242 = por %p240, %p241
      %s244 = sadd.s32 %s243, 1
      %p247 = scmp.eq.s32.totalorder %s29, 1
      %p248 = scmp.ne.s32.totalorder %s243, %s245
      %p249 = scmp.eq.s32.totalorder %s29, 0
      %p250 = por %p248, %p249
      %p251 = scmp.ne.s32.totalorder %s243, %s245
      %p252 = scmp.eq.s32.totalorder %s34, 1
      %p253 = por %p251, %p252
      %p254 = scmp.ne.s32.totalorder %s245, %s246
      %p255 = scmp.eq.s32.totalorder %s34, 0
      %p256 = por %p254, %p255
      %p257 = scmp.ne.s32.totalorder %s245, %s246
      %p258 = scmp.eq.s32.totalorder %s35, 1
      %p259 = por %p257, %p258
      %p261 = scmp.ne.s32.totalorder %s246, %s260
      %p262 = scmp.eq.s32.totalorder %s35, 0
      %p263 = por %p261, %p262
      %s265 = sadd.s32 %s264, 1
      %p268 = scmp.eq.s32.totalorder %s29, 1
      %p269 = scmp.ne.s32.totalorder %s264, %s266
      %p270 = scmp.eq.s32.totalorder %s29, 0
      %p271 = por %p269, %p270
      %p272 = scmp.ne.s32.totalorder %s264, %s266
      %p273 = scmp.eq.s32.totalorder %s34, 1
      %p274 = por %p272, %p273
      %p275 = scmp.ne.s32.totalorder %s266, %s267
      %p276 = scmp.eq.s32.totalorder %s34, 0
      %p277 = por %p275, %p276
      %p278 = scmp.ne.s32.totalorder %s266, %s267
      %p279 = scmp.eq.s32.totalorder %s35, 1
      %p280 = por %p278, %p279
      %p282 = scmp.ne.s32.totalorder %s267, %s281
      %p283 = scmp.eq.s32.totalorder %s35, 0
      %p284 = por %p282, %p283
      %s286 = sadd.s32 %s285, 1
      %p289 = scmp.eq.s32.totalorder %s29, 1
      %p290 = scmp.ne.s32.totalorder %s285, %s287
      %p291 = scmp.eq.s32.totalorder %s29, 0
      %p292 = por %p290, %p291
      %p293 = scmp.ne.s32.totalorder %s285, %s287
      %p294 = scmp.eq.s32.totalorder %s34, 1
      %p295 = por %p293, %p294
      %p296 = scmp.ne.s32.totalorder %s287, %s288
      %p297 = scmp.eq.s32.totalorder %s34, 0
      %p298 = por %p296, %p297
      %p299 = scmp.ne.s32.totalorder %s287, %s288
      %p300 = scmp.eq.s32.totalorder %s35, 1
      %p301 = por %p299, %p300
      %p303 = scmp.ne.s32.totalorder %s288, %s302
      %p304 = scmp.eq.s32.totalorder %s35, 0
      %p305 = por %p303, %p304
      %s307 = sadd.s32 %s306, 1
      %p310 = scmp.eq.s32.totalorder %s29, 1
      %p311 = scmp.ne.s32.totalorder %s306, %s308
      %p312 = scmp.eq.s32.totalorder %s29, 0
      %p313 = por %p311, %p312
      %p314 = scmp.ne.s32.totalorder %s306, %s308
      %p315 = scmp.eq.s32.totalorder %s34, 1
      %p316 = por %p314, %p315
      %p317 = scmp.ne.s32.totalorder %s308, %s309
      %p318 = scmp.eq.s32.totalorder %s34, 0
      %p319 = por %p317, %p318
      %p320 = scmp.ne.s32.totalorder %s308, %s309
      %p321 = scmp.eq.s32.totalorder %s35, 1
      %p322 = por %p320, %p321
      %p324 = scmp.ne.s32.totalorder %s309, %s323
      %p325 = scmp.eq.s32.totalorder %s35, 0
      %p326 = por %p324, %p325
      %s328 = sadd.s32 %s327, 1
      %p331 = scmp.eq.s32.totalorder %s29, 1
      %p332 = scmp.ne.s32.totalorder %s327, %s329
      %p333 = scmp.eq.s32.totalorder %s29, 0
      %p334 = por %p332, %p333
      %p335 = scmp.ne.s32.totalorder %s327, %s329
      %p336 = scmp.eq.s32.totalorder %s34, 1
      %p337 = por %p335, %p336
      %p338 = scmp.ne.s32.totalorder %s329, %s330
      %p339 = scmp.eq.s32.totalorder %s34, 0
      %p340 = por %p338, %p339
      %p341 = scmp.ne.s32.totalorder %s329, %s330
      %p342 = scmp.eq.s32.totalorder %s35, 1
      %p343 = por %p341, %p342
      %p345 = scmp.ne.s32.totalorder %s330, %s344
      %p346 = scmp.eq.s32.totalorder %s35, 0
      %p347 = por %p345, %p346
      %s349 = sadd.s32 %s348, 1
      %p352 = scmp.eq.s32.totalorder %s29, 1
      %p353 = scmp.ne.s32.totalorder %s348, %s350
      %p354 = scmp.eq.s32.totalorder %s29, 0
      %p355 = por %p353, %p354
      %p356 = scmp.ne.s32.totalorder %s348, %s350
      %p357 = scmp.eq.s32.totalorder %s34, 1
      %p358 = por %p356, %p357
      %p359 = scmp.ne.s32.totalorder %s350, %s351
      %p360 = scmp.eq.s32.totalorder %s34, 0
      %p361 = por %p359, %p360
      %p362 = scmp.ne.s32.totalorder %s350, %s351
      %p363 = scmp.eq.s32.totalorder %s35, 1
      %p364 = por %p362, %p363
      %p366 = scmp.ne.s32.totalorder %s351, %s365
      %p367 = scmp.eq.s32.totalorder %s35, 0
      %p368 = por %p366, %p367
      %s370 = sadd.s32 %s369, 1
      %p373 = scmp.eq.s32.totalorder %s29, 1
      %p374 = scmp.ne.s32.totalorder %s369, %s371
      %p375 = scmp.eq.s32.totalorder %s29, 0
      %p376 = por %p374, %p375
      %p377 = scmp.ne.s32.totalorder %s369, %s371
      %p378 = scmp.eq.s32.totalorder %s34, 1
      %p379 = por %p377, %p378
      %p380 = scmp.ne.s32.totalorder %s371, %s372
      %p381 = scmp.eq.s32.totalorder %s34, 0
      %p382 = por %p380, %p381
      %p383 = scmp.ne.s32.totalorder %s371, %s372
      %p384 = scmp.eq.s32.totalorder %s35, 1
      %p385 = por %p383, %p384
      %p387 = scmp.ne.s32.totalorder %s372, %s386
      %p388 = scmp.eq.s32.totalorder %s35, 0
      %p389 = por %p387, %p388
      %s390 = ssub.s32 %s36, %s48
      %s391 = ssub.s32 %s37, %s44
      %s392 = sor.u32 %s390, %s391
      %p393 = scmp.eq.s32.totalorder %s392, 0
      %s395 = sadd.s32 %s394, 1
      %s396 = scalar_select %p393, %s394, %s395
      %p399 = pneg %p393
      %p400 = scmp.eq.s32.totalorder %s29, 1
      %p401 = por %p399, %p400
      %p402 = scmp.ne.s32.totalorder %s394, %s397
      %p403 = scmp.eq.s32.totalorder %s29, 0
      %p404 = por %p402, %p403
      %p405 = scmp.ne.s32.totalorder %s394, %s397
      %p406 = scmp.eq.s32.totalorder %s34, 1
      %p407 = por %p405, %p406
      %p408 = scmp.ne.s32.totalorder %s397, %s398
      %p409 = scmp.eq.s32.totalorder %s34, 0
      %p410 = por %p408, %p409
      %p411 = scmp.ne.s32.totalorder %s397, %s398
      %p412 = scmp.eq.s32.totalorder %s35, 1
      %p413 = por %p411, %p412
      %p415 = scmp.ne.s32.totalorder %s398, %s414
      %p416 = scmp.eq.s32.totalorder %s35, 0
      %p417 = por %p415, %p416
      %s418 = ssub.s32 %s36, %s48
      %s419 = ssub.s32 %s37, %s44
      %s420 = sor.u32 %s418, %s419
      %p421 = scmp.eq.s32.totalorder %s420, 0
      %s423 = sadd.s32 %s422, 1
      %s424 = scalar_select %p421, %s422, %s423
      %p427 = pneg %p421
      %p428 = scmp.eq.s32.totalorder %s29, 1
      %p429 = por %p427, %p428
      %p430 = scmp.ne.s32.totalorder %s422, %s425
      %p431 = scmp.eq.s32.totalorder %s29, 0
      %p432 = por %p430, %p431
      %p433 = scmp.ne.s32.totalorder %s422, %s425
      %p434 = scmp.eq.s32.totalorder %s34, 1
      %p435 = por %p433, %p434
      %p436 = scmp.ne.s32.totalorder %s425, %s426
      %p437 = scmp.eq.s32.totalorder %s34, 0
      %p438 = por %p436, %p437
      %p439 = scmp.ne.s32.totalorder %s425, %s426
      %p440 = scmp.eq.s32.totalorder %s35, 1
      %p441 = por %p439, %p440
      %p443 = scmp.ne.s32.totalorder %s426, %s442
      %p444 = scmp.eq.s32.totalorder %s35, 0
      %p445 = por %p443, %p444
      %s446 = ssub.s32 %s36, %s48
      %s447 = ssub.s32 %s37, %s44
      %s448 = sor.u32 %s446, %s447
      %p449 = scmp.eq.s32.totalorder %s448, 0
      %s451 = sadd.s32 %s450, 1
      %s452 = scalar_select %p449, %s450, %s451
      %p455 = pneg %p449
      %p456 = scmp.eq.s32.totalorder %s29, 1
      %p457 = por %p455, %p456
      %p458 = scmp.ne.s32.totalorder %s450, %s453
      %p459 = scmp.eq.s32.totalorder %s29, 0
      %p460 = por %p458, %p459
      %p461 = scmp.ne.s32.totalorder %s450, %s453
      %p462 = scmp.eq.s32.totalorder %s34, 1
      %p463 = por %p461, %p462
      %p464 = scmp.ne.s32.totalorder %s453, %s454
      %p465 = scmp.eq.s32.totalorder %s34, 0
      %p466 = por %p464, %p465
      %p467 = scmp.ne.s32.totalorder %s453, %s454
      %p468 = scmp.eq.s32.totalorder %s35, 1
      %p469 = por %p467, %p468
      %p471 = scmp.ne.s32.totalorder %s454, %s470
      %p472 = scmp.eq.s32.totalorder %s35, 0
      %p473 = por %p471, %p472
      %p474 = scmp.le.s32.totalorder 1, %s29
      %p475 = scmp.lt.s32.totalorder %s29, 3
      %p476 = pnand %p474, %p475
      %p477 = pneg %p476
      // Predicated region
      $region9: #{gadecoder_forward.13} parent=5 // pred_check
        _
      $region10: #{gadecoder_forward.13} parent=5 // pred_check_branch
        %479 = sbr.rel (%p476) target = $region12
      $region11: #{gadecoder_forward.13} parent=5 // pred_region
        %s480 = ssub.s32 %s29, 1
        // Predicated region
        $region13: #{gadecoder_forward.13} parent=11 // pred_check
          %p481 = pneg %p256
        $region14: #{gadecoder_forward.13} parent=11 // pred_check_branch
          %483 = sbr.rel (%p481) target = $region16
        $region15: #{gadecoder_forward.13} parent=11 // pred_region
          _
        $region16: #{gadecoder_forward.13} parent=11 // pred_fallthru
          _
        // Predicated region
        $region17: #{gadecoder_forward.13} parent=11 // pred_check
          %p484 = pneg %p277
        $region18: #{gadecoder_forward.13} parent=11 // pred_check_branch
          %486 = sbr.rel (%p484) target = $region20
        $region19: #{gadecoder_forward.13} parent=11 // pred_region
          _
        $region20: #{gadecoder_forward.13} parent=11 // pred_fallthru
          _
        // Predicated region
        $region21: #{gadecoder_forward.13} parent=11 // pred_check
          %p487 = pneg %p298
        $region22: #{gadecoder_forward.13} parent=11 // pred_check_branch
          %489 = sbr.rel (%p487) target = $region24
        $region23: #{gadecoder_forward.13} parent=11 // pred_region
          _
        $region24: #{gadecoder_forward.13} parent=11 // pred_fallthru
          _
        // Predicated region
        $region25: #{gadecoder_forward.13} parent=11 // pred_check
          %p490 = pneg %p319
        $region26: #{gadecoder_forward.13} parent=11 // pred_check_branch
          %492 = sbr.rel (%p490) target = $region28
        $region27: #{gadecoder_forward.13} parent=11 // pred_region
          _
        $region28: #{gadecoder_forward.13} parent=11 // pred_fallthru
          _
        // Predicated region
        $region29: #{gadecoder_forward.13} parent=11 // pred_check
          %p493 = pneg %p340
        $region30: #{gadecoder_forward.13} parent=11 // pred_check_branch
          %495 = sbr.rel (%p493) target = $region32
        $region31: #{gadecoder_forward.13} parent=11 // pred_region
          _
        $region32: #{gadecoder_forward.13} parent=11 // pred_fallthru
          _
        // Predicated region
        $region33: #{gadecoder_forward.13} parent=11 // pred_check
          %p496 = pneg %p361
        $region34: #{gadecoder_forward.13} parent=11 // pred_check_branch
          %498 = sbr.rel (%p496) target = $region36
        $region35: #{gadecoder_forward.13} parent=11 // pred_region
          _
        $region36: #{gadecoder_forward.13} parent=11 // pred_fallthru
          _
        // Predicated region
        $region37: #{gadecoder_forward.13} parent=11 // pred_check
          %p499 = pneg %p382
        $region38: #{gadecoder_forward.13} parent=11 // pred_check_branch
          %501 = sbr.rel (%p499) target = $region40
        $region39: #{gadecoder_forward.13} parent=11 // pred_region
          _
        $region40: #{gadecoder_forward.13} parent=11 // pred_fallthru
          _
      $region12: #{gadecoder_forward.13} parent=5 // pred_fallthru
        _
      %p502 = scmp.lt.s32.totalorder %s29, 2
      // Predicated region
      $region41: #{gadecoder_forward.13} parent=5 // pred_check
        %p503 = pneg %p502
      $region42: #{gadecoder_forward.13} parent=5 // pred_check_branch
        %505 = sbr.rel (%p503) target = $region44
      $region43: #{gadecoder_forward.13} parent=5 // pred_region
        // Predicated region
        $region45: #{gadecoder_forward.13} parent=43 // pred_check
          %p506 = pneg %p63
        $region46: #{gadecoder_forward.13} parent=43 // pred_check_branch
          %508 = sbr.rel (%p506) target = $region48
        $region47: #{gadecoder_forward.13} parent=43 // pred_region
          %s509 = smul.u32 8, %s37
          %p510 = scmp.lt.s32.totalorder %s36, 1
          %s511 = scalar_select %p510, %s36, 1
          %p512 = scmp.lt.s32.totalorder %s509, 7
          %s513 = scalar_select %p512, %s509, 7
          %s514 = smul.addr %s511, 8
          %s515 = sadd.s32 %s513, %s514
          %s516 = smul.addr %s515, 8
          %s517 = scalar_lea.vmem %s0, %s516
          %s518 = smul.u32 8, %s37
        $region48: #{gadecoder_forward.13} parent=43 // pred_fallthru
          _
        // Predicated region
        $region49: #{gadecoder_forward.13} parent=43 // pred_check
          %p519 = pneg %p91
        $region50: #{gadecoder_forward.13} parent=43 // pred_check_branch
          %521 = sbr.rel (%p519) target = $region52
        $region51: #{gadecoder_forward.13} parent=43 // pred_region
          %s522 = smul.u32 8, %s37
          %p523 = scmp.lt.s32.totalorder %s36, 1
          %s524 = scalar_select %p523, %s36, 1
          %p525 = scmp.lt.s32.totalorder %s522, 7
          %s526 = scalar_select %p525, %s522, 7
          %s527 = smul.addr %s524, 8
          %s528 = sadd.s32 %s526, %s527
          %s529 = smul.addr %s528, 8
          %s530 = scalar_lea.vmem %s1, %s529
          %s531 = smul.u32 8, %s37
        $region52: #{gadecoder_forward.13} parent=43 // pred_fallthru
          _
        // Predicated region
        $region53: #{gadecoder_forward.13} parent=43 // pred_check
          %p532 = pneg %p119
        $region54: #{gadecoder_forward.13} parent=43 // pred_check_branch
          %534 = sbr.rel (%p532) target = $region56
        $region55: #{gadecoder_forward.13} parent=43 // pred_region
          %s535 = smul.u32 8, %s37
          %p536 = scmp.lt.s32.totalorder %s36, 1
          %s537 = scalar_select %p536, %s36, 1
          %p538 = scmp.lt.s32.totalorder %s535, 7
          %s539 = scalar_select %p538, %s535, 7
          %s540 = smul.addr %s537, 8
          %s541 = sadd.s32 %s539, %s540
          %s542 = scalar_lea.vmem %s2, %s541
          %s543 = smul.u32 8, %s37
        $region56: #{gadecoder_forward.13} parent=43 // pred_fallthru
          _
        // Predicated region
        $region57: #{gadecoder_forward.13} parent=43 // pred_check
          %p544 = pneg %p145
        $region58: #{gadecoder_forward.13} parent=43 // pred_check_branch
          %546 = sbr.rel (%p544) target = $region60
        $region59: #{gadecoder_forward.13} parent=43 // pred_region
          %p547 = scmp.lt.s32.totalorder %s36, 1
          %s548 = scalar_select %p547, %s36, 1
          %s549 = smul.addr %s548, 8
          %s550 = scalar_lea.vmem %s3, %s549
        $region60: #{gadecoder_forward.13} parent=43 // pred_fallthru
          _
        // Predicated region
        $region61: #{gadecoder_forward.13} parent=43 // pred_check
          %p551 = pneg %p173
        $region62: #{gadecoder_forward.13} parent=43 // pred_check_branch
          %553 = sbr.rel (%p551) target = $region64
        $region63: #{gadecoder_forward.13} parent=43 // pred_region
          %s554 = smul.u32 8, %s37
          %p555 = scmp.lt.s32.totalorder %s36, 1
          %s556 = scalar_select %p555, %s36, 1
          %p557 = scmp.lt.s32.totalorder %s554, 7
          %s558 = scalar_select %p557, %s554, 7
          %s559 = smul.addr %s556, 8
          %s560 = sadd.s32 %s558, %s559
          %s561 = smul.addr %s560, 8
          %s562 = scalar_lea.vmem %s4, %s561
          %s563 = smul.u32 8, %s37
        $region64: #{gadecoder_forward.13} parent=43 // pred_fallthru
          _
        // Predicated region
        $region65: #{gadecoder_forward.13} parent=43 // pred_check
          %p564 = pneg %p201
        $region66: #{gadecoder_forward.13} parent=43 // pred_check_branch
          %566 = sbr.rel (%p564) target = $region68
        $region67: #{gadecoder_forward.13} parent=43 // pred_region
          %s567 = smul.u32 8, %s37
          %p568 = scmp.lt.s32.totalorder %s36, 1
          %s569 = scalar_select %p568, %s36, 1
          %p570 = scmp.lt.s32.totalorder %s567, 7
          %s571 = scalar_select %p570, %s567, 7
          %s572 = smul.addr %s569, 8
          %s573 = sadd.s32 %s571, %s572
          %s574 = smul.addr %s573, 8
          %s575 = scalar_lea.vmem %s5, %s574
          %s576 = smul.u32 8, %s37
        $region68: #{gadecoder_forward.13} parent=43 // pred_fallthru
          _
        // Predicated region
        $region69: #{gadecoder_forward.13} parent=43 // pred_check
          %p577 = pneg %p229
        $region70: #{gadecoder_forward.13} parent=43 // pred_check_branch
          %579 = sbr.rel (%p577) target = $region72
        $region71: #{gadecoder_forward.13} parent=43 // pred_region
          %s580 = smul.u32 8, %s37
          %p581 = scmp.lt.s32.totalorder %s36, 1
          %s582 = scalar_select %p581, %s36, 1
          %p583 = scmp.lt.s32.totalorder %s580, 7
          %s584 = scalar_select %p583, %s580, 7
          %s585 = smul.addr %s582, 8
          %s586 = sadd.s32 %s584, %s585
          %s587 = smul.addr %s586, 8
          %s588 = scalar_lea.vmem %s6, %s587
          %s589 = smul.u32 8, %s37
        $region72: #{gadecoder_forward.13} parent=43 // pred_fallthru
          _
      $region44: #{gadecoder_forward.13} parent=5 // pred_fallthru
        _
      %p590 = scmp.le.s32.totalorder 1, %s29
      %p591 = scmp.lt.s32.totalorder %s29, 3
      %p592 = pnand %p590, %p591
      %p593 = pneg %p592
      // Predicated region
      $region73: #{gadecoder_forward.13} parent=5 // pred_check
        _
      $region74: #{gadecoder_forward.13} parent=5 // pred_check_branch
        %595 = sbr.rel (%p592) target = $region76
      $region75: #{gadecoder_forward.13} parent=5 // pred_region
        %s596 = ssub.s32 %s29, 1
        %s597 = smul.u32 8, %s39
        %p598 = scmp.lt.s32.totalorder %s38, 1
        %s599 = scalar_select %p598, %s38, 1
        %p600 = scmp.lt.s32.totalorder %s597, 7
        %s601 = scalar_select %p600, %s597, 7
        %s602 = smul.addr %s599, 8
        %s603 = sadd.s32 %s601, %s602
        %s604 = smul.addr %s603, 8
        %s605 = scalar_lea.vmem %s0, %s604
        %p606 = pneg %p69
        %p607 = pneg %p66
        %s608 = smul.u32 8, %s39
        %p609 = scmp.lt.s32.totalorder %s38, 1
        %s610 = scalar_select %p609, %s38, 1
        %p611 = scmp.lt.s32.totalorder %s608, 7
        %s612 = scalar_select %p611, %s608, 7
        %s613 = smul.addr %s610, 8
        %s614 = sadd.s32 %s612, %s613
        %s615 = smul.addr %s614, 8
        %s616 = scalar_lea.vmem %s1, %s615
        %p617 = pneg %p97
        %p618 = pneg %p94
        %s619 = smul.u32 8, %s39
        %p620 = scmp.lt.s32.totalorder %s38, 1
        %s621 = scalar_select %p620, %s38, 1
        %p622 = scmp.lt.s32.totalorder %s619, 7
        %s623 = scalar_select %p622, %s619, 7
        %s624 = smul.addr %s621, 8
        %s625 = sadd.s32 %s623, %s624
        %s626 = scalar_lea.vmem %s2, %s625
        %p627 = pneg %p125
        %p628 = pneg %p122
        %p629 = scmp.lt.s32.totalorder %s38, 1
        %s630 = scalar_select %p629, %s38, 1
        %s631 = smul.addr %s630, 8
        %s632 = scalar_lea.vmem %s3, %s631
        %p633 = pneg %p151
        %p634 = pneg %p148
        %s635 = smul.u32 8, %s39
        %p636 = scmp.lt.s32.totalorder %s38, 1
        %s637 = scalar_select %p636, %s38, 1
        %p638 = scmp.lt.s32.totalorder %s635, 7
        %s639 = scalar_select %p638, %s635, 7
        %s640 = smul.addr %s637, 8
        %s641 = sadd.s32 %s639, %s640
        %s642 = smul.addr %s641, 8
        %s643 = scalar_lea.vmem %s4, %s642
        %p644 = pneg %p179
        %p645 = pneg %p176
        %s646 = smul.u32 8, %s39
        %p647 = scmp.lt.s32.totalorder %s38, 1
        %s648 = scalar_select %p647, %s38, 1
        %p649 = scmp.lt.s32.totalorder %s646, 7
        %s650 = scalar_select %p649, %s646, 7
        %s651 = smul.addr %s648, 8
        %s652 = sadd.s32 %s650, %s651
        %s653 = smul.addr %s652, 8
        %s654 = scalar_lea.vmem %s5, %s653
        %p655 = pneg %p207
        %p656 = pneg %p204
        %s657 = smul.u32 8, %s39
        %p658 = scmp.lt.s32.totalorder %s38, 1
        %s659 = scalar_select %p658, %s38, 1
        %p660 = scmp.lt.s32.totalorder %s657, 7
        %s661 = scalar_select %p660, %s657, 7
        %s662 = smul.addr %s659, 8
        %s663 = sadd.s32 %s661, %s662
        %s664 = smul.addr %s663, 8
        %s665 = scalar_lea.vmem %s6, %s664
        %p666 = pneg %p235
        %p667 = pneg %p232
        %p668 = pneg %p256
        %p669 = pneg %p253
        %p670 = pneg %p277
        %p671 = pneg %p274
        %p672 = pneg %p298
        %p673 = pneg %p295
        %p674 = pneg %p319
        %p675 = pneg %p316
        %p676 = pneg %p340
        %p677 = pneg %p337
        %p678 = pneg %p361
        %p679 = pneg %p358
        %p680 = pneg %p382
        %p681 = pneg %p379
        %p682 = pneg %p410
        %p683 = pneg %p407
        %s684 = sand.u32 %s397, 1
        %s685 = scalar_lea.sflag [#allocation3], %s684
        %s686 = sand.u32 %s397, 1
        %s687 = smul.addr %s686, 8
        %s688 = scalar_lea.vmem [#allocation2], %s687
        %p689 = pneg %p438
        %p690 = pneg %p435
        %s691 = sand.u32 %s425, 1
        %s692 = scalar_lea.sflag [#allocation5], %s691
        %s693 = sand.u32 %s425, 1
        %s694 = smul.addr %s693, 8
        %s695 = scalar_lea.vmem [#allocation4], %s694
        %p696 = pneg %p466
        %p697 = pneg %p463
        %p698 = scmp.lt.s32.totalorder %s38, 1
        %s699 = scalar_select %p698, %s38, 1
        %p700 = scmp.lt.s32.totalorder %s39, 0
        %s701 = scalar_select %p700, %s39, 0
        %s702 = sadd.s32 %s701, %s699
        %s703 = smul.addr %s702, 8
        %s704 = scalar_lea.vmem %s16, %s703
        %s705 = smul.u32 8, %s39
        %p706 = scmp.lt.s32.totalorder %s38, 1
        %s707 = scalar_select %p706, %s38, 1
        %p708 = scmp.lt.s32.totalorder %s705, 7
        %s709 = scalar_select %p708, %s705, 7
        %s710 = smul.addr %s707, 8
        %s711 = sadd.s32 %s709, %s710
        %s712 = smul.addr %s711, 8
        %s713 = scalar_lea.vmem %s0, %s712
        %s714 = smul.u32 8, %s39
        %s715 = smul.u32 8, %s39
        %p716 = scmp.lt.s32.totalorder %s38, 1
        %s717 = scalar_select %p716, %s38, 1
        %p718 = scmp.lt.s32.totalorder %s715, 7
        %s719 = scalar_select %p718, %s715, 7
        %s720 = smul.addr %s717, 8
        %s721 = sadd.s32 %s719, %s720
        %s722 = smul.addr %s721, 8
        %s723 = scalar_lea.vmem %s1, %s722
        %s724 = smul.u32 8, %s39
        %s725 = smul.u32 8, %s39
        %p726 = scmp.lt.s32.totalorder %s38, 1
        %s727 = scalar_select %p726, %s38, 1
        %p728 = scmp.lt.s32.totalorder %s725, 7
        %s729 = scalar_select %p728, %s725, 7
        %s730 = smul.addr %s727, 8
        %s731 = sadd.s32 %s729, %s730
        %s732 = scalar_lea.vmem %s2, %s731
        %s733 = smul.u32 8, %s39
        %p734 = scmp.lt.s32.totalorder %s38, 1
        %s735 = scalar_select %p734, %s38, 1
        %s736 = smul.addr %s735, 8
        %s737 = scalar_lea.vmem %s3, %s736
        %s738 = smul.u32 8, %s39
        %p739 = scmp.lt.s32.totalorder %s38, 1
        %s740 = scalar_select %p739, %s38, 1
        %p741 = scmp.lt.s32.totalorder %s738, 7
        %s742 = scalar_select %p741, %s738, 7
        %s743 = smul.addr %s740, 8
        %s744 = sadd.s32 %s742, %s743
        %s745 = smul.addr %s744, 8
        %s746 = scalar_lea.vmem %s4, %s745
        %s747 = smul.u32 8, %s39
        %s748 = smul.u32 8, %s39
        %p749 = scmp.lt.s32.totalorder %s38, 1
        %s750 = scalar_select %p749, %s38, 1
        %p751 = scmp.lt.s32.totalorder %s748, 7
        %s752 = scalar_select %p751, %s748, 7
        %s753 = smul.addr %s750, 8
        %s754 = sadd.s32 %s752, %s753
        %s755 = smul.addr %s754, 8
        %s756 = scalar_lea.vmem %s5, %s755
        %s757 = smul.u32 8, %s39
        %s758 = smul.u32 8, %s39
        %p759 = scmp.lt.s32.totalorder %s38, 1
        %s760 = scalar_select %p759, %s38, 1
        %p761 = scmp.lt.s32.totalorder %s758, 7
        %s762 = scalar_select %p761, %s758, 7
        %s763 = smul.addr %s760, 8
        %s764 = sadd.s32 %s762, %s763
        %s765 = smul.addr %s764, 8
        %s766 = scalar_lea.vmem %s6, %s765
        %s767 = smul.u32 8, %s39
        %p768 = scmp.lt.s32.totalorder %s38, 1
        %s769 = scalar_select %p768, %s38, 1
        %p770 = scmp.lt.s32.totalorder %s39, 0
        %s771 = scalar_select %p770, %s39, 0
        %s772 = sadd.s32 %s771, %s769
        %s773 = smul.addr %s772, 8
        %s774 = scalar_lea.vmem %s16, %s773
        %v776 = vld [vmem:[%s713] sm:$0xff]
        %v777 = vld [vmem:[%s713 + $0x8] sm:$0xff]
        %v778 = vld [vmem:[%s713 + $0x10] sm:$0xff]
        %v779 = vld [vmem:[%s713 + $0x18] sm:$0xff]
        %v780 = vld [vmem:[%s713 + $0x20] sm:$0xff]
        %v781 = vld [vmem:[%s713 + $0x28] sm:$0xff]
        %v782 = vld [vmem:[%s713 + $0x30] sm:$0xff]
        %v783 = vld [vmem:[%s713 + $0x38] sm:$0xff]
        %v784 = vld [vmem:[%s723] sm:$0xff]
        %v785 = vld [vmem:[%s723 + $0x8] sm:$0xff]
        %v786 = vld [vmem:[%s723 + $0x10] sm:$0xff]
        %v787 = vld [vmem:[%s723 + $0x18] sm:$0xff]
        %v788 = vld [vmem:[%s723 + $0x20] sm:$0xff]
        %v789 = vld [vmem:[%s723 + $0x28] sm:$0xff]
        %v790 = vld [vmem:[%s723 + $0x30] sm:$0xff]
        %v791 = vld [vmem:[%s723 + $0x38] sm:$0xff]
        %v792 = vld [vmem:[%s7] sm:$0xf]
        %v793 = vld [vmem:[%s7 + $0x4] sm:$0xf]
        %v794 = vpack.c.bf16 %v777, %v776
        %v795 = vpack.c.bf16 %v779, %v778
        %v796 = vpack.c.bf16 %v781, %v780
        %v797 = vpack.c.bf16 %v783, %v782
        %v798 = vld [vmem:[%s8] sm:$0xf]
        %v799 = vld [vmem:[%s8 + $0x4] sm:$0xf]
        %v800 = vpack.c.bf16 %v785, %v784
        %v801 = vpack.c.bf16 %v787, %v786
        %v802 = vpack.c.bf16 %v789, %v788
        %v803 = vpack.c.bf16 %v791, %v790
        %v806 = vunpack.c.l.b16 %v798
        %v807 = vunpack.c.l.b16 %v799
        %v808 = vpack.c.b16 %v807, %v806
        %vm810 = vcmask 130048
        %v812 = vsel %vm810, %v800, 0
        %v815 = vsel %vm810, %v801, 0
        %v818 = vsel %vm810, %v802, 0
        %v821 = vsel %vm810, %v803, 0
        %823 = vmatprep.subr.bf16.mxu0 0
        %824 = vmatpush1.bf16.msra.mxu0 0
        %825 = vmatprep.subr.bf16.mxu0 0
        %826 = vmatpush1.bf16.msra.mxu0 0
        %827 = vmatprep.subr.bf16.mxu0 0
        %828 = vmatpush1.bf16.msra.mxu0 0
        %829 = vmatprep.subr.bf16.mxu0 0
        %830 = vmatpush1.bf16.msra.mxu0 0
        %831 = vmatprep.subr.bf16.mxu0 0
        %832 = vmatpush1.bf16.msra.mxu0 0
        %833 = vmatprep.subr.bf16.mxu0 0
        %834 = vmatpush1.bf16.msra.mxu0 0
        %835 = vmatprep.subr.bf16.mxu0 0
        %836 = vmatpush1.bf16.msra.mxu0 0
        %837 = vmatprep.subr.bf16.mxu0 0
        %838 = vmatpush1.bf16.msra.mxu0 %v808
        %839 = vmatprep.subr.bf16.mxu0 0
        %840 = vmatpush2.bf16.msra.mxu0 0
        %841 = vmatprep.subr.bf16.mxu0 0
        %842 = vmatpush2.bf16.msra.mxu0 0
        %843 = vmatprep.subr.bf16.mxu0 0
        %844 = vmatpush2.bf16.msra.mxu0 0
        %845 = vmatprep.subr.bf16.mxu0 0
        %846 = vmatpush2.bf16.msra.mxu0 0
        %847 = vmatprep.subr.bf16.mxu0 0
        %848 = vmatpush2.bf16.msra.mxu0 0
        %849 = vmatprep.subr.bf16.mxu0 0
        %850 = vmatpush2.bf16.msra.mxu0 0
        %851 = vmatprep.subr.bf16.mxu0 0
        %852 = vmatpush2.bf16.msra.mxu0 0
        %853 = vmatprep.subr.bf16.mxu0 0
        %854 = vmatpush2.bf16.msra.mxu0 0
        %855 = vmatprep.mubr.bf16.mxu0 0
        %856 = vmatmul.mubr.bf16.gmra.mxu0 %v812
        %v857 = vpop.f32.mrf.mxu0
        %v858 = vadd.f32 0.0, %v857
        %v859 = vpop.f32.mrf.mxu0
        %v860 = vpop.f32.mrf.mxu0
        %v861 = vadd.f32 0.0, %v860
        %v862 = vpop.f32.mrf.mxu0
        %863 = vmatprep.mubr.bf16.mxu0 0
        %864 = vmatmul.mubr.bf16.gmra.mxu0 %v815
        %v865 = vpop.f32.mrf.mxu0
        %v866 = vadd.f32 0.0, %v865
        %v867 = vpop.f32.mrf.mxu0
        %v868 = vpop.f32.mrf.mxu0
        %v869 = vadd.f32 0.0, %v868
        %v870 = vpop.f32.mrf.mxu0
        %871 = vmatprep.mubr.bf16.mxu0 0
        %872 = vmatmul.mubr.bf16.gmra.mxu0 %v818
        %v873 = vpop.f32.mrf.mxu0
        %v874 = vadd.f32 0.0, %v873
        %v875 = vpop.f32.mrf.mxu0
        %v876 = vpop.f32.mrf.mxu0
        %v877 = vadd.f32 0.0, %v876
        %v878 = vpop.f32.mrf.mxu0
        %879 = vmatprep.mubr.bf16.mxu0 0
        %880 = vmatmul.mubr.bf16.gmra.mxu0 %v821
        %v881 = vpop.f32.mrf.mxu0
        %v882 = vadd.f32 0.0, %v881
        %v883 = vpop.f32.mrf.mxu0
        %v884 = vpop.f32.mrf.mxu0
        %v885 = vadd.f32 0.0, %v884
        %v886 = vpop.f32.mrf.mxu0
        %887 = vdwg.mxu0
        %v890 = vunpack.c.l.b16 %v792
        %v891 = vunpack.c.l.b16 %v793
        %v892 = vpack.c.b16 %v891, %v890
        %v895 = vsel %vm810, %v794, 0
        %v898 = vsel %vm810, %v795, 0
        %v901 = vsel %vm810, %v796, 0
        %v904 = vsel %vm810, %v797, 0
        %906 = vmatprep.subr.bf16.mxu0 0
        %907 = vmatpush1.bf16.msra.mxu0 0
        %908 = vmatprep.subr.bf16.mxu0 0
        %909 = vmatpush1.bf16.msra.mxu0 0
        %910 = vmatprep.subr.bf16.mxu0 0
        %911 = vmatpush1.bf16.msra.mxu0 0
        %912 = vmatprep.subr.bf16.mxu0 0
        %913 = vmatpush1.bf16.msra.mxu0 0
        %914 = vmatprep.subr.bf16.mxu0 0
        %915 = vmatpush1.bf16.msra.mxu0 0
        %916 = vmatprep.subr.bf16.mxu0 0
        %917 = vmatpush1.bf16.msra.mxu0 0
        %918 = vmatprep.subr.bf16.mxu0 0
        %919 = vmatpush1.bf16.msra.mxu0 0
        %920 = vmatprep.subr.bf16.mxu0 0
        %921 = vmatpush1.bf16.msra.mxu0 %v892
        %922 = vmatprep.subr.bf16.mxu0 0
        %923 = vmatpush2.bf16.msra.mxu0 0
        %924 = vmatprep.subr.bf16.mxu0 0
        %925 = vmatpush2.bf16.msra.mxu0 0
        %926 = vmatprep.subr.bf16.mxu0 0
        %927 = vmatpush2.bf16.msra.mxu0 0
        %928 = vmatprep.subr.bf16.mxu0 0
        %929 = vmatpush2.bf16.msra.mxu0 0
        %930 = vmatprep.subr.bf16.mxu0 0
        %931 = vmatpush2.bf16.msra.mxu0 0
        %932 = vmatprep.subr.bf16.mxu0 0
        %933 = vmatpush2.bf16.msra.mxu0 0
        %934 = vmatprep.subr.bf16.mxu0 0
        %935 = vmatpush2.bf16.msra.mxu0 0
        %936 = vmatprep.subr.bf16.mxu0 0
        %937 = vmatpush2.bf16.msra.mxu0 0
        %938 = vmatprep.mubr.bf16.mxu0 0
        %939 = vmatmul.mubr.bf16.gmra.mxu0 %v895
        %v940 = vpop.f32.mrf.mxu0
        %v941 = vadd.f32 %v858, %v940
        %v942 = vpop.f32.mrf.mxu0
        %v943 = vpop.f32.mrf.mxu0
        %v944 = vadd.f32 %v861, %v943
        %v945 = vpop.f32.mrf.mxu0
        %946 = vmatprep.mubr.bf16.mxu0 0
        %947 = vmatmul.mubr.bf16.gmra.mxu0 %v898
        %v948 = vpop.f32.mrf.mxu0
        %v949 = vadd.f32 %v866, %v948
        %v950 = vpop.f32.mrf.mxu0
        %v951 = vpop.f32.mrf.mxu0
        %v952 = vadd.f32 %v869, %v951
        %v953 = vpop.f32.mrf.mxu0
        %954 = vmatprep.mubr.bf16.mxu0 0
        %955 = vmatmul.mubr.bf16.gmra.mxu0 %v901
        %v956 = vpop.f32.mrf.mxu0
        %v957 = vadd.f32 %v874, %v956
        %v958 = vpop.f32.mrf.mxu0
        %v959 = vpop.f32.mrf.mxu0
        %v960 = vadd.f32 %v877, %v959
        %v961 = vpop.f32.mrf.mxu0
        %962 = vmatprep.mubr.bf16.mxu0 0
        %963 = vmatmul.mubr.bf16.gmra.mxu0 %v904
        %v964 = vpop.f32.mrf.mxu0
        %v965 = vadd.f32 %v882, %v964
        %v966 = vpop.f32.mrf.mxu0
        %v967 = vpop.f32.mrf.mxu0
        %v968 = vadd.f32 %v885, %v967
        %v969 = vpop.f32.mrf.mxu0
        %970 = vdwg.mxu0
        %v971 = vld [vmem:[%s732] sm:$0x1]
        %v972 = vld [vmem:[%s732 + $0x1] sm:$0x1]
        %v973 = vld [vmem:[%s732 + $0x2] sm:$0x1]
        %v974 = vld [vmem:[%s732 + $0x3] sm:$0x1]
        %v975 = vld [vmem:[%s732 + $0x4] sm:$0x1]
        %v976 = vld [vmem:[%s732 + $0x5] sm:$0x1]
        %v977 = vld [vmem:[%s732 + $0x6] sm:$0x1]
        %v978 = vld [vmem:[%s732 + $0x7] sm:$0x1]
        %v987 = vlaneseq
        %v988 = vshrl.u32 %v987, 7
        %v989 = vsub.s32 0, %v988
        %v990 = vrot.slane %v971, %v989
        %v991 = vlaneseq
        %v992 = vshrl.u32 %v991, 7
        %v993 = vsub.s32 0, %v992
        %v994 = vrot.slane %v972, %v993
        %v995 = vlaneseq
        %v996 = vshrl.u32 %v995, 7
        %v997 = vsub.s32 0, %v996
        %v998 = vrot.slane %v973, %v997
        %v999 = vlaneseq
        %v1000 = vshrl.u32 %v999, 7
        %v1001 = vsub.s32 0, %v1000
        %v1002 = vrot.slane %v974, %v1001
        %v1003 = vlaneseq
        %v1004 = vshrl.u32 %v1003, 7
        %v1005 = vsub.s32 0, %v1004
        %v1006 = vrot.slane %v975, %v1005
        %v1007 = vlaneseq
        %v1008 = vshrl.u32 %v1007, 7
        %v1009 = vsub.s32 0, %v1008
        %v1010 = vrot.slane %v976, %v1009
        %v1011 = vlaneseq
        %v1012 = vshrl.u32 %v1011, 7
        %v1013 = vsub.s32 0, %v1012
        %v1014 = vrot.slane %v977, %v1013
        %v1015 = vlaneseq
        %v1016 = vshrl.u32 %v1015, 7
        %v1017 = vsub.s32 0, %v1016
        %v1018 = vrot.slane %v978, %v1017
        %v1027 = vadd.f32 %v941, %v990
        %v1028 = vadd.f32 %v944, %v994
        %v1029 = vadd.f32 %v949, %v998
        %v1030 = vadd.f32 %v952, %v1002
        %v1031 = vadd.f32 %v957, %v1006
        %v1032 = vadd.f32 %v960, %v1010
        %v1033 = vadd.f32 %v965, %v1014
        %v1034 = vadd.f32 %v968, %v1018
        %v1035 = vld [vmem:[%s737] sm:$0xff]
        %v1036 = vadd.f32 %v1027, %v1035
        %v1037 = vadd.f32 %v1028, %v1035
        %v1038 = vadd.f32 %v1029, %v1035
        %v1039 = vadd.f32 %v1030, %v1035
        %v1040 = vadd.f32 %v1031, %v1035
        %v1041 = vadd.f32 %v1032, %v1035
        %v1042 = vadd.f32 %v1033, %v1035
        %v1043 = vadd.f32 %v1034, %v1035
        %v1044 = vxor.u32 %v1036, 2147483648
        %v1045 = vxor.u32 %v1037, 2147483648
        %v1046 = vxor.u32 %v1038, 2147483648
        %v1047 = vxor.u32 %v1039, 2147483648
        %v1048 = vxor.u32 %v1040, 2147483648
        %v1049 = vxor.u32 %v1041, 2147483648
        %v1050 = vxor.u32 %v1042, 2147483648
        %v1051 = vxor.u32 %v1043, 2147483648
        %v1052 = vmul.f32 %v1044, 1.442695
        %v1053 = vpow.pop %v1052
        %v1054 = vmul.f32 %v1045, 1.442695
        %v1055 = vpow.pop %v1054
        %v1056 = vmul.f32 %v1046, 1.442695
        %v1057 = vpow.pop %v1056
        %v1058 = vmul.f32 %v1047, 1.442695
        %v1059 = vpow.pop %v1058
        %v1060 = vmul.f32 %v1048, 1.442695
        %v1061 = vpow.pop %v1060
        %v1062 = vmul.f32 %v1049, 1.442695
        %v1063 = vpow.pop %v1062
        %v1064 = vmul.f32 %v1050, 1.442695
        %v1065 = vpow.pop %v1064
        %v1066 = vmul.f32 %v1051, 1.442695
        %v1067 = vpow.pop %v1066
        %v1068 = vadd.f32 %v1053, 1.0
        %v1069 = vadd.f32 %v1055, 1.0
        %v1070 = vadd.f32 %v1057, 1.0
        %v1071 = vadd.f32 %v1059, 1.0
        %v1072 = vadd.f32 %v1061, 1.0
        %v1073 = vadd.f32 %v1063, 1.0
        %v1074 = vadd.f32 %v1065, 1.0
        %v1075 = vadd.f32 %v1067, 1.0
        %v1076 = vrcp.pop %v1068
        %v1077 = vmul.f32 1.0, %v1076
        %v1078 = vrcp.pop %v1069
        %v1079 = vmul.f32 1.0, %v1078
        %v1080 = vrcp.pop %v1070
        %v1081 = vmul.f32 1.0, %v1080
        %v1082 = vrcp.pop %v1071
        %v1083 = vmul.f32 1.0, %v1082
        %v1084 = vrcp.pop %v1072
        %v1085 = vmul.f32 1.0, %v1084
        %v1086 = vrcp.pop %v1073
        %v1087 = vmul.f32 1.0, %v1086
        %v1088 = vrcp.pop %v1074
        %v1089 = vmul.f32 1.0, %v1088
        %v1090 = vrcp.pop %v1075
        %v1091 = vmul.f32 1.0, %v1090
        %v1092 = vmul.f32 %v1036, %v1077
        %v1093 = vmul.f32 %v1037, %v1079
        %v1094 = vmul.f32 %v1038, %v1081
        %v1095 = vmul.f32 %v1039, %v1083
        %v1096 = vmul.f32 %v1040, %v1085
        %v1097 = vmul.f32 %v1041, %v1087
        %v1098 = vmul.f32 %v1042, %v1089
        %v1099 = vmul.f32 %v1043, %v1091
        %v1100 = vld [vmem:[%s9] sm:$0xf]
        %v1101 = vld [vmem:[%s9 + $0x4] sm:$0xf]
        %v1102 = vld [vmem:[%s9 + $0x8] sm:$0xf]
        %v1103 = vld [vmem:[%s9 + $0xc] sm:$0xf]
        %v1104 = vpack.c.bf16 %v1093, %v1092
        %v1105 = vpack.c.bf16 %v1095, %v1094
        %v1106 = vpack.c.bf16 %v1097, %v1096
        %v1107 = vpack.c.bf16 %v1099, %v1098
        %v1108 = vld [vmem:[%s10] sm:$0x1]
        %v1110 = vlaneseq
        %v1111 = vshrl.u32 %v1110, 7
        %v1112 = vsub.s32 0, %v1111
        %v1113 = vrot.slane %v1108, %v1112
        %v1119 = vunpack.c.l.b16 %v1100
        %v1120 = vunpack.c.l.b16 %v1101
        %v1121 = vunpack.c.l.b16 %v1102
        %v1122 = vunpack.c.l.b16 %v1103
        %v1123 = vpack.c.b16 %v1120, %v1119
        %v1124 = vpack.c.b16 %v1122, %v1121
        %vm1127 = vcmask 261120
        %v1129 = vsel %vm1127, %v1104, 0
        %v1132 = vsel %vm1127, %v1105, 0
        %v1135 = vsel %vm1127, %v1106, 0
        %v1138 = vsel %vm1127, %v1107, 0
        %1140 = vmatprep.subr.bf16.mxu0 0
        %1141 = vmatpush1.bf16.msra.mxu0 0
        %1142 = vmatprep.subr.bf16.mxu0 0
        %1143 = vmatpush1.bf16.msra.mxu0 0
        %1144 = vmatprep.subr.bf16.mxu0 0
        %1145 = vmatpush1.bf16.msra.mxu0 0
        %1146 = vmatprep.subr.bf16.mxu0 0
        %1147 = vmatpush1.bf16.msra.mxu0 0
        %1148 = vmatprep.subr.bf16.mxu0 0
        %1149 = vmatpush1.bf16.msra.mxu0 0
        %1150 = vmatprep.subr.bf16.mxu0 0
        %1151 = vmatpush1.bf16.msra.mxu0 0
        %1152 = vmatprep.subr.bf16.mxu0 0
        %1153 = vmatpush1.bf16.msra.mxu0 %v1124
        %1154 = vmatprep.subr.bf16.mxu0 0
        %1155 = vmatpush1.bf16.msra.mxu0 %v1123
        %1156 = vmatprep.subr.bf16.mxu0 0
        %1157 = vmatpush2.bf16.msra.mxu0 0
        %1158 = vmatprep.subr.bf16.mxu0 0
        %1159 = vmatpush2.bf16.msra.mxu0 0
        %1160 = vmatprep.subr.bf16.mxu0 0
        %1161 = vmatpush2.bf16.msra.mxu0 0
        %1162 = vmatprep.subr.bf16.mxu0 0
        %1163 = vmatpush2.bf16.msra.mxu0 0
        %1164 = vmatprep.subr.bf16.mxu0 0
        %1165 = vmatpush2.bf16.msra.mxu0 0
        %1166 = vmatprep.subr.bf16.mxu0 0
        %1167 = vmatpush2.bf16.msra.mxu0 0
        %1168 = vmatprep.subr.bf16.mxu0 0
        %1169 = vmatpush2.bf16.msra.mxu0 0
        %1170 = vmatprep.subr.bf16.mxu0 0
        %1171 = vmatpush2.bf16.msra.mxu0 0
        %1172 = vmatprep.mubr.bf16.mxu0 0
        %1173 = vmatmul.mubr.bf16.gmra.mxu0 %v1129
        %v1174 = vpop.f32.mrf.mxu0
        %v1175 = vadd.f32 %v1113, %v1174
        %v1176 = vpop.f32.mrf.mxu0
        %v1177 = vpop.f32.mrf.mxu0
        %v1178 = vadd.f32 %v1113, %v1177
        %v1179 = vpop.f32.mrf.mxu0
        %1180 = vmatprep.mubr.bf16.mxu0 0
        %1181 = vmatmul.mubr.bf16.gmra.mxu0 %v1132
        %v1182 = vpop.f32.mrf.mxu0
        %v1183 = vadd.f32 %v1113, %v1182
        %v1184 = vpop.f32.mrf.mxu0
        %v1185 = vpop.f32.mrf.mxu0
        %v1186 = vadd.f32 %v1113, %v1185
        %v1187 = vpop.f32.mrf.mxu0
        %1188 = vmatprep.mubr.bf16.mxu0 0
        %1189 = vmatmul.mubr.bf16.gmra.mxu0 %v1135
        %v1190 = vpop.f32.mrf.mxu0
        %v1191 = vadd.f32 %v1113, %v1190
        %v1192 = vpop.f32.mrf.mxu0
        %v1193 = vpop.f32.mrf.mxu0
        %v1194 = vadd.f32 %v1113, %v1193
        %v1195 = vpop.f32.mrf.mxu0
        %1196 = vmatprep.mubr.bf16.mxu0 0
        %1197 = vmatmul.mubr.bf16.gmra.mxu0 %v1138
        %v1198 = vpop.f32.mrf.mxu0
        %v1199 = vadd.f32 %v1113, %v1198
        %v1200 = vpop.f32.mrf.mxu0
        %v1201 = vpop.f32.mrf.mxu0
        %v1202 = vadd.f32 %v1113, %v1201
        %v1203 = vpop.f32.mrf.mxu0
        %1204 = vdwg.mxu0
        %v1205 = vld [vmem:[%s756] sm:$0xff]
        %v1206 = vld [vmem:[%s756 + $0x8] sm:$0xff]
        %v1207 = vld [vmem:[%s756 + $0x10] sm:$0xff]
        %v1208 = vld [vmem:[%s756 + $0x18] sm:$0xff]
        %v1209 = vld [vmem:[%s756 + $0x20] sm:$0xff]
        %v1210 = vld [vmem:[%s756 + $0x28] sm:$0xff]
        %v1211 = vld [vmem:[%s756 + $0x30] sm:$0xff]
        %v1212 = vld [vmem:[%s756 + $0x38] sm:$0xff]
        %v1213 = vld [vmem:[%s766] sm:$0xff]
        %v1214 = vld [vmem:[%s766 + $0x8] sm:$0xff]
        %v1215 = vld [vmem:[%s766 + $0x10] sm:$0xff]
        %v1216 = vld [vmem:[%s766 + $0x18] sm:$0xff]
        %v1217 = vld [vmem:[%s766 + $0x20] sm:$0xff]
        %v1218 = vld [vmem:[%s766 + $0x28] sm:$0xff]
        %v1219 = vld [vmem:[%s766 + $0x30] sm:$0xff]
        %v1220 = vld [vmem:[%s766 + $0x38] sm:$0xff]
        %1222 = vset.pattern.permute.xlu0 0
        %1223 = vperm.xlu0 %1222, %v1205
        %v1224 = vpop.permute.xlu0 %1223
        %1227 = vset.pattern.permute.xlu0 0
        %1228 = vperm.xlu0 %1227, %v1206
        %v1229 = vpop.permute.xlu0 %1228
        %1232 = vset.pattern.permute.xlu0 0
        %1233 = vperm.xlu0 %1232, %v1207
        %v1234 = vpop.permute.xlu0 %1233
        %1237 = vset.pattern.permute.xlu0 0
        %1238 = vperm.xlu0 %1237, %v1208
        %v1239 = vpop.permute.xlu0 %1238
        %1242 = vset.pattern.permute.xlu0 0
        %1243 = vperm.xlu0 %1242, %v1209
        %v1244 = vpop.permute.xlu0 %1243
        %1247 = vset.pattern.permute.xlu0 0
        %1248 = vperm.xlu0 %1247, %v1210
        %v1249 = vpop.permute.xlu0 %1248
        %1252 = vset.pattern.permute.xlu0 0
        %1253 = vperm.xlu0 %1252, %v1211
        %v1254 = vpop.permute.xlu0 %1253
        %1257 = vset.pattern.permute.xlu0 0
        %1258 = vperm.xlu0 %1257, %v1212
        %v1259 = vpop.permute.xlu0 %1258
        %v1261 = vmul.f32 %v1175, %v1224
        %v1262 = vmul.f32 %v1178, %v1229
        %v1263 = vmul.f32 %v1183, %v1234
        %v1264 = vmul.f32 %v1186, %v1239
        %v1265 = vmul.f32 %v1191, %v1244
        %v1266 = vmul.f32 %v1194, %v1249
        %v1267 = vmul.f32 %v1199, %v1254
        %v1268 = vmul.f32 %v1202, %v1259
        %v1269 = vsel %vm1127, %v1261, 0.0
        %v1270 = vrot.slane %v1269, 4
        %v1271 = vadd.f32 %v1269, %v1270
        %v1272 = vrot.slane %v1271, 2
        %v1273 = vadd.f32 %v1271, %v1272
        %v1274 = vrot.slane %v1273, 1
        %v1275 = vadd.f32 %v1273, %v1274
        %v1276 = vsel %vm1127, %v1262, 0.0
        %v1277 = vrot.slane %v1276, 4
        %v1278 = vadd.f32 %v1276, %v1277
        %v1279 = vrot.slane %v1278, 2
        %v1280 = vadd.f32 %v1278, %v1279
        %v1281 = vrot.slane %v1280, 1
        %v1282 = vadd.f32 %v1280, %v1281
        %v1283 = vsel %vm1127, %v1263, 0.0
        %v1284 = vrot.slane %v1283, 4
        %v1285 = vadd.f32 %v1283, %v1284
        %v1286 = vrot.slane %v1285, 2
        %v1287 = vadd.f32 %v1285, %v1286
        %v1288 = vrot.slane %v1287, 1
        %v1289 = vadd.f32 %v1287, %v1288
        %v1290 = vsel %vm1127, %v1264, 0.0
        %v1291 = vrot.slane %v1290, 4
        %v1292 = vadd.f32 %v1290, %v1291
        %v1293 = vrot.slane %v1292, 2
        %v1294 = vadd.f32 %v1292, %v1293
        %v1295 = vrot.slane %v1294, 1
        %v1296 = vadd.f32 %v1294, %v1295
        %v1297 = vsel %vm1127, %v1265, 0.0
        %v1298 = vrot.slane %v1297, 4
        %v1299 = vadd.f32 %v1297, %v1298
        %v1300 = vrot.slane %v1299, 2
        %v1301 = vadd.f32 %v1299, %v1300
        %v1302 = vrot.slane %v1301, 1
        %v1303 = vadd.f32 %v1301, %v1302
        %v1304 = vsel %vm1127, %v1266, 0.0
        %v1305 = vrot.slane %v1304, 4
        %v1306 = vadd.f32 %v1304, %v1305
        %v1307 = vrot.slane %v1306, 2
        %v1308 = vadd.f32 %v1306, %v1307
        %v1309 = vrot.slane %v1308, 1
        %v1310 = vadd.f32 %v1308, %v1309
        %v1311 = vsel %vm1127, %v1267, 0.0
        %v1312 = vrot.slane %v1311, 4
        %v1313 = vadd.f32 %v1311, %v1312
        %v1314 = vrot.slane %v1313, 2
        %v1315 = vadd.f32 %v1313, %v1314
        %v1316 = vrot.slane %v1315, 1
        %v1317 = vadd.f32 %v1315, %v1316
        %v1318 = vsel %vm1127, %v1268, 0.0
        %v1319 = vrot.slane %v1318, 4
        %v1320 = vadd.f32 %v1318, %v1319
        %v1321 = vrot.slane %v1320, 2
        %v1322 = vadd.f32 %v1320, %v1321
        %v1323 = vrot.slane %v1322, 1
        %v1324 = vadd.f32 %v1322, %v1323
        %vm1333 = vcmask 1041409
        %v1334 = vsel %vm1333, %v1282, %v1275
        %vm1335 = vcmask 1042434
        %v1336 = vsel %vm1335, %v1289, %v1334
        %vm1337 = vcmask 1043459
        %v1338 = vsel %vm1337, %v1296, %v1336
        %vm1339 = vcmask 1044484
        %v1340 = vsel %vm1339, %v1303, %v1338
        %vm1341 = vcmask 1045509
        %v1342 = vsel %vm1341, %v1310, %v1340
        %vm1343 = vcmask 1046534
        %v1344 = vsel %vm1343, %v1317, %v1342
        %vm1345 = vcmask 1047559
        %v1346 = vsel %vm1345, %v1324, %v1344
        %1348 = vst.msk [vmem:[%s688] sm:$0xff] %vm1127, %v1346
        %1350 = vset.pattern.permute.xlu0 0
        %1351 = vperm.xlu0 %1350, %v1213
        %v1352 = vpop.permute.xlu0 %1351
        %1355 = vset.pattern.permute.xlu0 0
        %1356 = vperm.xlu0 %1355, %v1214
        %v1357 = vpop.permute.xlu0 %1356
        %1360 = vset.pattern.permute.xlu0 0
        %1361 = vperm.xlu0 %1360, %v1215
        %v1362 = vpop.permute.xlu0 %1361
        %1365 = vset.pattern.permute.xlu0 0
        %1366 = vperm.xlu0 %1365, %v1216
        %v1367 = vpop.permute.xlu0 %1366
        %1370 = vset.pattern.permute.xlu0 0
        %1371 = vperm.xlu0 %1370, %v1217
        %v1372 = vpop.permute.xlu0 %1371
        %1375 = vset.pattern.permute.xlu0 0
        %1376 = vperm.xlu0 %1375, %v1218
        %v1377 = vpop.permute.xlu0 %1376
        %1380 = vset.pattern.permute.xlu0 0
        %1381 = vperm.xlu0 %1380, %v1219
        %v1382 = vpop.permute.xlu0 %1381
        %1385 = vset.pattern.permute.xlu0 0
        %1386 = vperm.xlu0 %1385, %v1220
        %v1387 = vpop.permute.xlu0 %1386
        %v1389 = vmul.f32 %v1175, %v1352
        %v1390 = vmul.f32 %v1178, %v1357
        %v1391 = vmul.f32 %v1183, %v1362
        %v1392 = vmul.f32 %v1186, %v1367
        %v1393 = vmul.f32 %v1191, %v1372
        %v1394 = vmul.f32 %v1194, %v1377
        %v1395 = vmul.f32 %v1199, %v1382
        %v1396 = vmul.f32 %v1202, %v1387
        %v1397 = vsel %vm1127, %v1389, 0.0
        %v1398 = vrot.slane %v1397, 4
        %v1399 = vadd.f32 %v1397, %v1398
        %v1400 = vrot.slane %v1399, 2
        %v1401 = vadd.f32 %v1399, %v1400
        %v1402 = vrot.slane %v1401, 1
        %v1403 = vadd.f32 %v1401, %v1402
        %v1404 = vsel %vm1127, %v1390, 0.0
        %v1405 = vrot.slane %v1404, 4
        %v1406 = vadd.f32 %v1404, %v1405
        %v1407 = vrot.slane %v1406, 2
        %v1408 = vadd.f32 %v1406, %v1407
        %v1409 = vrot.slane %v1408, 1
        %v1410 = vadd.f32 %v1408, %v1409
        %v1411 = vsel %vm1127, %v1391, 0.0
        %v1412 = vrot.slane %v1411, 4
        %v1413 = vadd.f32 %v1411, %v1412
        %v1414 = vrot.slane %v1413, 2
        %v1415 = vadd.f32 %v1413, %v1414
        %v1416 = vrot.slane %v1415, 1
        %v1417 = vadd.f32 %v1415, %v1416
        %v1418 = vsel %vm1127, %v1392, 0.0
        %v1419 = vrot.slane %v1418, 4
        %v1420 = vadd.f32 %v1418, %v1419
        %v1421 = vrot.slane %v1420, 2
        %v1422 = vadd.f32 %v1420, %v1421
        %v1423 = vrot.slane %v1422, 1
        %v1424 = vadd.f32 %v1422, %v1423
        %v1425 = vsel %vm1127, %v1393, 0.0
        %v1426 = vrot.slane %v1425, 4
        %v1427 = vadd.f32 %v1425, %v1426
        %v1428 = vrot.slane %v1427, 2
        %v1429 = vadd.f32 %v1427, %v1428
        %v1430 = vrot.slane %v1429, 1
        %v1431 = vadd.f32 %v1429, %v1430
        %v1432 = vsel %vm1127, %v1394, 0.0
        %v1433 = vrot.slane %v1432, 4
        %v1434 = vadd.f32 %v1432, %v1433
        %v1435 = vrot.slane %v1434, 2
        %v1436 = vadd.f32 %v1434, %v1435
        %v1437 = vrot.slane %v1436, 1
        %v1438 = vadd.f32 %v1436, %v1437
        %v1439 = vsel %vm1127, %v1395, 0.0
        %v1440 = vrot.slane %v1439, 4
        %v1441 = vadd.f32 %v1439, %v1440
        %v1442 = vrot.slane %v1441, 2
        %v1443 = vadd.f32 %v1441, %v1442
        %v1444 = vrot.slane %v1443, 1
        %v1445 = vadd.f32 %v1443, %v1444
        %v1446 = vsel %vm1127, %v1396, 0.0
        %v1447 = vrot.slane %v1446, 4
        %v1448 = vadd.f32 %v1446, %v1447
        %v1449 = vrot.slane %v1448, 2
        %v1450 = vadd.f32 %v1448, %v1449
        %v1451 = vrot.slane %v1450, 1
        %v1452 = vadd.f32 %v1450, %v1451
        %v1461 = vsel %vm1333, %v1410, %v1403
        %v1462 = vsel %vm1335, %v1417, %v1461
        %v1463 = vsel %vm1337, %v1424, %v1462
        %v1464 = vsel %vm1339, %v1431, %v1463
        %v1465 = vsel %vm1341, %v1438, %v1464
        %v1466 = vsel %vm1343, %v1445, %v1465
        %v1467 = vsel %vm1345, %v1452, %v1466
        %1469 = vst.msk [vmem:[%s695] sm:$0xff] %vm1127, %v1467
        %v1470 = vld [vmem:[%s11] sm:$0xf]
        %v1471 = vld [vmem:[%s11 + $0x4] sm:$0xf]
        %v1472 = vld [vmem:[%s11 + $0x8] sm:$0xf]
        %v1473 = vld [vmem:[%s11 + $0xc] sm:$0xf]
        %v1474 = vpack.c.bf16 %v1178, %v1175
        %v1475 = vpack.c.bf16 %v1186, %v1183
        %v1476 = vpack.c.bf16 %v1194, %v1191
        %v1477 = vpack.c.bf16 %v1202, %v1199
        %v1478 = vld [vmem:[%s12] sm:$0x1]
        %v1480 = vlaneseq
        %v1481 = vshrl.u32 %v1480, 7
        %v1482 = vsub.s32 0, %v1481
        %v1483 = vrot.slane %v1478, %v1482
        %v1489 = vunpack.c.l.b16 %v1470
        %v1490 = vunpack.c.l.b16 %v1471
        %v1491 = vunpack.c.l.b16 %v1472
        %v1492 = vunpack.c.l.b16 %v1473
        %v1493 = vpack.c.b16 %v1490, %v1489
        %v1494 = vpack.c.b16 %v1492, %v1491
        %v1498 = vsel %vm1127, %v1474, 0
        %v1501 = vsel %vm1127, %v1475, 0
        %v1504 = vsel %vm1127, %v1476, 0
        %v1507 = vsel %vm1127, %v1477, 0
        %1509 = vmatprep.subr.bf16.mxu0 0
        %1510 = vmatpush1.bf16.msra.mxu0 0
        %1511 = vmatprep.subr.bf16.mxu0 0
        %1512 = vmatpush1.bf16.msra.mxu0 0
        %1513 = vmatprep.subr.bf16.mxu0 0
        %1514 = vmatpush1.bf16.msra.mxu0 0
        %1515 = vmatprep.subr.bf16.mxu0 0
        %1516 = vmatpush1.bf16.msra.mxu0 0
        %1517 = vmatprep.subr.bf16.mxu0 0
        %1518 = vmatpush1.bf16.msra.mxu0 0
        %1519 = vmatprep.subr.bf16.mxu0 0
        %1520 = vmatpush1.bf16.msra.mxu0 0
        %1521 = vmatprep.subr.bf16.mxu0 0
        %1522 = vmatpush1.bf16.msra.mxu0 %v1494
        %1523 = vmatprep.subr.bf16.mxu0 0
        %1524 = vmatpush1.bf16.msra.mxu0 %v1493
        %1525 = vmatprep.subr.bf16.mxu0 0
        %1526 = vmatpush2.bf16.msra.mxu0 0
        %1527 = vmatprep.subr.bf16.mxu0 0
        %1528 = vmatpush2.bf16.msra.mxu0 0
        %1529 = vmatprep.subr.bf16.mxu0 0
        %1530 = vmatpush2.bf16.msra.mxu0 0
        %1531 = vmatprep.subr.bf16.mxu0 0
        %1532 = vmatpush2.bf16.msra.mxu0 0
        %1533 = vmatprep.subr.bf16.mxu0 0
        %1534 = vmatpush2.bf16.msra.mxu0 0
        %1535 = vmatprep.subr.bf16.mxu0 0
        %1536 = vmatpush2.bf16.msra.mxu0 0
        %1537 = vmatprep.subr.bf16.mxu0 0
        %1538 = vmatpush2.bf16.msra.mxu0 0
        %1539 = vmatprep.subr.bf16.mxu0 0
        %1540 = vmatpush2.bf16.msra.mxu0 0
        %1541 = vmatprep.mubr.bf16.mxu0 0
        %1542 = vmatmul.mubr.bf16.gmra.mxu0 %v1498
        %v1543 = vpop.f32.mrf.mxu0
        %v1544 = vadd.f32 %v1483, %v1543
        %v1545 = vpop.f32.mrf.mxu0
        %v1546 = vpop.f32.mrf.mxu0
        %v1547 = vadd.f32 %v1483, %v1546
        %v1548 = vpop.f32.mrf.mxu0
        %1549 = vmatprep.mubr.bf16.mxu0 0
        %1550 = vmatmul.mubr.bf16.gmra.mxu0 %v1501
        %v1551 = vpop.f32.mrf.mxu0
        %v1552 = vadd.f32 %v1483, %v1551
        %v1553 = vpop.f32.mrf.mxu0
        %v1554 = vpop.f32.mrf.mxu0
        %v1555 = vadd.f32 %v1483, %v1554
        %v1556 = vpop.f32.mrf.mxu0
        %1557 = vmatprep.mubr.bf16.mxu0 0
        %1558 = vmatmul.mubr.bf16.gmra.mxu0 %v1504
        %v1559 = vpop.f32.mrf.mxu0
        %v1560 = vadd.f32 %v1483, %v1559
        %v1561 = vpop.f32.mrf.mxu0
        %v1562 = vpop.f32.mrf.mxu0
        %v1563 = vadd.f32 %v1483, %v1562
        %v1564 = vpop.f32.mrf.mxu0
        %1565 = vmatprep.mubr.bf16.mxu0 0
        %1566 = vmatmul.mubr.bf16.gmra.mxu0 %v1507
        %v1567 = vpop.f32.mrf.mxu0
        %v1568 = vadd.f32 %v1483, %v1567
        %v1569 = vpop.f32.mrf.mxu0
        %v1570 = vpop.f32.mrf.mxu0
        %v1571 = vadd.f32 %v1483, %v1570
        %v1572 = vpop.f32.mrf.mxu0
        %1573 = vdwg.mxu0
        %v1574 = vxor.u32 %v1544, 2147483648
        %v1575 = vxor.u32 %v1547, 2147483648
        %v1576 = vxor.u32 %v1552, 2147483648
        %v1577 = vxor.u32 %v1555, 2147483648
        %v1578 = vxor.u32 %v1560, 2147483648
        %v1579 = vxor.u32 %v1563, 2147483648
        %v1580 = vxor.u32 %v1568, 2147483648
        %v1581 = vxor.u32 %v1571, 2147483648
        %v1582 = vmul.f32 %v1574, 1.442695
        %v1583 = vpow.pop %v1582
        %v1584 = vmul.f32 %v1575, 1.442695
        %v1585 = vpow.pop %v1584
        %v1586 = vmul.f32 %v1576, 1.442695
        %v1587 = vpow.pop %v1586
        %v1588 = vmul.f32 %v1577, 1.442695
        %v1589 = vpow.pop %v1588
        %v1590 = vmul.f32 %v1578, 1.442695
        %v1591 = vpow.pop %v1590
        %v1592 = vmul.f32 %v1579, 1.442695
        %v1593 = vpow.pop %v1592
        %v1594 = vmul.f32 %v1580, 1.442695
        %v1595 = vpow.pop %v1594
        %v1596 = vmul.f32 %v1581, 1.442695
        %v1597 = vpow.pop %v1596
        %v1598 = vadd.f32 %v1583, 1.0
        %v1599 = vadd.f32 %v1585, 1.0
        %v1600 = vadd.f32 %v1587, 1.0
        %v1601 = vadd.f32 %v1589, 1.0
        %v1602 = vadd.f32 %v1591, 1.0
        %v1603 = vadd.f32 %v1593, 1.0
        %v1604 = vadd.f32 %v1595, 1.0
        %v1605 = vadd.f32 %v1597, 1.0
        %v1606 = vrcp.pop %v1598
        %v1607 = vmul.f32 1.0, %v1606
        %v1608 = vrcp.pop %v1599
        %v1609 = vmul.f32 1.0, %v1608
        %v1610 = vrcp.pop %v1600
        %v1611 = vmul.f32 1.0, %v1610
        %v1612 = vrcp.pop %v1601
        %v1613 = vmul.f32 1.0, %v1612
        %v1614 = vrcp.pop %v1602
        %v1615 = vmul.f32 1.0, %v1614
        %v1616 = vrcp.pop %v1603
        %v1617 = vmul.f32 1.0, %v1616
        %v1618 = vrcp.pop %v1604
        %v1619 = vmul.f32 1.0, %v1618
        %v1620 = vrcp.pop %v1605
        %v1621 = vmul.f32 1.0, %v1620
        %v1622 = vmul.f32 %v1544, %v1607
        %v1623 = vmul.f32 %v1547, %v1609
        %v1624 = vmul.f32 %v1552, %v1611
        %v1625 = vmul.f32 %v1555, %v1613
        %v1626 = vmul.f32 %v1560, %v1615
        %v1627 = vmul.f32 %v1563, %v1617
        %v1628 = vmul.f32 %v1568, %v1619
        %v1629 = vmul.f32 %v1571, %v1621
        %v1630 = vld [vmem:[%s13] sm:$0xf]
        %v1631 = vld [vmem:[%s13 + $0x4] sm:$0xf]
        %v1632 = vld [vmem:[%s13 + $0x8] sm:$0xf]
        %v1633 = vld [vmem:[%s13 + $0xc] sm:$0xf]
        %v1634 = vld [vmem:[%s13 + $0x10] sm:$0xf]
        %v1635 = vld [vmem:[%s13 + $0x14] sm:$0xf]
        %v1636 = vld [vmem:[%s13 + $0x18] sm:$0xf]
        %v1637 = vld [vmem:[%s13 + $0x1c] sm:$0xf]
        %v1638 = vpack.c.bf16 %v1623, %v1622
        %v1639 = vpack.c.bf16 %v1625, %v1624
        %v1640 = vpack.c.bf16 %v1627, %v1626
        %v1641 = vpack.c.bf16 %v1629, %v1628
        %v1650 = vunpack.c.l.b16 %v1630
        %v1651 = vunpack.c.l.b16 %v1631
        %v1652 = vunpack.c.l.b16 %v1632
        %v1653 = vunpack.c.l.b16 %v1633
        %v1654 = vunpack.c.l.b16 %v1634
        %v1655 = vunpack.c.l.b16 %v1635
        %v1656 = vunpack.c.l.b16 %v1636
        %v1657 = vunpack.c.l.b16 %v1637
        %v1658 = vpack.c.b16 %v1651, %v1650
        %v1659 = vpack.c.b16 %v1653, %v1652
        %v1660 = vpack.c.b16 %v1655, %v1654
        %v1661 = vpack.c.b16 %v1657, %v1656
        %vm1666 = vcmask 523264
        %v1668 = vsel %vm1666, %v1638, 0
        %v1671 = vsel %vm1666, %v1639, 0
        %v1674 = vsel %vm1666, %v1640, 0
        %v1677 = vsel %vm1666, %v1641, 0
        %1679 = vmatprep.subr.bf16.mxu0 0
        %1680 = vmatpush1.bf16.msra.mxu0 0
        %1681 = vmatprep.subr.bf16.mxu0 0
        %1682 = vmatpush1.bf16.msra.mxu0 0
        %1683 = vmatprep.subr.bf16.mxu0 0
        %1684 = vmatpush1.bf16.msra.mxu0 0
        %1685 = vmatprep.subr.bf16.mxu0 0
        %1686 = vmatpush1.bf16.msra.mxu0 0
        %1687 = vmatprep.subr.bf16.mxu0 0
        %1688 = vmatpush1.bf16.msra.mxu0 %v1661
        %1689 = vmatprep.subr.bf16.mxu0 0
        %1690 = vmatpush1.bf16.msra.mxu0 %v1660
        %1691 = vmatprep.subr.bf16.mxu0 0
        %1692 = vmatpush1.bf16.msra.mxu0 %v1659
        %1693 = vmatprep.subr.bf16.mxu0 0
        %1694 = vmatpush1.bf16.msra.mxu0 %v1658
        %1695 = vmatprep.subr.bf16.mxu0 0
        %1696 = vmatpush2.bf16.msra.mxu0 0
        %1697 = vmatprep.subr.bf16.mxu0 0
        %1698 = vmatpush2.bf16.msra.mxu0 0
        %1699 = vmatprep.subr.bf16.mxu0 0
        %1700 = vmatpush2.bf16.msra.mxu0 0
        %1701 = vmatprep.subr.bf16.mxu0 0
        %1702 = vmatpush2.bf16.msra.mxu0 0
        %1703 = vmatprep.subr.bf16.mxu0 0
        %1704 = vmatpush2.bf16.msra.mxu0 0
        %1705 = vmatprep.subr.bf16.mxu0 0
        %1706 = vmatpush2.bf16.msra.mxu0 0
        %1707 = vmatprep.subr.bf16.mxu0 0
        %1708 = vmatpush2.bf16.msra.mxu0 0
        %1709 = vmatprep.subr.bf16.mxu0 0
        %1710 = vmatpush2.bf16.msra.mxu0 0
        %1711 = vmatprep.mubr.bf16.mxu0 0
        %1712 = vmatmul.mubr.bf16.gmra.mxu0 %v1668
        %v1713 = vpop.f32.mrf.mxu0
        %v1714 = vadd.f32 0.0, %v1713
        %v1715 = vpop.f32.mrf.mxu0
        %v1716 = vpop.f32.mrf.mxu0
        %v1717 = vadd.f32 0.0, %v1716
        %v1718 = vpop.f32.mrf.mxu0
        %1719 = vmatprep.mubr.bf16.mxu0 0
        %1720 = vmatmul.mubr.bf16.gmra.mxu0 %v1671
        %v1721 = vpop.f32.mrf.mxu0
        %v1722 = vadd.f32 0.0, %v1721
        %v1723 = vpop.f32.mrf.mxu0
        %v1724 = vpop.f32.mrf.mxu0
        %v1725 = vadd.f32 0.0, %v1724
        %v1726 = vpop.f32.mrf.mxu0
        %1727 = vmatprep.mubr.bf16.mxu0 0
        %1728 = vmatmul.mubr.bf16.gmra.mxu0 %v1674
        %v1729 = vpop.f32.mrf.mxu0
        %v1730 = vadd.f32 0.0, %v1729
        %v1731 = vpop.f32.mrf.mxu0
        %v1732 = vpop.f32.mrf.mxu0
        %v1733 = vadd.f32 0.0, %v1732
        %v1734 = vpop.f32.mrf.mxu0
        %1735 = vmatprep.mubr.bf16.mxu0 0
        %1736 = vmatmul.mubr.bf16.gmra.mxu0 %v1677
        %v1737 = vpop.f32.mrf.mxu0
        %v1738 = vadd.f32 0.0, %v1737
        %v1739 = vpop.f32.mrf.mxu0
        %v1740 = vpop.f32.mrf.mxu0
        %v1741 = vadd.f32 0.0, %v1740
        %v1742 = vpop.f32.mrf.mxu0
        %1743 = vdwg.mxu0
        %v1744 = vmul.f32 %v1714, %v1224
        %v1745 = vmul.f32 %v1717, %v1229
        %v1746 = vmul.f32 %v1722, %v1234
        %v1747 = vmul.f32 %v1725, %v1239
        %v1748 = vmul.f32 %v1730, %v1244
        %v1749 = vmul.f32 %v1733, %v1249
        %v1750 = vmul.f32 %v1738, %v1254
        %v1751 = vmul.f32 %v1741, %v1259
        %v1752 = vmul.f32 %v1714, %v1352
        %v1753 = vmul.f32 %v1717, %v1357
        %v1754 = vmul.f32 %v1722, %v1362
        %v1755 = vmul.f32 %v1725, %v1367
        %v1756 = vmul.f32 %v1730, %v1372
        %v1757 = vmul.f32 %v1733, %v1377
        %v1758 = vmul.f32 %v1738, %v1382
        %v1759 = vmul.f32 %v1741, %v1387
        %1768 = vrot.lane.b32.xlu0 %v1752, 116
        %v1769 = vpop.permute.xlu0 %1768
        %1770 = vrot.lane.b32.xlu0 %v1753, 116
        %v1771 = vpop.permute.xlu0 %1770
        %1772 = vrot.lane.b32.xlu0 %v1754, 116
        %v1773 = vpop.permute.xlu0 %1772
        %1774 = vrot.lane.b32.xlu0 %v1755, 116
        %v1775 = vpop.permute.xlu0 %1774
        %1776 = vrot.lane.b32.xlu0 %v1756, 116
        %v1777 = vpop.permute.xlu0 %1776
        %1778 = vrot.lane.b32.xlu0 %v1757, 116
        %v1779 = vpop.permute.xlu0 %1778
        %1780 = vrot.lane.b32.xlu0 %v1758, 116
        %v1781 = vpop.permute.xlu0 %1780
        %1782 = vrot.lane.b32.xlu0 %v1759, 116
        %v1783 = vpop.permute.xlu0 %1782
        %v1792 = vadd.f32 %v1744, %v1769
        %v1793 = vadd.f32 %v1745, %v1771
        %v1794 = vadd.f32 %v1746, %v1773
        %v1795 = vadd.f32 %v1747, %v1775
        %v1796 = vadd.f32 %v1748, %v1777
        %v1797 = vadd.f32 %v1749, %v1779
        %v1798 = vadd.f32 %v1750, %v1781
        %v1799 = vadd.f32 %v1751, %v1783
        %v1800 = vld [vmem:[%s746] sm:$0xff]
        %v1801 = vld [vmem:[%s746 + $0x8] sm:$0xff]
        %v1802 = vld [vmem:[%s746 + $0x10] sm:$0xff]
        %v1803 = vld [vmem:[%s746 + $0x18] sm:$0xff]
        %v1804 = vld [vmem:[%s746 + $0x20] sm:$0xff]
        %v1805 = vld [vmem:[%s746 + $0x28] sm:$0xff]
        %v1806 = vld [vmem:[%s746 + $0x30] sm:$0xff]
        %v1807 = vld [vmem:[%s746 + $0x38] sm:$0xff]
        %v1808 = vmul.f32 %v1800, %v1792
        %v1809 = vmul.f32 %v1801, %v1793
        %v1810 = vmul.f32 %v1802, %v1794
        %v1811 = vmul.f32 %v1803, %v1795
        %v1812 = vmul.f32 %v1804, %v1796
        %v1813 = vmul.f32 %v1805, %v1797
        %v1814 = vmul.f32 %v1806, %v1798
        %v1815 = vmul.f32 %v1807, %v1799
        %vm1816 = vcmask 97280
        %v1817 = vsel %vm1816, %v1808, 0.0
        %v1818 = vrot.slane %v1817, 4
        %v1819 = vadd.f32 %v1817, %v1818
        %v1820 = vrot.slane %v1819, 2
        %v1821 = vadd.f32 %v1819, %v1820
        %v1822 = vrot.slane %v1821, 1
        %v1823 = vadd.f32 %v1821, %v1822
        %v1824 = vsel %vm1816, %v1809, 0.0
        %v1825 = vrot.slane %v1824, 4
        %v1826 = vadd.f32 %v1824, %v1825
        %v1827 = vrot.slane %v1826, 2
        %v1828 = vadd.f32 %v1826, %v1827
        %v1829 = vrot.slane %v1828, 1
        %v1830 = vadd.f32 %v1828, %v1829
        %v1831 = vsel %vm1816, %v1810, 0.0
        %v1832 = vrot.slane %v1831, 4
        %v1833 = vadd.f32 %v1831, %v1832
        %v1834 = vrot.slane %v1833, 2
        %v1835 = vadd.f32 %v1833, %v1834
        %v1836 = vrot.slane %v1835, 1
        %v1837 = vadd.f32 %v1835, %v1836
        %v1838 = vsel %vm1816, %v1811, 0.0
        %v1839 = vrot.slane %v1838, 4
        %v1840 = vadd.f32 %v1838, %v1839
        %v1841 = vrot.slane %v1840, 2
        %v1842 = vadd.f32 %v1840, %v1841
        %v1843 = vrot.slane %v1842, 1
        %v1844 = vadd.f32 %v1842, %v1843
        %v1845 = vsel %vm1816, %v1812, 0.0
        %v1846 = vrot.slane %v1845, 4
        %v1847 = vadd.f32 %v1845, %v1846
        %v1848 = vrot.slane %v1847, 2
        %v1849 = vadd.f32 %v1847, %v1848
        %v1850 = vrot.slane %v1849, 1
        %v1851 = vadd.f32 %v1849, %v1850
        %v1852 = vsel %vm1816, %v1813, 0.0
        %v1853 = vrot.slane %v1852, 4
        %v1854 = vadd.f32 %v1852, %v1853
        %v1855 = vrot.slane %v1854, 2
        %v1856 = vadd.f32 %v1854, %v1855
        %v1857 = vrot.slane %v1856, 1
        %v1858 = vadd.f32 %v1856, %v1857
        %v1859 = vsel %vm1816, %v1814, 0.0
        %v1860 = vrot.slane %v1859, 4
        %v1861 = vadd.f32 %v1859, %v1860
        %v1862 = vrot.slane %v1861, 2
        %v1863 = vadd.f32 %v1861, %v1862
        %v1864 = vrot.slane %v1863, 1
        %v1865 = vadd.f32 %v1863, %v1864
        %v1866 = vsel %vm1816, %v1815, 0.0
        %v1867 = vrot.slane %v1866, 4
        %v1868 = vadd.f32 %v1866, %v1867
        %v1869 = vrot.slane %v1868, 2
        %v1870 = vadd.f32 %v1868, %v1869
        %v1871 = vrot.slane %v1870, 1
        %v1872 = vadd.f32 %v1870, %v1871
        %v1873 = vmax.f32 %v1205, %v1213
        %v1874 = vmax.f32 %v1206, %v1214
        %v1875 = vmax.f32 %v1207, %v1215
        %v1876 = vmax.f32 %v1208, %v1216
        %v1877 = vmax.f32 %v1209, %v1217
        %v1878 = vmax.f32 %v1210, %v1218
        %v1879 = vmax.f32 %v1211, %v1219
        %v1880 = vmax.f32 %v1212, %v1220
        %v1881 = vadd.f32 %v1873, 1e-06
        %v1882 = vadd.f32 %v1874, 1e-06
        %v1883 = vadd.f32 %v1875, 1e-06
        %v1884 = vadd.f32 %v1876, 1e-06
        %v1885 = vadd.f32 %v1877, 1e-06
        %v1886 = vadd.f32 %v1878, 1e-06
        %v1887 = vadd.f32 %v1879, 1e-06
        %v1888 = vadd.f32 %v1880, 1e-06
        %vm1889 = vcmask 7168
        %v1890 = vsel %vm1889, %v1881, 0.0
        %v1891 = vrot.slane %v1890, 4
        %v1892 = vadd.f32 %v1890, %v1891
        %v1893 = vrot.slane %v1892, 2
        %v1894 = vadd.f32 %v1892, %v1893
        %v1895 = vrot.slane %v1894, 1
        %v1896 = vadd.f32 %v1894, %v1895
        %v1897 = vsel %vm1889, %v1882, 0.0
        %v1898 = vrot.slane %v1897, 4
        %v1899 = vadd.f32 %v1897, %v1898
        %v1900 = vrot.slane %v1899, 2
        %v1901 = vadd.f32 %v1899, %v1900
        %v1902 = vrot.slane %v1901, 1
        %v1903 = vadd.f32 %v1901, %v1902
        %v1904 = vsel %vm1889, %v1883, 0.0
        %v1905 = vrot.slane %v1904, 4
        %v1906 = vadd.f32 %v1904, %v1905
        %v1907 = vrot.slane %v1906, 2
        %v1908 = vadd.f32 %v1906, %v1907
        %v1909 = vrot.slane %v1908, 1
        %v1910 = vadd.f32 %v1908, %v1909
        %v1911 = vsel %vm1889, %v1884, 0.0
        %v1912 = vrot.slane %v1911, 4
        %v1913 = vadd.f32 %v1911, %v1912
        %v1914 = vrot.slane %v1913, 2
        %v1915 = vadd.f32 %v1913, %v1914
        %v1916 = vrot.slane %v1915, 1
        %v1917 = vadd.f32 %v1915, %v1916
        %v1918 = vsel %vm1889, %v1885, 0.0
        %v1919 = vrot.slane %v1918, 4
        %v1920 = vadd.f32 %v1918, %v1919
        %v1921 = vrot.slane %v1920, 2
        %v1922 = vadd.f32 %v1920, %v1921
        %v1923 = vrot.slane %v1922, 1
        %v1924 = vadd.f32 %v1922, %v1923
        %v1925 = vsel %vm1889, %v1886, 0.0
        %v1926 = vrot.slane %v1925, 4
        %v1927 = vadd.f32 %v1925, %v1926
        %v1928 = vrot.slane %v1927, 2
        %v1929 = vadd.f32 %v1927, %v1928
        %v1930 = vrot.slane %v1929, 1
        %v1931 = vadd.f32 %v1929, %v1930
        %v1932 = vsel %vm1889, %v1887, 0.0
        %v1933 = vrot.slane %v1932, 4
        %v1934 = vadd.f32 %v1932, %v1933
        %v1935 = vrot.slane %v1934, 2
        %v1936 = vadd.f32 %v1934, %v1935
        %v1937 = vrot.slane %v1936, 1
        %v1938 = vadd.f32 %v1936, %v1937
        %v1939 = vsel %vm1889, %v1888, 0.0
        %v1940 = vrot.slane %v1939, 4
        %v1941 = vadd.f32 %v1939, %v1940
        %v1942 = vrot.slane %v1941, 2
        %v1943 = vadd.f32 %v1941, %v1942
        %v1944 = vrot.slane %v1943, 1
        %v1945 = vadd.f32 %v1943, %v1944
        %1947 = vset.pattern.permute.xlu0 0
        %1948 = vperm.xlu0 %1947, %v1896
        %v1949 = vpop.permute.xlu0 %1948
        %1952 = vset.pattern.permute.xlu0 0
        %1953 = vperm.xlu0 %1952, %v1903
        %v1954 = vpop.permute.xlu0 %1953
        %1957 = vset.pattern.permute.xlu0 0
        %1958 = vperm.xlu0 %1957, %v1910
        %v1959 = vpop.permute.xlu0 %1958
        %1962 = vset.pattern.permute.xlu0 0
        %1963 = vperm.xlu0 %1962, %v1917
        %v1964 = vpop.permute.xlu0 %1963
        %1967 = vset.pattern.permute.xlu0 0
        %1968 = vperm.xlu0 %1967, %v1924
        %v1969 = vpop.permute.xlu0 %1968
        %1972 = vset.pattern.permute.xlu0 0
        %1973 = vperm.xlu0 %1972, %v1931
        %v1974 = vpop.permute.xlu0 %1973
        %1977 = vset.pattern.permute.xlu0 0
        %1978 = vperm.xlu0 %1977, %v1938
        %v1979 = vpop.permute.xlu0 %1978
        %1982 = vset.pattern.permute.xlu0 0
        %1983 = vperm.xlu0 %1982, %v1945
        %v1984 = vpop.permute.xlu0 %1983
        %v1986 = vrcp.pop %v1949
        %v1987 = vmul.f32 %v1823, %v1986
        %v1988 = vrcp.pop %v1954
        %v1989 = vmul.f32 %v1830, %v1988
        %v1990 = vrcp.pop %v1959
        %v1991 = vmul.f32 %v1837, %v1990
        %v1992 = vrcp.pop %v1964
        %v1993 = vmul.f32 %v1844, %v1992
        %v1994 = vrcp.pop %v1969
        %v1995 = vmul.f32 %v1851, %v1994
        %v1996 = vrcp.pop %v1974
        %v1997 = vmul.f32 %v1858, %v1996
        %v1998 = vrcp.pop %v1979
        %v1999 = vmul.f32 %v1865, %v1998
        %v2000 = vrcp.pop %v1984
        %v2001 = vmul.f32 %v1872, %v2000
        %v2010 = vsel %vm1333, %v1989, %v1987
        %v2011 = vsel %vm1335, %v1991, %v2010
        %v2012 = vsel %vm1337, %v1993, %v2011
        %v2013 = vsel %vm1339, %v1995, %v2012
        %v2014 = vsel %vm1341, %v1997, %v2013
        %v2015 = vsel %vm1343, %v1999, %v2014
        %v2016 = vsel %vm1345, %v2001, %v2015
        %2018 = vst.msk [vmem:[%s774] sm:$0xff] %vm1816, %v2016
        %s2019 = sand.u32 %s397, 1
        %s2020 = scalar_lea.sflag [#allocation3], %s2019
        %s2021 = sand.u32 %s397, 1
        %s2022 = smul.addr %s2021, 8
        %s2023 = scalar_lea.vmem [#allocation2], %s2022
        %s2024 = sand.u32 %s425, 1
        %s2025 = scalar_lea.sflag [#allocation5], %s2024
        %s2026 = sand.u32 %s425, 1
        %s2027 = smul.addr %s2026, 8
        %s2028 = scalar_lea.vmem [#allocation4], %s2027
        %p2029 = scmp.lt.s32.totalorder %s38, 1
        %s2030 = scalar_select %p2029, %s38, 1
        %p2031 = scmp.lt.s32.totalorder %s39, 0
        %s2032 = scalar_select %p2031, %s39, 0
        %s2033 = sadd.s32 %s2032, %s2030
        %s2034 = smul.addr %s2033, 8
        %s2035 = scalar_lea.vmem %s16, %s2034
        // Predicated region
        $region77: #{gadecoder_forward.13} parent=75 // pred_check
          %p2036 = pneg %p407
        $region78: #{gadecoder_forward.13} parent=75 // pred_check_branch
          %2038 = sbr.rel (%p2036) target = $region80
        $region79: #{gadecoder_forward.13} parent=75 // pred_region
          %s2040 = ssub.s32 128, 128
          %2041 = vsyncadd %s2020, %s2040
          %s2042 = sadd.s32 %s39, %s38
          %s2043 = smul.addr %s2042, 128
          %s2044 = scalar_lea.hbm %s14, %s2043
          %s2046 = sshll.u32 %s2023, 4
          %s2047 = int_to_ptr.vmem [resolvable:$true] %s2046
          %2049 = dma.vmem_to_hbm [thread:$0]  %s2047, 128, %s2044, %s2020
        $region80: #{gadecoder_forward.13} parent=75 // pred_fallthru
          _
        // Predicated region
        $region81: #{gadecoder_forward.13} parent=75 // pred_check
          %p2050 = pneg %p435
        $region82: #{gadecoder_forward.13} parent=75 // pred_check_branch
          %2052 = sbr.rel (%p2050) target = $region84
        $region83: #{gadecoder_forward.13} parent=75 // pred_region
          %s2054 = ssub.s32 128, 128
          %2055 = vsyncadd %s2025, %s2054
          %s2056 = sadd.s32 %s39, %s38
          %s2057 = smul.addr %s2056, 128
          %s2058 = scalar_lea.hbm %s15, %s2057
          %s2060 = sshll.u32 %s2028, 4
          %s2061 = int_to_ptr.vmem [resolvable:$true] %s2060
          %2063 = dma.vmem_to_hbm [thread:$0]  %s2061, 128, %s2058, %s2025
        $region84: #{gadecoder_forward.13} parent=75 // pred_fallthru
          _
        // Predicated region
        $region85: #{gadecoder_forward.13} parent=75 // pred_check
          %p2064 = pneg %p463
        $region86: #{gadecoder_forward.13} parent=75 // pred_check_branch
          %2066 = sbr.rel (%p2064) target = $region88
        $region87: #{gadecoder_forward.13} parent=75 // pred_region
          _
        $region88: #{gadecoder_forward.13} parent=75 // pred_fallthru
          _
      $region76: #{gadecoder_forward.13} parent=5 // pred_fallthru
        _
      %p2067 = scmp.le.s32.totalorder 2, %s29
      // Predicated region
      $region89: #{gadecoder_forward.13} parent=5 // pred_check
        %p2068 = pneg %p2067
      $region90: #{gadecoder_forward.13} parent=5 // pred_check_branch
        %2070 = sbr.rel (%p2068) target = $region92
      $region91: #{gadecoder_forward.13} parent=5 // pred_region
        %s2071 = ssub.s32 %s29, 2
        // Predicated region
        $region93: #{gadecoder_forward.13} parent=91 // pred_check
          %p2072 = pneg %p413
        $region94: #{gadecoder_forward.13} parent=91 // pred_check_branch
          %2074 = sbr.rel (%p2072) target = $region96
        $region95: #{gadecoder_forward.13} parent=91 // pred_region
          %s2075 = sand.u32 %s398, 1
          %s2076 = scalar_lea.sflag [#allocation3], %s2075
          %s2077 = sand.u32 %s398, 1
          %s2078 = smul.addr %s2077, 8
          %s2079 = scalar_lea.vmem [#allocation2], %s2078
          %2080 = dma.done %s2076, 128
        $region96: #{gadecoder_forward.13} parent=91 // pred_fallthru
          _
        // Predicated region
        $region97: #{gadecoder_forward.13} parent=91 // pred_check
          %p2081 = pneg %p441
        $region98: #{gadecoder_forward.13} parent=91 // pred_check_branch
          %2083 = sbr.rel (%p2081) target = $region100
        $region99: #{gadecoder_forward.13} parent=91 // pred_region
          %s2084 = sand.u32 %s426, 1
          %s2085 = scalar_lea.sflag [#allocation5], %s2084
          %s2086 = sand.u32 %s426, 1
          %s2087 = smul.addr %s2086, 8
          %s2088 = scalar_lea.vmem [#allocation4], %s2087
          %2089 = dma.done %s2085, 128
        $region100: #{gadecoder_forward.13} parent=91 // pred_fallthru
          _
        // Predicated region
        $region101: #{gadecoder_forward.13} parent=91 // pred_check
          %p2090 = pneg %p469
        $region102: #{gadecoder_forward.13} parent=91 // pred_check_branch
          %2092 = sbr.rel (%p2090) target = $region104
        $region103: #{gadecoder_forward.13} parent=91 // pred_region
          %p2093 = scmp.lt.s32.totalorder %s40, 1
          %s2094 = scalar_select %p2093, %s40, 1
          %p2095 = scmp.lt.s32.totalorder %s41, 0
          %s2096 = scalar_select %p2095, %s41, 0
          %s2097 = sadd.s32 %s2096, %s2094
          %s2098 = smul.addr %s2097, 8
          %s2099 = scalar_lea.vmem %s16, %s2098
        $region104: #{gadecoder_forward.13} parent=91 // pred_fallthru
          _
      $region92: #{gadecoder_forward.13} parent=5 // pred_fallthru
        _
    $region6: #{gadecoder_forward.13} parent=1 // loop_footer
      %s33 = sadd.s32 1, %s29
    $region7: #{gadecoder_forward.13} parent=1 // loop_footer_branch
      %28 = sbr.rel target = $region3
    $region8: #{gadecoder_forward.13} parent=1 // loop_exit
      _
    %2100 = vsyncpa [#allocation3], 1
    %s2101 = scalar_lea.sflag [#allocation3], 1
    %2102 = vsyncpa %s2101, 1
    %2103 = vsyncpa [#allocation5], 1
    %s2104 = scalar_lea.sflag [#allocation5], 1
    %2105 = vsyncpa %s2104, 1

</llo_original>
